<compile_context>
chip_gen: v6e
topology: v6e:2x2x1
jax: 0.10.0
libtpu: 0.0.40
codegen_flags: <defaults>
</compile_context>

<pallas_src>
import jax
import jax.numpy as jnp
from jax.experimental import pallas as pl
from jax.experimental.pallas import tpu as pltpu

EPS = 1e-5
CP = 128  # lane-dense padded channel width (multiple of 128)


def double_conv_kernel(xp_ref, w1_ref, g1_ref, b1_ref,
                       w2_ref, g2_ref, b2_ref, o_ref, pad_ref):
    # xp_ref : (N, H+2, W+2, CP) f32  zero-padded NHWC input (channels padded to CP)
    # w*_ref : (9*CP, CP)        bf16 im2col-reshaped HWIO weights
    # g*,b*  : (1, CP)           f32  batchnorm affine params (zero-padded)
    # o_ref  : (N, H, W, CP)     f32
    # pad_ref: (N, H+2, W+2, CP) f32  VMEM scratch for the conv2 halo
    N, H, W, _ = o_ref.shape
    M = N * H * W

    def im2col_bf16(src):
        # (N, H+2, W+2, CP) -> (M, 9*CP) bf16 patch matrix (single MXU matmul feed)
        cols = []
        for dy in range(3):
            for dx in range(3):
                cols.append(src[:, dy:dy + H, dx:dx + W, :]
                            .reshape(M, CP).astype(jnp.bfloat16))
        return jnp.concatenate(cols, axis=-1)

    def bn_relu(y, g_ref, b_ref):
        # Training-mode BN, single pass: per-channel sum & sum-of-squares
        # (f32), biased variance, eps=1e-5, affine, then ReLU.
        inv_m = 1.0 / M
        mean = jnp.sum(y, axis=0, keepdims=True) * inv_m
        ex2 = jnp.sum(y * y, axis=0, keepdims=True) * inv_m
        var = ex2 - mean * mean
        scale = jax.lax.rsqrt(var + EPS) * g_ref[...]
        return jnp.maximum((y - mean) * scale + b_ref[...], 0.0)

    # ---- conv1 (one bf16 MXU matmul, f32 acc) + BN1 + ReLU ----
    y1 = bn_relu(
        jnp.dot(im2col_bf16(xp_ref[...]), w1_ref[...],
                preferred_element_type=jnp.float32),
        g1_ref, b1_ref)

    # ---- stage intermediate for conv2: interior write + border-only zeroing ----
    pad_ref[:, 1:H + 1, 1:W + 1, :] = y1.reshape(N, H, W, CP)
    zrow = jnp.zeros((N, 1, W + 2, CP), jnp.float32)
    zcol = jnp.zeros((N, H, 1, CP), jnp.float32)
    pad_ref[:, 0:1, :, :] = zrow
    pad_ref[:, H + 1:H + 2, :, :] = zrow
    pad_ref[:, 1:H + 1, 0:1, :] = zcol
    pad_ref[:, 1:H + 1, W + 1:W + 2, :] = zcol

    # ---- conv2 + BN2 + ReLU ----
    y2 = bn_relu(
        jnp.dot(im2col_bf16(pad_ref[...]), w2_ref[...],
                preferred_element_type=jnp.float32),
        g2_ref, b2_ref)
    o_ref[...] = y2.reshape(N, H, W, CP)


def double_conv(x_nchw, w1, g1, b1, w2, g2, b2):
    """x_nchw: (N, Cin, H, W) f32; w*: (3,3,in,out) HWIO; returns (N, Cout, H, W)."""
    N, Cin, H, W = x_nchw.shape
    Cout = w1.shape[-1]
    assert Cin <= CP and Cout <= CP

    # --- one-off layout prep (tiny XLA ops at these sizes) ---
    # TODO(synk): at production sizes fold the NCHW<->NHWC transposes + 1-px
    # halo into row-tiled BlockSpecs and use a two-phase (stats, normalize)
    # BN reduction across the grid instead of this single-block design.
    x = jnp.transpose(x_nchw, (0, 2, 3, 1)).astype(jnp.float32)
    xp = jnp.pad(x, ((0, 0), (1, 1), (1, 1), (0, CP - Cin)))  # spatial halo + lane pad

    def prep_w(w):
        ci, co = w.shape[2], w.shape[3]
        wp = jnp.pad(w, ((0, 0), (0, 0), (0, CP - ci), (0, CP - co)))
        return wp.reshape(9 * CP, CP).astype(jnp.bfloat16)     # (dy,dx,cin) row order

    def prep_v(v):
        return jnp.pad(v, (0, CP - v.shape[0])).reshape(1, CP).astype(jnp.float32)

    w1r, w2r = prep_w(w1), prep_w(w2)
    g1r, b1r, g2r, b2r = prep_v(g1), prep_v(b1), prep_v(g2), prep_v(b2)

    out_nhwc = pl.pallas_call(
        double_conv_kernel,
        out_shape=jax.ShapeDtypeStruct((N, H, W, CP), jnp.float32),
        grid=(1,),  # whole problem fits in VMEM at these shapes (single step)
        in_specs=[
            pl.BlockSpec((N, H + 2, W + 2, CP), lambda i: (0, 0, 0, 0)),
            pl.BlockSpec((9 * CP, CP), lambda i: (0, 0)),
            pl.BlockSpec((1, CP), lambda i: (0, 0)),
            pl.BlockSpec((1, CP), lambda i: (0, 0)),
            pl.BlockSpec((9 * CP, CP), lambda i: (0, 0)),
            pl.BlockSpec((1, CP), lambda i: (0, 0)),
            pl.BlockSpec((1, CP), lambda i: (0, 0)),
        ],
        out_specs=pl.BlockSpec((N, H, W, CP), lambda i: (0, 0, 0, 0)),
        scratch_shapes=[pltpu.VMEM((N, H + 2, W + 2, CP), jnp.float32)],
        compiler_params=pltpu.CompilerParams(
            dimension_semantics=("arbitrary",),
            vmem_limit_bytes=32 * 1024 * 1024),
    )(xp, w1r, g1r, b1r, w2r, g2r, b2r)

    # slice off padded channels, back to NCHW
    return jnp.transpose(out_nhwc[..., :Cout], (0, 3, 1, 2))


def double_conv_reference(x_nchw, w1, g1, b1, w2, g2, b2):
    """Pure-JAX f32 reference with the same (training-mode BN) semantics."""
    def conv(x, w):
        return jax.lax.conv_general_dilated(
            x, w, window_strides=(1, 1), padding="SAME",
            dimension_numbers=("NHWC", "HWIO", "NHWC"))

    def bn_relu(y, g, b):
        mean = y.mean(axis=(0, 1, 2), keepdims=True)
        var = ((y - mean) ** 2).mean(axis=(0, 1, 2), keepdims=True)
        return jnp.maximum((y - mean) * jax.lax.rsqrt(var + EPS) * g + b, 0.0)

    x = jnp.transpose(x_nchw, (0, 2, 3, 1)).astype(jnp.float32)
    y = bn_relu(conv(x, w1), g1, b1)
    y = bn_relu(conv(y, w2), g2, b2)
    return jnp.transpose(y, (0, 3, 1, 2))


if __name__ == "__main__":
    N, Cin, Cout, H, W = 2, 4, 8, 16, 16

    key = jax.random.PRNGKey(0)
    k_x, k_w1, k_w2, k_g1, k_b1, k_g2, k_b2 = jax.random.split(key, 7)

    x = jax.random.normal(k_x, (N, Cin, H, W), jnp.float32)
    # Conv weights in HWIO layout (3,3,in,out), bias=False as in the module.
    w1 = jax.random.normal(k_w1, (3, 3, Cin, Cout), jnp.float32) * 0.1
    w2 = jax.random.normal(k_w2, (3, 3, Cout, Cout), jnp.float32) * 0.1
    # BatchNorm affine params (deterministic, non-trivial values).
    g1 = 1.0 + 0.1 * jax.random.normal(k_g1, (Cout,), jnp.float32)
    b1 = 0.1 * jax.random.normal(k_b1, (Cout,), jnp.float32)
    g2 = 1.0 + 0.1 * jax.random.normal(k_g2, (Cout,), jnp.float32)
    b2 = 0.1 * jax.random.normal(k_b2, (Cout,), jnp.float32)

    out = double_conv(x, w1, g1, b1, w2, g2, b2)
    out = jax.block_until_ready(out)

    ref = double_conv_reference(x, w1, g1, b1, w2, g2, b2)
    assert out.shape == (N, Cout, H, W)
    # bf16 MXU inputs (f32 accumulation) -> tolerance loosened vs the f32 ref.
    assert jnp.allclose(out, ref, rtol=5e-2, atol=5e-2), \
        f"max abs err = {jnp.max(jnp.abs(out - ref))}"

    print("KERNEL_OK")
</pallas_src>

<mosaic_0001>
module attributes {stable_mosaic.version = 11 : i64} {
  func.func @double_conv_kernel(%arg0: i32, %arg1: memref<2x18x18x128xf32, #tpu.memory_space<vmem>>, %arg2: memref<1152x128xbf16, #tpu.memory_space<vmem>>, %arg3: memref<1x128xf32, #tpu.memory_space<vmem>>, %arg4: memref<1x128xf32, #tpu.memory_space<vmem>>, %arg5: memref<1152x128xbf16, #tpu.memory_space<vmem>>, %arg6: memref<1x128xf32, #tpu.memory_space<vmem>>, %arg7: memref<1x128xf32, #tpu.memory_space<vmem>>, %arg8: memref<2x16x16x128xf32, #tpu.memory_space<vmem>>, %arg9: memref<2x18x18x128xf32, #tpu.memory_space<vmem>>) attributes {dimension_semantics = [#tpu.dimension_semantics<arbitrary>], iteration_bounds = array<i64: 1>, scalar_prefetch = 0 : i64, scratch_operands = 1 : i64, tpu.core_type = #tpu.core_type<tc>, window_params = [{pipeline_mode = #tpu.pipeline_mode<synchronous>, transform_indices = @transform_0, window_bounds = array<i64: 2, 18, 18, 128>}, {pipeline_mode = #tpu.pipeline_mode<synchronous>, transform_indices = @transform_1, window_bounds = array<i64: 1152, 128>}, {pipeline_mode = #tpu.pipeline_mode<synchronous>, transform_indices = @transform_2, window_bounds = array<i64: 1, 128>}, {pipeline_mode = #tpu.pipeline_mode<synchronous>, transform_indices = @transform_3, window_bounds = array<i64: 1, 128>}, {pipeline_mode = #tpu.pipeline_mode<synchronous>, transform_indices = @transform_4, window_bounds = array<i64: 1152, 128>}, {pipeline_mode = #tpu.pipeline_mode<synchronous>, transform_indices = @transform_5, window_bounds = array<i64: 1, 128>}, {pipeline_mode = #tpu.pipeline_mode<synchronous>, transform_indices = @transform_6, window_bounds = array<i64: 1, 128>}, {pipeline_mode = #tpu.pipeline_mode<synchronous>, transform_indices = @transform_7, window_bounds = array<i64: 2, 16, 16, 128>}]} {
    %c0 = arith.constant 0 : index
    %c0_0 = arith.constant 0 : index
    %c0_1 = arith.constant 0 : index
    %c0_2 = arith.constant 0 : index
    %0 = vector.load %arg1[%c0, %c0_0, %c0_1, %c0_2] : memref<2x18x18x128xf32, #tpu.memory_space<vmem>>, vector<2x18x18x128xf32>
    %1 = vector.extract_strided_slice %0 {offsets = [0, 0, 0, 0], sizes = [2, 16, 16, 128], strides = [1, 1, 1, 1]} : vector<2x18x18x128xf32> to vector<2x16x16x128xf32>
    %2 = vector.shape_cast %1 : vector<2x16x16x128xf32> to vector<512x128xf32>
    %3 = arith.truncf %2 : vector<512x128xf32> to vector<512x128xbf16>
    %4 = vector.extract_strided_slice %0 {offsets = [0, 0, 1, 0], sizes = [2, 16, 16, 128], strides = [1, 1, 1, 1]} : vector<2x18x18x128xf32> to vector<2x16x16x128xf32>
    %5 = vector.shape_cast %4 : vector<2x16x16x128xf32> to vector<512x128xf32>
    %6 = arith.truncf %5 : vector<512x128xf32> to vector<512x128xbf16>
    %7 = vector.extract_strided_slice %0 {offsets = [0, 0, 2, 0], sizes = [2, 16, 16, 128], strides = [1, 1, 1, 1]} : vector<2x18x18x128xf32> to vector<2x16x16x128xf32>
    %8 = vector.shape_cast %7 : vector<2x16x16x128xf32> to vector<512x128xf32>
    %9 = arith.truncf %8 : vector<512x128xf32> to vector<512x128xbf16>
    %10 = vector.extract_strided_slice %0 {offsets = [0, 1, 0, 0], sizes = [2, 16, 16, 128], strides = [1, 1, 1, 1]} : vector<2x18x18x128xf32> to vector<2x16x16x128xf32>
    %11 = vector.shape_cast %10 : vector<2x16x16x128xf32> to vector<512x128xf32>
    %12 = arith.truncf %11 : vector<512x128xf32> to vector<512x128xbf16>
    %13 = vector.extract_strided_slice %0 {offsets = [0, 1, 1, 0], sizes = [2, 16, 16, 128], strides = [1, 1, 1, 1]} : vector<2x18x18x128xf32> to vector<2x16x16x128xf32>
    %14 = vector.shape_cast %13 : vector<2x16x16x128xf32> to vector<512x128xf32>
    %15 = arith.truncf %14 : vector<512x128xf32> to vector<512x128xbf16>
    %16 = vector.extract_strided_slice %0 {offsets = [0, 1, 2, 0], sizes = [2, 16, 16, 128], strides = [1, 1, 1, 1]} : vector<2x18x18x128xf32> to vector<2x16x16x128xf32>
    %17 = vector.shape_cast %16 : vector<2x16x16x128xf32> to vector<512x128xf32>
    %18 = arith.truncf %17 : vector<512x128xf32> to vector<512x128xbf16>
    %19 = vector.extract_strided_slice %0 {offsets = [0, 2, 0, 0], sizes = [2, 16, 16, 128], strides = [1, 1, 1, 1]} : vector<2x18x18x128xf32> to vector<2x16x16x128xf32>
    %20 = vector.shape_cast %19 : vector<2x16x16x128xf32> to vector<512x128xf32>
    %21 = arith.truncf %20 : vector<512x128xf32> to vector<512x128xbf16>
    %22 = vector.extract_strided_slice %0 {offsets = [0, 2, 1, 0], sizes = [2, 16, 16, 128], strides = [1, 1, 1, 1]} : vector<2x18x18x128xf32> to vector<2x16x16x128xf32>
    %23 = vector.shape_cast %22 : vector<2x16x16x128xf32> to vector<512x128xf32>
    %24 = arith.truncf %23 : vector<512x128xf32> to vector<512x128xbf16>
    %25 = vector.extract_strided_slice %0 {offsets = [0, 2, 2, 0], sizes = [2, 16, 16, 128], strides = [1, 1, 1, 1]} : vector<2x18x18x128xf32> to vector<2x16x16x128xf32>
    %26 = vector.shape_cast %25 : vector<2x16x16x128xf32> to vector<512x128xf32>
    %27 = arith.truncf %26 : vector<512x128xf32> to vector<512x128xbf16>
    %28 = tpu.concatenate %3, %6, %9, %12, %15, %18, %21, %24, %27 in 1 : vector<512x128xbf16>, vector<512x128xbf16>, vector<512x128xbf16>, vector<512x128xbf16>, vector<512x128xbf16>, vector<512x128xbf16>, vector<512x128xbf16>, vector<512x128xbf16>, vector<512x128xbf16> -> vector<512x1152xbf16>
    %c0_3 = arith.constant 0 : index
    %c0_4 = arith.constant 0 : index
    %29 = vector.load %arg2[%c0_3, %c0_4] : memref<1152x128xbf16, #tpu.memory_space<vmem>>, vector<1152x128xbf16>
    %cst = arith.constant dense<0.000000e+00> : vector<512x128xf32>
    %30 = tpu.matmul %28, %29, %cst {dimension_numbers = #tpu.dot_dimension_numbers<[1], [0], [0], [1], [0, 0, 1, 1], [], []>} : vector<512x1152xbf16>, vector<1152x128xbf16>, vector<512x128xf32> -> vector<512x128xf32>
    %cst_5 = arith.constant dense<0.000000e+00> : vector<128xf32>
    %31 = vector.multi_reduction <add>, %30, %cst_5 [0] : vector<512x128xf32> to vector<128xf32>
    %32 = vector.shape_cast %31 : vector<128xf32> to vector<1x128xf32>
    %cst_6 = arith.constant 0.001953125 : f32
    %33 = vector.broadcast %cst_6 : f32 to vector<1x128xf32>
    %34 = arith.mulf %32, %33 : vector<1x128xf32>
    %35 = arith.mulf %30, %30 : vector<512x128xf32>
    %cst_7 = arith.constant dense<0.000000e+00> : vector<128xf32>
    %36 = vector.multi_reduction <add>, %35, %cst_7 [0] : vector<512x128xf32> to vector<128xf32>
    %37 = vector.shape_cast %36 : vector<128xf32> to vector<1x128xf32>
    %cst_8 = arith.constant 0.001953125 : f32
    %38 = vector.broadcast %cst_8 : f32 to vector<1x128xf32>
    %39 = arith.mulf %37, %38 : vector<1x128xf32>
    %40 = arith.mulf %34, %34 : vector<1x128xf32>
    %41 = arith.subf %39, %40 : vector<1x128xf32>
    %cst_9 = arith.constant 9.99999974E-6 : f32
    %42 = vector.broadcast %cst_9 : f32 to vector<1x128xf32>
    %43 = arith.addf %41, %42 : vector<1x128xf32>
    %44 = math.rsqrt %43 : vector<1x128xf32>
    %c0_10 = arith.constant 0 : index
    %c0_11 = arith.constant 0 : index
    %45 = vector.load %arg3[%c0_10, %c0_11] : memref<1x128xf32, #tpu.memory_space<vmem>>, vector<1x128xf32>
    %46 = arith.mulf %44, %45 : vector<1x128xf32>
    %47 = vector.broadcast %34 : vector<1x128xf32> to vector<512x128xf32>
    %48 = arith.subf %30, %47 : vector<512x128xf32>
    %49 = vector.broadcast %46 : vector<1x128xf32> to vector<512x128xf32>
    %50 = arith.mulf %48, %49 : vector<512x128xf32>
    %c0_12 = arith.constant 0 : index
    %c0_13 = arith.constant 0 : index
    %51 = vector.load %arg4[%c0_12, %c0_13] : memref<1x128xf32, #tpu.memory_space<vmem>>, vector<1x128xf32>
    %52 = vector.broadcast %51 : vector<1x128xf32> to vector<512x128xf32>
    %53 = arith.addf %50, %52 : vector<512x128xf32>
    %cst_14 = arith.constant 0.000000e+00 : f32
    %54 = vector.broadcast %cst_14 : f32 to vector<512x128xf32>
    %55 = arith.maximumf %53, %54 : vector<512x128xf32>
    %56 = vector.shape_cast %55 : vector<512x128xf32> to vector<2x16x16x128xf32>
    %c0_15 = arith.constant 0 : index
    %c1 = arith.constant 1 : index
    %c1_16 = arith.constant 1 : index
    %c0_17 = arith.constant 0 : index
    %57 = vector.load %arg9[%c0_15, %c1, %c1_16, %c0_17] : memref<2x18x18x128xf32, #tpu.memory_space<vmem>>, vector<2x16x16x128xf32>
    tpu.vector_store %arg9[%c0_15, %c1, %c1_16, %c0_17], %56 {strides = array<i32>} : memref<2x18x18x128xf32, #tpu.memory_space<vmem>>, vector<2x16x16x128xf32>,
    %cst_18 = arith.constant 0.000000e+00 : f32
    %58 = vector.broadcast %cst_18 : f32 to vector<2x1x18x128xf32>
    %cst_19 = arith.constant 0.000000e+00 : f32
    %59 = vector.broadcast %cst_19 : f32 to vector<2x16x1x128xf32>
    %c0_20 = arith.constant 0 : index
    %c0_21 = arith.constant 0 : index
    %c0_22 = arith.constant 0 : index
    %c0_23 = arith.constant 0 : index
    %60 = vector.load %arg9[%c0_20, %c0_21, %c0_22, %c0_23] : memref<2x18x18x128xf32, #tpu.memory_space<vmem>>, vector<2x1x18x128xf32>
    tpu.vector_store %arg9[%c0_20, %c0_21, %c0_22, %c0_23], %58 {strides = array<i32>} : memref<2x18x18x128xf32, #tpu.memory_space<vmem>>, vector<2x1x18x128xf32>,
    %c0_24 = arith.constant 0 : index
    %c17 = arith.constant 17 : index
    %c0_25 = arith.constant 0 : index
    %c0_26 = arith.constant 0 : index
    %61 = vector.load %arg9[%c0_24, %c17, %c0_25, %c0_26] : memref<2x18x18x128xf32, #tpu.memory_space<vmem>>, vector<2x1x18x128xf32>
    tpu.vector_store %arg9[%c0_24, %c17, %c0_25, %c0_26], %58 {strides = array<i32>} : memref<2x18x18x128xf32, #tpu.memory_space<vmem>>, vector<2x1x18x128xf32>,
    %c0_27 = arith.constant 0 : index
    %c1_28 = arith.constant 1 : index
    %c0_29 = arith.constant 0 : index
    %c0_30 = arith.constant 0 : index
    %62 = vector.load %arg9[%c0_27, %c1_28, %c0_29, %c0_30] : memref<2x18x18x128xf32, #tpu.memory_space<vmem>>, vector<2x16x1x128xf32>
    tpu.vector_store %arg9[%c0_27, %c1_28, %c0_29, %c0_30], %59 {strides = array<i32>} : memref<2x18x18x128xf32, #tpu.memory_space<vmem>>, vector<2x16x1x128xf32>,
    %c0_31 = arith.constant 0 : index
    %c1_32 = arith.constant 1 : index
    %c17_33 = arith.constant 17 : index
    %c0_34 = arith.constant 0 : index
    %63 = vector.load %arg9[%c0_31, %c1_32, %c17_33, %c0_34] : memref<2x18x18x128xf32, #tpu.memory_space<vmem>>, vector<2x16x1x128xf32>
    tpu.vector_store %arg9[%c0_31, %c1_32, %c17_33, %c0_34], %59 {strides = array<i32>} : memref<2x18x18x128xf32, #tpu.memory_space<vmem>>, vector<2x16x1x128xf32>,
    %c0_35 = arith.constant 0 : index
    %c0_36 = arith.constant 0 : index
    %c0_37 = arith.constant 0 : index
    %c0_38 = arith.constant 0 : index
    %64 = vector.load %arg9[%c0_35, %c0_36, %c0_37, %c0_38] : memref<2x18x18x128xf32, #tpu.memory_space<vmem>>, vector<2x18x18x128xf32>
    %65 = vector.extract_strided_slice %64 {offsets = [0, 0, 0, 0], sizes = [2, 16, 16, 128], strides = [1, 1, 1, 1]} : vector<2x18x18x128xf32> to vector<2x16x16x128xf32>
    %66 = vector.shape_cast %65 : vector<2x16x16x128xf32> to vector<512x128xf32>
    %67 = arith.truncf %66 : vector<512x128xf32> to vector<512x128xbf16>
    %68 = vector.extract_strided_slice %64 {offsets = [0, 0, 1, 0], sizes = [2, 16, 16, 128], strides = [1, 1, 1, 1]} : vector<2x18x18x128xf32> to vector<2x16x16x128xf32>
    %69 = vector.shape_cast %68 : vector<2x16x16x128xf32> to vector<512x128xf32>
    %70 = arith.truncf %69 : vector<512x128xf32> to vector<512x128xbf16>
    %71 = vector.extract_strided_slice %64 {offsets = [0, 0, 2, 0], sizes = [2, 16, 16, 128], strides = [1, 1, 1, 1]} : vector<2x18x18x128xf32> to vector<2x16x16x128xf32>
    %72 = vector.shape_cast %71 : vector<2x16x16x128xf32> to vector<512x128xf32>
    %73 = arith.truncf %72 : vector<512x128xf32> to vector<512x128xbf16>
    %74 = vector.extract_strided_slice %64 {offsets = [0, 1, 0, 0], sizes = [2, 16, 16, 128], strides = [1, 1, 1, 1]} : vector<2x18x18x128xf32> to vector<2x16x16x128xf32>
    %75 = vector.shape_cast %74 : vector<2x16x16x128xf32> to vector<512x128xf32>
    %76 = arith.truncf %75 : vector<512x128xf32> to vector<512x128xbf16>
    %77 = vector.extract_strided_slice %64 {offsets = [0, 1, 1, 0], sizes = [2, 16, 16, 128], strides = [1, 1, 1, 1]} : vector<2x18x18x128xf32> to vector<2x16x16x128xf32>
    %78 = vector.shape_cast %77 : vector<2x16x16x128xf32> to vector<512x128xf32>
    %79 = arith.truncf %78 : vector<512x128xf32> to vector<512x128xbf16>
    %80 = vector.extract_strided_slice %64 {offsets = [0, 1, 2, 0], sizes = [2, 16, 16, 128], strides = [1, 1, 1, 1]} : vector<2x18x18x128xf32> to vector<2x16x16x128xf32>
    %81 = vector.shape_cast %80 : vector<2x16x16x128xf32> to vector<512x128xf32>
    %82 = arith.truncf %81 : vector<512x128xf32> to vector<512x128xbf16>
    %83 = vector.extract_strided_slice %64 {offsets = [0, 2, 0, 0], sizes = [2, 16, 16, 128], strides = [1, 1, 1, 1]} : vector<2x18x18x128xf32> to vector<2x16x16x128xf32>
    %84 = vector.shape_cast %83 : vector<2x16x16x128xf32> to vector<512x128xf32>
    %85 = arith.truncf %84 : vector<512x128xf32> to vector<512x128xbf16>
    %86 = vector.extract_strided_slice %64 {offsets = [0, 2, 1, 0], sizes = [2, 16, 16, 128], strides = [1, 1, 1, 1]} : vector<2x18x18x128xf32> to vector<2x16x16x128xf32>
    %87 = vector.shape_cast %86 : vector<2x16x16x128xf32> to vector<512x128xf32>
    %88 = arith.truncf %87 : vector<512x128xf32> to vector<512x128xbf16>
    %89 = vector.extract_strided_slice %64 {offsets = [0, 2, 2, 0], sizes = [2, 16, 16, 128], strides = [1, 1, 1, 1]} : vector<2x18x18x128xf32> to vector<2x16x16x128xf32>
    %90 = vector.shape_cast %89 : vector<2x16x16x128xf32> to vector<512x128xf32>
    %91 = arith.truncf %90 : vector<512x128xf32> to vector<512x128xbf16>
    %92 = tpu.concatenate %67, %70, %73, %76, %79, %82, %85, %88, %91 in 1 : vector<512x128xbf16>, vector<512x128xbf16>, vector<512x128xbf16>, vector<512x128xbf16>, vector<512x128xbf16>, vector<512x128xbf16>, vector<512x128xbf16>, vector<512x128xbf16>, vector<512x128xbf16> -> vector<512x1152xbf16>
    %c0_39 = arith.constant 0 : index
    %c0_40 = arith.constant 0 : index
    %93 = vector.load %arg5[%c0_39, %c0_40] : memref<1152x128xbf16, #tpu.memory_space<vmem>>, vector<1152x128xbf16>
    %cst_41 = arith.constant dense<0.000000e+00> : vector<512x128xf32>
    %94 = tpu.matmul %92, %93, %cst_41 {dimension_numbers = #tpu.dot_dimension_numbers<[1], [0], [0], [1], [0, 0, 1, 1], [], []>} : vector<512x1152xbf16>, vector<1152x128xbf16>, vector<512x128xf32> -> vector<512x128xf32>
    %cst_42 = arith.constant dense<0.000000e+00> : vector<128xf32>
    %95 = vector.multi_reduction <add>, %94, %cst_42 [0] : vector<512x128xf32> to vector<128xf32>
    %96 = vector.shape_cast %95 : vector<128xf32> to vector<1x128xf32>
    %cst_43 = arith.constant 0.001953125 : f32
    %97 = vector.broadcast %cst_43 : f32 to vector<1x128xf32>
    %98 = arith.mulf %96, %97 : vector<1x128xf32>
    %99 = arith.mulf %94, %94 : vector<512x128xf32>
    %cst_44 = arith.constant dense<0.000000e+00> : vector<128xf32>
    %100 = vector.multi_reduction <add>, %99, %cst_44 [0] : vector<512x128xf32> to vector<128xf32>
    %101 = vector.shape_cast %100 : vector<128xf32> to vector<1x128xf32>
    %cst_45 = arith.constant 0.001953125 : f32
    %102 = vector.broadcast %cst_45 : f32 to vector<1x128xf32>
    %103 = arith.mulf %101, %102 : vector<1x128xf32>
    %104 = arith.mulf %98, %98 : vector<1x128xf32>
    %105 = arith.subf %103, %104 : vector<1x128xf32>
    %cst_46 = arith.constant 9.99999974E-6 : f32
    %106 = vector.broadcast %cst_46 : f32 to vector<1x128xf32>
    %107 = arith.addf %105, %106 : vector<1x128xf32>
    %108 = math.rsqrt %107 : vector<1x128xf32>
    %c0_47 = arith.constant 0 : index
    %c0_48 = arith.constant 0 : index
    %109 = vector.load %arg6[%c0_47, %c0_48] : memref<1x128xf32, #tpu.memory_space<vmem>>, vector<1x128xf32>
    %110 = arith.mulf %108, %109 : vector<1x128xf32>
    %111 = vector.broadcast %98 : vector<1x128xf32> to vector<512x128xf32>
    %112 = arith.subf %94, %111 : vector<512x128xf32>
    %113 = vector.broadcast %110 : vector<1x128xf32> to vector<512x128xf32>
    %114 = arith.mulf %112, %113 : vector<512x128xf32>
    %c0_49 = arith.constant 0 : index
    %c0_50 = arith.constant 0 : index
    %115 = vector.load %arg7[%c0_49, %c0_50] : memref<1x128xf32, #tpu.memory_space<vmem>>, vector<1x128xf32>
    %116 = vector.broadcast %115 : vector<1x128xf32> to vector<512x128xf32>
    %117 = arith.addf %114, %116 : vector<512x128xf32>
    %cst_51 = arith.constant 0.000000e+00 : f32
    %118 = vector.broadcast %cst_51 : f32 to vector<512x128xf32>
    %119 = arith.maximumf %117, %118 : vector<512x128xf32>
    %120 = vector.shape_cast %119 : vector<512x128xf32> to vector<2x16x16x128xf32>
    %c0_52 = arith.constant 0 : index
    %c0_53 = arith.constant 0 : index
    %c0_54 = arith.constant 0 : index
    %c0_55 = arith.constant 0 : index
    %121 = vector.load %arg8[%c0_52, %c0_53, %c0_54, %c0_55] : memref<2x16x16x128xf32, #tpu.memory_space<vmem>>, vector<2x16x16x128xf32>
    tpu.vector_store %arg8[%c0_52, %c0_53, %c0_54, %c0_55], %120 {strides = array<i32>} : memref<2x16x16x128xf32, #tpu.memory_space<vmem>>, vector<2x16x16x128xf32>,
    return
  }
  func.func @transform_0(%arg0: i32) -> (i32, i32, i32, i32) {
    %c0_i32 = arith.constant 0 : i32
    %c0_i32_0 = arith.constant 0 : i32
    %c0_i32_1 = arith.constant 0 : i32
    %c0_i32_2 = arith.constant 0 : i32
    %c0_i32_3 = arith.constant 0 : i32
    return %c0_i32, %c0_i32_0, %c0_i32_1, %c0_i32_2 : i32, i32, i32, i32
  }
  func.func @transform_1(%arg0: i32) -> (i32, i32) {
    %c0_i32 = arith.constant 0 : i32
    %c0_i32_0 = arith.constant 0 : i32
    %c0_i32_1 = arith.constant 0 : i32
    return %c0_i32, %c0_i32_0 : i32, i32
  }
  func.func @transform_2(%arg0: i32) -> (i32, i32) {
    %c0_i32 = arith.constant 0 : i32
    %c0_i32_0 = arith.constant 0 : i32
    %c0_i32_1 = arith.constant 0 : i32
    return %c0_i32, %c0_i32_0 : i32, i32
  }
  func.func @transform_3(%arg0: i32) -> (i32, i32) {
    %c0_i32 = arith.constant 0 : i32
    %c0_i32_0 = arith.constant 0 : i32
    %c0_i32_1 = arith.constant 0 : i32
    return %c0_i32, %c0_i32_0 : i32, i32
  }
  func.func @transform_4(%arg0: i32) -> (i32, i32) {
    %c0_i32 = arith.constant 0 : i32
    %c0_i32_0 = arith.constant 0 : i32
    %c0_i32_1 = arith.constant 0 : i32
    return %c0_i32, %c0_i32_0 : i32, i32
  }
  func.func @transform_5(%arg0: i32) -> (i32, i32) {
    %c0_i32 = arith.constant 0 : i32
    %c0_i32_0 = arith.constant 0 : i32
    %c0_i32_1 = arith.constant 0 : i32
    return %c0_i32, %c0_i32_0 : i32, i32
  }
  func.func @transform_6(%arg0: i32) -> (i32, i32) {
    %c0_i32 = arith.constant 0 : i32
    %c0_i32_0 = arith.constant 0 : i32
    %c0_i32_1 = arith.constant 0 : i32
    return %c0_i32, %c0_i32_0 : i32, i32
  }
  func.func @transform_7(%arg0: i32) -> (i32, i32, i32, i32) {
    %c0_i32 = arith.constant 0 : i32
    %c0_i32_0 = arith.constant 0 : i32
    %c0_i32_1 = arith.constant 0 : i32
    %c0_i32_2 = arith.constant 0 : i32
    %c0_i32_3 = arith.constant 0 : i32
    return %c0_i32, %c0_i32_0, %c0_i32_1, %c0_i32_2 : i32, i32, i32, i32
  }
}

</mosaic_0001>

<llo_original>
// kernel: tpu_custom_call.1
$region0: #{tpu_custom_call.1}
  #allocation0 [shape = 'u32[]', space=smem, size = 0x4, offset = 0x4, fixed_abs, tag = 'smem constant byte address 0x4 - core index']
  #allocation1 [shape = 'u32[144,128]{1,0:T(1,128)}', space=vmem, size = 0x12000, scoped, tag = 'internal scratch']
  #allocation2 [shape = 'f32[2,18,18,128]{3,2,1,0:T(8,128)}', space=vmem, size = 0x6c000, scoped, tag = 'scratch operand']
  %s0 = inlined_call_operand.vmem [shape: f32[2,18,18,128], index: 0, kind: input, shape index: {}]
  %s1 = inlined_call_operand.vmem [shape: bf16[1152,128], index: 1, kind: input, shape index: {}]
  %s2 = inlined_call_operand.vmem [shape: f32[1,128], index: 2, kind: input, shape index: {}]
  %s3 = inlined_call_operand.vmem [shape: f32[1,128], index: 3, kind: input, shape index: {}]
  %s4 = inlined_call_operand.vmem [shape: bf16[1152,128], index: 4, kind: input, shape index: {}]
  %s5 = inlined_call_operand.vmem [shape: f32[1,128], index: 5, kind: input, shape index: {}]
  %s6 = inlined_call_operand.vmem [shape: f32[1,128], index: 6, kind: input, shape index: {}]
  %s7 = inlined_call_operand.hbm [shape: f32[2,16,16,128], index: 7, kind: output, shape index: {}]
  %s8 = sld [smem:[#allocation0]]
  $region38: #{tpu_custom_call.1} parent=0
    _
  %s10 = ssub.s32 1, %s8
  %s11 = scalar_select 0, %s10, %s8
  $region1: #{tpu_custom_call.1} parent=0
    #allocation3 [shape = 'u8[262144]{0}', space=vmem, size = 0x40000, scoped, tag = 'output window, operand 0, single buffered']
    #allocation4 [shape = 's32[1]{0}', space=sflag, size = 0x4, scoped, tag = 'scoped memory for tpu_custom_call.1']
    %12 = vsyncpa [#allocation4], 0
    // Predicated region
    $region2: #{tpu_custom_call.1} parent=1 // pred_check
      _
    $region3: #{tpu_custom_call.1} parent=1 // pred_check_branch
      %14 = sbr.rel (0) target = $region5
    $region4: #{tpu_custom_call.1} parent=1 // pred_region
      _
    $region5: #{tpu_custom_call.1} parent=1 // pred_fallthru
      _
    // Predicated region
    $region6: #{tpu_custom_call.1} parent=1 // pred_check
      _
    $region7: #{tpu_custom_call.1} parent=1 // pred_check_branch
      %16 = sbr.rel (0) target = $region9
    $region8: #{tpu_custom_call.1} parent=1 // pred_region
      _
    $region9: #{tpu_custom_call.1} parent=1 // pred_fallthru
      _
    // Predicated region
    $region10: #{tpu_custom_call.1} parent=1 // pred_check
      _
    $region11: #{tpu_custom_call.1} parent=1 // pred_check_branch
      %18 = sbr.rel (0) target = $region13
    $region12: #{tpu_custom_call.1} parent=1 // pred_region
      _
    $region13: #{tpu_custom_call.1} parent=1 // pred_fallthru
      _
    // Predicated region
    $region14: #{tpu_custom_call.1} parent=1 // pred_check
      _
    $region15: #{tpu_custom_call.1} parent=1 // pred_check_branch
      %20 = sbr.rel (0) target = $region17
    $region16: #{tpu_custom_call.1} parent=1 // pred_region
      _
    $region17: #{tpu_custom_call.1} parent=1 // pred_fallthru
      _
    // Predicated region
    $region18: #{tpu_custom_call.1} parent=1 // pred_check
      _
    $region19: #{tpu_custom_call.1} parent=1 // pred_check_branch
      %22 = sbr.rel (0) target = $region21
    $region20: #{tpu_custom_call.1} parent=1 // pred_region
      _
    $region21: #{tpu_custom_call.1} parent=1 // pred_fallthru
      _
    // Predicated region
    $region22: #{tpu_custom_call.1} parent=1 // pred_check
      _
    $region23: #{tpu_custom_call.1} parent=1 // pred_check_branch
      %24 = sbr.rel (0) target = $region25
    $region24: #{tpu_custom_call.1} parent=1 // pred_region
      _
    $region25: #{tpu_custom_call.1} parent=1 // pred_fallthru
      _
    // Predicated region
    $region26: #{tpu_custom_call.1} parent=1 // pred_check
      _
    $region27: #{tpu_custom_call.1} parent=1 // pred_check_branch
      %26 = sbr.rel (0) target = $region29
    $region28: #{tpu_custom_call.1} parent=1 // pred_region
      _
    $region29: #{tpu_custom_call.1} parent=1 // pred_fallthru
      _
    %v28 = vld [vmem:[%s0] sm:$0xff]
    %v29 = vld [vmem:[%s0 + $0x8] sm:$0xff]
    %v30 = vld [vmem:[%s0 + $0x10] sm:$0x3]
    %v31 = vld [vmem:[%s0 + $0x18] sm:$0xff]
    %v32 = vld [vmem:[%s0 + $0x20] sm:$0xff]
    %v33 = vld [vmem:[%s0 + $0x28] sm:$0x3]
    %v34 = vld [vmem:[%s0 + $0x30] sm:$0xff]
    %v35 = vld [vmem:[%s0 + $0x38] sm:$0xff]
    %v36 = vld [vmem:[%s0 + $0x40] sm:$0x3]
    %v37 = vld [vmem:[%s0 + $0x48] sm:$0xff]
    %v38 = vld [vmem:[%s0 + $0x50] sm:$0xff]
    %v39 = vld [vmem:[%s0 + $0x58] sm:$0x3]
    %v40 = vld [vmem:[%s0 + $0x60] sm:$0xff]
    %v41 = vld [vmem:[%s0 + $0x68] sm:$0xff]
    %v42 = vld [vmem:[%s0 + $0x70] sm:$0x3]
    %v43 = vld [vmem:[%s0 + $0x78] sm:$0xff]
    %v44 = vld [vmem:[%s0 + $0x80] sm:$0xff]
    %v45 = vld [vmem:[%s0 + $0x88] sm:$0x3]
    %v46 = vld [vmem:[%s0 + $0x90] sm:$0xff]
    %v47 = vld [vmem:[%s0 + $0x98] sm:$0xff]
    %v48 = vld [vmem:[%s0 + $0xa0] sm:$0x3]
    %v49 = vld [vmem:[%s0 + $0xa8] sm:$0xff]
    %v50 = vld [vmem:[%s0 + $0xb0] sm:$0xff]
    %v51 = vld [vmem:[%s0 + $0xb8] sm:$0x3]
    %v52 = vld [vmem:[%s0 + $0xc0] sm:$0xff]
    %v53 = vld [vmem:[%s0 + $0xc8] sm:$0xff]
    %v54 = vld [vmem:[%s0 + $0xd0] sm:$0x3]
    %v55 = vld [vmem:[%s0 + $0xd8] sm:$0xff]
    %v56 = vld [vmem:[%s0 + $0xe0] sm:$0xff]
    %v57 = vld [vmem:[%s0 + $0xe8] sm:$0x3]
    %v58 = vld [vmem:[%s0 + $0xf0] sm:$0xff]
    %v59 = vld [vmem:[%s0 + $0xf8] sm:$0xff]
    %v60 = vld [vmem:[%s0 + $0x100] sm:$0x3]
    %v61 = vld [vmem:[%s0 + $0x108] sm:$0xff]
    %v62 = vld [vmem:[%s0 + $0x110] sm:$0xff]
    %v63 = vld [vmem:[%s0 + $0x118] sm:$0x3]
    %v64 = vld [vmem:[%s0 + $0x120] sm:$0xff]
    %v65 = vld [vmem:[%s0 + $0x128] sm:$0xff]
    %v66 = vld [vmem:[%s0 + $0x130] sm:$0x3]
    %v67 = vld [vmem:[%s0 + $0x138] sm:$0xff]
    %v68 = vld [vmem:[%s0 + $0x140] sm:$0xff]
    %v69 = vld [vmem:[%s0 + $0x148] sm:$0x3]
    %v70 = vld [vmem:[%s0 + $0x150] sm:$0xff]
    %v71 = vld [vmem:[%s0 + $0x158] sm:$0xff]
    %v72 = vld [vmem:[%s0 + $0x160] sm:$0x3]
    %v73 = vld [vmem:[%s0 + $0x168] sm:$0xff]
    %v74 = vld [vmem:[%s0 + $0x170] sm:$0xff]
    %v75 = vld [vmem:[%s0 + $0x178] sm:$0x3]
    %v76 = vld [vmem:[%s0 + $0x180] sm:$0xff]
    %v77 = vld [vmem:[%s0 + $0x188] sm:$0xff]
    %v78 = vld [vmem:[%s0 + $0x190] sm:$0x3]
    %v79 = vld [vmem:[%s0 + $0x198] sm:$0xff]
    %v80 = vld [vmem:[%s0 + $0x1a0] sm:$0xff]
    %v81 = vld [vmem:[%s0 + $0x1a8] sm:$0x3]
    %v82 = vld [vmem:[%s0 + $0x1b0] sm:$0xff]
    %v83 = vld [vmem:[%s0 + $0x1b8] sm:$0xff]
    %v84 = vld [vmem:[%s0 + $0x1c0] sm:$0x3]
    %v85 = vld [vmem:[%s0 + $0x1c8] sm:$0xff]
    %v86 = vld [vmem:[%s0 + $0x1d0] sm:$0xff]
    %v87 = vld [vmem:[%s0 + $0x1d8] sm:$0x3]
    %v88 = vld [vmem:[%s0 + $0x1e0] sm:$0xff]
    %v89 = vld [vmem:[%s0 + $0x1e8] sm:$0xff]
    %v90 = vld [vmem:[%s0 + $0x1f0] sm:$0x3]
    %v91 = vld [vmem:[%s0 + $0x1f8] sm:$0xff]
    %v92 = vld [vmem:[%s0 + $0x200] sm:$0xff]
    %v93 = vld [vmem:[%s0 + $0x208] sm:$0x3]
    %v94 = vld [vmem:[%s0 + $0x210] sm:$0xff]
    %v95 = vld [vmem:[%s0 + $0x218] sm:$0xff]
    %v96 = vld [vmem:[%s0 + $0x220] sm:$0x3]
    %v97 = vld [vmem:[%s0 + $0x228] sm:$0xff]
    %v98 = vld [vmem:[%s0 + $0x230] sm:$0xff]
    %v99 = vld [vmem:[%s0 + $0x238] sm:$0x3]
    %v100 = vld [vmem:[%s0 + $0x240] sm:$0xff]
    %v101 = vld [vmem:[%s0 + $0x248] sm:$0xff]
    %v102 = vld [vmem:[%s0 + $0x250] sm:$0x3]
    %v103 = vld [vmem:[%s0 + $0x258] sm:$0xff]
    %v104 = vld [vmem:[%s0 + $0x260] sm:$0xff]
    %v105 = vld [vmem:[%s0 + $0x268] sm:$0x3]
    %v106 = vld [vmem:[%s0 + $0x270] sm:$0xff]
    %v107 = vld [vmem:[%s0 + $0x278] sm:$0xff]
    %v108 = vld [vmem:[%s0 + $0x280] sm:$0x3]
    %v109 = vld [vmem:[%s0 + $0x288] sm:$0xff]
    %v110 = vld [vmem:[%s0 + $0x290] sm:$0xff]
    %v111 = vld [vmem:[%s0 + $0x298] sm:$0x3]
    %v112 = vld [vmem:[%s0 + $0x2a0] sm:$0xff]
    %v113 = vld [vmem:[%s0 + $0x2a8] sm:$0xff]
    %v114 = vld [vmem:[%s0 + $0x2b0] sm:$0x3]
    %v115 = vld [vmem:[%s0 + $0x2b8] sm:$0xff]
    %v116 = vld [vmem:[%s0 + $0x2c0] sm:$0xff]
    %v117 = vld [vmem:[%s0 + $0x2c8] sm:$0x3]
    %v118 = vld [vmem:[%s0 + $0x2d0] sm:$0xff]
    %v119 = vld [vmem:[%s0 + $0x2d8] sm:$0xff]
    %v120 = vld [vmem:[%s0 + $0x2e0] sm:$0x3]
    %v121 = vld [vmem:[%s0 + $0x2e8] sm:$0xff]
    %v122 = vld [vmem:[%s0 + $0x2f0] sm:$0xff]
    %v123 = vld [vmem:[%s0 + $0x2f8] sm:$0x3]
    %v124 = vld [vmem:[%s0 + $0x300] sm:$0xff]
    %v125 = vld [vmem:[%s0 + $0x308] sm:$0xff]
    %v126 = vld [vmem:[%s0 + $0x310] sm:$0x3]
    %v127 = vld [vmem:[%s0 + $0x318] sm:$0xff]
    %v128 = vld [vmem:[%s0 + $0x320] sm:$0xff]
    %v129 = vld [vmem:[%s0 + $0x328] sm:$0x3]
    %v130 = vld [vmem:[%s0 + $0x330] sm:$0xff]
    %v131 = vld [vmem:[%s0 + $0x338] sm:$0xff]
    %v132 = vld [vmem:[%s0 + $0x340] sm:$0x3]
    %v133 = vld [vmem:[%s0 + $0x348] sm:$0xff]
    %v134 = vld [vmem:[%s0 + $0x350] sm:$0xff]
    %v135 = vld [vmem:[%s0 + $0x358] sm:$0x3]
    %v136 = vpack.c.bf16 %v29, %v28
    %v137 = vpack.c.bf16 %v32, %v31
    %v138 = vpack.c.bf16 %v35, %v34
    %v139 = vpack.c.bf16 %v38, %v37
    %v140 = vpack.c.bf16 %v41, %v40
    %v141 = vpack.c.bf16 %v44, %v43
    %v142 = vpack.c.bf16 %v47, %v46
    %v143 = vpack.c.bf16 %v50, %v49
    %v144 = vpack.c.bf16 %v53, %v52
    %v145 = vpack.c.bf16 %v56, %v55
    %v146 = vpack.c.bf16 %v59, %v58
    %v147 = vpack.c.bf16 %v62, %v61
    %v148 = vpack.c.bf16 %v65, %v64
    %v149 = vpack.c.bf16 %v68, %v67
    %v150 = vpack.c.bf16 %v71, %v70
    %v151 = vpack.c.bf16 %v74, %v73
    %v152 = vpack.c.bf16 %v83, %v82
    %v153 = vpack.c.bf16 %v86, %v85
    %v154 = vpack.c.bf16 %v89, %v88
    %v155 = vpack.c.bf16 %v92, %v91
    %v156 = vpack.c.bf16 %v95, %v94
    %v157 = vpack.c.bf16 %v98, %v97
    %v158 = vpack.c.bf16 %v101, %v100
    %v159 = vpack.c.bf16 %v104, %v103
    %v160 = vpack.c.bf16 %v107, %v106
    %v161 = vpack.c.bf16 %v110, %v109
    %v162 = vpack.c.bf16 %v113, %v112
    %v163 = vpack.c.bf16 %v116, %v115
    %v164 = vpack.c.bf16 %v119, %v118
    %v165 = vpack.c.bf16 %v122, %v121
    %v166 = vpack.c.bf16 %v125, %v124
    %v167 = vpack.c.bf16 %v128, %v127
    %vm264 = vcmask 1046528
    %v265 = vrot.slane %v28, 1
    %v266 = vrot.slane %v29, 1
    %v267 = vsel %vm264, %v265, %v266
    %v268 = vrot.slane %v30, 1
    %v269 = vsel %vm264, %v266, %v268
    %v270 = vrot.slane %v31, 1
    %v271 = vrot.slane %v32, 1
    %v272 = vsel %vm264, %v270, %v271
    %v273 = vrot.slane %v33, 1
    %v274 = vsel %vm264, %v271, %v273
    %v275 = vrot.slane %v34, 1
    %v276 = vrot.slane %v35, 1
    %v277 = vsel %vm264, %v275, %v276
    %v278 = vrot.slane %v36, 1
    %v279 = vsel %vm264, %v276, %v278
    %v280 = vrot.slane %v37, 1
    %v281 = vrot.slane %v38, 1
    %v282 = vsel %vm264, %v280, %v281
    %v283 = vrot.slane %v39, 1
    %v284 = vsel %vm264, %v281, %v283
    %v285 = vrot.slane %v40, 1
    %v286 = vrot.slane %v41, 1
    %v287 = vsel %vm264, %v285, %v286
    %v288 = vrot.slane %v42, 1
    %v289 = vsel %vm264, %v286, %v288
    %v290 = vrot.slane %v43, 1
    %v291 = vrot.slane %v44, 1
    %v292 = vsel %vm264, %v290, %v291
    %v293 = vrot.slane %v45, 1
    %v294 = vsel %vm264, %v291, %v293
    %v295 = vrot.slane %v46, 1
    %v296 = vrot.slane %v47, 1
    %v297 = vsel %vm264, %v295, %v296
    %v298 = vrot.slane %v48, 1
    %v299 = vsel %vm264, %v296, %v298
    %v300 = vrot.slane %v49, 1
    %v301 = vrot.slane %v50, 1
    %v302 = vsel %vm264, %v300, %v301
    %v303 = vrot.slane %v51, 1
    %v304 = vsel %vm264, %v301, %v303
    %v305 = vrot.slane %v52, 1
    %v306 = vrot.slane %v53, 1
    %v307 = vsel %vm264, %v305, %v306
    %v308 = vrot.slane %v54, 1
    %v309 = vsel %vm264, %v306, %v308
    %v310 = vrot.slane %v55, 1
    %v311 = vrot.slane %v56, 1
    %v312 = vsel %vm264, %v310, %v311
    %v313 = vrot.slane %v57, 1
    %v314 = vsel %vm264, %v311, %v313
    %v315 = vrot.slane %v58, 1
    %v316 = vrot.slane %v59, 1
    %v317 = vsel %vm264, %v315, %v316
    %v318 = vrot.slane %v60, 1
    %v319 = vsel %vm264, %v316, %v318
    %v320 = vrot.slane %v61, 1
    %v321 = vrot.slane %v62, 1
    %v322 = vsel %vm264, %v320, %v321
    %v323 = vrot.slane %v63, 1
    %v324 = vsel %vm264, %v321, %v323
    %v325 = vrot.slane %v64, 1
    %v326 = vrot.slane %v65, 1
    %v327 = vsel %vm264, %v325, %v326
    %v328 = vrot.slane %v66, 1
    %v329 = vsel %vm264, %v326, %v328
    %v330 = vrot.slane %v67, 1
    %v331 = vrot.slane %v68, 1
    %v332 = vsel %vm264, %v330, %v331
    %v333 = vrot.slane %v69, 1
    %v334 = vsel %vm264, %v331, %v333
    %v335 = vrot.slane %v70, 1
    %v336 = vrot.slane %v71, 1
    %v337 = vsel %vm264, %v335, %v336
    %v338 = vrot.slane %v72, 1
    %v339 = vsel %vm264, %v336, %v338
    %v340 = vrot.slane %v73, 1
    %v341 = vrot.slane %v74, 1
    %v342 = vsel %vm264, %v340, %v341
    %v343 = vrot.slane %v75, 1
    %v344 = vsel %vm264, %v341, %v343
    %v345 = vrot.slane %v82, 1
    %v346 = vrot.slane %v83, 1
    %v347 = vsel %vm264, %v345, %v346
    %v348 = vrot.slane %v84, 1
    %v349 = vsel %vm264, %v346, %v348
    %v350 = vrot.slane %v85, 1
    %v351 = vrot.slane %v86, 1
    %v352 = vsel %vm264, %v350, %v351
    %v353 = vrot.slane %v87, 1
    %v354 = vsel %vm264, %v351, %v353
    %v355 = vrot.slane %v88, 1
    %v356 = vrot.slane %v89, 1
    %v357 = vsel %vm264, %v355, %v356
    %v358 = vrot.slane %v90, 1
    %v359 = vsel %vm264, %v356, %v358
    %v360 = vrot.slane %v91, 1
    %v361 = vrot.slane %v92, 1
    %v362 = vsel %vm264, %v360, %v361
    %v363 = vrot.slane %v93, 1
    %v364 = vsel %vm264, %v361, %v363
    %v365 = vrot.slane %v94, 1
    %v366 = vrot.slane %v95, 1
    %v367 = vsel %vm264, %v365, %v366
    %v368 = vrot.slane %v96, 1
    %v369 = vsel %vm264, %v366, %v368
    %v370 = vrot.slane %v97, 1
    %v371 = vrot.slane %v98, 1
    %v372 = vsel %vm264, %v370, %v371
    %v373 = vrot.slane %v99, 1
    %v374 = vsel %vm264, %v371, %v373
    %v375 = vrot.slane %v100, 1
    %v376 = vrot.slane %v101, 1
    %v377 = vsel %vm264, %v375, %v376
    %v378 = vrot.slane %v102, 1
    %v379 = vsel %vm264, %v376, %v378
    %v380 = vrot.slane %v103, 1
    %v381 = vrot.slane %v104, 1
    %v382 = vsel %vm264, %v380, %v381
    %v383 = vrot.slane %v105, 1
    %v384 = vsel %vm264, %v381, %v383
    %v385 = vrot.slane %v106, 1
    %v386 = vrot.slane %v107, 1
    %v387 = vsel %vm264, %v385, %v386
    %v388 = vrot.slane %v108, 1
    %v389 = vsel %vm264, %v386, %v388
    %v390 = vrot.slane %v109, 1
    %v391 = vrot.slane %v110, 1
    %v392 = vsel %vm264, %v390, %v391
    %v393 = vrot.slane %v111, 1
    %v394 = vsel %vm264, %v391, %v393
    %v395 = vrot.slane %v112, 1
    %v396 = vrot.slane %v113, 1
    %v397 = vsel %vm264, %v395, %v396
    %v398 = vrot.slane %v114, 1
    %v399 = vsel %vm264, %v396, %v398
    %v400 = vrot.slane %v115, 1
    %v401 = vrot.slane %v116, 1
    %v402 = vsel %vm264, %v400, %v401
    %v403 = vrot.slane %v117, 1
    %v404 = vsel %vm264, %v401, %v403
    %v405 = vrot.slane %v118, 1
    %v406 = vrot.slane %v119, 1
    %v407 = vsel %vm264, %v405, %v406
    %v408 = vrot.slane %v120, 1
    %v409 = vsel %vm264, %v406, %v408
    %v410 = vrot.slane %v121, 1
    %v411 = vrot.slane %v122, 1
    %v412 = vsel %vm264, %v410, %v411
    %v413 = vrot.slane %v123, 1
    %v414 = vsel %vm264, %v411, %v413
    %v415 = vrot.slane %v124, 1
    %v416 = vrot.slane %v125, 1
    %v417 = vsel %vm264, %v415, %v416
    %v418 = vrot.slane %v126, 1
    %v419 = vsel %vm264, %v416, %v418
    %v420 = vrot.slane %v127, 1
    %v421 = vrot.slane %v128, 1
    %v422 = vsel %vm264, %v420, %v421
    %v423 = vrot.slane %v129, 1
    %v424 = vsel %vm264, %v421, %v423
    %v489 = vpack.c.bf16 %v269, %v267
    %v490 = vpack.c.bf16 %v274, %v272
    %v491 = vpack.c.bf16 %v279, %v277
    %v492 = vpack.c.bf16 %v284, %v282
    %v493 = vpack.c.bf16 %v289, %v287
    %v494 = vpack.c.bf16 %v294, %v292
    %v495 = vpack.c.bf16 %v299, %v297
    %v496 = vpack.c.bf16 %v304, %v302
    %v497 = vpack.c.bf16 %v309, %v307
    %v498 = vpack.c.bf16 %v314, %v312
    %v499 = vpack.c.bf16 %v319, %v317
    %v500 = vpack.c.bf16 %v324, %v322
    %v501 = vpack.c.bf16 %v329, %v327
    %v502 = vpack.c.bf16 %v334, %v332
    %v503 = vpack.c.bf16 %v339, %v337
    %v504 = vpack.c.bf16 %v344, %v342
    %v505 = vpack.c.bf16 %v349, %v347
    %v506 = vpack.c.bf16 %v354, %v352
    %v507 = vpack.c.bf16 %v359, %v357
    %v508 = vpack.c.bf16 %v364, %v362
    %v509 = vpack.c.bf16 %v369, %v367
    %v510 = vpack.c.bf16 %v374, %v372
    %v511 = vpack.c.bf16 %v379, %v377
    %v512 = vpack.c.bf16 %v384, %v382
    %v513 = vpack.c.bf16 %v389, %v387
    %v514 = vpack.c.bf16 %v394, %v392
    %v515 = vpack.c.bf16 %v399, %v397
    %v516 = vpack.c.bf16 %v404, %v402
    %v517 = vpack.c.bf16 %v409, %v407
    %v518 = vpack.c.bf16 %v414, %v412
    %v519 = vpack.c.bf16 %v419, %v417
    %v520 = vpack.c.bf16 %v424, %v422
    %vm521 = vcmask 1045504
    %v522 = vrot.slane %v28, 2
    %v523 = vrot.slane %v29, 2
    %v524 = vsel %vm521, %v522, %v523
    %v525 = vrot.slane %v30, 2
    %v526 = vsel %vm521, %v523, %v525
    %v527 = vrot.slane %v31, 2
    %v528 = vrot.slane %v32, 2
    %v529 = vsel %vm521, %v527, %v528
    %v530 = vrot.slane %v33, 2
    %v531 = vsel %vm521, %v528, %v530
    %v532 = vrot.slane %v34, 2
    %v533 = vrot.slane %v35, 2
    %v534 = vsel %vm521, %v532, %v533
    %v535 = vrot.slane %v36, 2
    %v536 = vsel %vm521, %v533, %v535
    %v537 = vrot.slane %v37, 2
    %v538 = vrot.slane %v38, 2
    %v539 = vsel %vm521, %v537, %v538
    %v540 = vrot.slane %v39, 2
    %v541 = vsel %vm521, %v538, %v540
    %v542 = vrot.slane %v40, 2
    %v543 = vrot.slane %v41, 2
    %v544 = vsel %vm521, %v542, %v543
    %v545 = vrot.slane %v42, 2
    %v546 = vsel %vm521, %v543, %v545
    %v547 = vrot.slane %v43, 2
    %v548 = vrot.slane %v44, 2
    %v549 = vsel %vm521, %v547, %v548
    %v550 = vrot.slane %v45, 2
    %v551 = vsel %vm521, %v548, %v550
    %v552 = vrot.slane %v46, 2
    %v553 = vrot.slane %v47, 2
    %v554 = vsel %vm521, %v552, %v553
    %v555 = vrot.slane %v48, 2
    %v556 = vsel %vm521, %v553, %v555
    %v557 = vrot.slane %v49, 2
    %v558 = vrot.slane %v50, 2
    %v559 = vsel %vm521, %v557, %v558
    %v560 = vrot.slane %v51, 2
    %v561 = vsel %vm521, %v558, %v560
    %v562 = vrot.slane %v52, 2
    %v563 = vrot.slane %v53, 2
    %v564 = vsel %vm521, %v562, %v563
    %v565 = vrot.slane %v54, 2
    %v566 = vsel %vm521, %v563, %v565
    %v567 = vrot.slane %v55, 2
    %v568 = vrot.slane %v56, 2
    %v569 = vsel %vm521, %v567, %v568
    %v570 = vrot.slane %v57, 2
    %v571 = vsel %vm521, %v568, %v570
    %v572 = vrot.slane %v58, 2
    %v573 = vrot.slane %v59, 2
    %v574 = vsel %vm521, %v572, %v573
    %v575 = vrot.slane %v60, 2
    %v576 = vsel %vm521, %v573, %v575
    %v577 = vrot.slane %v61, 2
    %v578 = vrot.slane %v62, 2
    %v579 = vsel %vm521, %v577, %v578
    %v580 = vrot.slane %v63, 2
    %v581 = vsel %vm521, %v578, %v580
    %v582 = vrot.slane %v64, 2
    %v583 = vrot.slane %v65, 2
    %v584 = vsel %vm521, %v582, %v583
    %v585 = vrot.slane %v66, 2
    %v586 = vsel %vm521, %v583, %v585
    %v587 = vrot.slane %v67, 2
    %v588 = vrot.slane %v68, 2
    %v589 = vsel %vm521, %v587, %v588
    %v590 = vrot.slane %v69, 2
    %v591 = vsel %vm521, %v588, %v590
    %v592 = vrot.slane %v70, 2
    %v593 = vrot.slane %v71, 2
    %v594 = vsel %vm521, %v592, %v593
    %v595 = vrot.slane %v72, 2
    %v596 = vsel %vm521, %v593, %v595
    %v597 = vrot.slane %v73, 2
    %v598 = vrot.slane %v74, 2
    %v599 = vsel %vm521, %v597, %v598
    %v600 = vrot.slane %v75, 2
    %v601 = vsel %vm521, %v598, %v600
    %v602 = vrot.slane %v82, 2
    %v603 = vrot.slane %v83, 2
    %v604 = vsel %vm521, %v602, %v603
    %v605 = vrot.slane %v84, 2
    %v606 = vsel %vm521, %v603, %v605
    %v607 = vrot.slane %v85, 2
    %v608 = vrot.slane %v86, 2
    %v609 = vsel %vm521, %v607, %v608
    %v610 = vrot.slane %v87, 2
    %v611 = vsel %vm521, %v608, %v610
    %v612 = vrot.slane %v88, 2
    %v613 = vrot.slane %v89, 2
    %v614 = vsel %vm521, %v612, %v613
    %v615 = vrot.slane %v90, 2
    %v616 = vsel %vm521, %v613, %v615
    %v617 = vrot.slane %v91, 2
    %v618 = vrot.slane %v92, 2
    %v619 = vsel %vm521, %v617, %v618
    %v620 = vrot.slane %v93, 2
    %v621 = vsel %vm521, %v618, %v620
    %v622 = vrot.slane %v94, 2
    %v623 = vrot.slane %v95, 2
    %v624 = vsel %vm521, %v622, %v623
    %v625 = vrot.slane %v96, 2
    %v626 = vsel %vm521, %v623, %v625
    %v627 = vrot.slane %v97, 2
    %v628 = vrot.slane %v98, 2
    %v629 = vsel %vm521, %v627, %v628
    %v630 = vrot.slane %v99, 2
    %v631 = vsel %vm521, %v628, %v630
    %v632 = vrot.slane %v100, 2
    %v633 = vrot.slane %v101, 2
    %v634 = vsel %vm521, %v632, %v633
    %v635 = vrot.slane %v102, 2
    %v636 = vsel %vm521, %v633, %v635
    %v637 = vrot.slane %v103, 2
    %v638 = vrot.slane %v104, 2
    %v639 = vsel %vm521, %v637, %v638
    %v640 = vrot.slane %v105, 2
    %v641 = vsel %vm521, %v638, %v640
    %v642 = vrot.slane %v106, 2
    %v643 = vrot.slane %v107, 2
    %v644 = vsel %vm521, %v642, %v643
    %v645 = vrot.slane %v108, 2
    %v646 = vsel %vm521, %v643, %v645
    %v647 = vrot.slane %v109, 2
    %v648 = vrot.slane %v110, 2
    %v649 = vsel %vm521, %v647, %v648
    %v650 = vrot.slane %v111, 2
    %v651 = vsel %vm521, %v648, %v650
    %v652 = vrot.slane %v112, 2
    %v653 = vrot.slane %v113, 2
    %v654 = vsel %vm521, %v652, %v653
    %v655 = vrot.slane %v114, 2
    %v656 = vsel %vm521, %v653, %v655
    %v657 = vrot.slane %v115, 2
    %v658 = vrot.slane %v116, 2
    %v659 = vsel %vm521, %v657, %v658
    %v660 = vrot.slane %v117, 2
    %v661 = vsel %vm521, %v658, %v660
    %v662 = vrot.slane %v118, 2
    %v663 = vrot.slane %v119, 2
    %v664 = vsel %vm521, %v662, %v663
    %v665 = vrot.slane %v120, 2
    %v666 = vsel %vm521, %v663, %v665
    %v667 = vrot.slane %v121, 2
    %v668 = vrot.slane %v122, 2
    %v669 = vsel %vm521, %v667, %v668
    %v670 = vrot.slane %v123, 2
    %v671 = vsel %vm521, %v668, %v670
    %v672 = vrot.slane %v124, 2
    %v673 = vrot.slane %v125, 2
    %v674 = vsel %vm521, %v672, %v673
    %v675 = vrot.slane %v126, 2
    %v676 = vsel %vm521, %v673, %v675
    %v677 = vrot.slane %v127, 2
    %v678 = vrot.slane %v128, 2
    %v679 = vsel %vm521, %v677, %v678
    %v680 = vrot.slane %v129, 2
    %v681 = vsel %vm521, %v678, %v680
    %v746 = vpack.c.bf16 %v526, %v524
    %v747 = vpack.c.bf16 %v531, %v529
    %v748 = vpack.c.bf16 %v536, %v534
    %v749 = vpack.c.bf16 %v541, %v539
    %v750 = vpack.c.bf16 %v546, %v544
    %v751 = vpack.c.bf16 %v551, %v549
    %v752 = vpack.c.bf16 %v556, %v554
    %v753 = vpack.c.bf16 %v561, %v559
    %v754 = vpack.c.bf16 %v566, %v564
    %v755 = vpack.c.bf16 %v571, %v569
    %v756 = vpack.c.bf16 %v576, %v574
    %v757 = vpack.c.bf16 %v581, %v579
    %v758 = vpack.c.bf16 %v586, %v584
    %v759 = vpack.c.bf16 %v591, %v589
    %v760 = vpack.c.bf16 %v596, %v594
    %v761 = vpack.c.bf16 %v601, %v599
    %v762 = vpack.c.bf16 %v606, %v604
    %v763 = vpack.c.bf16 %v611, %v609
    %v764 = vpack.c.bf16 %v616, %v614
    %v765 = vpack.c.bf16 %v621, %v619
    %v766 = vpack.c.bf16 %v626, %v624
    %v767 = vpack.c.bf16 %v631, %v629
    %v768 = vpack.c.bf16 %v636, %v634
    %v769 = vpack.c.bf16 %v641, %v639
    %v770 = vpack.c.bf16 %v646, %v644
    %v771 = vpack.c.bf16 %v651, %v649
    %v772 = vpack.c.bf16 %v656, %v654
    %v773 = vpack.c.bf16 %v661, %v659
    %v774 = vpack.c.bf16 %v666, %v664
    %v775 = vpack.c.bf16 %v671, %v669
    %v776 = vpack.c.bf16 %v676, %v674
    %v777 = vpack.c.bf16 %v681, %v679
    %v778 = vpack.c.bf16 %v77, %v76
    %v779 = vpack.c.bf16 %v131, %v130
    %v786 = vrot.slane %v76, 1
    %v787 = vrot.slane %v77, 1
    %v788 = vsel %vm264, %v786, %v787
    %v789 = vrot.slane %v78, 1
    %v790 = vsel %vm264, %v787, %v789
    %v791 = vrot.slane %v130, 1
    %v792 = vrot.slane %v131, 1
    %v793 = vsel %vm264, %v791, %v792
    %v794 = vrot.slane %v132, 1
    %v795 = vsel %vm264, %v792, %v794
    %v800 = vpack.c.bf16 %v790, %v788
    %v801 = vpack.c.bf16 %v795, %v793
    %v802 = vrot.slane %v76, 2
    %v803 = vrot.slane %v77, 2
    %v804 = vsel %vm521, %v802, %v803
    %v805 = vrot.slane %v78, 2
    %v806 = vsel %vm521, %v803, %v805
    %v807 = vrot.slane %v130, 2
    %v808 = vrot.slane %v131, 2
    %v809 = vsel %vm521, %v807, %v808
    %v810 = vrot.slane %v132, 2
    %v811 = vsel %vm521, %v808, %v810
    %v816 = vpack.c.bf16 %v806, %v804
    %v817 = vpack.c.bf16 %v811, %v809
    %v818 = vpack.c.bf16 %v80, %v79
    %v819 = vpack.c.bf16 %v134, %v133
    %v826 = vrot.slane %v79, 1
    %v827 = vrot.slane %v80, 1
    %v828 = vsel %vm264, %v826, %v827
    %v829 = vrot.slane %v81, 1
    %v830 = vsel %vm264, %v827, %v829
    %v831 = vrot.slane %v133, 1
    %v832 = vrot.slane %v134, 1
    %v833 = vsel %vm264, %v831, %v832
    %v834 = vrot.slane %v135, 1
    %v835 = vsel %vm264, %v832, %v834
    %v840 = vpack.c.bf16 %v830, %v828
    %v841 = vpack.c.bf16 %v835, %v833
    %v842 = vrot.slane %v79, 2
    %v843 = vrot.slane %v80, 2
    %v844 = vsel %vm521, %v842, %v843
    %v845 = vrot.slane %v81, 2
    %v846 = vsel %vm521, %v843, %v845
    %v847 = vrot.slane %v133, 2
    %v848 = vrot.slane %v134, 2
    %v849 = vsel %vm521, %v847, %v848
    %v850 = vrot.slane %v135, 2
    %v851 = vsel %vm521, %v848, %v850
    %v856 = vpack.c.bf16 %v846, %v844
    %v857 = vpack.c.bf16 %v851, %v849
    %v858 = vld [vmem:[%s1] sm:$0xf]
    %v859 = vld [vmem:[%s1 + $0x4] sm:$0xf]
    %v860 = vld [vmem:[%s1 + $0x8] sm:$0xf]
    %v861 = vld [vmem:[%s1 + $0xc] sm:$0xf]
    %v862 = vld [vmem:[%s1 + $0x10] sm:$0xf]
    %v863 = vld [vmem:[%s1 + $0x14] sm:$0xf]
    %v864 = vld [vmem:[%s1 + $0x18] sm:$0xf]
    %v865 = vld [vmem:[%s1 + $0x1c] sm:$0xf]
    %v866 = vld [vmem:[%s1 + $0x20] sm:$0xf]
    %v867 = vld [vmem:[%s1 + $0x24] sm:$0xf]
    %v868 = vld [vmem:[%s1 + $0x28] sm:$0xf]
    %v869 = vld [vmem:[%s1 + $0x2c] sm:$0xf]
    %v870 = vld [vmem:[%s1 + $0x30] sm:$0xf]
    %v871 = vld [vmem:[%s1 + $0x34] sm:$0xf]
    %v872 = vld [vmem:[%s1 + $0x38] sm:$0xf]
    %v873 = vld [vmem:[%s1 + $0x3c] sm:$0xf]
    %v874 = vld [vmem:[%s1 + $0x40] sm:$0xf]
    %v875 = vld [vmem:[%s1 + $0x44] sm:$0xf]
    %v876 = vld [vmem:[%s1 + $0x48] sm:$0xf]
    %v877 = vld [vmem:[%s1 + $0x4c] sm:$0xf]
    %v878 = vld [vmem:[%s1 + $0x50] sm:$0xf]
    %v879 = vld [vmem:[%s1 + $0x54] sm:$0xf]
    %v880 = vld [vmem:[%s1 + $0x58] sm:$0xf]
    %v881 = vld [vmem:[%s1 + $0x5c] sm:$0xf]
    %v882 = vld [vmem:[%s1 + $0x60] sm:$0xf]
    %v883 = vld [vmem:[%s1 + $0x64] sm:$0xf]
    %v884 = vld [vmem:[%s1 + $0x68] sm:$0xf]
    %v885 = vld [vmem:[%s1 + $0x6c] sm:$0xf]
    %v886 = vld [vmem:[%s1 + $0x70] sm:$0xf]
    %v887 = vld [vmem:[%s1 + $0x74] sm:$0xf]
    %v888 = vld [vmem:[%s1 + $0x78] sm:$0xf]
    %v889 = vld [vmem:[%s1 + $0x7c] sm:$0xf]
    %v890 = vld [vmem:[%s1 + $0x80] sm:$0xf]
    %v891 = vld [vmem:[%s1 + $0x84] sm:$0xf]
    %v892 = vld [vmem:[%s1 + $0x88] sm:$0xf]
    %v893 = vld [vmem:[%s1 + $0x8c] sm:$0xf]
    %v894 = vld [vmem:[%s1 + $0x90] sm:$0xf]
    %v895 = vld [vmem:[%s1 + $0x94] sm:$0xf]
    %v896 = vld [vmem:[%s1 + $0x98] sm:$0xf]
    %v897 = vld [vmem:[%s1 + $0x9c] sm:$0xf]
    %v898 = vld [vmem:[%s1 + $0xa0] sm:$0xf]
    %v899 = vld [vmem:[%s1 + $0xa4] sm:$0xf]
    %v900 = vld [vmem:[%s1 + $0xa8] sm:$0xf]
    %v901 = vld [vmem:[%s1 + $0xac] sm:$0xf]
    %v902 = vld [vmem:[%s1 + $0xb0] sm:$0xf]
    %v903 = vld [vmem:[%s1 + $0xb4] sm:$0xf]
    %v904 = vld [vmem:[%s1 + $0xb8] sm:$0xf]
    %v905 = vld [vmem:[%s1 + $0xbc] sm:$0xf]
    %v906 = vld [vmem:[%s1 + $0xc0] sm:$0xf]
    %v907 = vld [vmem:[%s1 + $0xc4] sm:$0xf]
    %v908 = vld [vmem:[%s1 + $0xc8] sm:$0xf]
    %v909 = vld [vmem:[%s1 + $0xcc] sm:$0xf]
    %v910 = vld [vmem:[%s1 + $0xd0] sm:$0xf]
    %v911 = vld [vmem:[%s1 + $0xd4] sm:$0xf]
    %v912 = vld [vmem:[%s1 + $0xd8] sm:$0xf]
    %v913 = vld [vmem:[%s1 + $0xdc] sm:$0xf]
    %v914 = vld [vmem:[%s1 + $0xe0] sm:$0xf]
    %v915 = vld [vmem:[%s1 + $0xe4] sm:$0xf]
    %v916 = vld [vmem:[%s1 + $0xe8] sm:$0xf]
    %v917 = vld [vmem:[%s1 + $0xec] sm:$0xf]
    %v918 = vld [vmem:[%s1 + $0xf0] sm:$0xf]
    %v919 = vld [vmem:[%s1 + $0xf4] sm:$0xf]
    %v920 = vld [vmem:[%s1 + $0xf8] sm:$0xf]
    %v921 = vld [vmem:[%s1 + $0xfc] sm:$0xf]
    %v922 = vld [vmem:[%s1 + $0x100] sm:$0xf]
    %v923 = vld [vmem:[%s1 + $0x104] sm:$0xf]
    %v924 = vld [vmem:[%s1 + $0x108] sm:$0xf]
    %v925 = vld [vmem:[%s1 + $0x10c] sm:$0xf]
    %v926 = vld [vmem:[%s1 + $0x110] sm:$0xf]
    %v927 = vld [vmem:[%s1 + $0x114] sm:$0xf]
    %v928 = vld [vmem:[%s1 + $0x118] sm:$0xf]
    %v929 = vld [vmem:[%s1 + $0x11c] sm:$0xf]
    %v930 = vld [vmem:[%s1 + $0x120] sm:$0xf]
    %v931 = vld [vmem:[%s1 + $0x124] sm:$0xf]
    %v932 = vld [vmem:[%s1 + $0x128] sm:$0xf]
    %v933 = vld [vmem:[%s1 + $0x12c] sm:$0xf]
    %v934 = vld [vmem:[%s1 + $0x130] sm:$0xf]
    %v935 = vld [vmem:[%s1 + $0x134] sm:$0xf]
    %v936 = vld [vmem:[%s1 + $0x138] sm:$0xf]
    %v937 = vld [vmem:[%s1 + $0x13c] sm:$0xf]
    %v938 = vld [vmem:[%s1 + $0x140] sm:$0xf]
    %v939 = vld [vmem:[%s1 + $0x144] sm:$0xf]
    %v940 = vld [vmem:[%s1 + $0x148] sm:$0xf]
    %v941 = vld [vmem:[%s1 + $0x14c] sm:$0xf]
    %v942 = vld [vmem:[%s1 + $0x150] sm:$0xf]
    %v943 = vld [vmem:[%s1 + $0x154] sm:$0xf]
    %v944 = vld [vmem:[%s1 + $0x158] sm:$0xf]
    %v945 = vld [vmem:[%s1 + $0x15c] sm:$0xf]
    %v946 = vld [vmem:[%s1 + $0x160] sm:$0xf]
    %v947 = vld [vmem:[%s1 + $0x164] sm:$0xf]
    %v948 = vld [vmem:[%s1 + $0x168] sm:$0xf]
    %v949 = vld [vmem:[%s1 + $0x16c] sm:$0xf]
    %v950 = vld [vmem:[%s1 + $0x170] sm:$0xf]
    %v951 = vld [vmem:[%s1 + $0x174] sm:$0xf]
    %v952 = vld [vmem:[%s1 + $0x178] sm:$0xf]
    %v953 = vld [vmem:[%s1 + $0x17c] sm:$0xf]
    %v954 = vld [vmem:[%s1 + $0x180] sm:$0xf]
    %v955 = vld [vmem:[%s1 + $0x184] sm:$0xf]
    %v956 = vld [vmem:[%s1 + $0x188] sm:$0xf]
    %v957 = vld [vmem:[%s1 + $0x18c] sm:$0xf]
    %v958 = vld [vmem:[%s1 + $0x190] sm:$0xf]
    %v959 = vld [vmem:[%s1 + $0x194] sm:$0xf]
    %v960 = vld [vmem:[%s1 + $0x198] sm:$0xf]
    %v961 = vld [vmem:[%s1 + $0x19c] sm:$0xf]
    %v962 = vld [vmem:[%s1 + $0x1a0] sm:$0xf]
    %v963 = vld [vmem:[%s1 + $0x1a4] sm:$0xf]
    %v964 = vld [vmem:[%s1 + $0x1a8] sm:$0xf]
    %v965 = vld [vmem:[%s1 + $0x1ac] sm:$0xf]
    %v966 = vld [vmem:[%s1 + $0x1b0] sm:$0xf]
    %v967 = vld [vmem:[%s1 + $0x1b4] sm:$0xf]
    %v968 = vld [vmem:[%s1 + $0x1b8] sm:$0xf]
    %v969 = vld [vmem:[%s1 + $0x1bc] sm:$0xf]
    %v970 = vld [vmem:[%s1 + $0x1c0] sm:$0xf]
    %v971 = vld [vmem:[%s1 + $0x1c4] sm:$0xf]
    %v972 = vld [vmem:[%s1 + $0x1c8] sm:$0xf]
    %v973 = vld [vmem:[%s1 + $0x1cc] sm:$0xf]
    %v974 = vld [vmem:[%s1 + $0x1d0] sm:$0xf]
    %v975 = vld [vmem:[%s1 + $0x1d4] sm:$0xf]
    %v976 = vld [vmem:[%s1 + $0x1d8] sm:$0xf]
    %v977 = vld [vmem:[%s1 + $0x1dc] sm:$0xf]
    %v978 = vld [vmem:[%s1 + $0x1e0] sm:$0xf]
    %v979 = vld [vmem:[%s1 + $0x1e4] sm:$0xf]
    %v980 = vld [vmem:[%s1 + $0x1e8] sm:$0xf]
    %v981 = vld [vmem:[%s1 + $0x1ec] sm:$0xf]
    %v982 = vld [vmem:[%s1 + $0x1f0] sm:$0xf]
    %v983 = vld [vmem:[%s1 + $0x1f4] sm:$0xf]
    %v984 = vld [vmem:[%s1 + $0x1f8] sm:$0xf]
    %v985 = vld [vmem:[%s1 + $0x1fc] sm:$0xf]
    %v986 = vld [vmem:[%s1 + $0x200] sm:$0xf]
    %v987 = vld [vmem:[%s1 + $0x204] sm:$0xf]
    %v988 = vld [vmem:[%s1 + $0x208] sm:$0xf]
    %v989 = vld [vmem:[%s1 + $0x20c] sm:$0xf]
    %v990 = vld [vmem:[%s1 + $0x210] sm:$0xf]
    %v991 = vld [vmem:[%s1 + $0x214] sm:$0xf]
    %v992 = vld [vmem:[%s1 + $0x218] sm:$0xf]
    %v993 = vld [vmem:[%s1 + $0x21c] sm:$0xf]
    %v994 = vld [vmem:[%s1 + $0x220] sm:$0xf]
    %v995 = vld [vmem:[%s1 + $0x224] sm:$0xf]
    %v996 = vld [vmem:[%s1 + $0x228] sm:$0xf]
    %v997 = vld [vmem:[%s1 + $0x22c] sm:$0xf]
    %v998 = vld [vmem:[%s1 + $0x230] sm:$0xf]
    %v999 = vld [vmem:[%s1 + $0x234] sm:$0xf]
    %v1000 = vld [vmem:[%s1 + $0x238] sm:$0xf]
    %v1001 = vld [vmem:[%s1 + $0x23c] sm:$0xf]
    %v1146 = vunpack.c.l.b16 %v858
    %v1147 = vunpack.c.l.b16 %v859
    %v1148 = vunpack.c.l.b16 %v860
    %v1149 = vunpack.c.l.b16 %v861
    %v1150 = vunpack.c.l.b16 %v862
    %v1151 = vunpack.c.l.b16 %v863
    %v1152 = vunpack.c.l.b16 %v864
    %v1153 = vunpack.c.l.b16 %v865
    %v1154 = vunpack.c.l.b16 %v866
    %v1155 = vunpack.c.l.b16 %v867
    %v1156 = vunpack.c.l.b16 %v868
    %v1157 = vunpack.c.l.b16 %v869
    %v1158 = vunpack.c.l.b16 %v870
    %v1159 = vunpack.c.l.b16 %v871
    %v1160 = vunpack.c.l.b16 %v872
    %v1161 = vunpack.c.l.b16 %v873
    %v1162 = vunpack.c.l.b16 %v874
    %v1163 = vunpack.c.l.b16 %v875
    %v1164 = vunpack.c.l.b16 %v876
    %v1165 = vunpack.c.l.b16 %v877
    %v1166 = vunpack.c.l.b16 %v878
    %v1167 = vunpack.c.l.b16 %v879
    %v1168 = vunpack.c.l.b16 %v880
    %v1169 = vunpack.c.l.b16 %v881
    %v1170 = vunpack.c.l.b16 %v882
    %v1171 = vunpack.c.l.b16 %v883
    %v1172 = vunpack.c.l.b16 %v884
    %v1173 = vunpack.c.l.b16 %v885
    %v1174 = vunpack.c.l.b16 %v886
    %v1175 = vunpack.c.l.b16 %v887
    %v1176 = vunpack.c.l.b16 %v888
    %v1177 = vunpack.c.l.b16 %v889
    %v1178 = vunpack.c.l.b16 %v890
    %v1179 = vunpack.c.l.b16 %v891
    %v1180 = vunpack.c.l.b16 %v892
    %v1181 = vunpack.c.l.b16 %v893
    %v1182 = vunpack.c.l.b16 %v894
    %v1183 = vunpack.c.l.b16 %v895
    %v1184 = vunpack.c.l.b16 %v896
    %v1185 = vunpack.c.l.b16 %v897
    %v1186 = vunpack.c.l.b16 %v898
    %v1187 = vunpack.c.l.b16 %v899
    %v1188 = vunpack.c.l.b16 %v900
    %v1189 = vunpack.c.l.b16 %v901
    %v1190 = vunpack.c.l.b16 %v902
    %v1191 = vunpack.c.l.b16 %v903
    %v1192 = vunpack.c.l.b16 %v904
    %v1193 = vunpack.c.l.b16 %v905
    %v1194 = vunpack.c.l.b16 %v906
    %v1195 = vunpack.c.l.b16 %v907
    %v1196 = vunpack.c.l.b16 %v908
    %v1197 = vunpack.c.l.b16 %v909
    %v1198 = vunpack.c.l.b16 %v910
    %v1199 = vunpack.c.l.b16 %v911
    %v1200 = vunpack.c.l.b16 %v912
    %v1201 = vunpack.c.l.b16 %v913
    %v1202 = vunpack.c.l.b16 %v914
    %v1203 = vunpack.c.l.b16 %v915
    %v1204 = vunpack.c.l.b16 %v916
    %v1205 = vunpack.c.l.b16 %v917
    %v1206 = vunpack.c.l.b16 %v918
    %v1207 = vunpack.c.l.b16 %v919
    %v1208 = vunpack.c.l.b16 %v920
    %v1209 = vunpack.c.l.b16 %v921
    %v1210 = vunpack.c.l.b16 %v922
    %v1211 = vunpack.c.l.b16 %v923
    %v1212 = vunpack.c.l.b16 %v924
    %v1213 = vunpack.c.l.b16 %v925
    %v1214 = vunpack.c.l.b16 %v926
    %v1215 = vunpack.c.l.b16 %v927
    %v1216 = vunpack.c.l.b16 %v928
    %v1217 = vunpack.c.l.b16 %v929
    %v1218 = vunpack.c.l.b16 %v930
    %v1219 = vunpack.c.l.b16 %v931
    %v1220 = vunpack.c.l.b16 %v932
    %v1221 = vunpack.c.l.b16 %v933
    %v1222 = vunpack.c.l.b16 %v934
    %v1223 = vunpack.c.l.b16 %v935
    %v1224 = vunpack.c.l.b16 %v936
    %v1225 = vunpack.c.l.b16 %v937
    %v1226 = vunpack.c.l.b16 %v938
    %v1227 = vunpack.c.l.b16 %v939
    %v1228 = vunpack.c.l.b16 %v940
    %v1229 = vunpack.c.l.b16 %v941
    %v1230 = vunpack.c.l.b16 %v942
    %v1231 = vunpack.c.l.b16 %v943
    %v1232 = vunpack.c.l.b16 %v944
    %v1233 = vunpack.c.l.b16 %v945
    %v1234 = vunpack.c.l.b16 %v946
    %v1235 = vunpack.c.l.b16 %v947
    %v1236 = vunpack.c.l.b16 %v948
    %v1237 = vunpack.c.l.b16 %v949
    %v1238 = vunpack.c.l.b16 %v950
    %v1239 = vunpack.c.l.b16 %v951
    %v1240 = vunpack.c.l.b16 %v952
    %v1241 = vunpack.c.l.b16 %v953
    %v1242 = vunpack.c.l.b16 %v954
    %v1243 = vunpack.c.l.b16 %v955
    %v1244 = vunpack.c.l.b16 %v956
    %v1245 = vunpack.c.l.b16 %v957
    %v1246 = vunpack.c.l.b16 %v958
    %v1247 = vunpack.c.l.b16 %v959
    %v1248 = vunpack.c.l.b16 %v960
    %v1249 = vunpack.c.l.b16 %v961
    %v1250 = vunpack.c.l.b16 %v962
    %v1251 = vunpack.c.l.b16 %v963
    %v1252 = vunpack.c.l.b16 %v964
    %v1253 = vunpack.c.l.b16 %v965
    %v1254 = vunpack.c.l.b16 %v966
    %v1255 = vunpack.c.l.b16 %v967
    %v1256 = vunpack.c.l.b16 %v968
    %v1257 = vunpack.c.l.b16 %v969
    %v1258 = vunpack.c.l.b16 %v970
    %v1259 = vunpack.c.l.b16 %v971
    %v1260 = vunpack.c.l.b16 %v972
    %v1261 = vunpack.c.l.b16 %v973
    %v1262 = vunpack.c.l.b16 %v974
    %v1263 = vunpack.c.l.b16 %v975
    %v1264 = vunpack.c.l.b16 %v976
    %v1265 = vunpack.c.l.b16 %v977
    %v1266 = vunpack.c.l.b16 %v978
    %v1267 = vunpack.c.l.b16 %v979
    %v1268 = vunpack.c.l.b16 %v980
    %v1269 = vunpack.c.l.b16 %v981
    %v1270 = vunpack.c.l.b16 %v982
    %v1271 = vunpack.c.l.b16 %v983
    %v1272 = vunpack.c.l.b16 %v984
    %v1273 = vunpack.c.l.b16 %v985
    %v1274 = vunpack.c.l.b16 %v986
    %v1275 = vunpack.c.l.b16 %v987
    %v1276 = vunpack.c.l.b16 %v988
    %v1277 = vunpack.c.l.b16 %v989
    %v1278 = vunpack.c.l.b16 %v990
    %v1279 = vunpack.c.l.b16 %v991
    %v1280 = vunpack.c.l.b16 %v992
    %v1281 = vunpack.c.l.b16 %v993
    %v1282 = vunpack.c.l.b16 %v994
    %v1283 = vunpack.c.l.b16 %v995
    %v1284 = vunpack.c.l.b16 %v996
    %v1285 = vunpack.c.l.b16 %v997
    %v1286 = vunpack.c.l.b16 %v998
    %v1287 = vunpack.c.l.b16 %v999
    %v1288 = vunpack.c.l.b16 %v1000
    %v1289 = vunpack.c.l.b16 %v1001
    %v1290 = vpack.c.b16 %v1147, %v1146
    %v1291 = vpack.c.b16 %v1149, %v1148
    %v1292 = vpack.c.b16 %v1151, %v1150
    %v1293 = vpack.c.b16 %v1153, %v1152
    %v1294 = vpack.c.b16 %v1155, %v1154
    %v1295 = vpack.c.b16 %v1157, %v1156
    %v1296 = vpack.c.b16 %v1159, %v1158
    %v1297 = vpack.c.b16 %v1161, %v1160
    %v1298 = vpack.c.b16 %v1163, %v1162
    %v1299 = vpack.c.b16 %v1165, %v1164
    %v1300 = vpack.c.b16 %v1167, %v1166
    %v1301 = vpack.c.b16 %v1169, %v1168
    %v1302 = vpack.c.b16 %v1171, %v1170
    %v1303 = vpack.c.b16 %v1173, %v1172
    %v1304 = vpack.c.b16 %v1175, %v1174
    %v1305 = vpack.c.b16 %v1177, %v1176
    %v1306 = vpack.c.b16 %v1179, %v1178
    %v1307 = vpack.c.b16 %v1181, %v1180
    %v1308 = vpack.c.b16 %v1183, %v1182
    %v1309 = vpack.c.b16 %v1185, %v1184
    %v1310 = vpack.c.b16 %v1187, %v1186
    %v1311 = vpack.c.b16 %v1189, %v1188
    %v1312 = vpack.c.b16 %v1191, %v1190
    %v1313 = vpack.c.b16 %v1193, %v1192
    %v1314 = vpack.c.b16 %v1195, %v1194
    %v1315 = vpack.c.b16 %v1197, %v1196
    %v1316 = vpack.c.b16 %v1199, %v1198
    %v1317 = vpack.c.b16 %v1201, %v1200
    %v1318 = vpack.c.b16 %v1203, %v1202
    %v1319 = vpack.c.b16 %v1205, %v1204
    %v1320 = vpack.c.b16 %v1207, %v1206
    %v1321 = vpack.c.b16 %v1209, %v1208
    %v1322 = vpack.c.b16 %v1211, %v1210
    %v1323 = vpack.c.b16 %v1213, %v1212
    %v1324 = vpack.c.b16 %v1215, %v1214
    %v1325 = vpack.c.b16 %v1217, %v1216
    %v1326 = vpack.c.b16 %v1219, %v1218
    %v1327 = vpack.c.b16 %v1221, %v1220
    %v1328 = vpack.c.b16 %v1223, %v1222
    %v1329 = vpack.c.b16 %v1225, %v1224
    %v1330 = vpack.c.b16 %v1227, %v1226
    %v1331 = vpack.c.b16 %v1229, %v1228
    %v1332 = vpack.c.b16 %v1231, %v1230
    %v1333 = vpack.c.b16 %v1233, %v1232
    %v1334 = vpack.c.b16 %v1235, %v1234
    %v1335 = vpack.c.b16 %v1237, %v1236
    %v1336 = vpack.c.b16 %v1239, %v1238
    %v1337 = vpack.c.b16 %v1241, %v1240
    %v1338 = vpack.c.b16 %v1243, %v1242
    %v1339 = vpack.c.b16 %v1245, %v1244
    %v1340 = vpack.c.b16 %v1247, %v1246
    %v1341 = vpack.c.b16 %v1249, %v1248
    %v1342 = vpack.c.b16 %v1251, %v1250
    %v1343 = vpack.c.b16 %v1253, %v1252
    %v1344 = vpack.c.b16 %v1255, %v1254
    %v1345 = vpack.c.b16 %v1257, %v1256
    %v1346 = vpack.c.b16 %v1259, %v1258
    %v1347 = vpack.c.b16 %v1261, %v1260
    %v1348 = vpack.c.b16 %v1263, %v1262
    %v1349 = vpack.c.b16 %v1265, %v1264
    %v1350 = vpack.c.b16 %v1267, %v1266
    %v1351 = vpack.c.b16 %v1269, %v1268
    %v1352 = vpack.c.b16 %v1271, %v1270
    %v1353 = vpack.c.b16 %v1273, %v1272
    %v1354 = vpack.c.b16 %v1275, %v1274
    %v1355 = vpack.c.b16 %v1277, %v1276
    %v1356 = vpack.c.b16 %v1279, %v1278
    %v1357 = vpack.c.b16 %v1281, %v1280
    %v1358 = vpack.c.b16 %v1283, %v1282
    %v1359 = vpack.c.b16 %v1285, %v1284
    %v1360 = vpack.c.b16 %v1287, %v1286
    %v1361 = vpack.c.b16 %v1289, %v1288
    %1434 = vmatprep.subr.bf16.mxu0 0
    %1435 = vmatpush1.bf16.msra.mxu0 %v1297
    %1436 = vmatprep.subr.bf16.mxu0 0
    %1437 = vmatpush1.bf16.msra.mxu0 %v1296
    %1438 = vmatprep.subr.bf16.mxu0 0
    %1439 = vmatpush1.bf16.msra.mxu0 %v1295
    %1440 = vmatprep.subr.bf16.mxu0 0
    %1441 = vmatpush1.bf16.msra.mxu0 %v1294
    %1442 = vmatprep.subr.bf16.mxu0 0
    %1443 = vmatpush1.bf16.msra.mxu0 %v1293
    %1444 = vmatprep.subr.bf16.mxu0 0
    %1445 = vmatpush1.bf16.msra.mxu0 %v1292
    %1446 = vmatprep.subr.bf16.mxu0 0
    %1447 = vmatpush1.bf16.msra.mxu0 %v1291
    %1448 = vmatprep.subr.bf16.mxu0 0
    %1449 = vmatpush1.bf16.msra.mxu0 %v1290
    %1450 = vmatprep.subr.bf16.mxu0 0
    %1451 = vmatpush2.bf16.msra.mxu0 %v1305
    %1452 = vmatprep.subr.bf16.mxu0 0
    %1453 = vmatpush2.bf16.msra.mxu0 %v1304
    %1454 = vmatprep.subr.bf16.mxu0 0
    %1455 = vmatpush2.bf16.msra.mxu0 %v1303
    %1456 = vmatprep.subr.bf16.mxu0 0
    %1457 = vmatpush2.bf16.msra.mxu0 %v1302
    %1458 = vmatprep.subr.bf16.mxu0 0
    %1459 = vmatpush2.bf16.msra.mxu0 %v1301
    %1460 = vmatprep.subr.bf16.mxu0 0
    %1461 = vmatpush2.bf16.msra.mxu0 %v1300
    %1462 = vmatprep.subr.bf16.mxu0 0
    %1463 = vmatpush2.bf16.msra.mxu0 %v1299
    %1464 = vmatprep.subr.bf16.mxu0 0
    %1465 = vmatpush2.bf16.msra.mxu0 %v1298
    %1466 = vmatprep.mubr.bf16.mxu0 %v489
    %1467 = vmatmul.mubr.bf16.gmra.mxu0 %v136
    %v1468 = vpop.f32.mrf.mxu0
    %v1469 = vadd.f32 0.0, %v1468
    %v1470 = vpop.f32.mrf.mxu0
    %v1471 = vpop.f32.mrf.mxu0
    %v1472 = vadd.f32 0.0, %v1471
    %v1473 = vpop.f32.mrf.mxu0
    %1474 = vmatprep.mubr.bf16.mxu0 %v490
    %1475 = vmatmul.mubr.bf16.gmra.mxu0 %v137
    %v1476 = vpop.f32.mrf.mxu0
    %v1477 = vadd.f32 0.0, %v1476
    %v1478 = vpop.f32.mrf.mxu0
    %v1479 = vpop.f32.mrf.mxu0
    %v1480 = vadd.f32 0.0, %v1479
    %v1481 = vpop.f32.mrf.mxu0
    %1482 = vmatprep.mubr.bf16.mxu0 %v491
    %1483 = vmatmul.mubr.bf16.gmra.mxu0 %v138
    %v1484 = vpop.f32.mrf.mxu0
    %v1485 = vadd.f32 0.0, %v1484
    %v1486 = vpop.f32.mrf.mxu0
    %v1487 = vpop.f32.mrf.mxu0
    %v1488 = vadd.f32 0.0, %v1487
    %v1489 = vpop.f32.mrf.mxu0
    %1490 = vmatprep.mubr.bf16.mxu0 %v492
    %1491 = vmatmul.mubr.bf16.gmra.mxu0 %v139
    %v1492 = vpop.f32.mrf.mxu0
    %v1493 = vadd.f32 0.0, %v1492
    %v1494 = vpop.f32.mrf.mxu0
    %v1495 = vpop.f32.mrf.mxu0
    %v1496 = vadd.f32 0.0, %v1495
    %v1497 = vpop.f32.mrf.mxu0
    %1498 = vmatprep.mubr.bf16.mxu0 %v493
    %1499 = vmatmul.mubr.bf16.gmra.mxu0 %v140
    %v1500 = vpop.f32.mrf.mxu0
    %v1501 = vadd.f32 0.0, %v1500
    %v1502 = vpop.f32.mrf.mxu0
    %v1503 = vpop.f32.mrf.mxu0
    %v1504 = vadd.f32 0.0, %v1503
    %v1505 = vpop.f32.mrf.mxu0
    %1506 = vmatprep.mubr.bf16.mxu0 %v494
    %1507 = vmatmul.mubr.bf16.gmra.mxu0 %v141
    %v1508 = vpop.f32.mrf.mxu0
    %v1509 = vadd.f32 0.0, %v1508
    %v1510 = vpop.f32.mrf.mxu0
    %v1511 = vpop.f32.mrf.mxu0
    %v1512 = vadd.f32 0.0, %v1511
    %v1513 = vpop.f32.mrf.mxu0
    %1514 = vmatprep.mubr.bf16.mxu0 %v495
    %1515 = vmatmul.mubr.bf16.gmra.mxu0 %v142
    %v1516 = vpop.f32.mrf.mxu0
    %v1517 = vadd.f32 0.0, %v1516
    %v1518 = vpop.f32.mrf.mxu0
    %v1519 = vpop.f32.mrf.mxu0
    %v1520 = vadd.f32 0.0, %v1519
    %v1521 = vpop.f32.mrf.mxu0
    %1522 = vmatprep.mubr.bf16.mxu0 %v496
    %1523 = vmatmul.mubr.bf16.gmra.mxu0 %v143
    %v1524 = vpop.f32.mrf.mxu0
    %v1525 = vadd.f32 0.0, %v1524
    %v1526 = vpop.f32.mrf.mxu0
    %v1527 = vpop.f32.mrf.mxu0
    %v1528 = vadd.f32 0.0, %v1527
    %v1529 = vpop.f32.mrf.mxu0
    %1530 = vmatprep.mubr.bf16.mxu0 %v497
    %1531 = vmatmul.mubr.bf16.gmra.mxu0 %v144
    %v1532 = vpop.f32.mrf.mxu0
    %v1533 = vadd.f32 0.0, %v1532
    %v1534 = vpop.f32.mrf.mxu0
    %v1535 = vpop.f32.mrf.mxu0
    %v1536 = vadd.f32 0.0, %v1535
    %v1537 = vpop.f32.mrf.mxu0
    %1538 = vmatprep.mubr.bf16.mxu0 %v498
    %1539 = vmatmul.mubr.bf16.gmra.mxu0 %v145
    %v1540 = vpop.f32.mrf.mxu0
    %v1541 = vadd.f32 0.0, %v1540
    %v1542 = vpop.f32.mrf.mxu0
    %v1543 = vpop.f32.mrf.mxu0
    %v1544 = vadd.f32 0.0, %v1543
    %v1545 = vpop.f32.mrf.mxu0
    %1546 = vmatprep.mubr.bf16.mxu0 %v499
    %1547 = vmatmul.mubr.bf16.gmra.mxu0 %v146
    %v1548 = vpop.f32.mrf.mxu0
    %v1549 = vadd.f32 0.0, %v1548
    %v1550 = vpop.f32.mrf.mxu0
    %v1551 = vpop.f32.mrf.mxu0
    %v1552 = vadd.f32 0.0, %v1551
    %v1553 = vpop.f32.mrf.mxu0
    %1554 = vmatprep.mubr.bf16.mxu0 %v500
    %1555 = vmatmul.mubr.bf16.gmra.mxu0 %v147
    %v1556 = vpop.f32.mrf.mxu0
    %v1557 = vadd.f32 0.0, %v1556
    %v1558 = vpop.f32.mrf.mxu0
    %v1559 = vpop.f32.mrf.mxu0
    %v1560 = vadd.f32 0.0, %v1559
    %v1561 = vpop.f32.mrf.mxu0
    %1562 = vmatprep.mubr.bf16.mxu0 %v501
    %1563 = vmatmul.mubr.bf16.gmra.mxu0 %v148
    %v1564 = vpop.f32.mrf.mxu0
    %v1565 = vadd.f32 0.0, %v1564
    %v1566 = vpop.f32.mrf.mxu0
    %v1567 = vpop.f32.mrf.mxu0
    %v1568 = vadd.f32 0.0, %v1567
    %v1569 = vpop.f32.mrf.mxu0
    %1570 = vmatprep.mubr.bf16.mxu0 %v502
    %1571 = vmatmul.mubr.bf16.gmra.mxu0 %v149
    %v1572 = vpop.f32.mrf.mxu0
    %v1573 = vadd.f32 0.0, %v1572
    %v1574 = vpop.f32.mrf.mxu0
    %v1575 = vpop.f32.mrf.mxu0
    %v1576 = vadd.f32 0.0, %v1575
    %v1577 = vpop.f32.mrf.mxu0
    %1578 = vmatprep.mubr.bf16.mxu0 %v503
    %1579 = vmatmul.mubr.bf16.gmra.mxu0 %v150
    %v1580 = vpop.f32.mrf.mxu0
    %v1581 = vadd.f32 0.0, %v1580
    %v1582 = vpop.f32.mrf.mxu0
    %v1583 = vpop.f32.mrf.mxu0
    %v1584 = vadd.f32 0.0, %v1583
    %v1585 = vpop.f32.mrf.mxu0
    %1586 = vmatprep.mubr.bf16.mxu0 %v504
    %1587 = vmatmul.mubr.bf16.gmra.mxu0 %v151
    %v1588 = vpop.f32.mrf.mxu0
    %v1589 = vadd.f32 0.0, %v1588
    %v1590 = vpop.f32.mrf.mxu0
    %v1591 = vpop.f32.mrf.mxu0
    %v1592 = vadd.f32 0.0, %v1591
    %v1593 = vpop.f32.mrf.mxu0
    %1594 = vmatprep.mubr.bf16.mxu0 %v505
    %1595 = vmatmul.mubr.bf16.gmra.mxu0 %v152
    %v1596 = vpop.f32.mrf.mxu0
    %v1597 = vadd.f32 0.0, %v1596
    %v1598 = vpop.f32.mrf.mxu0
    %v1599 = vpop.f32.mrf.mxu0
    %v1600 = vadd.f32 0.0, %v1599
    %v1601 = vpop.f32.mrf.mxu0
    %1602 = vmatprep.mubr.bf16.mxu0 %v506
    %1603 = vmatmul.mubr.bf16.gmra.mxu0 %v153
    %v1604 = vpop.f32.mrf.mxu0
    %v1605 = vadd.f32 0.0, %v1604
    %v1606 = vpop.f32.mrf.mxu0
    %v1607 = vpop.f32.mrf.mxu0
    %v1608 = vadd.f32 0.0, %v1607
    %v1609 = vpop.f32.mrf.mxu0
    %1610 = vmatprep.mubr.bf16.mxu0 %v507
    %1611 = vmatmul.mubr.bf16.gmra.mxu0 %v154
    %v1612 = vpop.f32.mrf.mxu0
    %v1613 = vadd.f32 0.0, %v1612
    %v1614 = vpop.f32.mrf.mxu0
    %v1615 = vpop.f32.mrf.mxu0
    %v1616 = vadd.f32 0.0, %v1615
    %v1617 = vpop.f32.mrf.mxu0
    %1618 = vmatprep.mubr.bf16.mxu0 %v508
    %1619 = vmatmul.mubr.bf16.gmra.mxu0 %v155
    %v1620 = vpop.f32.mrf.mxu0
    %v1621 = vadd.f32 0.0, %v1620
    %v1622 = vpop.f32.mrf.mxu0
    %v1623 = vpop.f32.mrf.mxu0
    %v1624 = vadd.f32 0.0, %v1623
    %v1625 = vpop.f32.mrf.mxu0
    %1626 = vmatprep.mubr.bf16.mxu0 %v509
    %1627 = vmatmul.mubr.bf16.gmra.mxu0 %v156
    %v1628 = vpop.f32.mrf.mxu0
    %v1629 = vadd.f32 0.0, %v1628
    %v1630 = vpop.f32.mrf.mxu0
    %v1631 = vpop.f32.mrf.mxu0
    %v1632 = vadd.f32 0.0, %v1631
    %v1633 = vpop.f32.mrf.mxu0
    %1634 = vmatprep.mubr.bf16.mxu0 %v510
    %1635 = vmatmul.mubr.bf16.gmra.mxu0 %v157
    %v1636 = vpop.f32.mrf.mxu0
    %v1637 = vadd.f32 0.0, %v1636
    %v1638 = vpop.f32.mrf.mxu0
    %v1639 = vpop.f32.mrf.mxu0
    %v1640 = vadd.f32 0.0, %v1639
    %v1641 = vpop.f32.mrf.mxu0
    %1642 = vmatprep.mubr.bf16.mxu0 %v511
    %1643 = vmatmul.mubr.bf16.gmra.mxu0 %v158
    %v1644 = vpop.f32.mrf.mxu0
    %v1645 = vadd.f32 0.0, %v1644
    %v1646 = vpop.f32.mrf.mxu0
    %v1647 = vpop.f32.mrf.mxu0
    %v1648 = vadd.f32 0.0, %v1647
    %v1649 = vpop.f32.mrf.mxu0
    %1650 = vmatprep.mubr.bf16.mxu0 %v512
    %1651 = vmatmul.mubr.bf16.gmra.mxu0 %v159
    %v1652 = vpop.f32.mrf.mxu0
    %v1653 = vadd.f32 0.0, %v1652
    %v1654 = vpop.f32.mrf.mxu0
    %v1655 = vpop.f32.mrf.mxu0
    %v1656 = vadd.f32 0.0, %v1655
    %v1657 = vpop.f32.mrf.mxu0
    %1658 = vmatprep.mubr.bf16.mxu0 %v513
    %1659 = vmatmul.mubr.bf16.gmra.mxu0 %v160
    %v1660 = vpop.f32.mrf.mxu0
    %v1661 = vadd.f32 0.0, %v1660
    %v1662 = vpop.f32.mrf.mxu0
    %v1663 = vpop.f32.mrf.mxu0
    %v1664 = vadd.f32 0.0, %v1663
    %v1665 = vpop.f32.mrf.mxu0
    %1666 = vmatprep.mubr.bf16.mxu0 %v514
    %1667 = vmatmul.mubr.bf16.gmra.mxu0 %v161
    %v1668 = vpop.f32.mrf.mxu0
    %v1669 = vadd.f32 0.0, %v1668
    %v1670 = vpop.f32.mrf.mxu0
    %v1671 = vpop.f32.mrf.mxu0
    %v1672 = vadd.f32 0.0, %v1671
    %v1673 = vpop.f32.mrf.mxu0
    %1674 = vmatprep.mubr.bf16.mxu0 %v515
    %1675 = vmatmul.mubr.bf16.gmra.mxu0 %v162
    %v1676 = vpop.f32.mrf.mxu0
    %v1677 = vadd.f32 0.0, %v1676
    %v1678 = vpop.f32.mrf.mxu0
    %v1679 = vpop.f32.mrf.mxu0
    %v1680 = vadd.f32 0.0, %v1679
    %v1681 = vpop.f32.mrf.mxu0
    %1682 = vmatprep.mubr.bf16.mxu0 %v516
    %1683 = vmatmul.mubr.bf16.gmra.mxu0 %v163
    %v1684 = vpop.f32.mrf.mxu0
    %v1685 = vadd.f32 0.0, %v1684
    %v1686 = vpop.f32.mrf.mxu0
    %v1687 = vpop.f32.mrf.mxu0
    %v1688 = vadd.f32 0.0, %v1687
    %v1689 = vpop.f32.mrf.mxu0
    %1690 = vmatprep.mubr.bf16.mxu0 %v517
    %1691 = vmatmul.mubr.bf16.gmra.mxu0 %v164
    %v1692 = vpop.f32.mrf.mxu0
    %v1693 = vadd.f32 0.0, %v1692
    %v1694 = vpop.f32.mrf.mxu0
    %v1695 = vpop.f32.mrf.mxu0
    %v1696 = vadd.f32 0.0, %v1695
    %v1697 = vpop.f32.mrf.mxu0
    %1698 = vmatprep.mubr.bf16.mxu0 %v518
    %1699 = vmatmul.mubr.bf16.gmra.mxu0 %v165
    %v1700 = vpop.f32.mrf.mxu0
    %v1701 = vadd.f32 0.0, %v1700
    %v1702 = vpop.f32.mrf.mxu0
    %v1703 = vpop.f32.mrf.mxu0
    %v1704 = vadd.f32 0.0, %v1703
    %v1705 = vpop.f32.mrf.mxu0
    %1706 = vmatprep.mubr.bf16.mxu0 %v519
    %1707 = vmatmul.mubr.bf16.gmra.mxu0 %v166
    %v1708 = vpop.f32.mrf.mxu0
    %v1709 = vadd.f32 0.0, %v1708
    %v1710 = vpop.f32.mrf.mxu0
    %v1711 = vpop.f32.mrf.mxu0
    %v1712 = vadd.f32 0.0, %v1711
    %v1713 = vpop.f32.mrf.mxu0
    %1714 = vmatprep.mubr.bf16.mxu0 %v520
    %1715 = vmatmul.mubr.bf16.gmra.mxu0 %v167
    %v1716 = vpop.f32.mrf.mxu0
    %v1717 = vadd.f32 0.0, %v1716
    %v1718 = vpop.f32.mrf.mxu0
    %v1719 = vpop.f32.mrf.mxu0
    %v1720 = vadd.f32 0.0, %v1719
    %v1721 = vpop.f32.mrf.mxu0
    %1722 = vdwg.mxu0
    %1723 = vmatprep.subr.bf16.mxu0 0
    %1724 = vmatpush1.bf16.msra.mxu0 %v1313
    %1725 = vmatprep.subr.bf16.mxu0 0
    %1726 = vmatpush1.bf16.msra.mxu0 %v1312
    %1727 = vmatprep.subr.bf16.mxu0 0
    %1728 = vmatpush1.bf16.msra.mxu0 %v1311
    %1729 = vmatprep.subr.bf16.mxu0 0
    %1730 = vmatpush1.bf16.msra.mxu0 %v1310
    %1731 = vmatprep.subr.bf16.mxu0 0
    %1732 = vmatpush1.bf16.msra.mxu0 %v1309
    %1733 = vmatprep.subr.bf16.mxu0 0
    %1734 = vmatpush1.bf16.msra.mxu0 %v1308
    %1735 = vmatprep.subr.bf16.mxu0 0
    %1736 = vmatpush1.bf16.msra.mxu0 %v1307
    %1737 = vmatprep.subr.bf16.mxu0 0
    %1738 = vmatpush1.bf16.msra.mxu0 %v1306
    %1739 = vmatprep.subr.bf16.mxu0 0
    %1740 = vmatpush2.bf16.msra.mxu0 %v1321
    %1741 = vmatprep.subr.bf16.mxu0 0
    %1742 = vmatpush2.bf16.msra.mxu0 %v1320
    %1743 = vmatprep.subr.bf16.mxu0 0
    %1744 = vmatpush2.bf16.msra.mxu0 %v1319
    %1745 = vmatprep.subr.bf16.mxu0 0
    %1746 = vmatpush2.bf16.msra.mxu0 %v1318
    %1747 = vmatprep.subr.bf16.mxu0 0
    %1748 = vmatpush2.bf16.msra.mxu0 %v1317
    %1749 = vmatprep.subr.bf16.mxu0 0
    %1750 = vmatpush2.bf16.msra.mxu0 %v1316
    %1751 = vmatprep.subr.bf16.mxu0 0
    %1752 = vmatpush2.bf16.msra.mxu0 %v1315
    %1753 = vmatprep.subr.bf16.mxu0 0
    %1754 = vmatpush2.bf16.msra.mxu0 %v1314
    %1755 = vmatprep.mubr.bf16.mxu0 %v137
    %1756 = vmatmul.mubr.bf16.gmra.mxu0 %v746
    %v1757 = vpop.f32.mrf.mxu0
    %v1758 = vadd.f32 %v1469, %v1757
    %v1759 = vpop.f32.mrf.mxu0
    %v1760 = vpop.f32.mrf.mxu0
    %v1761 = vadd.f32 %v1472, %v1760
    %v1762 = vpop.f32.mrf.mxu0
    %1763 = vmatprep.mubr.bf16.mxu0 %v138
    %1764 = vmatmul.mubr.bf16.gmra.mxu0 %v747
    %v1765 = vpop.f32.mrf.mxu0
    %v1766 = vadd.f32 %v1477, %v1765
    %v1767 = vpop.f32.mrf.mxu0
    %v1768 = vpop.f32.mrf.mxu0
    %v1769 = vadd.f32 %v1480, %v1768
    %v1770 = vpop.f32.mrf.mxu0
    %1771 = vmatprep.mubr.bf16.mxu0 %v139
    %1772 = vmatmul.mubr.bf16.gmra.mxu0 %v748
    %v1773 = vpop.f32.mrf.mxu0
    %v1774 = vadd.f32 %v1485, %v1773
    %v1775 = vpop.f32.mrf.mxu0
    %v1776 = vpop.f32.mrf.mxu0
    %v1777 = vadd.f32 %v1488, %v1776
    %v1778 = vpop.f32.mrf.mxu0
    %1779 = vmatprep.mubr.bf16.mxu0 %v140
    %1780 = vmatmul.mubr.bf16.gmra.mxu0 %v749
    %v1781 = vpop.f32.mrf.mxu0
    %v1782 = vadd.f32 %v1493, %v1781
    %v1783 = vpop.f32.mrf.mxu0
    %v1784 = vpop.f32.mrf.mxu0
    %v1785 = vadd.f32 %v1496, %v1784
    %v1786 = vpop.f32.mrf.mxu0
    %1787 = vmatprep.mubr.bf16.mxu0 %v141
    %1788 = vmatmul.mubr.bf16.gmra.mxu0 %v750
    %v1789 = vpop.f32.mrf.mxu0
    %v1790 = vadd.f32 %v1501, %v1789
    %v1791 = vpop.f32.mrf.mxu0
    %v1792 = vpop.f32.mrf.mxu0
    %v1793 = vadd.f32 %v1504, %v1792
    %v1794 = vpop.f32.mrf.mxu0
    %1795 = vmatprep.mubr.bf16.mxu0 %v142
    %1796 = vmatmul.mubr.bf16.gmra.mxu0 %v751
    %v1797 = vpop.f32.mrf.mxu0
    %v1798 = vadd.f32 %v1509, %v1797
    %v1799 = vpop.f32.mrf.mxu0
    %v1800 = vpop.f32.mrf.mxu0
    %v1801 = vadd.f32 %v1512, %v1800
    %v1802 = vpop.f32.mrf.mxu0
    %1803 = vmatprep.mubr.bf16.mxu0 %v143
    %1804 = vmatmul.mubr.bf16.gmra.mxu0 %v752
    %v1805 = vpop.f32.mrf.mxu0
    %v1806 = vadd.f32 %v1517, %v1805
    %v1807 = vpop.f32.mrf.mxu0
    %v1808 = vpop.f32.mrf.mxu0
    %v1809 = vadd.f32 %v1520, %v1808
    %v1810 = vpop.f32.mrf.mxu0
    %1811 = vmatprep.mubr.bf16.mxu0 %v144
    %1812 = vmatmul.mubr.bf16.gmra.mxu0 %v753
    %v1813 = vpop.f32.mrf.mxu0
    %v1814 = vadd.f32 %v1525, %v1813
    %v1815 = vpop.f32.mrf.mxu0
    %v1816 = vpop.f32.mrf.mxu0
    %v1817 = vadd.f32 %v1528, %v1816
    %v1818 = vpop.f32.mrf.mxu0
    %1819 = vmatprep.mubr.bf16.mxu0 %v145
    %1820 = vmatmul.mubr.bf16.gmra.mxu0 %v754
    %v1821 = vpop.f32.mrf.mxu0
    %v1822 = vadd.f32 %v1533, %v1821
    %v1823 = vpop.f32.mrf.mxu0
    %v1824 = vpop.f32.mrf.mxu0
    %v1825 = vadd.f32 %v1536, %v1824
    %v1826 = vpop.f32.mrf.mxu0
    %1827 = vmatprep.mubr.bf16.mxu0 %v146
    %1828 = vmatmul.mubr.bf16.gmra.mxu0 %v755
    %v1829 = vpop.f32.mrf.mxu0
    %v1830 = vadd.f32 %v1541, %v1829
    %v1831 = vpop.f32.mrf.mxu0
    %v1832 = vpop.f32.mrf.mxu0
    %v1833 = vadd.f32 %v1544, %v1832
    %v1834 = vpop.f32.mrf.mxu0
    %1835 = vmatprep.mubr.bf16.mxu0 %v147
    %1836 = vmatmul.mubr.bf16.gmra.mxu0 %v756
    %v1837 = vpop.f32.mrf.mxu0
    %v1838 = vadd.f32 %v1549, %v1837
    %v1839 = vpop.f32.mrf.mxu0
    %v1840 = vpop.f32.mrf.mxu0
    %v1841 = vadd.f32 %v1552, %v1840
    %v1842 = vpop.f32.mrf.mxu0
    %1843 = vmatprep.mubr.bf16.mxu0 %v148
    %1844 = vmatmul.mubr.bf16.gmra.mxu0 %v757
    %v1845 = vpop.f32.mrf.mxu0
    %v1846 = vadd.f32 %v1557, %v1845
    %v1847 = vpop.f32.mrf.mxu0
    %v1848 = vpop.f32.mrf.mxu0
    %v1849 = vadd.f32 %v1560, %v1848
    %v1850 = vpop.f32.mrf.mxu0
    %1851 = vmatprep.mubr.bf16.mxu0 %v149
    %1852 = vmatmul.mubr.bf16.gmra.mxu0 %v758
    %v1853 = vpop.f32.mrf.mxu0
    %v1854 = vadd.f32 %v1565, %v1853
    %v1855 = vpop.f32.mrf.mxu0
    %v1856 = vpop.f32.mrf.mxu0
    %v1857 = vadd.f32 %v1568, %v1856
    %v1858 = vpop.f32.mrf.mxu0
    %1859 = vmatprep.mubr.bf16.mxu0 %v150
    %1860 = vmatmul.mubr.bf16.gmra.mxu0 %v759
    %v1861 = vpop.f32.mrf.mxu0
    %v1862 = vadd.f32 %v1573, %v1861
    %v1863 = vpop.f32.mrf.mxu0
    %v1864 = vpop.f32.mrf.mxu0
    %v1865 = vadd.f32 %v1576, %v1864
    %v1866 = vpop.f32.mrf.mxu0
    %1867 = vmatprep.mubr.bf16.mxu0 %v151
    %1868 = vmatmul.mubr.bf16.gmra.mxu0 %v760
    %v1869 = vpop.f32.mrf.mxu0
    %v1870 = vadd.f32 %v1581, %v1869
    %v1871 = vpop.f32.mrf.mxu0
    %v1872 = vpop.f32.mrf.mxu0
    %v1873 = vadd.f32 %v1584, %v1872
    %v1874 = vpop.f32.mrf.mxu0
    %1875 = vmatprep.mubr.bf16.mxu0 %v778
    %1876 = vmatmul.mubr.bf16.gmra.mxu0 %v761
    %v1877 = vpop.f32.mrf.mxu0
    %v1878 = vadd.f32 %v1589, %v1877
    %v1879 = vpop.f32.mrf.mxu0
    %v1880 = vpop.f32.mrf.mxu0
    %v1881 = vadd.f32 %v1592, %v1880
    %v1882 = vpop.f32.mrf.mxu0
    %1883 = vmatprep.mubr.bf16.mxu0 %v153
    %1884 = vmatmul.mubr.bf16.gmra.mxu0 %v762
    %v1885 = vpop.f32.mrf.mxu0
    %v1886 = vadd.f32 %v1597, %v1885
    %v1887 = vpop.f32.mrf.mxu0
    %v1888 = vpop.f32.mrf.mxu0
    %v1889 = vadd.f32 %v1600, %v1888
    %v1890 = vpop.f32.mrf.mxu0
    %1891 = vmatprep.mubr.bf16.mxu0 %v154
    %1892 = vmatmul.mubr.bf16.gmra.mxu0 %v763
    %v1893 = vpop.f32.mrf.mxu0
    %v1894 = vadd.f32 %v1605, %v1893
    %v1895 = vpop.f32.mrf.mxu0
    %v1896 = vpop.f32.mrf.mxu0
    %v1897 = vadd.f32 %v1608, %v1896
    %v1898 = vpop.f32.mrf.mxu0
    %1899 = vmatprep.mubr.bf16.mxu0 %v155
    %1900 = vmatmul.mubr.bf16.gmra.mxu0 %v764
    %v1901 = vpop.f32.mrf.mxu0
    %v1902 = vadd.f32 %v1613, %v1901
    %v1903 = vpop.f32.mrf.mxu0
    %v1904 = vpop.f32.mrf.mxu0
    %v1905 = vadd.f32 %v1616, %v1904
    %v1906 = vpop.f32.mrf.mxu0
    %1907 = vmatprep.mubr.bf16.mxu0 %v156
    %1908 = vmatmul.mubr.bf16.gmra.mxu0 %v765
    %v1909 = vpop.f32.mrf.mxu0
    %v1910 = vadd.f32 %v1621, %v1909
    %v1911 = vpop.f32.mrf.mxu0
    %v1912 = vpop.f32.mrf.mxu0
    %v1913 = vadd.f32 %v1624, %v1912
    %v1914 = vpop.f32.mrf.mxu0
    %1915 = vmatprep.mubr.bf16.mxu0 %v157
    %1916 = vmatmul.mubr.bf16.gmra.mxu0 %v766
    %v1917 = vpop.f32.mrf.mxu0
    %v1918 = vadd.f32 %v1629, %v1917
    %v1919 = vpop.f32.mrf.mxu0
    %v1920 = vpop.f32.mrf.mxu0
    %v1921 = vadd.f32 %v1632, %v1920
    %v1922 = vpop.f32.mrf.mxu0
    %1923 = vmatprep.mubr.bf16.mxu0 %v158
    %1924 = vmatmul.mubr.bf16.gmra.mxu0 %v767
    %v1925 = vpop.f32.mrf.mxu0
    %v1926 = vadd.f32 %v1637, %v1925
    %v1927 = vpop.f32.mrf.mxu0
    %v1928 = vpop.f32.mrf.mxu0
    %v1929 = vadd.f32 %v1640, %v1928
    %v1930 = vpop.f32.mrf.mxu0
    %1931 = vmatprep.mubr.bf16.mxu0 %v159
    %1932 = vmatmul.mubr.bf16.gmra.mxu0 %v768
    %v1933 = vpop.f32.mrf.mxu0
    %v1934 = vadd.f32 %v1645, %v1933
    %v1935 = vpop.f32.mrf.mxu0
    %v1936 = vpop.f32.mrf.mxu0
    %v1937 = vadd.f32 %v1648, %v1936
    %v1938 = vpop.f32.mrf.mxu0
    %1939 = vmatprep.mubr.bf16.mxu0 %v160
    %1940 = vmatmul.mubr.bf16.gmra.mxu0 %v769
    %v1941 = vpop.f32.mrf.mxu0
    %v1942 = vadd.f32 %v1653, %v1941
    %v1943 = vpop.f32.mrf.mxu0
    %v1944 = vpop.f32.mrf.mxu0
    %v1945 = vadd.f32 %v1656, %v1944
    %v1946 = vpop.f32.mrf.mxu0
    %1947 = vmatprep.mubr.bf16.mxu0 %v161
    %1948 = vmatmul.mubr.bf16.gmra.mxu0 %v770
    %v1949 = vpop.f32.mrf.mxu0
    %v1950 = vadd.f32 %v1661, %v1949
    %v1951 = vpop.f32.mrf.mxu0
    %v1952 = vpop.f32.mrf.mxu0
    %v1953 = vadd.f32 %v1664, %v1952
    %v1954 = vpop.f32.mrf.mxu0
    %1955 = vmatprep.mubr.bf16.mxu0 %v162
    %1956 = vmatmul.mubr.bf16.gmra.mxu0 %v771
    %v1957 = vpop.f32.mrf.mxu0
    %v1958 = vadd.f32 %v1669, %v1957
    %v1959 = vpop.f32.mrf.mxu0
    %v1960 = vpop.f32.mrf.mxu0
    %v1961 = vadd.f32 %v1672, %v1960
    %v1962 = vpop.f32.mrf.mxu0
    %1963 = vmatprep.mubr.bf16.mxu0 %v163
    %1964 = vmatmul.mubr.bf16.gmra.mxu0 %v772
    %v1965 = vpop.f32.mrf.mxu0
    %v1966 = vadd.f32 %v1677, %v1965
    %v1967 = vpop.f32.mrf.mxu0
    %v1968 = vpop.f32.mrf.mxu0
    %v1969 = vadd.f32 %v1680, %v1968
    %v1970 = vpop.f32.mrf.mxu0
    %1971 = vmatprep.mubr.bf16.mxu0 %v164
    %1972 = vmatmul.mubr.bf16.gmra.mxu0 %v773
    %v1973 = vpop.f32.mrf.mxu0
    %v1974 = vadd.f32 %v1685, %v1973
    %v1975 = vpop.f32.mrf.mxu0
    %v1976 = vpop.f32.mrf.mxu0
    %v1977 = vadd.f32 %v1688, %v1976
    %v1978 = vpop.f32.mrf.mxu0
    %1979 = vmatprep.mubr.bf16.mxu0 %v165
    %1980 = vmatmul.mubr.bf16.gmra.mxu0 %v774
    %v1981 = vpop.f32.mrf.mxu0
    %v1982 = vadd.f32 %v1693, %v1981
    %v1983 = vpop.f32.mrf.mxu0
    %v1984 = vpop.f32.mrf.mxu0
    %v1985 = vadd.f32 %v1696, %v1984
    %v1986 = vpop.f32.mrf.mxu0
    %1987 = vmatprep.mubr.bf16.mxu0 %v166
    %1988 = vmatmul.mubr.bf16.gmra.mxu0 %v775
    %v1989 = vpop.f32.mrf.mxu0
    %v1990 = vadd.f32 %v1701, %v1989
    %v1991 = vpop.f32.mrf.mxu0
    %v1992 = vpop.f32.mrf.mxu0
    %v1993 = vadd.f32 %v1704, %v1992
    %v1994 = vpop.f32.mrf.mxu0
    %1995 = vmatprep.mubr.bf16.mxu0 %v167
    %1996 = vmatmul.mubr.bf16.gmra.mxu0 %v776
    %v1997 = vpop.f32.mrf.mxu0
    %v1998 = vadd.f32 %v1709, %v1997
    %v1999 = vpop.f32.mrf.mxu0
    %v2000 = vpop.f32.mrf.mxu0
    %v2001 = vadd.f32 %v1712, %v2000
    %v2002 = vpop.f32.mrf.mxu0
    %2003 = vmatprep.mubr.bf16.mxu0 %v779
    %2004 = vmatmul.mubr.bf16.gmra.mxu0 %v777
    %v2005 = vpop.f32.mrf.mxu0
    %v2006 = vadd.f32 %v1717, %v2005
    %v2007 = vpop.f32.mrf.mxu0
    %v2008 = vpop.f32.mrf.mxu0
    %v2009 = vadd.f32 %v1720, %v2008
    %v2010 = vpop.f32.mrf.mxu0
    %2011 = vdwg.mxu0
    %2012 = vmatprep.subr.bf16.mxu0 0
    %2013 = vmatpush1.bf16.msra.mxu0 %v1329
    %2014 = vmatprep.subr.bf16.mxu0 0
    %2015 = vmatpush1.bf16.msra.mxu0 %v1328
    %2016 = vmatprep.subr.bf16.mxu0 0
    %2017 = vmatpush1.bf16.msra.mxu0 %v1327
    %2018 = vmatprep.subr.bf16.mxu0 0
    %2019 = vmatpush1.bf16.msra.mxu0 %v1326
    %2020 = vmatprep.subr.bf16.mxu0 0
    %2021 = vmatpush1.bf16.msra.mxu0 %v1325
    %2022 = vmatprep.subr.bf16.mxu0 0
    %2023 = vmatpush1.bf16.msra.mxu0 %v1324
    %2024 = vmatprep.subr.bf16.mxu0 0
    %2025 = vmatpush1.bf16.msra.mxu0 %v1323
    %2026 = vmatprep.subr.bf16.mxu0 0
    %2027 = vmatpush1.bf16.msra.mxu0 %v1322
    %2028 = vmatprep.subr.bf16.mxu0 0
    %2029 = vmatpush2.bf16.msra.mxu0 %v1337
    %2030 = vmatprep.subr.bf16.mxu0 0
    %2031 = vmatpush2.bf16.msra.mxu0 %v1336
    %2032 = vmatprep.subr.bf16.mxu0 0
    %2033 = vmatpush2.bf16.msra.mxu0 %v1335
    %2034 = vmatprep.subr.bf16.mxu0 0
    %2035 = vmatpush2.bf16.msra.mxu0 %v1334
    %2036 = vmatprep.subr.bf16.mxu0 0
    %2037 = vmatpush2.bf16.msra.mxu0 %v1333
    %2038 = vmatprep.subr.bf16.mxu0 0
    %2039 = vmatpush2.bf16.msra.mxu0 %v1332
    %2040 = vmatprep.subr.bf16.mxu0 0
    %2041 = vmatpush2.bf16.msra.mxu0 %v1331
    %2042 = vmatprep.subr.bf16.mxu0 0
    %2043 = vmatpush2.bf16.msra.mxu0 %v1330
    %2044 = vmatprep.mubr.bf16.mxu0 %v747
    %2045 = vmatmul.mubr.bf16.gmra.mxu0 %v490
    %v2046 = vpop.f32.mrf.mxu0
    %v2047 = vadd.f32 %v1758, %v2046
    %v2048 = vpop.f32.mrf.mxu0
    %v2049 = vpop.f32.mrf.mxu0
    %v2050 = vadd.f32 %v1761, %v2049
    %v2051 = vpop.f32.mrf.mxu0
    %2052 = vmatprep.mubr.bf16.mxu0 %v748
    %2053 = vmatmul.mubr.bf16.gmra.mxu0 %v491
    %v2054 = vpop.f32.mrf.mxu0
    %v2055 = vadd.f32 %v1766, %v2054
    %v2056 = vpop.f32.mrf.mxu0
    %v2057 = vpop.f32.mrf.mxu0
    %v2058 = vadd.f32 %v1769, %v2057
    %v2059 = vpop.f32.mrf.mxu0
    %2060 = vmatprep.mubr.bf16.mxu0 %v749
    %2061 = vmatmul.mubr.bf16.gmra.mxu0 %v492
    %v2062 = vpop.f32.mrf.mxu0
    %v2063 = vadd.f32 %v1774, %v2062
    %v2064 = vpop.f32.mrf.mxu0
    %v2065 = vpop.f32.mrf.mxu0
    %v2066 = vadd.f32 %v1777, %v2065
    %v2067 = vpop.f32.mrf.mxu0
    %2068 = vmatprep.mubr.bf16.mxu0 %v750
    %2069 = vmatmul.mubr.bf16.gmra.mxu0 %v493
    %v2070 = vpop.f32.mrf.mxu0
    %v2071 = vadd.f32 %v1782, %v2070
    %v2072 = vpop.f32.mrf.mxu0
    %v2073 = vpop.f32.mrf.mxu0
    %v2074 = vadd.f32 %v1785, %v2073
    %v2075 = vpop.f32.mrf.mxu0
    %2076 = vmatprep.mubr.bf16.mxu0 %v751
    %2077 = vmatmul.mubr.bf16.gmra.mxu0 %v494
    %v2078 = vpop.f32.mrf.mxu0
    %v2079 = vadd.f32 %v1790, %v2078
    %v2080 = vpop.f32.mrf.mxu0
    %v2081 = vpop.f32.mrf.mxu0
    %v2082 = vadd.f32 %v1793, %v2081
    %v2083 = vpop.f32.mrf.mxu0
    %2084 = vmatprep.mubr.bf16.mxu0 %v752
    %2085 = vmatmul.mubr.bf16.gmra.mxu0 %v495
    %v2086 = vpop.f32.mrf.mxu0
    %v2087 = vadd.f32 %v1798, %v2086
    %v2088 = vpop.f32.mrf.mxu0
    %v2089 = vpop.f32.mrf.mxu0
    %v2090 = vadd.f32 %v1801, %v2089
    %v2091 = vpop.f32.mrf.mxu0
    %2092 = vmatprep.mubr.bf16.mxu0 %v753
    %2093 = vmatmul.mubr.bf16.gmra.mxu0 %v496
    %v2094 = vpop.f32.mrf.mxu0
    %v2095 = vadd.f32 %v1806, %v2094
    %v2096 = vpop.f32.mrf.mxu0
    %v2097 = vpop.f32.mrf.mxu0
    %v2098 = vadd.f32 %v1809, %v2097
    %v2099 = vpop.f32.mrf.mxu0
    %2100 = vmatprep.mubr.bf16.mxu0 %v754
    %2101 = vmatmul.mubr.bf16.gmra.mxu0 %v497
    %v2102 = vpop.f32.mrf.mxu0
    %v2103 = vadd.f32 %v1814, %v2102
    %v2104 = vpop.f32.mrf.mxu0
    %v2105 = vpop.f32.mrf.mxu0
    %v2106 = vadd.f32 %v1817, %v2105
    %v2107 = vpop.f32.mrf.mxu0
    %2108 = vmatprep.mubr.bf16.mxu0 %v755
    %2109 = vmatmul.mubr.bf16.gmra.mxu0 %v498
    %v2110 = vpop.f32.mrf.mxu0
    %v2111 = vadd.f32 %v1822, %v2110
    %v2112 = vpop.f32.mrf.mxu0
    %v2113 = vpop.f32.mrf.mxu0
    %v2114 = vadd.f32 %v1825, %v2113
    %v2115 = vpop.f32.mrf.mxu0
    %2116 = vmatprep.mubr.bf16.mxu0 %v756
    %2117 = vmatmul.mubr.bf16.gmra.mxu0 %v499
    %v2118 = vpop.f32.mrf.mxu0
    %v2119 = vadd.f32 %v1830, %v2118
    %v2120 = vpop.f32.mrf.mxu0
    %v2121 = vpop.f32.mrf.mxu0
    %v2122 = vadd.f32 %v1833, %v2121
    %v2123 = vpop.f32.mrf.mxu0
    %2124 = vmatprep.mubr.bf16.mxu0 %v757
    %2125 = vmatmul.mubr.bf16.gmra.mxu0 %v500
    %v2126 = vpop.f32.mrf.mxu0
    %v2127 = vadd.f32 %v1838, %v2126
    %v2128 = vpop.f32.mrf.mxu0
    %v2129 = vpop.f32.mrf.mxu0
    %v2130 = vadd.f32 %v1841, %v2129
    %v2131 = vpop.f32.mrf.mxu0
    %2132 = vmatprep.mubr.bf16.mxu0 %v758
    %2133 = vmatmul.mubr.bf16.gmra.mxu0 %v501
    %v2134 = vpop.f32.mrf.mxu0
    %v2135 = vadd.f32 %v1846, %v2134
    %v2136 = vpop.f32.mrf.mxu0
    %v2137 = vpop.f32.mrf.mxu0
    %v2138 = vadd.f32 %v1849, %v2137
    %v2139 = vpop.f32.mrf.mxu0
    %2140 = vmatprep.mubr.bf16.mxu0 %v759
    %2141 = vmatmul.mubr.bf16.gmra.mxu0 %v502
    %v2142 = vpop.f32.mrf.mxu0
    %v2143 = vadd.f32 %v1854, %v2142
    %v2144 = vpop.f32.mrf.mxu0
    %v2145 = vpop.f32.mrf.mxu0
    %v2146 = vadd.f32 %v1857, %v2145
    %v2147 = vpop.f32.mrf.mxu0
    %2148 = vmatprep.mubr.bf16.mxu0 %v760
    %2149 = vmatmul.mubr.bf16.gmra.mxu0 %v503
    %v2150 = vpop.f32.mrf.mxu0
    %v2151 = vadd.f32 %v1862, %v2150
    %v2152 = vpop.f32.mrf.mxu0
    %v2153 = vpop.f32.mrf.mxu0
    %v2154 = vadd.f32 %v1865, %v2153
    %v2155 = vpop.f32.mrf.mxu0
    %2156 = vmatprep.mubr.bf16.mxu0 %v761
    %2157 = vmatmul.mubr.bf16.gmra.mxu0 %v504
    %v2158 = vpop.f32.mrf.mxu0
    %v2159 = vadd.f32 %v1870, %v2158
    %v2160 = vpop.f32.mrf.mxu0
    %v2161 = vpop.f32.mrf.mxu0
    %v2162 = vadd.f32 %v1873, %v2161
    %v2163 = vpop.f32.mrf.mxu0
    %2164 = vmatprep.mubr.bf16.mxu0 %v816
    %2165 = vmatmul.mubr.bf16.gmra.mxu0 %v800
    %v2166 = vpop.f32.mrf.mxu0
    %v2167 = vadd.f32 %v1878, %v2166
    %v2168 = vpop.f32.mrf.mxu0
    %v2169 = vpop.f32.mrf.mxu0
    %v2170 = vadd.f32 %v1881, %v2169
    %v2171 = vpop.f32.mrf.mxu0
    %2172 = vmatprep.mubr.bf16.mxu0 %v763
    %2173 = vmatmul.mubr.bf16.gmra.mxu0 %v506
    %v2174 = vpop.f32.mrf.mxu0
    %v2175 = vadd.f32 %v1886, %v2174
    %v2176 = vpop.f32.mrf.mxu0
    %v2177 = vpop.f32.mrf.mxu0
    %v2178 = vadd.f32 %v1889, %v2177
    %v2179 = vpop.f32.mrf.mxu0
    %2180 = vmatprep.mubr.bf16.mxu0 %v764
    %2181 = vmatmul.mubr.bf16.gmra.mxu0 %v507
    %v2182 = vpop.f32.mrf.mxu0
    %v2183 = vadd.f32 %v1894, %v2182
    %v2184 = vpop.f32.mrf.mxu0
    %v2185 = vpop.f32.mrf.mxu0
    %v2186 = vadd.f32 %v1897, %v2185
    %v2187 = vpop.f32.mrf.mxu0
    %2188 = vmatprep.mubr.bf16.mxu0 %v765
    %2189 = vmatmul.mubr.bf16.gmra.mxu0 %v508
    %v2190 = vpop.f32.mrf.mxu0
    %v2191 = vadd.f32 %v1902, %v2190
    %v2192 = vpop.f32.mrf.mxu0
    %v2193 = vpop.f32.mrf.mxu0
    %v2194 = vadd.f32 %v1905, %v2193
    %v2195 = vpop.f32.mrf.mxu0
    %2196 = vmatprep.mubr.bf16.mxu0 %v766
    %2197 = vmatmul.mubr.bf16.gmra.mxu0 %v509
    %v2198 = vpop.f32.mrf.mxu0
    %v2199 = vadd.f32 %v1910, %v2198
    %v2200 = vpop.f32.mrf.mxu0
    %v2201 = vpop.f32.mrf.mxu0
    %v2202 = vadd.f32 %v1913, %v2201
    %v2203 = vpop.f32.mrf.mxu0
    %2204 = vmatprep.mubr.bf16.mxu0 %v767
    %2205 = vmatmul.mubr.bf16.gmra.mxu0 %v510
    %v2206 = vpop.f32.mrf.mxu0
    %v2207 = vadd.f32 %v1918, %v2206
    %v2208 = vpop.f32.mrf.mxu0
    %v2209 = vpop.f32.mrf.mxu0
    %v2210 = vadd.f32 %v1921, %v2209
    %v2211 = vpop.f32.mrf.mxu0
    %2212 = vmatprep.mubr.bf16.mxu0 %v768
    %2213 = vmatmul.mubr.bf16.gmra.mxu0 %v511
    %v2214 = vpop.f32.mrf.mxu0
    %v2215 = vadd.f32 %v1926, %v2214
    %v2216 = vpop.f32.mrf.mxu0
    %v2217 = vpop.f32.mrf.mxu0
    %v2218 = vadd.f32 %v1929, %v2217
    %v2219 = vpop.f32.mrf.mxu0
    %2220 = vmatprep.mubr.bf16.mxu0 %v769
    %2221 = vmatmul.mubr.bf16.gmra.mxu0 %v512
    %v2222 = vpop.f32.mrf.mxu0
    %v2223 = vadd.f32 %v1934, %v2222
    %v2224 = vpop.f32.mrf.mxu0
    %v2225 = vpop.f32.mrf.mxu0
    %v2226 = vadd.f32 %v1937, %v2225
    %v2227 = vpop.f32.mrf.mxu0
    %2228 = vmatprep.mubr.bf16.mxu0 %v770
    %2229 = vmatmul.mubr.bf16.gmra.mxu0 %v513
    %v2230 = vpop.f32.mrf.mxu0
    %v2231 = vadd.f32 %v1942, %v2230
    %v2232 = vpop.f32.mrf.mxu0
    %v2233 = vpop.f32.mrf.mxu0
    %v2234 = vadd.f32 %v1945, %v2233
    %v2235 = vpop.f32.mrf.mxu0
    %2236 = vmatprep.mubr.bf16.mxu0 %v771
    %2237 = vmatmul.mubr.bf16.gmra.mxu0 %v514
    %v2238 = vpop.f32.mrf.mxu0
    %v2239 = vadd.f32 %v1950, %v2238
    %v2240 = vpop.f32.mrf.mxu0
    %v2241 = vpop.f32.mrf.mxu0
    %v2242 = vadd.f32 %v1953, %v2241
    %v2243 = vpop.f32.mrf.mxu0
    %2244 = vmatprep.mubr.bf16.mxu0 %v772
    %2245 = vmatmul.mubr.bf16.gmra.mxu0 %v515
    %v2246 = vpop.f32.mrf.mxu0
    %v2247 = vadd.f32 %v1958, %v2246
    %v2248 = vpop.f32.mrf.mxu0
    %v2249 = vpop.f32.mrf.mxu0
    %v2250 = vadd.f32 %v1961, %v2249
    %v2251 = vpop.f32.mrf.mxu0
    %2252 = vmatprep.mubr.bf16.mxu0 %v773
    %2253 = vmatmul.mubr.bf16.gmra.mxu0 %v516
    %v2254 = vpop.f32.mrf.mxu0
    %v2255 = vadd.f32 %v1966, %v2254
    %v2256 = vpop.f32.mrf.mxu0
    %v2257 = vpop.f32.mrf.mxu0
    %v2258 = vadd.f32 %v1969, %v2257
    %v2259 = vpop.f32.mrf.mxu0
    %2260 = vmatprep.mubr.bf16.mxu0 %v774
    %2261 = vmatmul.mubr.bf16.gmra.mxu0 %v517
    %v2262 = vpop.f32.mrf.mxu0
    %v2263 = vadd.f32 %v1974, %v2262
    %v2264 = vpop.f32.mrf.mxu0
    %v2265 = vpop.f32.mrf.mxu0
    %v2266 = vadd.f32 %v1977, %v2265
    %v2267 = vpop.f32.mrf.mxu0
    %2268 = vmatprep.mubr.bf16.mxu0 %v775
    %2269 = vmatmul.mubr.bf16.gmra.mxu0 %v518
    %v2270 = vpop.f32.mrf.mxu0
    %v2271 = vadd.f32 %v1982, %v2270
    %v2272 = vpop.f32.mrf.mxu0
    %v2273 = vpop.f32.mrf.mxu0
    %v2274 = vadd.f32 %v1985, %v2273
    %v2275 = vpop.f32.mrf.mxu0
    %2276 = vmatprep.mubr.bf16.mxu0 %v776
    %2277 = vmatmul.mubr.bf16.gmra.mxu0 %v519
    %v2278 = vpop.f32.mrf.mxu0
    %v2279 = vadd.f32 %v1990, %v2278
    %v2280 = vpop.f32.mrf.mxu0
    %v2281 = vpop.f32.mrf.mxu0
    %v2282 = vadd.f32 %v1993, %v2281
    %v2283 = vpop.f32.mrf.mxu0
    %2284 = vmatprep.mubr.bf16.mxu0 %v777
    %2285 = vmatmul.mubr.bf16.gmra.mxu0 %v520
    %v2286 = vpop.f32.mrf.mxu0
    %v2287 = vadd.f32 %v1998, %v2286
    %v2288 = vpop.f32.mrf.mxu0
    %v2289 = vpop.f32.mrf.mxu0
    %v2290 = vadd.f32 %v2001, %v2289
    %v2291 = vpop.f32.mrf.mxu0
    %2292 = vmatprep.mubr.bf16.mxu0 %v817
    %2293 = vmatmul.mubr.bf16.gmra.mxu0 %v801
    %v2294 = vpop.f32.mrf.mxu0
    %v2295 = vadd.f32 %v2006, %v2294
    %v2296 = vpop.f32.mrf.mxu0
    %v2297 = vpop.f32.mrf.mxu0
    %v2298 = vadd.f32 %v2009, %v2297
    %v2299 = vpop.f32.mrf.mxu0
    %2300 = vdwg.mxu0
    %2301 = vmatprep.subr.bf16.mxu0 0
    %2302 = vmatpush1.bf16.msra.mxu0 %v1345
    %2303 = vmatprep.subr.bf16.mxu0 0
    %2304 = vmatpush1.bf16.msra.mxu0 %v1344
    %2305 = vmatprep.subr.bf16.mxu0 0
    %2306 = vmatpush1.bf16.msra.mxu0 %v1343
    %2307 = vmatprep.subr.bf16.mxu0 0
    %2308 = vmatpush1.bf16.msra.mxu0 %v1342
    %2309 = vmatprep.subr.bf16.mxu0 0
    %2310 = vmatpush1.bf16.msra.mxu0 %v1341
    %2311 = vmatprep.subr.bf16.mxu0 0
    %2312 = vmatpush1.bf16.msra.mxu0 %v1340
    %2313 = vmatprep.subr.bf16.mxu0 0
    %2314 = vmatpush1.bf16.msra.mxu0 %v1339
    %2315 = vmatprep.subr.bf16.mxu0 0
    %2316 = vmatpush1.bf16.msra.mxu0 %v1338
    %2317 = vmatprep.subr.bf16.mxu0 0
    %2318 = vmatpush2.bf16.msra.mxu0 %v1353
    %2319 = vmatprep.subr.bf16.mxu0 0
    %2320 = vmatpush2.bf16.msra.mxu0 %v1352
    %2321 = vmatprep.subr.bf16.mxu0 0
    %2322 = vmatpush2.bf16.msra.mxu0 %v1351
    %2323 = vmatprep.subr.bf16.mxu0 0
    %2324 = vmatpush2.bf16.msra.mxu0 %v1350
    %2325 = vmatprep.subr.bf16.mxu0 0
    %2326 = vmatpush2.bf16.msra.mxu0 %v1349
    %2327 = vmatprep.subr.bf16.mxu0 0
    %2328 = vmatpush2.bf16.msra.mxu0 %v1348
    %2329 = vmatprep.subr.bf16.mxu0 0
    %2330 = vmatpush2.bf16.msra.mxu0 %v1347
    %2331 = vmatprep.subr.bf16.mxu0 0
    %2332 = vmatpush2.bf16.msra.mxu0 %v1346
    %2333 = vmatprep.mubr.bf16.mxu0 %v491
    %2334 = vmatmul.mubr.bf16.gmra.mxu0 %v138
    %v2335 = vpop.f32.mrf.mxu0
    %v2336 = vadd.f32 %v2047, %v2335
    %v2337 = vpop.f32.mrf.mxu0
    %v2338 = vpop.f32.mrf.mxu0
    %v2339 = vadd.f32 %v2050, %v2338
    %v2340 = vpop.f32.mrf.mxu0
    %2341 = vmatprep.mubr.bf16.mxu0 %v492
    %2342 = vmatmul.mubr.bf16.gmra.mxu0 %v139
    %v2343 = vpop.f32.mrf.mxu0
    %v2344 = vadd.f32 %v2055, %v2343
    %v2345 = vpop.f32.mrf.mxu0
    %v2346 = vpop.f32.mrf.mxu0
    %v2347 = vadd.f32 %v2058, %v2346
    %v2348 = vpop.f32.mrf.mxu0
    %2349 = vmatprep.mubr.bf16.mxu0 %v493
    %2350 = vmatmul.mubr.bf16.gmra.mxu0 %v140
    %v2351 = vpop.f32.mrf.mxu0
    %v2352 = vadd.f32 %v2063, %v2351
    %v2353 = vpop.f32.mrf.mxu0
    %v2354 = vpop.f32.mrf.mxu0
    %v2355 = vadd.f32 %v2066, %v2354
    %v2356 = vpop.f32.mrf.mxu0
    %2357 = vmatprep.mubr.bf16.mxu0 %v494
    %2358 = vmatmul.mubr.bf16.gmra.mxu0 %v141
    %v2359 = vpop.f32.mrf.mxu0
    %v2360 = vadd.f32 %v2071, %v2359
    %v2361 = vpop.f32.mrf.mxu0
    %v2362 = vpop.f32.mrf.mxu0
    %v2363 = vadd.f32 %v2074, %v2362
    %v2364 = vpop.f32.mrf.mxu0
    %2365 = vmatprep.mubr.bf16.mxu0 %v495
    %2366 = vmatmul.mubr.bf16.gmra.mxu0 %v142
    %v2367 = vpop.f32.mrf.mxu0
    %v2368 = vadd.f32 %v2079, %v2367
    %v2369 = vpop.f32.mrf.mxu0
    %v2370 = vpop.f32.mrf.mxu0
    %v2371 = vadd.f32 %v2082, %v2370
    %v2372 = vpop.f32.mrf.mxu0
    %2373 = vmatprep.mubr.bf16.mxu0 %v496
    %2374 = vmatmul.mubr.bf16.gmra.mxu0 %v143
    %v2375 = vpop.f32.mrf.mxu0
    %v2376 = vadd.f32 %v2087, %v2375
    %v2377 = vpop.f32.mrf.mxu0
    %v2378 = vpop.f32.mrf.mxu0
    %v2379 = vadd.f32 %v2090, %v2378
    %v2380 = vpop.f32.mrf.mxu0
    %2381 = vmatprep.mubr.bf16.mxu0 %v497
    %2382 = vmatmul.mubr.bf16.gmra.mxu0 %v144
    %v2383 = vpop.f32.mrf.mxu0
    %v2384 = vadd.f32 %v2095, %v2383
    %v2385 = vpop.f32.mrf.mxu0
    %v2386 = vpop.f32.mrf.mxu0
    %v2387 = vadd.f32 %v2098, %v2386
    %v2388 = vpop.f32.mrf.mxu0
    %2389 = vmatprep.mubr.bf16.mxu0 %v498
    %2390 = vmatmul.mubr.bf16.gmra.mxu0 %v145
    %v2391 = vpop.f32.mrf.mxu0
    %v2392 = vadd.f32 %v2103, %v2391
    %v2393 = vpop.f32.mrf.mxu0
    %v2394 = vpop.f32.mrf.mxu0
    %v2395 = vadd.f32 %v2106, %v2394
    %v2396 = vpop.f32.mrf.mxu0
    %2397 = vmatprep.mubr.bf16.mxu0 %v499
    %2398 = vmatmul.mubr.bf16.gmra.mxu0 %v146
    %v2399 = vpop.f32.mrf.mxu0
    %v2400 = vadd.f32 %v2111, %v2399
    %v2401 = vpop.f32.mrf.mxu0
    %v2402 = vpop.f32.mrf.mxu0
    %v2403 = vadd.f32 %v2114, %v2402
    %v2404 = vpop.f32.mrf.mxu0
    %2405 = vmatprep.mubr.bf16.mxu0 %v500
    %2406 = vmatmul.mubr.bf16.gmra.mxu0 %v147
    %v2407 = vpop.f32.mrf.mxu0
    %v2408 = vadd.f32 %v2119, %v2407
    %v2409 = vpop.f32.mrf.mxu0
    %v2410 = vpop.f32.mrf.mxu0
    %v2411 = vadd.f32 %v2122, %v2410
    %v2412 = vpop.f32.mrf.mxu0
    %2413 = vmatprep.mubr.bf16.mxu0 %v501
    %2414 = vmatmul.mubr.bf16.gmra.mxu0 %v148
    %v2415 = vpop.f32.mrf.mxu0
    %v2416 = vadd.f32 %v2127, %v2415
    %v2417 = vpop.f32.mrf.mxu0
    %v2418 = vpop.f32.mrf.mxu0
    %v2419 = vadd.f32 %v2130, %v2418
    %v2420 = vpop.f32.mrf.mxu0
    %2421 = vmatprep.mubr.bf16.mxu0 %v502
    %2422 = vmatmul.mubr.bf16.gmra.mxu0 %v149
    %v2423 = vpop.f32.mrf.mxu0
    %v2424 = vadd.f32 %v2135, %v2423
    %v2425 = vpop.f32.mrf.mxu0
    %v2426 = vpop.f32.mrf.mxu0
    %v2427 = vadd.f32 %v2138, %v2426
    %v2428 = vpop.f32.mrf.mxu0
    %2429 = vmatprep.mubr.bf16.mxu0 %v503
    %2430 = vmatmul.mubr.bf16.gmra.mxu0 %v150
    %v2431 = vpop.f32.mrf.mxu0
    %v2432 = vadd.f32 %v2143, %v2431
    %v2433 = vpop.f32.mrf.mxu0
    %v2434 = vpop.f32.mrf.mxu0
    %v2435 = vadd.f32 %v2146, %v2434
    %v2436 = vpop.f32.mrf.mxu0
    %2437 = vmatprep.mubr.bf16.mxu0 %v504
    %2438 = vmatmul.mubr.bf16.gmra.mxu0 %v151
    %v2439 = vpop.f32.mrf.mxu0
    %v2440 = vadd.f32 %v2151, %v2439
    %v2441 = vpop.f32.mrf.mxu0
    %v2442 = vpop.f32.mrf.mxu0
    %v2443 = vadd.f32 %v2154, %v2442
    %v2444 = vpop.f32.mrf.mxu0
    %2445 = vmatprep.mubr.bf16.mxu0 %v800
    %2446 = vmatmul.mubr.bf16.gmra.mxu0 %v778
    %v2447 = vpop.f32.mrf.mxu0
    %v2448 = vadd.f32 %v2159, %v2447
    %v2449 = vpop.f32.mrf.mxu0
    %v2450 = vpop.f32.mrf.mxu0
    %v2451 = vadd.f32 %v2162, %v2450
    %v2452 = vpop.f32.mrf.mxu0
    %2453 = vmatprep.mubr.bf16.mxu0 %v840
    %2454 = vmatmul.mubr.bf16.gmra.mxu0 %v818
    %v2455 = vpop.f32.mrf.mxu0
    %v2456 = vadd.f32 %v2167, %v2455
    %v2457 = vpop.f32.mrf.mxu0
    %v2458 = vpop.f32.mrf.mxu0
    %v2459 = vadd.f32 %v2170, %v2458
    %v2460 = vpop.f32.mrf.mxu0
    %2461 = vmatprep.mubr.bf16.mxu0 %v507
    %2462 = vmatmul.mubr.bf16.gmra.mxu0 %v154
    %v2463 = vpop.f32.mrf.mxu0
    %v2464 = vadd.f32 %v2175, %v2463
    %v2465 = vpop.f32.mrf.mxu0
    %v2466 = vpop.f32.mrf.mxu0
    %v2467 = vadd.f32 %v2178, %v2466
    %v2468 = vpop.f32.mrf.mxu0
    %2469 = vmatprep.mubr.bf16.mxu0 %v508
    %2470 = vmatmul.mubr.bf16.gmra.mxu0 %v155
    %v2471 = vpop.f32.mrf.mxu0
    %v2472 = vadd.f32 %v2183, %v2471
    %v2473 = vpop.f32.mrf.mxu0
    %v2474 = vpop.f32.mrf.mxu0
    %v2475 = vadd.f32 %v2186, %v2474
    %v2476 = vpop.f32.mrf.mxu0
    %2477 = vmatprep.mubr.bf16.mxu0 %v509
    %2478 = vmatmul.mubr.bf16.gmra.mxu0 %v156
    %v2479 = vpop.f32.mrf.mxu0
    %v2480 = vadd.f32 %v2191, %v2479
    %v2481 = vpop.f32.mrf.mxu0
    %v2482 = vpop.f32.mrf.mxu0
    %v2483 = vadd.f32 %v2194, %v2482
    %v2484 = vpop.f32.mrf.mxu0
    %2485 = vmatprep.mubr.bf16.mxu0 %v510
    %2486 = vmatmul.mubr.bf16.gmra.mxu0 %v157
    %v2487 = vpop.f32.mrf.mxu0
    %v2488 = vadd.f32 %v2199, %v2487
    %v2489 = vpop.f32.mrf.mxu0
    %v2490 = vpop.f32.mrf.mxu0
    %v2491 = vadd.f32 %v2202, %v2490
    %v2492 = vpop.f32.mrf.mxu0
    %2493 = vmatprep.mubr.bf16.mxu0 %v511
    %2494 = vmatmul.mubr.bf16.gmra.mxu0 %v158
    %v2495 = vpop.f32.mrf.mxu0
    %v2496 = vadd.f32 %v2207, %v2495
    %v2497 = vpop.f32.mrf.mxu0
    %v2498 = vpop.f32.mrf.mxu0
    %v2499 = vadd.f32 %v2210, %v2498
    %v2500 = vpop.f32.mrf.mxu0
    %2501 = vmatprep.mubr.bf16.mxu0 %v512
    %2502 = vmatmul.mubr.bf16.gmra.mxu0 %v159
    %v2503 = vpop.f32.mrf.mxu0
    %v2504 = vadd.f32 %v2215, %v2503
    %v2505 = vpop.f32.mrf.mxu0
    %v2506 = vpop.f32.mrf.mxu0
    %v2507 = vadd.f32 %v2218, %v2506
    %v2508 = vpop.f32.mrf.mxu0
    %2509 = vmatprep.mubr.bf16.mxu0 %v513
    %2510 = vmatmul.mubr.bf16.gmra.mxu0 %v160
    %v2511 = vpop.f32.mrf.mxu0
    %v2512 = vadd.f32 %v2223, %v2511
    %v2513 = vpop.f32.mrf.mxu0
    %v2514 = vpop.f32.mrf.mxu0
    %v2515 = vadd.f32 %v2226, %v2514
    %v2516 = vpop.f32.mrf.mxu0
    %2517 = vmatprep.mubr.bf16.mxu0 %v514
    %2518 = vmatmul.mubr.bf16.gmra.mxu0 %v161
    %v2519 = vpop.f32.mrf.mxu0
    %v2520 = vadd.f32 %v2231, %v2519
    %v2521 = vpop.f32.mrf.mxu0
    %v2522 = vpop.f32.mrf.mxu0
    %v2523 = vadd.f32 %v2234, %v2522
    %v2524 = vpop.f32.mrf.mxu0
    %2525 = vmatprep.mubr.bf16.mxu0 %v515
    %2526 = vmatmul.mubr.bf16.gmra.mxu0 %v162
    %v2527 = vpop.f32.mrf.mxu0
    %v2528 = vadd.f32 %v2239, %v2527
    %v2529 = vpop.f32.mrf.mxu0
    %v2530 = vpop.f32.mrf.mxu0
    %v2531 = vadd.f32 %v2242, %v2530
    %v2532 = vpop.f32.mrf.mxu0
    %2533 = vmatprep.mubr.bf16.mxu0 %v516
    %2534 = vmatmul.mubr.bf16.gmra.mxu0 %v163
    %v2535 = vpop.f32.mrf.mxu0
    %v2536 = vadd.f32 %v2247, %v2535
    %v2537 = vpop.f32.mrf.mxu0
    %v2538 = vpop.f32.mrf.mxu0
    %v2539 = vadd.f32 %v2250, %v2538
    %v2540 = vpop.f32.mrf.mxu0
    %2541 = vmatprep.mubr.bf16.mxu0 %v517
    %2542 = vmatmul.mubr.bf16.gmra.mxu0 %v164
    %v2543 = vpop.f32.mrf.mxu0
    %v2544 = vadd.f32 %v2255, %v2543
    %v2545 = vpop.f32.mrf.mxu0
    %v2546 = vpop.f32.mrf.mxu0
    %v2547 = vadd.f32 %v2258, %v2546
    %v2548 = vpop.f32.mrf.mxu0
    %2549 = vmatprep.mubr.bf16.mxu0 %v518
    %2550 = vmatmul.mubr.bf16.gmra.mxu0 %v165
    %v2551 = vpop.f32.mrf.mxu0
    %v2552 = vadd.f32 %v2263, %v2551
    %v2553 = vpop.f32.mrf.mxu0
    %v2554 = vpop.f32.mrf.mxu0
    %v2555 = vadd.f32 %v2266, %v2554
    %v2556 = vpop.f32.mrf.mxu0
    %2557 = vmatprep.mubr.bf16.mxu0 %v519
    %2558 = vmatmul.mubr.bf16.gmra.mxu0 %v166
    %v2559 = vpop.f32.mrf.mxu0
    %v2560 = vadd.f32 %v2271, %v2559
    %v2561 = vpop.f32.mrf.mxu0
    %v2562 = vpop.f32.mrf.mxu0
    %v2563 = vadd.f32 %v2274, %v2562
    %v2564 = vpop.f32.mrf.mxu0
    %2565 = vmatprep.mubr.bf16.mxu0 %v520
    %2566 = vmatmul.mubr.bf16.gmra.mxu0 %v167
    %v2567 = vpop.f32.mrf.mxu0
    %v2568 = vadd.f32 %v2279, %v2567
    %v2569 = vpop.f32.mrf.mxu0
    %v2570 = vpop.f32.mrf.mxu0
    %v2571 = vadd.f32 %v2282, %v2570
    %v2572 = vpop.f32.mrf.mxu0
    %2573 = vmatprep.mubr.bf16.mxu0 %v801
    %2574 = vmatmul.mubr.bf16.gmra.mxu0 %v779
    %v2575 = vpop.f32.mrf.mxu0
    %v2576 = vadd.f32 %v2287, %v2575
    %v2577 = vpop.f32.mrf.mxu0
    %v2578 = vpop.f32.mrf.mxu0
    %v2579 = vadd.f32 %v2290, %v2578
    %v2580 = vpop.f32.mrf.mxu0
    %2581 = vmatprep.mubr.bf16.mxu0 %v841
    %2582 = vmatmul.mubr.bf16.gmra.mxu0 %v819
    %v2583 = vpop.f32.mrf.mxu0
    %v2584 = vadd.f32 %v2295, %v2583
    %v2585 = vpop.f32.mrf.mxu0
    %v2586 = vpop.f32.mrf.mxu0
    %v2587 = vadd.f32 %v2298, %v2586
    %v2588 = vpop.f32.mrf.mxu0
    %2589 = vdwg.mxu0
    %2590 = vmatprep.subr.bf16.mxu0 0
    %2591 = vmatpush1.bf16.msra.mxu0 %v1361
    %2592 = vmatprep.subr.bf16.mxu0 0
    %2593 = vmatpush1.bf16.msra.mxu0 %v1360
    %2594 = vmatprep.subr.bf16.mxu0 0
    %2595 = vmatpush1.bf16.msra.mxu0 %v1359
    %2596 = vmatprep.subr.bf16.mxu0 0
    %2597 = vmatpush1.bf16.msra.mxu0 %v1358
    %2598 = vmatprep.subr.bf16.mxu0 0
    %2599 = vmatpush1.bf16.msra.mxu0 %v1357
    %2600 = vmatprep.subr.bf16.mxu0 0
    %2601 = vmatpush1.bf16.msra.mxu0 %v1356
    %2602 = vmatprep.subr.bf16.mxu0 0
    %2603 = vmatpush1.bf16.msra.mxu0 %v1355
    %2604 = vmatprep.subr.bf16.mxu0 0
    %2605 = vmatpush1.bf16.msra.mxu0 %v1354
    %2606 = vmatprep.subr.bf16.mxu0 0
    %2607 = vmatpush2.bf16.msra.mxu0 0
    %2608 = vmatprep.subr.bf16.mxu0 0
    %2609 = vmatpush2.bf16.msra.mxu0 0
    %2610 = vmatprep.subr.bf16.mxu0 0
    %2611 = vmatpush2.bf16.msra.mxu0 0
    %2612 = vmatprep.subr.bf16.mxu0 0
    %2613 = vmatpush2.bf16.msra.mxu0 0
    %2614 = vmatprep.subr.bf16.mxu0 0
    %2615 = vmatpush2.bf16.msra.mxu0 0
    %2616 = vmatprep.subr.bf16.mxu0 0
    %2617 = vmatpush2.bf16.msra.mxu0 0
    %2618 = vmatprep.subr.bf16.mxu0 0
    %2619 = vmatpush2.bf16.msra.mxu0 0
    %2620 = vmatprep.subr.bf16.mxu0 0
    %2621 = vmatpush2.bf16.msra.mxu0 0
    %2622 = vmatprep.mubr.bf16.mxu0 0
    %2623 = vmatmul.mubr.bf16.gmra.mxu0 %v748
    %v2624 = vpop.f32.mrf.mxu0
    %v2625 = vadd.f32 %v2336, %v2624
    %v2626 = vpop.f32.mrf.mxu0
    %v2627 = vpop.f32.mrf.mxu0
    %v2628 = vadd.f32 %v2339, %v2627
    %v2629 = vpop.f32.mrf.mxu0
    %2630 = vmatprep.mubr.bf16.mxu0 0
    %2631 = vmatmul.mubr.bf16.gmra.mxu0 %v749
    %v2632 = vpop.f32.mrf.mxu0
    %v2633 = vadd.f32 %v2344, %v2632
    %v2634 = vpop.f32.mrf.mxu0
    %v2635 = vpop.f32.mrf.mxu0
    %v2636 = vadd.f32 %v2347, %v2635
    %v2637 = vpop.f32.mrf.mxu0
    %2638 = vmatprep.mubr.bf16.mxu0 0
    %2639 = vmatmul.mubr.bf16.gmra.mxu0 %v750
    %v2640 = vpop.f32.mrf.mxu0
    %v2641 = vadd.f32 %v2352, %v2640
    %v2642 = vpop.f32.mrf.mxu0
    %v2643 = vpop.f32.mrf.mxu0
    %v2644 = vadd.f32 %v2355, %v2643
    %v2645 = vpop.f32.mrf.mxu0
    %2646 = vmatprep.mubr.bf16.mxu0 0
    %2647 = vmatmul.mubr.bf16.gmra.mxu0 %v751
    %v2648 = vpop.f32.mrf.mxu0
    %v2649 = vadd.f32 %v2360, %v2648
    %v2650 = vpop.f32.mrf.mxu0
    %v2651 = vpop.f32.mrf.mxu0
    %v2652 = vadd.f32 %v2363, %v2651
    %v2653 = vpop.f32.mrf.mxu0
    %2654 = vmatprep.mubr.bf16.mxu0 0
    %2655 = vmatmul.mubr.bf16.gmra.mxu0 %v752
    %v2656 = vpop.f32.mrf.mxu0
    %v2657 = vadd.f32 %v2368, %v2656
    %v2658 = vpop.f32.mrf.mxu0
    %v2659 = vpop.f32.mrf.mxu0
    %v2660 = vadd.f32 %v2371, %v2659
    %v2661 = vpop.f32.mrf.mxu0
    %2662 = vmatprep.mubr.bf16.mxu0 0
    %2663 = vmatmul.mubr.bf16.gmra.mxu0 %v753
    %v2664 = vpop.f32.mrf.mxu0
    %v2665 = vadd.f32 %v2376, %v2664
    %v2666 = vpop.f32.mrf.mxu0
    %v2667 = vpop.f32.mrf.mxu0
    %v2668 = vadd.f32 %v2379, %v2667
    %v2669 = vpop.f32.mrf.mxu0
    %2670 = vmatprep.mubr.bf16.mxu0 0
    %2671 = vmatmul.mubr.bf16.gmra.mxu0 %v754
    %v2672 = vpop.f32.mrf.mxu0
    %v2673 = vadd.f32 %v2384, %v2672
    %v2674 = vpop.f32.mrf.mxu0
    %v2675 = vpop.f32.mrf.mxu0
    %v2676 = vadd.f32 %v2387, %v2675
    %v2677 = vpop.f32.mrf.mxu0
    %2678 = vmatprep.mubr.bf16.mxu0 0
    %2679 = vmatmul.mubr.bf16.gmra.mxu0 %v755
    %v2680 = vpop.f32.mrf.mxu0
    %v2681 = vadd.f32 %v2392, %v2680
    %v2682 = vpop.f32.mrf.mxu0
    %v2683 = vpop.f32.mrf.mxu0
    %v2684 = vadd.f32 %v2395, %v2683
    %v2685 = vpop.f32.mrf.mxu0
    %2686 = vmatprep.mubr.bf16.mxu0 0
    %2687 = vmatmul.mubr.bf16.gmra.mxu0 %v756
    %v2688 = vpop.f32.mrf.mxu0
    %v2689 = vadd.f32 %v2400, %v2688
    %v2690 = vpop.f32.mrf.mxu0
    %v2691 = vpop.f32.mrf.mxu0
    %v2692 = vadd.f32 %v2403, %v2691
    %v2693 = vpop.f32.mrf.mxu0
    %2694 = vmatprep.mubr.bf16.mxu0 0
    %2695 = vmatmul.mubr.bf16.gmra.mxu0 %v757
    %v2696 = vpop.f32.mrf.mxu0
    %v2697 = vadd.f32 %v2408, %v2696
    %v2698 = vpop.f32.mrf.mxu0
    %v2699 = vpop.f32.mrf.mxu0
    %v2700 = vadd.f32 %v2411, %v2699
    %v2701 = vpop.f32.mrf.mxu0
    %2702 = vmatprep.mubr.bf16.mxu0 0
    %2703 = vmatmul.mubr.bf16.gmra.mxu0 %v758
    %v2704 = vpop.f32.mrf.mxu0
    %v2705 = vadd.f32 %v2416, %v2704
    %v2706 = vpop.f32.mrf.mxu0
    %v2707 = vpop.f32.mrf.mxu0
    %v2708 = vadd.f32 %v2419, %v2707
    %v2709 = vpop.f32.mrf.mxu0
    %2710 = vmatprep.mubr.bf16.mxu0 0
    %2711 = vmatmul.mubr.bf16.gmra.mxu0 %v759
    %v2712 = vpop.f32.mrf.mxu0
    %v2713 = vadd.f32 %v2424, %v2712
    %v2714 = vpop.f32.mrf.mxu0
    %v2715 = vpop.f32.mrf.mxu0
    %v2716 = vadd.f32 %v2427, %v2715
    %v2717 = vpop.f32.mrf.mxu0
    %2718 = vmatprep.mubr.bf16.mxu0 0
    %2719 = vmatmul.mubr.bf16.gmra.mxu0 %v760
    %v2720 = vpop.f32.mrf.mxu0
    %v2721 = vadd.f32 %v2432, %v2720
    %v2722 = vpop.f32.mrf.mxu0
    %v2723 = vpop.f32.mrf.mxu0
    %v2724 = vadd.f32 %v2435, %v2723
    %v2725 = vpop.f32.mrf.mxu0
    %2726 = vmatprep.mubr.bf16.mxu0 0
    %2727 = vmatmul.mubr.bf16.gmra.mxu0 %v761
    %v2728 = vpop.f32.mrf.mxu0
    %v2729 = vadd.f32 %v2440, %v2728
    %v2730 = vpop.f32.mrf.mxu0
    %v2731 = vpop.f32.mrf.mxu0
    %v2732 = vadd.f32 %v2443, %v2731
    %v2733 = vpop.f32.mrf.mxu0
    %2734 = vmatprep.mubr.bf16.mxu0 0
    %2735 = vmatmul.mubr.bf16.gmra.mxu0 %v816
    %v2736 = vpop.f32.mrf.mxu0
    %v2737 = vadd.f32 %v2448, %v2736
    %v2738 = vpop.f32.mrf.mxu0
    %v2739 = vpop.f32.mrf.mxu0
    %v2740 = vadd.f32 %v2451, %v2739
    %v2741 = vpop.f32.mrf.mxu0
    %2742 = vmatprep.mubr.bf16.mxu0 0
    %2743 = vmatmul.mubr.bf16.gmra.mxu0 %v856
    %v2744 = vpop.f32.mrf.mxu0
    %v2745 = vadd.f32 %v2456, %v2744
    %v2746 = vpop.f32.mrf.mxu0
    %v2747 = vpop.f32.mrf.mxu0
    %v2748 = vadd.f32 %v2459, %v2747
    %v2749 = vpop.f32.mrf.mxu0
    %2750 = vmatprep.mubr.bf16.mxu0 0
    %2751 = vmatmul.mubr.bf16.gmra.mxu0 %v764
    %v2752 = vpop.f32.mrf.mxu0
    %v2753 = vadd.f32 %v2464, %v2752
    %v2754 = vpop.f32.mrf.mxu0
    %v2755 = vpop.f32.mrf.mxu0
    %v2756 = vadd.f32 %v2467, %v2755
    %v2757 = vpop.f32.mrf.mxu0
    %2758 = vmatprep.mubr.bf16.mxu0 0
    %2759 = vmatmul.mubr.bf16.gmra.mxu0 %v765
    %v2760 = vpop.f32.mrf.mxu0
    %v2761 = vadd.f32 %v2472, %v2760
    %v2762 = vpop.f32.mrf.mxu0
    %v2763 = vpop.f32.mrf.mxu0
    %v2764 = vadd.f32 %v2475, %v2763
    %v2765 = vpop.f32.mrf.mxu0
    %2766 = vmatprep.mubr.bf16.mxu0 0
    %2767 = vmatmul.mubr.bf16.gmra.mxu0 %v766
    %v2768 = vpop.f32.mrf.mxu0
    %v2769 = vadd.f32 %v2480, %v2768
    %v2770 = vpop.f32.mrf.mxu0
    %v2771 = vpop.f32.mrf.mxu0
    %v2772 = vadd.f32 %v2483, %v2771
    %v2773 = vpop.f32.mrf.mxu0
    %2774 = vmatprep.mubr.bf16.mxu0 0
    %2775 = vmatmul.mubr.bf16.gmra.mxu0 %v767
    %v2776 = vpop.f32.mrf.mxu0
    %v2777 = vadd.f32 %v2488, %v2776
    %v2778 = vpop.f32.mrf.mxu0
    %v2779 = vpop.f32.mrf.mxu0
    %v2780 = vadd.f32 %v2491, %v2779
    %v2781 = vpop.f32.mrf.mxu0
    %2782 = vmatprep.mubr.bf16.mxu0 0
    %2783 = vmatmul.mubr.bf16.gmra.mxu0 %v768
    %v2784 = vpop.f32.mrf.mxu0
    %v2785 = vadd.f32 %v2496, %v2784
    %v2786 = vpop.f32.mrf.mxu0
    %v2787 = vpop.f32.mrf.mxu0
    %v2788 = vadd.f32 %v2499, %v2787
    %v2789 = vpop.f32.mrf.mxu0
    %2790 = vmatprep.mubr.bf16.mxu0 0
    %2791 = vmatmul.mubr.bf16.gmra.mxu0 %v769
    %v2792 = vpop.f32.mrf.mxu0
    %v2793 = vadd.f32 %v2504, %v2792
    %v2794 = vpop.f32.mrf.mxu0
    %v2795 = vpop.f32.mrf.mxu0
    %v2796 = vadd.f32 %v2507, %v2795
    %v2797 = vpop.f32.mrf.mxu0
    %2798 = vmatprep.mubr.bf16.mxu0 0
    %2799 = vmatmul.mubr.bf16.gmra.mxu0 %v770
    %v2800 = vpop.f32.mrf.mxu0
    %v2801 = vadd.f32 %v2512, %v2800
    %v2802 = vpop.f32.mrf.mxu0
    %v2803 = vpop.f32.mrf.mxu0
    %v2804 = vadd.f32 %v2515, %v2803
    %v2805 = vpop.f32.mrf.mxu0
    %2806 = vmatprep.mubr.bf16.mxu0 0
    %2807 = vmatmul.mubr.bf16.gmra.mxu0 %v771
    %v2808 = vpop.f32.mrf.mxu0
    %v2809 = vadd.f32 %v2520, %v2808
    %v2810 = vpop.f32.mrf.mxu0
    %v2811 = vpop.f32.mrf.mxu0
    %v2812 = vadd.f32 %v2523, %v2811
    %v2813 = vpop.f32.mrf.mxu0
    %2814 = vmatprep.mubr.bf16.mxu0 0
    %2815 = vmatmul.mubr.bf16.gmra.mxu0 %v772
    %v2816 = vpop.f32.mrf.mxu0
    %v2817 = vadd.f32 %v2528, %v2816
    %v2818 = vpop.f32.mrf.mxu0
    %v2819 = vpop.f32.mrf.mxu0
    %v2820 = vadd.f32 %v2531, %v2819
    %v2821 = vpop.f32.mrf.mxu0
    %2822 = vmatprep.mubr.bf16.mxu0 0
    %2823 = vmatmul.mubr.bf16.gmra.mxu0 %v773
    %v2824 = vpop.f32.mrf.mxu0
    %v2825 = vadd.f32 %v2536, %v2824
    %v2826 = vpop.f32.mrf.mxu0
    %v2827 = vpop.f32.mrf.mxu0
    %v2828 = vadd.f32 %v2539, %v2827
    %v2829 = vpop.f32.mrf.mxu0
    %2830 = vmatprep.mubr.bf16.mxu0 0
    %2831 = vmatmul.mubr.bf16.gmra.mxu0 %v774
    %v2832 = vpop.f32.mrf.mxu0
    %v2833 = vadd.f32 %v2544, %v2832
    %v2834 = vpop.f32.mrf.mxu0
    %v2835 = vpop.f32.mrf.mxu0
    %v2836 = vadd.f32 %v2547, %v2835
    %v2837 = vpop.f32.mrf.mxu0
    %2838 = vmatprep.mubr.bf16.mxu0 0
    %2839 = vmatmul.mubr.bf16.gmra.mxu0 %v775
    %v2840 = vpop.f32.mrf.mxu0
    %v2841 = vadd.f32 %v2552, %v2840
    %v2842 = vpop.f32.mrf.mxu0
    %v2843 = vpop.f32.mrf.mxu0
    %v2844 = vadd.f32 %v2555, %v2843
    %v2845 = vpop.f32.mrf.mxu0
    %2846 = vmatprep.mubr.bf16.mxu0 0
    %2847 = vmatmul.mubr.bf16.gmra.mxu0 %v776
    %v2848 = vpop.f32.mrf.mxu0
    %v2849 = vadd.f32 %v2560, %v2848
    %v2850 = vpop.f32.mrf.mxu0
    %v2851 = vpop.f32.mrf.mxu0
    %v2852 = vadd.f32 %v2563, %v2851
    %v2853 = vpop.f32.mrf.mxu0
    %2854 = vmatprep.mubr.bf16.mxu0 0
    %2855 = vmatmul.mubr.bf16.gmra.mxu0 %v777
    %v2856 = vpop.f32.mrf.mxu0
    %v2857 = vadd.f32 %v2568, %v2856
    %v2858 = vpop.f32.mrf.mxu0
    %v2859 = vpop.f32.mrf.mxu0
    %v2860 = vadd.f32 %v2571, %v2859
    %v2861 = vpop.f32.mrf.mxu0
    %2862 = vmatprep.mubr.bf16.mxu0 0
    %2863 = vmatmul.mubr.bf16.gmra.mxu0 %v817
    %v2864 = vpop.f32.mrf.mxu0
    %v2865 = vadd.f32 %v2576, %v2864
    %v2866 = vpop.f32.mrf.mxu0
    %v2867 = vpop.f32.mrf.mxu0
    %v2868 = vadd.f32 %v2579, %v2867
    %v2869 = vpop.f32.mrf.mxu0
    %2870 = vmatprep.mubr.bf16.mxu0 0
    %2871 = vmatmul.mubr.bf16.gmra.mxu0 %v857
    %v2872 = vpop.f32.mrf.mxu0
    %v2873 = vadd.f32 %v2584, %v2872
    %v2874 = vpop.f32.mrf.mxu0
    %v2875 = vpop.f32.mrf.mxu0
    %v2876 = vadd.f32 %v2587, %v2875
    %v2877 = vpop.f32.mrf.mxu0
    %2878 = vdwg.mxu0
    %v2879 = vadd.f32 %v2625, %v2628
    %v2880 = vadd.f32 %v2879, %v2633
    %v2881 = vadd.f32 %v2880, %v2636
    %v2882 = vadd.f32 %v2881, %v2641
    %v2883 = vadd.f32 %v2882, %v2644
    %v2884 = vadd.f32 %v2883, %v2649
    %v2885 = vadd.f32 %v2884, %v2652
    %v2886 = vadd.f32 %v2885, %v2657
    %v2887 = vadd.f32 %v2886, %v2660
    %v2888 = vadd.f32 %v2887, %v2665
    %v2889 = vadd.f32 %v2888, %v2668
    %v2890 = vadd.f32 %v2889, %v2673
    %v2891 = vadd.f32 %v2890, %v2676
    %v2892 = vadd.f32 %v2891, %v2681
    %v2893 = vadd.f32 %v2892, %v2684
    %v2894 = vadd.f32 %v2893, %v2689
    %v2895 = vadd.f32 %v2894, %v2692
    %v2896 = vadd.f32 %v2895, %v2697
    %v2897 = vadd.f32 %v2896, %v2700
    %v2898 = vadd.f32 %v2897, %v2705
    %v2899 = vadd.f32 %v2898, %v2708
    %v2900 = vadd.f32 %v2899, %v2713
    %v2901 = vadd.f32 %v2900, %v2716
    %v2902 = vadd.f32 %v2901, %v2721
    %v2903 = vadd.f32 %v2902, %v2724
    %v2904 = vadd.f32 %v2903, %v2729
    %v2905 = vadd.f32 %v2904, %v2732
    %v2906 = vadd.f32 %v2905, %v2737
    %v2907 = vadd.f32 %v2906, %v2740
    %v2908 = vadd.f32 %v2907, %v2745
    %v2909 = vadd.f32 %v2908, %v2748
    %v2910 = vadd.f32 %v2909, %v2753
    %v2911 = vadd.f32 %v2910, %v2756
    %v2912 = vadd.f32 %v2911, %v2761
    %v2913 = vadd.f32 %v2912, %v2764
    %v2914 = vadd.f32 %v2913, %v2769
    %v2915 = vadd.f32 %v2914, %v2772
    %v2916 = vadd.f32 %v2915, %v2777
    %v2917 = vadd.f32 %v2916, %v2780
    %v2918 = vadd.f32 %v2917, %v2785
    %v2919 = vadd.f32 %v2918, %v2788
    %v2920 = vadd.f32 %v2919, %v2793
    %v2921 = vadd.f32 %v2920, %v2796
    %v2922 = vadd.f32 %v2921, %v2801
    %v2923 = vadd.f32 %v2922, %v2804
    %v2924 = vadd.f32 %v2923, %v2809
    %v2925 = vadd.f32 %v2924, %v2812
    %v2926 = vadd.f32 %v2925, %v2817
    %v2927 = vadd.f32 %v2926, %v2820
    %v2928 = vadd.f32 %v2927, %v2825
    %v2929 = vadd.f32 %v2928, %v2828
    %v2930 = vadd.f32 %v2929, %v2833
    %v2931 = vadd.f32 %v2930, %v2836
    %v2932 = vadd.f32 %v2931, %v2841
    %v2933 = vadd.f32 %v2932, %v2844
    %v2934 = vadd.f32 %v2933, %v2849
    %v2935 = vadd.f32 %v2934, %v2852
    %v2936 = vadd.f32 %v2935, %v2857
    %v2937 = vadd.f32 %v2936, %v2860
    %v2938 = vadd.f32 %v2937, %v2865
    %v2939 = vadd.f32 %v2938, %v2868
    %v2940 = vadd.f32 %v2939, %v2873
    %v2941 = vadd.f32 %v2940, %v2876
    %v2942 = vrot.slane %v2941, 4
    %v2943 = vadd.f32 %v2941, %v2942
    %v2944 = vrot.slane %v2943, 2
    %v2945 = vadd.f32 %v2943, %v2944
    %v2946 = vrot.slane %v2945, 1
    %v2947 = vadd.f32 %v2945, %v2946
    %v2948 = vmul.f32 %v2947, 0.001953125
    %v2949 = vmul.f32 %v2625, %v2625
    %v2950 = vmul.f32 %v2628, %v2628
    %v2951 = vmul.f32 %v2633, %v2633
    %v2952 = vmul.f32 %v2636, %v2636
    %v2953 = vmul.f32 %v2641, %v2641
    %v2954 = vmul.f32 %v2644, %v2644
    %v2955 = vmul.f32 %v2649, %v2649
    %v2956 = vmul.f32 %v2652, %v2652
    %v2957 = vmul.f32 %v2657, %v2657
    %v2958 = vmul.f32 %v2660, %v2660
    %v2959 = vmul.f32 %v2665, %v2665
    %v2960 = vmul.f32 %v2668, %v2668
    %v2961 = vmul.f32 %v2673, %v2673
    %v2962 = vmul.f32 %v2676, %v2676
    %v2963 = vmul.f32 %v2681, %v2681
    %v2964 = vmul.f32 %v2684, %v2684
    %v2965 = vmul.f32 %v2689, %v2689
    %v2966 = vmul.f32 %v2692, %v2692
    %v2967 = vmul.f32 %v2697, %v2697
    %v2968 = vmul.f32 %v2700, %v2700
    %v2969 = vmul.f32 %v2705, %v2705
    %v2970 = vmul.f32 %v2708, %v2708
    %v2971 = vmul.f32 %v2713, %v2713
    %v2972 = vmul.f32 %v2716, %v2716
    %v2973 = vmul.f32 %v2721, %v2721
    %v2974 = vmul.f32 %v2724, %v2724
    %v2975 = vmul.f32 %v2729, %v2729
    %v2976 = vmul.f32 %v2732, %v2732
    %v2977 = vmul.f32 %v2737, %v2737
    %v2978 = vmul.f32 %v2740, %v2740
    %v2979 = vmul.f32 %v2745, %v2745
    %v2980 = vmul.f32 %v2748, %v2748
    %v2981 = vmul.f32 %v2753, %v2753
    %v2982 = vmul.f32 %v2756, %v2756
    %v2983 = vmul.f32 %v2761, %v2761
    %v2984 = vmul.f32 %v2764, %v2764
    %v2985 = vmul.f32 %v2769, %v2769
    %v2986 = vmul.f32 %v2772, %v2772
    %v2987 = vmul.f32 %v2777, %v2777
    %v2988 = vmul.f32 %v2780, %v2780
    %v2989 = vmul.f32 %v2785, %v2785
    %v2990 = vmul.f32 %v2788, %v2788
    %v2991 = vmul.f32 %v2793, %v2793
    %v2992 = vmul.f32 %v2796, %v2796
    %v2993 = vmul.f32 %v2801, %v2801
    %v2994 = vmul.f32 %v2804, %v2804
    %v2995 = vmul.f32 %v2809, %v2809
    %v2996 = vmul.f32 %v2812, %v2812
    %v2997 = vmul.f32 %v2817, %v2817
    %v2998 = vmul.f32 %v2820, %v2820
    %v2999 = vmul.f32 %v2825, %v2825
    %v3000 = vmul.f32 %v2828, %v2828
    %v3001 = vmul.f32 %v2833, %v2833
    %v3002 = vmul.f32 %v2836, %v2836
    %v3003 = vmul.f32 %v2841, %v2841
    %v3004 = vmul.f32 %v2844, %v2844
    %v3005 = vmul.f32 %v2849, %v2849
    %v3006 = vmul.f32 %v2852, %v2852
    %v3007 = vmul.f32 %v2857, %v2857
    %v3008 = vmul.f32 %v2860, %v2860
    %v3009 = vmul.f32 %v2865, %v2865
    %v3010 = vmul.f32 %v2868, %v2868
    %v3011 = vmul.f32 %v2873, %v2873
    %v3012 = vmul.f32 %v2876, %v2876
    %v3013 = vadd.f32 %v2949, %v2950
    %v3014 = vadd.f32 %v3013, %v2951
    %v3015 = vadd.f32 %v3014, %v2952
    %v3016 = vadd.f32 %v3015, %v2953
    %v3017 = vadd.f32 %v3016, %v2954
    %v3018 = vadd.f32 %v3017, %v2955
    %v3019 = vadd.f32 %v3018, %v2956
    %v3020 = vadd.f32 %v3019, %v2957
    %v3021 = vadd.f32 %v3020, %v2958
    %v3022 = vadd.f32 %v3021, %v2959
    %v3023 = vadd.f32 %v3022, %v2960
    %v3024 = vadd.f32 %v3023, %v2961
    %v3025 = vadd.f32 %v3024, %v2962
    %v3026 = vadd.f32 %v3025, %v2963
    %v3027 = vadd.f32 %v3026, %v2964
    %v3028 = vadd.f32 %v3027, %v2965
    %v3029 = vadd.f32 %v3028, %v2966
    %v3030 = vadd.f32 %v3029, %v2967
    %v3031 = vadd.f32 %v3030, %v2968
    %v3032 = vadd.f32 %v3031, %v2969
    %v3033 = vadd.f32 %v3032, %v2970
    %v3034 = vadd.f32 %v3033, %v2971
    %v3035 = vadd.f32 %v3034, %v2972
    %v3036 = vadd.f32 %v3035, %v2973
    %v3037 = vadd.f32 %v3036, %v2974
    %v3038 = vadd.f32 %v3037, %v2975
    %v3039 = vadd.f32 %v3038, %v2976
    %v3040 = vadd.f32 %v3039, %v2977
    %v3041 = vadd.f32 %v3040, %v2978
    %v3042 = vadd.f32 %v3041, %v2979
    %v3043 = vadd.f32 %v3042, %v2980
    %v3044 = vadd.f32 %v3043, %v2981
    %v3045 = vadd.f32 %v3044, %v2982
    %v3046 = vadd.f32 %v3045, %v2983
    %v3047 = vadd.f32 %v3046, %v2984
    %v3048 = vadd.f32 %v3047, %v2985
    %v3049 = vadd.f32 %v3048, %v2986
    %v3050 = vadd.f32 %v3049, %v2987
    %v3051 = vadd.f32 %v3050, %v2988
    %v3052 = vadd.f32 %v3051, %v2989
    %v3053 = vadd.f32 %v3052, %v2990
    %v3054 = vadd.f32 %v3053, %v2991
    %v3055 = vadd.f32 %v3054, %v2992
    %v3056 = vadd.f32 %v3055, %v2993
    %v3057 = vadd.f32 %v3056, %v2994
    %v3058 = vadd.f32 %v3057, %v2995
    %v3059 = vadd.f32 %v3058, %v2996
    %v3060 = vadd.f32 %v3059, %v2997
    %v3061 = vadd.f32 %v3060, %v2998
    %v3062 = vadd.f32 %v3061, %v2999
    %v3063 = vadd.f32 %v3062, %v3000
    %v3064 = vadd.f32 %v3063, %v3001
    %v3065 = vadd.f32 %v3064, %v3002
    %v3066 = vadd.f32 %v3065, %v3003
    %v3067 = vadd.f32 %v3066, %v3004
    %v3068 = vadd.f32 %v3067, %v3005
    %v3069 = vadd.f32 %v3068, %v3006
    %v3070 = vadd.f32 %v3069, %v3007
    %v3071 = vadd.f32 %v3070, %v3008
    %v3072 = vadd.f32 %v3071, %v3009
    %v3073 = vadd.f32 %v3072, %v3010
    %v3074 = vadd.f32 %v3073, %v3011
    %v3075 = vadd.f32 %v3074, %v3012
    %v3076 = vrot.slane %v3075, 4
    %v3077 = vadd.f32 %v3075, %v3076
    %v3078 = vrot.slane %v3077, 2
    %v3079 = vadd.f32 %v3077, %v3078
    %v3080 = vrot.slane %v3079, 1
    %v3081 = vadd.f32 %v3079, %v3080
    %v3082 = vmul.f32 %v3081, 0.001953125
    %v3083 = vmul.f32 %v2948, %v2948
    %v3084 = vsub.f32 %v3082, %v3083
    %v3085 = vadd.f32 %v3084, 1e-05
    %v3086 = vrsqrt.pop %v3085
    %v3087 = vld [vmem:[%s2] sm:$0x1]
    %v3088 = vmul.f32 %v3086, %v3087
    %v3089 = vsub.f32 %v2625, %v2948
    %v3090 = vsub.f32 %v2628, %v2948
    %v3091 = vsub.f32 %v2633, %v2948
    %v3092 = vsub.f32 %v2636, %v2948
    %v3093 = vsub.f32 %v2641, %v2948
    %v3094 = vsub.f32 %v2644, %v2948
    %v3095 = vsub.f32 %v2649, %v2948
    %v3096 = vsub.f32 %v2652, %v2948
    %v3097 = vsub.f32 %v2657, %v2948
    %v3098 = vsub.f32 %v2660, %v2948
    %v3099 = vsub.f32 %v2665, %v2948
    %v3100 = vsub.f32 %v2668, %v2948
    %v3101 = vsub.f32 %v2673, %v2948
    %v3102 = vsub.f32 %v2676, %v2948
    %v3103 = vsub.f32 %v2681, %v2948
    %v3104 = vsub.f32 %v2684, %v2948
    %v3105 = vsub.f32 %v2689, %v2948
    %v3106 = vsub.f32 %v2692, %v2948
    %v3107 = vsub.f32 %v2697, %v2948
    %v3108 = vsub.f32 %v2700, %v2948
    %v3109 = vsub.f32 %v2705, %v2948
    %v3110 = vsub.f32 %v2708, %v2948
    %v3111 = vsub.f32 %v2713, %v2948
    %v3112 = vsub.f32 %v2716, %v2948
    %v3113 = vsub.f32 %v2721, %v2948
    %v3114 = vsub.f32 %v2724, %v2948
    %v3115 = vsub.f32 %v2729, %v2948
    %v3116 = vsub.f32 %v2732, %v2948
    %v3117 = vsub.f32 %v2737, %v2948
    %v3118 = vsub.f32 %v2740, %v2948
    %v3119 = vsub.f32 %v2745, %v2948
    %v3120 = vsub.f32 %v2748, %v2948
    %v3121 = vsub.f32 %v2753, %v2948
    %v3122 = vsub.f32 %v2756, %v2948
    %v3123 = vsub.f32 %v2761, %v2948
    %v3124 = vsub.f32 %v2764, %v2948
    %v3125 = vsub.f32 %v2769, %v2948
    %v3126 = vsub.f32 %v2772, %v2948
    %v3127 = vsub.f32 %v2777, %v2948
    %v3128 = vsub.f32 %v2780, %v2948
    %v3129 = vsub.f32 %v2785, %v2948
    %v3130 = vsub.f32 %v2788, %v2948
    %v3131 = vsub.f32 %v2793, %v2948
    %v3132 = vsub.f32 %v2796, %v2948
    %v3133 = vsub.f32 %v2801, %v2948
    %v3134 = vsub.f32 %v2804, %v2948
    %v3135 = vsub.f32 %v2809, %v2948
    %v3136 = vsub.f32 %v2812, %v2948
    %v3137 = vsub.f32 %v2817, %v2948
    %v3138 = vsub.f32 %v2820, %v2948
    %v3139 = vsub.f32 %v2825, %v2948
    %v3140 = vsub.f32 %v2828, %v2948
    %v3141 = vsub.f32 %v2833, %v2948
    %v3142 = vsub.f32 %v2836, %v2948
    %v3143 = vsub.f32 %v2841, %v2948
    %v3144 = vsub.f32 %v2844, %v2948
    %v3145 = vsub.f32 %v2849, %v2948
    %v3146 = vsub.f32 %v2852, %v2948
    %v3147 = vsub.f32 %v2857, %v2948
    %v3148 = vsub.f32 %v2860, %v2948
    %v3149 = vsub.f32 %v2865, %v2948
    %v3150 = vsub.f32 %v2868, %v2948
    %v3151 = vsub.f32 %v2873, %v2948
    %v3152 = vsub.f32 %v2876, %v2948
    %v3153 = vlaneseq
    %v3154 = vshrl.u32 %v3153, 7
    %v3155 = vsub.s32 0, %v3154
    %v3156 = vrot.slane %v3088, %v3155
    %v3157 = vmul.f32 %v3089, %v3156
    %v3158 = vmul.f32 %v3090, %v3156
    %v3159 = vmul.f32 %v3091, %v3156
    %v3160 = vmul.f32 %v3092, %v3156
    %v3161 = vmul.f32 %v3093, %v3156
    %v3162 = vmul.f32 %v3094, %v3156
    %v3163 = vmul.f32 %v3095, %v3156
    %v3164 = vmul.f32 %v3096, %v3156
    %v3165 = vmul.f32 %v3097, %v3156
    %v3166 = vmul.f32 %v3098, %v3156
    %v3167 = vmul.f32 %v3099, %v3156
    %v3168 = vmul.f32 %v3100, %v3156
    %v3169 = vmul.f32 %v3101, %v3156
    %v3170 = vmul.f32 %v3102, %v3156
    %v3171 = vmul.f32 %v3103, %v3156
    %v3172 = vmul.f32 %v3104, %v3156
    %v3173 = vmul.f32 %v3105, %v3156
    %v3174 = vmul.f32 %v3106, %v3156
    %v3175 = vmul.f32 %v3107, %v3156
    %v3176 = vmul.f32 %v3108, %v3156
    %v3177 = vmul.f32 %v3109, %v3156
    %v3178 = vmul.f32 %v3110, %v3156
    %v3179 = vmul.f32 %v3111, %v3156
    %v3180 = vmul.f32 %v3112, %v3156
    %v3181 = vmul.f32 %v3113, %v3156
    %v3182 = vmul.f32 %v3114, %v3156
    %v3183 = vmul.f32 %v3115, %v3156
    %v3184 = vmul.f32 %v3116, %v3156
    %v3185 = vmul.f32 %v3117, %v3156
    %v3186 = vmul.f32 %v3118, %v3156
    %v3187 = vmul.f32 %v3119, %v3156
    %v3188 = vmul.f32 %v3120, %v3156
    %v3189 = vmul.f32 %v3121, %v3156
    %v3190 = vmul.f32 %v3122, %v3156
    %v3191 = vmul.f32 %v3123, %v3156
    %v3192 = vmul.f32 %v3124, %v3156
    %v3193 = vmul.f32 %v3125, %v3156
    %v3194 = vmul.f32 %v3126, %v3156
    %v3195 = vmul.f32 %v3127, %v3156
    %v3196 = vmul.f32 %v3128, %v3156
    %v3197 = vmul.f32 %v3129, %v3156
    %v3198 = vmul.f32 %v3130, %v3156
    %v3199 = vmul.f32 %v3131, %v3156
    %v3200 = vmul.f32 %v3132, %v3156
    %v3201 = vmul.f32 %v3133, %v3156
    %v3202 = vmul.f32 %v3134, %v3156
    %v3203 = vmul.f32 %v3135, %v3156
    %v3204 = vmul.f32 %v3136, %v3156
    %v3205 = vmul.f32 %v3137, %v3156
    %v3206 = vmul.f32 %v3138, %v3156
    %v3207 = vmul.f32 %v3139, %v3156
    %v3208 = vmul.f32 %v3140, %v3156
    %v3209 = vmul.f32 %v3141, %v3156
    %v3210 = vmul.f32 %v3142, %v3156
    %v3211 = vmul.f32 %v3143, %v3156
    %v3212 = vmul.f32 %v3144, %v3156
    %v3213 = vmul.f32 %v3145, %v3156
    %v3214 = vmul.f32 %v3146, %v3156
    %v3215 = vmul.f32 %v3147, %v3156
    %v3216 = vmul.f32 %v3148, %v3156
    %v3217 = vmul.f32 %v3149, %v3156
    %v3218 = vmul.f32 %v3150, %v3156
    %v3219 = vmul.f32 %v3151, %v3156
    %v3220 = vmul.f32 %v3152, %v3156
    %v3221 = vld [vmem:[%s3] sm:$0x1]
    %v3223 = vlaneseq
    %v3224 = vshrl.u32 %v3223, 7
    %v3225 = vsub.s32 0, %v3224
    %v3226 = vrot.slane %v3221, %v3225
    %v3228 = vadd.f32 %v3157, %v3226
    %v3229 = vadd.f32 %v3158, %v3226
    %v3230 = vadd.f32 %v3159, %v3226
    %v3231 = vadd.f32 %v3160, %v3226
    %v3232 = vadd.f32 %v3161, %v3226
    %v3233 = vadd.f32 %v3162, %v3226
    %v3234 = vadd.f32 %v3163, %v3226
    %v3235 = vadd.f32 %v3164, %v3226
    %v3236 = vadd.f32 %v3165, %v3226
    %v3237 = vadd.f32 %v3166, %v3226
    %v3238 = vadd.f32 %v3167, %v3226
    %v3239 = vadd.f32 %v3168, %v3226
    %v3240 = vadd.f32 %v3169, %v3226
    %v3241 = vadd.f32 %v3170, %v3226
    %v3242 = vadd.f32 %v3171, %v3226
    %v3243 = vadd.f32 %v3172, %v3226
    %v3244 = vadd.f32 %v3173, %v3226
    %v3245 = vadd.f32 %v3174, %v3226
    %v3246 = vadd.f32 %v3175, %v3226
    %v3247 = vadd.f32 %v3176, %v3226
    %v3248 = vadd.f32 %v3177, %v3226
    %v3249 = vadd.f32 %v3178, %v3226
    %v3250 = vadd.f32 %v3179, %v3226
    %v3251 = vadd.f32 %v3180, %v3226
    %v3252 = vadd.f32 %v3181, %v3226
    %v3253 = vadd.f32 %v3182, %v3226
    %v3254 = vadd.f32 %v3183, %v3226
    %v3255 = vadd.f32 %v3184, %v3226
    %v3256 = vadd.f32 %v3185, %v3226
    %v3257 = vadd.f32 %v3186, %v3226
    %v3258 = vadd.f32 %v3187, %v3226
    %v3259 = vadd.f32 %v3188, %v3226
    %v3260 = vadd.f32 %v3189, %v3226
    %v3261 = vadd.f32 %v3190, %v3226
    %v3262 = vadd.f32 %v3191, %v3226
    %v3263 = vadd.f32 %v3192, %v3226
    %v3264 = vadd.f32 %v3193, %v3226
    %v3265 = vadd.f32 %v3194, %v3226
    %v3266 = vadd.f32 %v3195, %v3226
    %v3267 = vadd.f32 %v3196, %v3226
    %v3268 = vadd.f32 %v3197, %v3226
    %v3269 = vadd.f32 %v3198, %v3226
    %v3270 = vadd.f32 %v3199, %v3226
    %v3271 = vadd.f32 %v3200, %v3226
    %v3272 = vadd.f32 %v3201, %v3226
    %v3273 = vadd.f32 %v3202, %v3226
    %v3274 = vadd.f32 %v3203, %v3226
    %v3275 = vadd.f32 %v3204, %v3226
    %v3276 = vadd.f32 %v3205, %v3226
    %v3277 = vadd.f32 %v3206, %v3226
    %v3278 = vadd.f32 %v3207, %v3226
    %v3279 = vadd.f32 %v3208, %v3226
    %v3280 = vadd.f32 %v3209, %v3226
    %v3281 = vadd.f32 %v3210, %v3226
    %v3282 = vadd.f32 %v3211, %v3226
    %v3283 = vadd.f32 %v3212, %v3226
    %v3284 = vadd.f32 %v3213, %v3226
    %v3285 = vadd.f32 %v3214, %v3226
    %v3286 = vadd.f32 %v3215, %v3226
    %v3287 = vadd.f32 %v3216, %v3226
    %v3288 = vadd.f32 %v3217, %v3226
    %v3289 = vadd.f32 %v3218, %v3226
    %v3290 = vadd.f32 %v3219, %v3226
    %v3291 = vadd.f32 %v3220, %v3226
    %v3292 = vmax.f32 %v3228, 0.0
    %v3293 = vmax.f32 %v3229, 0.0
    %v3294 = vmax.f32 %v3230, 0.0
    %v3295 = vmax.f32 %v3231, 0.0
    %v3296 = vmax.f32 %v3232, 0.0
    %v3297 = vmax.f32 %v3233, 0.0
    %v3298 = vmax.f32 %v3234, 0.0
    %v3299 = vmax.f32 %v3235, 0.0
    %v3300 = vmax.f32 %v3236, 0.0
    %v3301 = vmax.f32 %v3237, 0.0
    %v3302 = vmax.f32 %v3238, 0.0
    %v3303 = vmax.f32 %v3239, 0.0
    %v3304 = vmax.f32 %v3240, 0.0
    %v3305 = vmax.f32 %v3241, 0.0
    %v3306 = vmax.f32 %v3242, 0.0
    %v3307 = vmax.f32 %v3243, 0.0
    %v3308 = vmax.f32 %v3244, 0.0
    %v3309 = vmax.f32 %v3245, 0.0
    %v3310 = vmax.f32 %v3246, 0.0
    %v3311 = vmax.f32 %v3247, 0.0
    %v3312 = vmax.f32 %v3248, 0.0
    %v3313 = vmax.f32 %v3249, 0.0
    %v3314 = vmax.f32 %v3250, 0.0
    %v3315 = vmax.f32 %v3251, 0.0
    %v3316 = vmax.f32 %v3252, 0.0
    %v3317 = vmax.f32 %v3253, 0.0
    %v3318 = vmax.f32 %v3254, 0.0
    %v3319 = vmax.f32 %v3255, 0.0
    %v3320 = vmax.f32 %v3256, 0.0
    %v3321 = vmax.f32 %v3257, 0.0
    %v3322 = vmax.f32 %v3258, 0.0
    %v3323 = vmax.f32 %v3259, 0.0
    %v3324 = vmax.f32 %v3260, 0.0
    %v3325 = vmax.f32 %v3261, 0.0
    %v3326 = vmax.f32 %v3262, 0.0
    %v3327 = vmax.f32 %v3263, 0.0
    %v3328 = vmax.f32 %v3264, 0.0
    %v3329 = vmax.f32 %v3265, 0.0
    %v3330 = vmax.f32 %v3266, 0.0
    %v3331 = vmax.f32 %v3267, 0.0
    %v3332 = vmax.f32 %v3268, 0.0
    %v3333 = vmax.f32 %v3269, 0.0
    %v3334 = vmax.f32 %v3270, 0.0
    %v3335 = vmax.f32 %v3271, 0.0
    %v3336 = vmax.f32 %v3272, 0.0
    %v3337 = vmax.f32 %v3273, 0.0
    %v3338 = vmax.f32 %v3274, 0.0
    %v3339 = vmax.f32 %v3275, 0.0
    %v3340 = vmax.f32 %v3276, 0.0
    %v3341 = vmax.f32 %v3277, 0.0
    %v3342 = vmax.f32 %v3278, 0.0
    %v3343 = vmax.f32 %v3279, 0.0
    %v3344 = vmax.f32 %v3280, 0.0
    %v3345 = vmax.f32 %v3281, 0.0
    %v3346 = vmax.f32 %v3282, 0.0
    %v3347 = vmax.f32 %v3283, 0.0
    %v3348 = vmax.f32 %v3284, 0.0
    %v3349 = vmax.f32 %v3285, 0.0
    %v3350 = vmax.f32 %v3286, 0.0
    %v3351 = vmax.f32 %v3287, 0.0
    %v3352 = vmax.f32 %v3288, 0.0
    %v3353 = vmax.f32 %v3289, 0.0
    %v3354 = vmax.f32 %v3290, 0.0
    %v3355 = vmax.f32 %v3291, 0.0
    %s3356 = scalar_lea.vmem [#allocation2], 24
    %3357 = vst [vmem:[%s3356 + $0x1] sm:$0xff] %v3292
    %3358 = vst [vmem:[%s3356 + $0x9] sm:$0xff] %v3293
    %3359 = vst [vmem:[%s3356 + $0x19] sm:$0xff] %v3294
    %3360 = vst [vmem:[%s3356 + $0x21] sm:$0xff] %v3295
    %3361 = vst [vmem:[%s3356 + $0x31] sm:$0xff] %v3296
    %3362 = vst [vmem:[%s3356 + $0x39] sm:$0xff] %v3297
    %3363 = vst [vmem:[%s3356 + $0x49] sm:$0xff] %v3298
    %3364 = vst [vmem:[%s3356 + $0x51] sm:$0xff] %v3299
    %3365 = vst [vmem:[%s3356 + $0x61] sm:$0xff] %v3300
    %3366 = vst [vmem:[%s3356 + $0x69] sm:$0xff] %v3301
    %3367 = vst [vmem:[%s3356 + $0x79] sm:$0xff] %v3302
    %3368 = vst [vmem:[%s3356 + $0x81] sm:$0xff] %v3303
    %3369 = vst [vmem:[%s3356 + $0x91] sm:$0xff] %v3304
    %3370 = vst [vmem:[%s3356 + $0x99] sm:$0xff] %v3305
    %3371 = vst [vmem:[%s3356 + $0xa9] sm:$0xff] %v3306
    %3372 = vst [vmem:[%s3356 + $0xb1] sm:$0xff] %v3307
    %3373 = vst [vmem:[%s3356 + $0xc1] sm:$0xff] %v3308
    %3374 = vst [vmem:[%s3356 + $0xc9] sm:$0xff] %v3309
    %3375 = vst [vmem:[%s3356 + $0xd9] sm:$0xff] %v3310
    %3376 = vst [vmem:[%s3356 + $0xe1] sm:$0xff] %v3311
    %3377 = vst [vmem:[%s3356 + $0xf1] sm:$0xff] %v3312
    %3378 = vst [vmem:[%s3356 + $0xf9] sm:$0xff] %v3313
    %3379 = vst [vmem:[%s3356 + $0x109] sm:$0xff] %v3314
    %3380 = vst [vmem:[%s3356 + $0x111] sm:$0xff] %v3315
    %3381 = vst [vmem:[%s3356 + $0x121] sm:$0xff] %v3316
    %3382 = vst [vmem:[%s3356 + $0x129] sm:$0xff] %v3317
    %3383 = vst [vmem:[%s3356 + $0x139] sm:$0xff] %v3318
    %3384 = vst [vmem:[%s3356 + $0x141] sm:$0xff] %v3319
    %3385 = vst [vmem:[%s3356 + $0x151] sm:$0xff] %v3320
    %3386 = vst [vmem:[%s3356 + $0x159] sm:$0xff] %v3321
    %3387 = vst [vmem:[%s3356 + $0x169] sm:$0xff] %v3322
    %3388 = vst [vmem:[%s3356 + $0x171] sm:$0xff] %v3323
    %3389 = vst [vmem:[%s3356 + $0x1b1] sm:$0xff] %v3324
    %3390 = vst [vmem:[%s3356 + $0x1b9] sm:$0xff] %v3325
    %3391 = vst [vmem:[%s3356 + $0x1c9] sm:$0xff] %v3326
    %3392 = vst [vmem:[%s3356 + $0x1d1] sm:$0xff] %v3327
    %3393 = vst [vmem:[%s3356 + $0x1e1] sm:$0xff] %v3328
    %3394 = vst [vmem:[%s3356 + $0x1e9] sm:$0xff] %v3329
    %3395 = vst [vmem:[%s3356 + $0x1f9] sm:$0xff] %v3330
    %3396 = vst [vmem:[%s3356 + $0x201] sm:$0xff] %v3331
    %3397 = vst [vmem:[%s3356 + $0x211] sm:$0xff] %v3332
    %3398 = vst [vmem:[%s3356 + $0x219] sm:$0xff] %v3333
    %3399 = vst [vmem:[%s3356 + $0x229] sm:$0xff] %v3334
    %3400 = vst [vmem:[%s3356 + $0x231] sm:$0xff] %v3335
    %3401 = vst [vmem:[%s3356 + $0x241] sm:$0xff] %v3336
    %3402 = vst [vmem:[%s3356 + $0x249] sm:$0xff] %v3337
    %3403 = vst [vmem:[%s3356 + $0x259] sm:$0xff] %v3338
    %3404 = vst [vmem:[%s3356 + $0x261] sm:$0xff] %v3339
    %3405 = vst [vmem:[%s3356 + $0x271] sm:$0xff] %v3340
    %3406 = vst [vmem:[%s3356 + $0x279] sm:$0xff] %v3341
    %3407 = vst [vmem:[%s3356 + $0x289] sm:$0xff] %v3342
    %3408 = vst [vmem:[%s3356 + $0x291] sm:$0xff] %v3343
    %3409 = vst [vmem:[%s3356 + $0x2a1] sm:$0xff] %v3344
    %3410 = vst [vmem:[%s3356 + $0x2a9] sm:$0xff] %v3345
    %3411 = vst [vmem:[%s3356 + $0x2b9] sm:$0xff] %v3346
    %3412 = vst [vmem:[%s3356 + $0x2c1] sm:$0xff] %v3347
    %3413 = vst [vmem:[%s3356 + $0x2d1] sm:$0xff] %v3348
    %3414 = vst [vmem:[%s3356 + $0x2d9] sm:$0xff] %v3349
    %3415 = vst [vmem:[%s3356 + $0x2e9] sm:$0xff] %v3350
    %3416 = vst [vmem:[%s3356 + $0x2f1] sm:$0xff] %v3351
    %3417 = vst [vmem:[%s3356 + $0x301] sm:$0xff] %v3352
    %3418 = vst [vmem:[%s3356 + $0x309] sm:$0xff] %v3353
    %3419 = vst [vmem:[%s3356 + $0x319] sm:$0xff] %v3354
    %3420 = vst [vmem:[%s3356 + $0x321] sm:$0xff] %v3355
    %3421 = vst [vmem:[#allocation2] sm:$0xff] 0.0
    %3422 = vst [vmem:[#allocation2 + $0x8] sm:$0xff] 0.0
    %3423 = vst [vmem:[#allocation2 + $0x10] sm:$0x3] 0.0
    %3424 = vst [vmem:[#allocation2 + $0x1b0] sm:$0xff] 0.0
    %3425 = vst [vmem:[#allocation2 + $0x1b8] sm:$0xff] 0.0
    %3426 = vst [vmem:[#allocation2 + $0x1c0] sm:$0x3] 0.0
    %s3427 = scalar_lea.vmem [#allocation2], 408
    %3428 = vst [vmem:[%s3427] sm:$0xff] 0.0
    %3429 = vst [vmem:[%s3427 + $0x8] sm:$0xff] 0.0
    %3430 = vst [vmem:[%s3427 + $0x10] sm:$0x3] 0.0
    %3431 = vst [vmem:[%s3427 + $0x1b0] sm:$0xff] 0.0
    %3432 = vst [vmem:[%s3427 + $0x1b8] sm:$0xff] 0.0
    %3433 = vst [vmem:[%s3427 + $0x1c0] sm:$0x3] 0.0
    %3434 = vst [vmem:[%s3356] sm:$0x1] 0.0
    %3435 = vst [vmem:[%s3356 + $0x18] sm:$0x1] 0.0
    %3436 = vst [vmem:[%s3356 + $0x30] sm:$0x1] 0.0
    %3437 = vst [vmem:[%s3356 + $0x48] sm:$0x1] 0.0
    %3438 = vst [vmem:[%s3356 + $0x60] sm:$0x1] 0.0
    %3439 = vst [vmem:[%s3356 + $0x78] sm:$0x1] 0.0
    %3440 = vst [vmem:[%s3356 + $0x90] sm:$0x1] 0.0
    %3441 = vst [vmem:[%s3356 + $0xa8] sm:$0x1] 0.0
    %3442 = vst [vmem:[%s3356 + $0xc0] sm:$0x1] 0.0
    %3443 = vst [vmem:[%s3356 + $0xd8] sm:$0x1] 0.0
    %3444 = vst [vmem:[%s3356 + $0xf0] sm:$0x1] 0.0
    %3445 = vst [vmem:[%s3356 + $0x108] sm:$0x1] 0.0
    %3446 = vst [vmem:[%s3356 + $0x120] sm:$0x1] 0.0
    %3447 = vst [vmem:[%s3356 + $0x138] sm:$0x1] 0.0
    %3448 = vst [vmem:[%s3356 + $0x150] sm:$0x1] 0.0
    %3449 = vst [vmem:[%s3356 + $0x168] sm:$0x1] 0.0
    %3450 = vst [vmem:[%s3356 + $0x1b0] sm:$0x1] 0.0
    %3451 = vst [vmem:[%s3356 + $0x1c8] sm:$0x1] 0.0
    %3452 = vst [vmem:[%s3356 + $0x1e0] sm:$0x1] 0.0
    %3453 = vst [vmem:[%s3356 + $0x1f8] sm:$0x1] 0.0
    %3454 = vst [vmem:[%s3356 + $0x210] sm:$0x1] 0.0
    %3455 = vst [vmem:[%s3356 + $0x228] sm:$0x1] 0.0
    %3456 = vst [vmem:[%s3356 + $0x240] sm:$0x1] 0.0
    %3457 = vst [vmem:[%s3356 + $0x258] sm:$0x1] 0.0
    %3458 = vst [vmem:[%s3356 + $0x270] sm:$0x1] 0.0
    %3459 = vst [vmem:[%s3356 + $0x288] sm:$0x1] 0.0
    %3460 = vst [vmem:[%s3356 + $0x2a0] sm:$0x1] 0.0
    %3461 = vst [vmem:[%s3356 + $0x2b8] sm:$0x1] 0.0
    %3462 = vst [vmem:[%s3356 + $0x2d0] sm:$0x1] 0.0
    %3463 = vst [vmem:[%s3356 + $0x2e8] sm:$0x1] 0.0
    %3464 = vst [vmem:[%s3356 + $0x300] sm:$0x1] 0.0
    %3465 = vst [vmem:[%s3356 + $0x318] sm:$0x1] 0.0
    %3466 = vst [vmem:[%s3356 + $0x11] sm:$0x1] 0.0
    %3467 = vst [vmem:[%s3356 + $0x29] sm:$0x1] 0.0
    %3468 = vst [vmem:[%s3356 + $0x41] sm:$0x1] 0.0
    %3469 = vst [vmem:[%s3356 + $0x59] sm:$0x1] 0.0
    %3470 = vst [vmem:[%s3356 + $0x71] sm:$0x1] 0.0
    %3471 = vst [vmem:[%s3356 + $0x89] sm:$0x1] 0.0
    %3472 = vst [vmem:[%s3356 + $0xa1] sm:$0x1] 0.0
    %3473 = vst [vmem:[%s3356 + $0xb9] sm:$0x1] 0.0
    %3474 = vst [vmem:[%s3356 + $0xd1] sm:$0x1] 0.0
    %3475 = vst [vmem:[%s3356 + $0xe9] sm:$0x1] 0.0
    %3476 = vst [vmem:[%s3356 + $0x101] sm:$0x1] 0.0
    %3477 = vst [vmem:[%s3356 + $0x119] sm:$0x1] 0.0
    %3478 = vst [vmem:[%s3356 + $0x131] sm:$0x1] 0.0
    %3479 = vst [vmem:[%s3356 + $0x149] sm:$0x1] 0.0
    %3480 = vst [vmem:[%s3356 + $0x161] sm:$0x1] 0.0
    %3481 = vst [vmem:[%s3356 + $0x179] sm:$0x1] 0.0
    %3482 = vst [vmem:[%s3356 + $0x1c1] sm:$0x1] 0.0
    %3483 = vst [vmem:[%s3356 + $0x1d9] sm:$0x1] 0.0
    %3484 = vst [vmem:[%s3356 + $0x1f1] sm:$0x1] 0.0
    %3485 = vst [vmem:[%s3356 + $0x209] sm:$0x1] 0.0
    %3486 = vst [vmem:[%s3356 + $0x221] sm:$0x1] 0.0
    %3487 = vst [vmem:[%s3356 + $0x239] sm:$0x1] 0.0
    %3488 = vst [vmem:[%s3356 + $0x251] sm:$0x1] 0.0
    %3489 = vst [vmem:[%s3356 + $0x269] sm:$0x1] 0.0
    %3490 = vst [vmem:[%s3356 + $0x281] sm:$0x1] 0.0
    %3491 = vst [vmem:[%s3356 + $0x299] sm:$0x1] 0.0
    %3492 = vst [vmem:[%s3356 + $0x2b1] sm:$0x1] 0.0
    %3493 = vst [vmem:[%s3356 + $0x2c9] sm:$0x1] 0.0
    %3494 = vst [vmem:[%s3356 + $0x2e1] sm:$0x1] 0.0
    %3495 = vst [vmem:[%s3356 + $0x2f9] sm:$0x1] 0.0
    %3496 = vst [vmem:[%s3356 + $0x311] sm:$0x1] 0.0
    %3497 = vst [vmem:[%s3356 + $0x329] sm:$0x1] 0.0
    %v3498 = vld [vmem:[#allocation2] sm:$0xff]
    %v3499 = vld [vmem:[#allocation2 + $0x8] sm:$0xff]
    %v3500 = vld [vmem:[#allocation2 + $0x10] sm:$0x3]
    %v3501 = vld [vmem:[#allocation2 + $0x18] sm:$0xff]
    %v3502 = vld [vmem:[#allocation2 + $0x20] sm:$0xff]
    %v3503 = vld [vmem:[#allocation2 + $0x28] sm:$0x3]
    %v3504 = vld [vmem:[#allocation2 + $0x30] sm:$0xff]
    %v3505 = vld [vmem:[#allocation2 + $0x38] sm:$0xff]
    %v3506 = vld [vmem:[#allocation2 + $0x40] sm:$0x3]
    %v3507 = vld [vmem:[#allocation2 + $0x48] sm:$0xff]
    %v3508 = vld [vmem:[#allocation2 + $0x50] sm:$0xff]
    %v3509 = vld [vmem:[#allocation2 + $0x58] sm:$0x3]
    %v3510 = vld [vmem:[#allocation2 + $0x60] sm:$0xff]
    %v3511 = vld [vmem:[#allocation2 + $0x68] sm:$0xff]
    %v3512 = vld [vmem:[#allocation2 + $0x70] sm:$0x3]
    %v3513 = vld [vmem:[#allocation2 + $0x78] sm:$0xff]
    %v3514 = vld [vmem:[#allocation2 + $0x80] sm:$0xff]
    %v3515 = vld [vmem:[#allocation2 + $0x88] sm:$0x3]
    %v3516 = vld [vmem:[#allocation2 + $0x90] sm:$0xff]
    %v3517 = vld [vmem:[#allocation2 + $0x98] sm:$0xff]
    %v3518 = vld [vmem:[#allocation2 + $0xa0] sm:$0x3]
    %v3519 = vld [vmem:[#allocation2 + $0xa8] sm:$0xff]
    %v3520 = vld [vmem:[#allocation2 + $0xb0] sm:$0xff]
    %v3521 = vld [vmem:[#allocation2 + $0xb8] sm:$0x3]
    %v3522 = vld [vmem:[#allocation2 + $0xc0] sm:$0xff]
    %v3523 = vld [vmem:[#allocation2 + $0xc8] sm:$0xff]
    %v3524 = vld [vmem:[#allocation2 + $0xd0] sm:$0x3]
    %v3525 = vld [vmem:[#allocation2 + $0xd8] sm:$0xff]
    %v3526 = vld [vmem:[#allocation2 + $0xe0] sm:$0xff]
    %v3527 = vld [vmem:[#allocation2 + $0xe8] sm:$0x3]
    %v3528 = vld [vmem:[#allocation2 + $0xf0] sm:$0xff]
    %v3529 = vld [vmem:[#allocation2 + $0xf8] sm:$0xff]
    %v3530 = vld [vmem:[#allocation2 + $0x100] sm:$0x3]
    %v3531 = vld [vmem:[#allocation2 + $0x108] sm:$0xff]
    %v3532 = vld [vmem:[#allocation2 + $0x110] sm:$0xff]
    %v3533 = vld [vmem:[#allocation2 + $0x118] sm:$0x3]
    %v3534 = vld [vmem:[#allocation2 + $0x120] sm:$0xff]
    %v3535 = vld [vmem:[#allocation2 + $0x128] sm:$0xff]
    %v3536 = vld [vmem:[#allocation2 + $0x130] sm:$0x3]
    %v3537 = vld [vmem:[#allocation2 + $0x138] sm:$0xff]
    %v3538 = vld [vmem:[#allocation2 + $0x140] sm:$0xff]
    %v3539 = vld [vmem:[#allocation2 + $0x148] sm:$0x3]
    %v3540 = vld [vmem:[#allocation2 + $0x150] sm:$0xff]
    %v3541 = vld [vmem:[#allocation2 + $0x158] sm:$0xff]
    %v3542 = vld [vmem:[#allocation2 + $0x160] sm:$0x3]
    %v3543 = vld [vmem:[#allocation2 + $0x168] sm:$0xff]
    %v3544 = vld [vmem:[#allocation2 + $0x170] sm:$0xff]
    %v3545 = vld [vmem:[#allocation2 + $0x178] sm:$0x3]
    %v3546 = vld [vmem:[#allocation2 + $0x180] sm:$0xff]
    %v3547 = vld [vmem:[#allocation2 + $0x188] sm:$0xff]
    %v3548 = vld [vmem:[#allocation2 + $0x190] sm:$0x3]
    %v3549 = vld [vmem:[#allocation2 + $0x198] sm:$0xff]
    %v3550 = vld [vmem:[#allocation2 + $0x1a0] sm:$0xff]
    %v3551 = vld [vmem:[#allocation2 + $0x1a8] sm:$0x3]
    %v3552 = vld [vmem:[#allocation2 + $0x1b0] sm:$0xff]
    %v3553 = vld [vmem:[#allocation2 + $0x1b8] sm:$0xff]
    %v3554 = vld [vmem:[#allocation2 + $0x1c0] sm:$0x3]
    %v3555 = vld [vmem:[#allocation2 + $0x1c8] sm:$0xff]
    %v3556 = vld [vmem:[#allocation2 + $0x1d0] sm:$0xff]
    %v3557 = vld [vmem:[#allocation2 + $0x1d8] sm:$0x3]
    %v3558 = vld [vmem:[#allocation2 + $0x1e0] sm:$0xff]
    %v3559 = vld [vmem:[#allocation2 + $0x1e8] sm:$0xff]
    %v3560 = vld [vmem:[#allocation2 + $0x1f0] sm:$0x3]
    %v3561 = vld [vmem:[#allocation2 + $0x1f8] sm:$0xff]
    %v3562 = vld [vmem:[#allocation2 + $0x200] sm:$0xff]
    %v3563 = vld [vmem:[#allocation2 + $0x208] sm:$0x3]
    %v3564 = vld [vmem:[#allocation2 + $0x210] sm:$0xff]
    %v3565 = vld [vmem:[#allocation2 + $0x218] sm:$0xff]
    %v3566 = vld [vmem:[#allocation2 + $0x220] sm:$0x3]
    %v3567 = vld [vmem:[#allocation2 + $0x228] sm:$0xff]
    %v3568 = vld [vmem:[#allocation2 + $0x230] sm:$0xff]
    %v3569 = vld [vmem:[#allocation2 + $0x238] sm:$0x3]
    %v3570 = vld [vmem:[#allocation2 + $0x240] sm:$0xff]
    %v3571 = vld [vmem:[#allocation2 + $0x248] sm:$0xff]
    %v3572 = vld [vmem:[#allocation2 + $0x250] sm:$0x3]
    %v3573 = vld [vmem:[#allocation2 + $0x258] sm:$0xff]
    %v3574 = vld [vmem:[#allocation2 + $0x260] sm:$0xff]
    %v3575 = vld [vmem:[#allocation2 + $0x268] sm:$0x3]
    %v3576 = vld [vmem:[#allocation2 + $0x270] sm:$0xff]
    %v3577 = vld [vmem:[#allocation2 + $0x278] sm:$0xff]
    %v3578 = vld [vmem:[#allocation2 + $0x280] sm:$0x3]
    %v3579 = vld [vmem:[#allocation2 + $0x288] sm:$0xff]
    %v3580 = vld [vmem:[#allocation2 + $0x290] sm:$0xff]
    %v3581 = vld [vmem:[#allocation2 + $0x298] sm:$0x3]
    %v3582 = vld [vmem:[#allocation2 + $0x2a0] sm:$0xff]
    %v3583 = vld [vmem:[#allocation2 + $0x2a8] sm:$0xff]
    %v3584 = vld [vmem:[#allocation2 + $0x2b0] sm:$0x3]
    %v3585 = vld [vmem:[#allocation2 + $0x2b8] sm:$0xff]
    %v3586 = vld [vmem:[#allocation2 + $0x2c0] sm:$0xff]
    %v3587 = vld [vmem:[#allocation2 + $0x2c8] sm:$0x3]
    %v3588 = vld [vmem:[#allocation2 + $0x2d0] sm:$0xff]
    %v3589 = vld [vmem:[#allocation2 + $0x2d8] sm:$0xff]
    %v3590 = vld [vmem:[#allocation2 + $0x2e0] sm:$0x3]
    %v3591 = vld [vmem:[#allocation2 + $0x2e8] sm:$0xff]
    %v3592 = vld [vmem:[#allocation2 + $0x2f0] sm:$0xff]
    %v3593 = vld [vmem:[#allocation2 + $0x2f8] sm:$0x3]
    %v3594 = vld [vmem:[#allocation2 + $0x300] sm:$0xff]
    %v3595 = vld [vmem:[#allocation2 + $0x308] sm:$0xff]
    %v3596 = vld [vmem:[#allocation2 + $0x310] sm:$0x3]
    %v3597 = vld [vmem:[#allocation2 + $0x318] sm:$0xff]
    %v3598 = vld [vmem:[#allocation2 + $0x320] sm:$0xff]
    %v3599 = vld [vmem:[#allocation2 + $0x328] sm:$0x3]
    %v3600 = vld [vmem:[#allocation2 + $0x330] sm:$0xff]
    %v3601 = vld [vmem:[#allocation2 + $0x338] sm:$0xff]
    %v3602 = vld [vmem:[#allocation2 + $0x340] sm:$0x3]
    %v3603 = vld [vmem:[#allocation2 + $0x348] sm:$0xff]
    %v3604 = vld [vmem:[#allocation2 + $0x350] sm:$0xff]
    %v3605 = vld [vmem:[#allocation2 + $0x358] sm:$0x3]
    %v3606 = vpack.c.bf16 %v3499, %v3498
    %v3607 = vpack.c.bf16 %v3502, %v3501
    %v3608 = vpack.c.bf16 %v3505, %v3504
    %v3609 = vpack.c.bf16 %v3508, %v3507
    %v3610 = vpack.c.bf16 %v3511, %v3510
    %v3611 = vpack.c.bf16 %v3514, %v3513
    %v3612 = vpack.c.bf16 %v3517, %v3516
    %v3613 = vpack.c.bf16 %v3520, %v3519
    %v3614 = vpack.c.bf16 %v3523, %v3522
    %v3615 = vpack.c.bf16 %v3526, %v3525
    %v3616 = vpack.c.bf16 %v3529, %v3528
    %v3617 = vpack.c.bf16 %v3532, %v3531
    %v3618 = vpack.c.bf16 %v3535, %v3534
    %v3619 = vpack.c.bf16 %v3538, %v3537
    %v3620 = vpack.c.bf16 %v3541, %v3540
    %v3621 = vpack.c.bf16 %v3544, %v3543
    %v3622 = vpack.c.bf16 %v3553, %v3552
    %v3623 = vpack.c.bf16 %v3556, %v3555
    %v3624 = vpack.c.bf16 %v3559, %v3558
    %v3625 = vpack.c.bf16 %v3562, %v3561
    %v3626 = vpack.c.bf16 %v3565, %v3564
    %v3627 = vpack.c.bf16 %v3568, %v3567
    %v3628 = vpack.c.bf16 %v3571, %v3570
    %v3629 = vpack.c.bf16 %v3574, %v3573
    %v3630 = vpack.c.bf16 %v3577, %v3576
    %v3631 = vpack.c.bf16 %v3580, %v3579
    %v3632 = vpack.c.bf16 %v3583, %v3582
    %v3633 = vpack.c.bf16 %v3586, %v3585
    %v3634 = vpack.c.bf16 %v3589, %v3588
    %v3635 = vpack.c.bf16 %v3592, %v3591
    %v3636 = vpack.c.bf16 %v3595, %v3594
    %v3637 = vpack.c.bf16 %v3598, %v3597
    %v3734 = vrot.slane %v3498, 1
    %v3735 = vrot.slane %v3499, 1
    %v3736 = vsel %vm264, %v3734, %v3735
    %v3737 = vrot.slane %v3500, 1
    %v3738 = vsel %vm264, %v3735, %v3737
    %v3739 = vrot.slane %v3501, 1
    %v3740 = vrot.slane %v3502, 1
    %v3741 = vsel %vm264, %v3739, %v3740
    %v3742 = vrot.slane %v3503, 1
    %v3743 = vsel %vm264, %v3740, %v3742
    %v3744 = vrot.slane %v3504, 1
    %v3745 = vrot.slane %v3505, 1
    %v3746 = vsel %vm264, %v3744, %v3745
    %v3747 = vrot.slane %v3506, 1
    %v3748 = vsel %vm264, %v3745, %v3747
    %v3749 = vrot.slane %v3507, 1
    %v3750 = vrot.slane %v3508, 1
    %v3751 = vsel %vm264, %v3749, %v3750
    %v3752 = vrot.slane %v3509, 1
    %v3753 = vsel %vm264, %v3750, %v3752
    %v3754 = vrot.slane %v3510, 1
    %v3755 = vrot.slane %v3511, 1
    %v3756 = vsel %vm264, %v3754, %v3755
    %v3757 = vrot.slane %v3512, 1
    %v3758 = vsel %vm264, %v3755, %v3757
    %v3759 = vrot.slane %v3513, 1
    %v3760 = vrot.slane %v3514, 1
    %v3761 = vsel %vm264, %v3759, %v3760
    %v3762 = vrot.slane %v3515, 1
    %v3763 = vsel %vm264, %v3760, %v3762
    %v3764 = vrot.slane %v3516, 1
    %v3765 = vrot.slane %v3517, 1
    %v3766 = vsel %vm264, %v3764, %v3765
    %v3767 = vrot.slane %v3518, 1
    %v3768 = vsel %vm264, %v3765, %v3767
    %v3769 = vrot.slane %v3519, 1
    %v3770 = vrot.slane %v3520, 1
    %v3771 = vsel %vm264, %v3769, %v3770
    %v3772 = vrot.slane %v3521, 1
    %v3773 = vsel %vm264, %v3770, %v3772
    %v3774 = vrot.slane %v3522, 1
    %v3775 = vrot.slane %v3523, 1
    %v3776 = vsel %vm264, %v3774, %v3775
    %v3777 = vrot.slane %v3524, 1
    %v3778 = vsel %vm264, %v3775, %v3777
    %v3779 = vrot.slane %v3525, 1
    %v3780 = vrot.slane %v3526, 1
    %v3781 = vsel %vm264, %v3779, %v3780
    %v3782 = vrot.slane %v3527, 1
    %v3783 = vsel %vm264, %v3780, %v3782
    %v3784 = vrot.slane %v3528, 1
    %v3785 = vrot.slane %v3529, 1
    %v3786 = vsel %vm264, %v3784, %v3785
    %v3787 = vrot.slane %v3530, 1
    %v3788 = vsel %vm264, %v3785, %v3787
    %v3789 = vrot.slane %v3531, 1
    %v3790 = vrot.slane %v3532, 1
    %v3791 = vsel %vm264, %v3789, %v3790
    %v3792 = vrot.slane %v3533, 1
    %v3793 = vsel %vm264, %v3790, %v3792
    %v3794 = vrot.slane %v3534, 1
    %v3795 = vrot.slane %v3535, 1
    %v3796 = vsel %vm264, %v3794, %v3795
    %v3797 = vrot.slane %v3536, 1
    %v3798 = vsel %vm264, %v3795, %v3797
    %v3799 = vrot.slane %v3537, 1
    %v3800 = vrot.slane %v3538, 1
    %v3801 = vsel %vm264, %v3799, %v3800
    %v3802 = vrot.slane %v3539, 1
    %v3803 = vsel %vm264, %v3800, %v3802
    %v3804 = vrot.slane %v3540, 1
    %v3805 = vrot.slane %v3541, 1
    %v3806 = vsel %vm264, %v3804, %v3805
    %v3807 = vrot.slane %v3542, 1
    %v3808 = vsel %vm264, %v3805, %v3807
    %v3809 = vrot.slane %v3543, 1
    %v3810 = vrot.slane %v3544, 1
    %v3811 = vsel %vm264, %v3809, %v3810
    %v3812 = vrot.slane %v3545, 1
    %v3813 = vsel %vm264, %v3810, %v3812
    %v3814 = vrot.slane %v3552, 1
    %v3815 = vrot.slane %v3553, 1
    %v3816 = vsel %vm264, %v3814, %v3815
    %v3817 = vrot.slane %v3554, 1
    %v3818 = vsel %vm264, %v3815, %v3817
    %v3819 = vrot.slane %v3555, 1
    %v3820 = vrot.slane %v3556, 1
    %v3821 = vsel %vm264, %v3819, %v3820
    %v3822 = vrot.slane %v3557, 1
    %v3823 = vsel %vm264, %v3820, %v3822
    %v3824 = vrot.slane %v3558, 1
    %v3825 = vrot.slane %v3559, 1
    %v3826 = vsel %vm264, %v3824, %v3825
    %v3827 = vrot.slane %v3560, 1
    %v3828 = vsel %vm264, %v3825, %v3827
    %v3829 = vrot.slane %v3561, 1
    %v3830 = vrot.slane %v3562, 1
    %v3831 = vsel %vm264, %v3829, %v3830
    %v3832 = vrot.slane %v3563, 1
    %v3833 = vsel %vm264, %v3830, %v3832
    %v3834 = vrot.slane %v3564, 1
    %v3835 = vrot.slane %v3565, 1
    %v3836 = vsel %vm264, %v3834, %v3835
    %v3837 = vrot.slane %v3566, 1
    %v3838 = vsel %vm264, %v3835, %v3837
    %v3839 = vrot.slane %v3567, 1
    %v3840 = vrot.slane %v3568, 1
    %v3841 = vsel %vm264, %v3839, %v3840
    %v3842 = vrot.slane %v3569, 1
    %v3843 = vsel %vm264, %v3840, %v3842
    %v3844 = vrot.slane %v3570, 1
    %v3845 = vrot.slane %v3571, 1
    %v3846 = vsel %vm264, %v3844, %v3845
    %v3847 = vrot.slane %v3572, 1
    %v3848 = vsel %vm264, %v3845, %v3847
    %v3849 = vrot.slane %v3573, 1
    %v3850 = vrot.slane %v3574, 1
    %v3851 = vsel %vm264, %v3849, %v3850
    %v3852 = vrot.slane %v3575, 1
    %v3853 = vsel %vm264, %v3850, %v3852
    %v3854 = vrot.slane %v3576, 1
    %v3855 = vrot.slane %v3577, 1
    %v3856 = vsel %vm264, %v3854, %v3855
    %v3857 = vrot.slane %v3578, 1
    %v3858 = vsel %vm264, %v3855, %v3857
    %v3859 = vrot.slane %v3579, 1
    %v3860 = vrot.slane %v3580, 1
    %v3861 = vsel %vm264, %v3859, %v3860
    %v3862 = vrot.slane %v3581, 1
    %v3863 = vsel %vm264, %v3860, %v3862
    %v3864 = vrot.slane %v3582, 1
    %v3865 = vrot.slane %v3583, 1
    %v3866 = vsel %vm264, %v3864, %v3865
    %v3867 = vrot.slane %v3584, 1
    %v3868 = vsel %vm264, %v3865, %v3867
    %v3869 = vrot.slane %v3585, 1
    %v3870 = vrot.slane %v3586, 1
    %v3871 = vsel %vm264, %v3869, %v3870
    %v3872 = vrot.slane %v3587, 1
    %v3873 = vsel %vm264, %v3870, %v3872
    %v3874 = vrot.slane %v3588, 1
    %v3875 = vrot.slane %v3589, 1
    %v3876 = vsel %vm264, %v3874, %v3875
    %v3877 = vrot.slane %v3590, 1
    %v3878 = vsel %vm264, %v3875, %v3877
    %v3879 = vrot.slane %v3591, 1
    %v3880 = vrot.slane %v3592, 1
    %v3881 = vsel %vm264, %v3879, %v3880
    %v3882 = vrot.slane %v3593, 1
    %v3883 = vsel %vm264, %v3880, %v3882
    %v3884 = vrot.slane %v3594, 1
    %v3885 = vrot.slane %v3595, 1
    %v3886 = vsel %vm264, %v3884, %v3885
    %v3887 = vrot.slane %v3596, 1
    %v3888 = vsel %vm264, %v3885, %v3887
    %v3889 = vrot.slane %v3597, 1
    %v3890 = vrot.slane %v3598, 1
    %v3891 = vsel %vm264, %v3889, %v3890
    %v3892 = vrot.slane %v3599, 1
    %v3893 = vsel %vm264, %v3890, %v3892
    %v3958 = vpack.c.bf16 %v3738, %v3736
    %v3959 = vpack.c.bf16 %v3743, %v3741
    %v3960 = vpack.c.bf16 %v3748, %v3746
    %v3961 = vpack.c.bf16 %v3753, %v3751
    %v3962 = vpack.c.bf16 %v3758, %v3756
    %v3963 = vpack.c.bf16 %v3763, %v3761
    %v3964 = vpack.c.bf16 %v3768, %v3766
    %v3965 = vpack.c.bf16 %v3773, %v3771
    %v3966 = vpack.c.bf16 %v3778, %v3776
    %v3967 = vpack.c.bf16 %v3783, %v3781
    %v3968 = vpack.c.bf16 %v3788, %v3786
    %v3969 = vpack.c.bf16 %v3793, %v3791
    %v3970 = vpack.c.bf16 %v3798, %v3796
    %v3971 = vpack.c.bf16 %v3803, %v3801
    %v3972 = vpack.c.bf16 %v3808, %v3806
    %v3973 = vpack.c.bf16 %v3813, %v3811
    %v3974 = vpack.c.bf16 %v3818, %v3816
    %v3975 = vpack.c.bf16 %v3823, %v3821
    %v3976 = vpack.c.bf16 %v3828, %v3826
    %v3977 = vpack.c.bf16 %v3833, %v3831
    %v3978 = vpack.c.bf16 %v3838, %v3836
    %v3979 = vpack.c.bf16 %v3843, %v3841
    %v3980 = vpack.c.bf16 %v3848, %v3846
    %v3981 = vpack.c.bf16 %v3853, %v3851
    %v3982 = vpack.c.bf16 %v3858, %v3856
    %v3983 = vpack.c.bf16 %v3863, %v3861
    %v3984 = vpack.c.bf16 %v3868, %v3866
    %v3985 = vpack.c.bf16 %v3873, %v3871
    %v3986 = vpack.c.bf16 %v3878, %v3876
    %v3987 = vpack.c.bf16 %v3883, %v3881
    %v3988 = vpack.c.bf16 %v3888, %v3886
    %v3989 = vpack.c.bf16 %v3893, %v3891
    %v3990 = vrot.slane %v3498, 2
    %v3991 = vrot.slane %v3499, 2
    %v3992 = vsel %vm521, %v3990, %v3991
    %v3993 = vrot.slane %v3500, 2
    %v3994 = vsel %vm521, %v3991, %v3993
    %v3995 = vrot.slane %v3501, 2
    %v3996 = vrot.slane %v3502, 2
    %v3997 = vsel %vm521, %v3995, %v3996
    %v3998 = vrot.slane %v3503, 2
    %v3999 = vsel %vm521, %v3996, %v3998
    %v4000 = vrot.slane %v3504, 2
    %v4001 = vrot.slane %v3505, 2
    %v4002 = vsel %vm521, %v4000, %v4001
    %v4003 = vrot.slane %v3506, 2
    %v4004 = vsel %vm521, %v4001, %v4003
    %v4005 = vrot.slane %v3507, 2
    %v4006 = vrot.slane %v3508, 2
    %v4007 = vsel %vm521, %v4005, %v4006
    %v4008 = vrot.slane %v3509, 2
    %v4009 = vsel %vm521, %v4006, %v4008
    %v4010 = vrot.slane %v3510, 2
    %v4011 = vrot.slane %v3511, 2
    %v4012 = vsel %vm521, %v4010, %v4011
    %v4013 = vrot.slane %v3512, 2
    %v4014 = vsel %vm521, %v4011, %v4013
    %v4015 = vrot.slane %v3513, 2
    %v4016 = vrot.slane %v3514, 2
    %v4017 = vsel %vm521, %v4015, %v4016
    %v4018 = vrot.slane %v3515, 2
    %v4019 = vsel %vm521, %v4016, %v4018
    %v4020 = vrot.slane %v3516, 2
    %v4021 = vrot.slane %v3517, 2
    %v4022 = vsel %vm521, %v4020, %v4021
    %v4023 = vrot.slane %v3518, 2
    %v4024 = vsel %vm521, %v4021, %v4023
    %v4025 = vrot.slane %v3519, 2
    %v4026 = vrot.slane %v3520, 2
    %v4027 = vsel %vm521, %v4025, %v4026
    %v4028 = vrot.slane %v3521, 2
    %v4029 = vsel %vm521, %v4026, %v4028
    %v4030 = vrot.slane %v3522, 2
    %v4031 = vrot.slane %v3523, 2
    %v4032 = vsel %vm521, %v4030, %v4031
    %v4033 = vrot.slane %v3524, 2
    %v4034 = vsel %vm521, %v4031, %v4033
    %v4035 = vrot.slane %v3525, 2
    %v4036 = vrot.slane %v3526, 2
    %v4037 = vsel %vm521, %v4035, %v4036
    %v4038 = vrot.slane %v3527, 2
    %v4039 = vsel %vm521, %v4036, %v4038
    %v4040 = vrot.slane %v3528, 2
    %v4041 = vrot.slane %v3529, 2
    %v4042 = vsel %vm521, %v4040, %v4041
    %v4043 = vrot.slane %v3530, 2
    %v4044 = vsel %vm521, %v4041, %v4043
    %v4045 = vrot.slane %v3531, 2
    %v4046 = vrot.slane %v3532, 2
    %v4047 = vsel %vm521, %v4045, %v4046
    %v4048 = vrot.slane %v3533, 2
    %v4049 = vsel %vm521, %v4046, %v4048
    %v4050 = vrot.slane %v3534, 2
    %v4051 = vrot.slane %v3535, 2
    %v4052 = vsel %vm521, %v4050, %v4051
    %v4053 = vrot.slane %v3536, 2
    %v4054 = vsel %vm521, %v4051, %v4053
    %v4055 = vrot.slane %v3537, 2
    %v4056 = vrot.slane %v3538, 2
    %v4057 = vsel %vm521, %v4055, %v4056
    %v4058 = vrot.slane %v3539, 2
    %v4059 = vsel %vm521, %v4056, %v4058
    %v4060 = vrot.slane %v3540, 2
    %v4061 = vrot.slane %v3541, 2
    %v4062 = vsel %vm521, %v4060, %v4061
    %v4063 = vrot.slane %v3542, 2
    %v4064 = vsel %vm521, %v4061, %v4063
    %v4065 = vrot.slane %v3543, 2
    %v4066 = vrot.slane %v3544, 2
    %v4067 = vsel %vm521, %v4065, %v4066
    %v4068 = vrot.slane %v3545, 2
    %v4069 = vsel %vm521, %v4066, %v4068
    %v4070 = vrot.slane %v3552, 2
    %v4071 = vrot.slane %v3553, 2
    %v4072 = vsel %vm521, %v4070, %v4071
    %v4073 = vrot.slane %v3554, 2
    %v4074 = vsel %vm521, %v4071, %v4073
    %v4075 = vrot.slane %v3555, 2
    %v4076 = vrot.slane %v3556, 2
    %v4077 = vsel %vm521, %v4075, %v4076
    %v4078 = vrot.slane %v3557, 2
    %v4079 = vsel %vm521, %v4076, %v4078
    %v4080 = vrot.slane %v3558, 2
    %v4081 = vrot.slane %v3559, 2
    %v4082 = vsel %vm521, %v4080, %v4081
    %v4083 = vrot.slane %v3560, 2
    %v4084 = vsel %vm521, %v4081, %v4083
    %v4085 = vrot.slane %v3561, 2
    %v4086 = vrot.slane %v3562, 2
    %v4087 = vsel %vm521, %v4085, %v4086
    %v4088 = vrot.slane %v3563, 2
    %v4089 = vsel %vm521, %v4086, %v4088
    %v4090 = vrot.slane %v3564, 2
    %v4091 = vrot.slane %v3565, 2
    %v4092 = vsel %vm521, %v4090, %v4091
    %v4093 = vrot.slane %v3566, 2
    %v4094 = vsel %vm521, %v4091, %v4093
    %v4095 = vrot.slane %v3567, 2
    %v4096 = vrot.slane %v3568, 2
    %v4097 = vsel %vm521, %v4095, %v4096
    %v4098 = vrot.slane %v3569, 2
    %v4099 = vsel %vm521, %v4096, %v4098
    %v4100 = vrot.slane %v3570, 2
    %v4101 = vrot.slane %v3571, 2
    %v4102 = vsel %vm521, %v4100, %v4101
    %v4103 = vrot.slane %v3572, 2
    %v4104 = vsel %vm521, %v4101, %v4103
    %v4105 = vrot.slane %v3573, 2
    %v4106 = vrot.slane %v3574, 2
    %v4107 = vsel %vm521, %v4105, %v4106
    %v4108 = vrot.slane %v3575, 2
    %v4109 = vsel %vm521, %v4106, %v4108
    %v4110 = vrot.slane %v3576, 2
    %v4111 = vrot.slane %v3577, 2
    %v4112 = vsel %vm521, %v4110, %v4111
    %v4113 = vrot.slane %v3578, 2
    %v4114 = vsel %vm521, %v4111, %v4113
    %v4115 = vrot.slane %v3579, 2
    %v4116 = vrot.slane %v3580, 2
    %v4117 = vsel %vm521, %v4115, %v4116
    %v4118 = vrot.slane %v3581, 2
    %v4119 = vsel %vm521, %v4116, %v4118
    %v4120 = vrot.slane %v3582, 2
    %v4121 = vrot.slane %v3583, 2
    %v4122 = vsel %vm521, %v4120, %v4121
    %v4123 = vrot.slane %v3584, 2
    %v4124 = vsel %vm521, %v4121, %v4123
    %v4125 = vrot.slane %v3585, 2
    %v4126 = vrot.slane %v3586, 2
    %v4127 = vsel %vm521, %v4125, %v4126
    %v4128 = vrot.slane %v3587, 2
    %v4129 = vsel %vm521, %v4126, %v4128
    %v4130 = vrot.slane %v3588, 2
    %v4131 = vrot.slane %v3589, 2
    %v4132 = vsel %vm521, %v4130, %v4131
    %v4133 = vrot.slane %v3590, 2
    %v4134 = vsel %vm521, %v4131, %v4133
    %v4135 = vrot.slane %v3591, 2
    %v4136 = vrot.slane %v3592, 2
    %v4137 = vsel %vm521, %v4135, %v4136
    %v4138 = vrot.slane %v3593, 2
    %v4139 = vsel %vm521, %v4136, %v4138
    %v4140 = vrot.slane %v3594, 2
    %v4141 = vrot.slane %v3595, 2
    %v4142 = vsel %vm521, %v4140, %v4141
    %v4143 = vrot.slane %v3596, 2
    %v4144 = vsel %vm521, %v4141, %v4143
    %v4145 = vrot.slane %v3597, 2
    %v4146 = vrot.slane %v3598, 2
    %v4147 = vsel %vm521, %v4145, %v4146
    %v4148 = vrot.slane %v3599, 2
    %v4149 = vsel %vm521, %v4146, %v4148
    %v4214 = vpack.c.bf16 %v3994, %v3992
    %v4215 = vpack.c.bf16 %v3999, %v3997
    %v4216 = vpack.c.bf16 %v4004, %v4002
    %v4217 = vpack.c.bf16 %v4009, %v4007
    %v4218 = vpack.c.bf16 %v4014, %v4012
    %v4219 = vpack.c.bf16 %v4019, %v4017
    %v4220 = vpack.c.bf16 %v4024, %v4022
    %v4221 = vpack.c.bf16 %v4029, %v4027
    %v4222 = vpack.c.bf16 %v4034, %v4032
    %v4223 = vpack.c.bf16 %v4039, %v4037
    %v4224 = vpack.c.bf16 %v4044, %v4042
    %v4225 = vpack.c.bf16 %v4049, %v4047
    %v4226 = vpack.c.bf16 %v4054, %v4052
    %v4227 = vpack.c.bf16 %v4059, %v4057
    %v4228 = vpack.c.bf16 %v4064, %v4062
    %v4229 = vpack.c.bf16 %v4069, %v4067
    %v4230 = vpack.c.bf16 %v4074, %v4072
    %v4231 = vpack.c.bf16 %v4079, %v4077
    %v4232 = vpack.c.bf16 %v4084, %v4082
    %v4233 = vpack.c.bf16 %v4089, %v4087
    %v4234 = vpack.c.bf16 %v4094, %v4092
    %v4235 = vpack.c.bf16 %v4099, %v4097
    %v4236 = vpack.c.bf16 %v4104, %v4102
    %v4237 = vpack.c.bf16 %v4109, %v4107
    %v4238 = vpack.c.bf16 %v4114, %v4112
    %v4239 = vpack.c.bf16 %v4119, %v4117
    %v4240 = vpack.c.bf16 %v4124, %v4122
    %v4241 = vpack.c.bf16 %v4129, %v4127
    %v4242 = vpack.c.bf16 %v4134, %v4132
    %v4243 = vpack.c.bf16 %v4139, %v4137
    %v4244 = vpack.c.bf16 %v4144, %v4142
    %v4245 = vpack.c.bf16 %v4149, %v4147
    %v4246 = vpack.c.bf16 %v3547, %v3546
    %v4247 = vpack.c.bf16 %v3601, %v3600
    %v4254 = vrot.slane %v3546, 1
    %v4255 = vrot.slane %v3547, 1
    %v4256 = vsel %vm264, %v4254, %v4255
    %v4257 = vrot.slane %v3548, 1
    %v4258 = vsel %vm264, %v4255, %v4257
    %v4259 = vrot.slane %v3600, 1
    %v4260 = vrot.slane %v3601, 1
    %v4261 = vsel %vm264, %v4259, %v4260
    %v4262 = vrot.slane %v3602, 1
    %v4263 = vsel %vm264, %v4260, %v4262
    %v4268 = vpack.c.bf16 %v4258, %v4256
    %v4269 = vpack.c.bf16 %v4263, %v4261
    %v4270 = vrot.slane %v3546, 2
    %v4271 = vrot.slane %v3547, 2
    %v4272 = vsel %vm521, %v4270, %v4271
    %v4273 = vrot.slane %v3548, 2
    %v4274 = vsel %vm521, %v4271, %v4273
    %v4275 = vrot.slane %v3600, 2
    %v4276 = vrot.slane %v3601, 2
    %v4277 = vsel %vm521, %v4275, %v4276
    %v4278 = vrot.slane %v3602, 2
    %v4279 = vsel %vm521, %v4276, %v4278
    %v4284 = vpack.c.bf16 %v4274, %v4272
    %v4285 = vpack.c.bf16 %v4279, %v4277
    %v4286 = vpack.c.bf16 %v3550, %v3549
    %v4287 = vpack.c.bf16 %v3604, %v3603
    %v4294 = vrot.slane %v3549, 1
    %v4295 = vrot.slane %v3550, 1
    %v4296 = vsel %vm264, %v4294, %v4295
    %v4297 = vrot.slane %v3551, 1
    %v4298 = vsel %vm264, %v4295, %v4297
    %v4299 = vrot.slane %v3603, 1
    %v4300 = vrot.slane %v3604, 1
    %v4301 = vsel %vm264, %v4299, %v4300
    %v4302 = vrot.slane %v3605, 1
    %v4303 = vsel %vm264, %v4300, %v4302
    %v4308 = vpack.c.bf16 %v4298, %v4296
    %v4309 = vpack.c.bf16 %v4303, %v4301
    %v4310 = vrot.slane %v3549, 2
    %v4311 = vrot.slane %v3550, 2
    %v4312 = vsel %vm521, %v4310, %v4311
    %v4313 = vrot.slane %v3551, 2
    %v4314 = vsel %vm521, %v4311, %v4313
    %v4315 = vrot.slane %v3603, 2
    %v4316 = vrot.slane %v3604, 2
    %v4317 = vsel %vm521, %v4315, %v4316
    %v4318 = vrot.slane %v3605, 2
    %v4319 = vsel %vm521, %v4316, %v4318
    %v4324 = vpack.c.bf16 %v4314, %v4312
    %v4325 = vpack.c.bf16 %v4319, %v4317
    %v4326 = vld [vmem:[%s4] sm:$0xf]
    %v4327 = vld [vmem:[%s4 + $0x4] sm:$0xf]
    %v4328 = vld [vmem:[%s4 + $0x8] sm:$0xf]
    %v4329 = vld [vmem:[%s4 + $0xc] sm:$0xf]
    %v4330 = vld [vmem:[%s4 + $0x10] sm:$0xf]
    %v4331 = vld [vmem:[%s4 + $0x14] sm:$0xf]
    %v4332 = vld [vmem:[%s4 + $0x18] sm:$0xf]
    %v4333 = vld [vmem:[%s4 + $0x1c] sm:$0xf]
    %v4334 = vld [vmem:[%s4 + $0x20] sm:$0xf]
    %v4335 = vld [vmem:[%s4 + $0x24] sm:$0xf]
    %v4336 = vld [vmem:[%s4 + $0x28] sm:$0xf]
    %v4337 = vld [vmem:[%s4 + $0x2c] sm:$0xf]
    %v4338 = vld [vmem:[%s4 + $0x30] sm:$0xf]
    %v4339 = vld [vmem:[%s4 + $0x34] sm:$0xf]
    %v4340 = vld [vmem:[%s4 + $0x38] sm:$0xf]
    %v4341 = vld [vmem:[%s4 + $0x3c] sm:$0xf]
    %v4342 = vld [vmem:[%s4 + $0x40] sm:$0xf]
    %v4343 = vld [vmem:[%s4 + $0x44] sm:$0xf]
    %v4344 = vld [vmem:[%s4 + $0x48] sm:$0xf]
    %v4345 = vld [vmem:[%s4 + $0x4c] sm:$0xf]
    %v4346 = vld [vmem:[%s4 + $0x50] sm:$0xf]
    %v4347 = vld [vmem:[%s4 + $0x54] sm:$0xf]
    %v4348 = vld [vmem:[%s4 + $0x58] sm:$0xf]
    %v4349 = vld [vmem:[%s4 + $0x5c] sm:$0xf]
    %v4350 = vld [vmem:[%s4 + $0x60] sm:$0xf]
    %v4351 = vld [vmem:[%s4 + $0x64] sm:$0xf]
    %v4352 = vld [vmem:[%s4 + $0x68] sm:$0xf]
    %v4353 = vld [vmem:[%s4 + $0x6c] sm:$0xf]
    %v4354 = vld [vmem:[%s4 + $0x70] sm:$0xf]
    %v4355 = vld [vmem:[%s4 + $0x74] sm:$0xf]
    %v4356 = vld [vmem:[%s4 + $0x78] sm:$0xf]
    %v4357 = vld [vmem:[%s4 + $0x7c] sm:$0xf]
    %v4358 = vld [vmem:[%s4 + $0x80] sm:$0xf]
    %v4359 = vld [vmem:[%s4 + $0x84] sm:$0xf]
    %v4360 = vld [vmem:[%s4 + $0x88] sm:$0xf]
    %v4361 = vld [vmem:[%s4 + $0x8c] sm:$0xf]
    %v4362 = vld [vmem:[%s4 + $0x90] sm:$0xf]
    %v4363 = vld [vmem:[%s4 + $0x94] sm:$0xf]
    %v4364 = vld [vmem:[%s4 + $0x98] sm:$0xf]
    %v4365 = vld [vmem:[%s4 + $0x9c] sm:$0xf]
    %v4366 = vld [vmem:[%s4 + $0xa0] sm:$0xf]
    %v4367 = vld [vmem:[%s4 + $0xa4] sm:$0xf]
    %v4368 = vld [vmem:[%s4 + $0xa8] sm:$0xf]
    %v4369 = vld [vmem:[%s4 + $0xac] sm:$0xf]
    %v4370 = vld [vmem:[%s4 + $0xb0] sm:$0xf]
    %v4371 = vld [vmem:[%s4 + $0xb4] sm:$0xf]
    %v4372 = vld [vmem:[%s4 + $0xb8] sm:$0xf]
    %v4373 = vld [vmem:[%s4 + $0xbc] sm:$0xf]
    %v4374 = vld [vmem:[%s4 + $0xc0] sm:$0xf]
    %v4375 = vld [vmem:[%s4 + $0xc4] sm:$0xf]
    %v4376 = vld [vmem:[%s4 + $0xc8] sm:$0xf]
    %v4377 = vld [vmem:[%s4 + $0xcc] sm:$0xf]
    %v4378 = vld [vmem:[%s4 + $0xd0] sm:$0xf]
    %v4379 = vld [vmem:[%s4 + $0xd4] sm:$0xf]
    %v4380 = vld [vmem:[%s4 + $0xd8] sm:$0xf]
    %v4381 = vld [vmem:[%s4 + $0xdc] sm:$0xf]
    %v4382 = vld [vmem:[%s4 + $0xe0] sm:$0xf]
    %v4383 = vld [vmem:[%s4 + $0xe4] sm:$0xf]
    %v4384 = vld [vmem:[%s4 + $0xe8] sm:$0xf]
    %v4385 = vld [vmem:[%s4 + $0xec] sm:$0xf]
    %v4386 = vld [vmem:[%s4 + $0xf0] sm:$0xf]
    %v4387 = vld [vmem:[%s4 + $0xf4] sm:$0xf]
    %v4388 = vld [vmem:[%s4 + $0xf8] sm:$0xf]
    %v4389 = vld [vmem:[%s4 + $0xfc] sm:$0xf]
    %v4390 = vld [vmem:[%s4 + $0x100] sm:$0xf]
    %v4391 = vld [vmem:[%s4 + $0x104] sm:$0xf]
    %v4392 = vld [vmem:[%s4 + $0x108] sm:$0xf]
    %v4393 = vld [vmem:[%s4 + $0x10c] sm:$0xf]
    %v4394 = vld [vmem:[%s4 + $0x110] sm:$0xf]
    %v4395 = vld [vmem:[%s4 + $0x114] sm:$0xf]
    %v4396 = vld [vmem:[%s4 + $0x118] sm:$0xf]
    %v4397 = vld [vmem:[%s4 + $0x11c] sm:$0xf]
    %v4398 = vld [vmem:[%s4 + $0x120] sm:$0xf]
    %v4399 = vld [vmem:[%s4 + $0x124] sm:$0xf]
    %v4400 = vld [vmem:[%s4 + $0x128] sm:$0xf]
    %v4401 = vld [vmem:[%s4 + $0x12c] sm:$0xf]
    %v4402 = vld [vmem:[%s4 + $0x130] sm:$0xf]
    %v4403 = vld [vmem:[%s4 + $0x134] sm:$0xf]
    %v4404 = vld [vmem:[%s4 + $0x138] sm:$0xf]
    %v4405 = vld [vmem:[%s4 + $0x13c] sm:$0xf]
    %v4406 = vld [vmem:[%s4 + $0x140] sm:$0xf]
    %v4407 = vld [vmem:[%s4 + $0x144] sm:$0xf]
    %v4408 = vld [vmem:[%s4 + $0x148] sm:$0xf]
    %v4409 = vld [vmem:[%s4 + $0x14c] sm:$0xf]
    %v4410 = vld [vmem:[%s4 + $0x150] sm:$0xf]
    %v4411 = vld [vmem:[%s4 + $0x154] sm:$0xf]
    %v4412 = vld [vmem:[%s4 + $0x158] sm:$0xf]
    %v4413 = vld [vmem:[%s4 + $0x15c] sm:$0xf]
    %v4414 = vld [vmem:[%s4 + $0x160] sm:$0xf]
    %v4415 = vld [vmem:[%s4 + $0x164] sm:$0xf]
    %v4416 = vld [vmem:[%s4 + $0x168] sm:$0xf]
    %v4417 = vld [vmem:[%s4 + $0x16c] sm:$0xf]
    %v4418 = vld [vmem:[%s4 + $0x170] sm:$0xf]
    %v4419 = vld [vmem:[%s4 + $0x174] sm:$0xf]
    %v4420 = vld [vmem:[%s4 + $0x178] sm:$0xf]
    %v4421 = vld [vmem:[%s4 + $0x17c] sm:$0xf]
    %v4422 = vld [vmem:[%s4 + $0x180] sm:$0xf]
    %v4423 = vld [vmem:[%s4 + $0x184] sm:$0xf]
    %v4424 = vld [vmem:[%s4 + $0x188] sm:$0xf]
    %v4425 = vld [vmem:[%s4 + $0x18c] sm:$0xf]
    %v4426 = vld [vmem:[%s4 + $0x190] sm:$0xf]
    %v4427 = vld [vmem:[%s4 + $0x194] sm:$0xf]
    %v4428 = vld [vmem:[%s4 + $0x198] sm:$0xf]
    %v4429 = vld [vmem:[%s4 + $0x19c] sm:$0xf]
    %v4430 = vld [vmem:[%s4 + $0x1a0] sm:$0xf]
    %v4431 = vld [vmem:[%s4 + $0x1a4] sm:$0xf]
    %v4432 = vld [vmem:[%s4 + $0x1a8] sm:$0xf]
    %v4433 = vld [vmem:[%s4 + $0x1ac] sm:$0xf]
    %v4434 = vld [vmem:[%s4 + $0x1b0] sm:$0xf]
    %v4435 = vld [vmem:[%s4 + $0x1b4] sm:$0xf]
    %v4436 = vld [vmem:[%s4 + $0x1b8] sm:$0xf]
    %v4437 = vld [vmem:[%s4 + $0x1bc] sm:$0xf]
    %v4438 = vld [vmem:[%s4 + $0x1c0] sm:$0xf]
    %v4439 = vld [vmem:[%s4 + $0x1c4] sm:$0xf]
    %v4440 = vld [vmem:[%s4 + $0x1c8] sm:$0xf]
    %v4441 = vld [vmem:[%s4 + $0x1cc] sm:$0xf]
    %v4442 = vld [vmem:[%s4 + $0x1d0] sm:$0xf]
    %v4443 = vld [vmem:[%s4 + $0x1d4] sm:$0xf]
    %v4444 = vld [vmem:[%s4 + $0x1d8] sm:$0xf]
    %v4445 = vld [vmem:[%s4 + $0x1dc] sm:$0xf]
    %v4446 = vld [vmem:[%s4 + $0x1e0] sm:$0xf]
    %v4447 = vld [vmem:[%s4 + $0x1e4] sm:$0xf]
    %v4448 = vld [vmem:[%s4 + $0x1e8] sm:$0xf]
    %v4449 = vld [vmem:[%s4 + $0x1ec] sm:$0xf]
    %v4450 = vld [vmem:[%s4 + $0x1f0] sm:$0xf]
    %v4451 = vld [vmem:[%s4 + $0x1f4] sm:$0xf]
    %v4452 = vld [vmem:[%s4 + $0x1f8] sm:$0xf]
    %v4453 = vld [vmem:[%s4 + $0x1fc] sm:$0xf]
    %v4454 = vld [vmem:[%s4 + $0x200] sm:$0xf]
    %v4455 = vld [vmem:[%s4 + $0x204] sm:$0xf]
    %v4456 = vld [vmem:[%s4 + $0x208] sm:$0xf]
    %v4457 = vld [vmem:[%s4 + $0x20c] sm:$0xf]
    %v4458 = vld [vmem:[%s4 + $0x210] sm:$0xf]
    %v4459 = vld [vmem:[%s4 + $0x214] sm:$0xf]
    %v4460 = vld [vmem:[%s4 + $0x218] sm:$0xf]
    %v4461 = vld [vmem:[%s4 + $0x21c] sm:$0xf]
    %v4462 = vld [vmem:[%s4 + $0x220] sm:$0xf]
    %v4463 = vld [vmem:[%s4 + $0x224] sm:$0xf]
    %v4464 = vld [vmem:[%s4 + $0x228] sm:$0xf]
    %v4465 = vld [vmem:[%s4 + $0x22c] sm:$0xf]
    %v4466 = vld [vmem:[%s4 + $0x230] sm:$0xf]
    %v4467 = vld [vmem:[%s4 + $0x234] sm:$0xf]
    %v4468 = vld [vmem:[%s4 + $0x238] sm:$0xf]
    %v4469 = vld [vmem:[%s4 + $0x23c] sm:$0xf]
    %v4614 = vunpack.c.l.b16 %v4326
    %v4615 = vunpack.c.l.b16 %v4327
    %v4616 = vunpack.c.l.b16 %v4328
    %v4617 = vunpack.c.l.b16 %v4329
    %v4618 = vunpack.c.l.b16 %v4330
    %v4619 = vunpack.c.l.b16 %v4331
    %v4620 = vunpack.c.l.b16 %v4332
    %v4621 = vunpack.c.l.b16 %v4333
    %v4622 = vunpack.c.l.b16 %v4334
    %v4623 = vunpack.c.l.b16 %v4335
    %v4624 = vunpack.c.l.b16 %v4336
    %v4625 = vunpack.c.l.b16 %v4337
    %v4626 = vunpack.c.l.b16 %v4338
    %v4627 = vunpack.c.l.b16 %v4339
    %v4628 = vunpack.c.l.b16 %v4340
    %v4629 = vunpack.c.l.b16 %v4341
    %v4630 = vunpack.c.l.b16 %v4342
    %v4631 = vunpack.c.l.b16 %v4343
    %v4632 = vunpack.c.l.b16 %v4344
    %v4633 = vunpack.c.l.b16 %v4345
    %v4634 = vunpack.c.l.b16 %v4346
    %v4635 = vunpack.c.l.b16 %v4347
    %v4636 = vunpack.c.l.b16 %v4348
    %v4637 = vunpack.c.l.b16 %v4349
    %v4638 = vunpack.c.l.b16 %v4350
    %v4639 = vunpack.c.l.b16 %v4351
    %v4640 = vunpack.c.l.b16 %v4352
    %v4641 = vunpack.c.l.b16 %v4353
    %v4642 = vunpack.c.l.b16 %v4354
    %v4643 = vunpack.c.l.b16 %v4355
    %v4644 = vunpack.c.l.b16 %v4356
    %v4645 = vunpack.c.l.b16 %v4357
    %v4646 = vunpack.c.l.b16 %v4358
    %v4647 = vunpack.c.l.b16 %v4359
    %v4648 = vunpack.c.l.b16 %v4360
    %v4649 = vunpack.c.l.b16 %v4361
    %v4650 = vunpack.c.l.b16 %v4362
    %v4651 = vunpack.c.l.b16 %v4363
    %v4652 = vunpack.c.l.b16 %v4364
    %v4653 = vunpack.c.l.b16 %v4365
    %v4654 = vunpack.c.l.b16 %v4366
    %v4655 = vunpack.c.l.b16 %v4367
    %v4656 = vunpack.c.l.b16 %v4368
    %v4657 = vunpack.c.l.b16 %v4369
    %v4658 = vunpack.c.l.b16 %v4370
    %v4659 = vunpack.c.l.b16 %v4371
    %v4660 = vunpack.c.l.b16 %v4372
    %v4661 = vunpack.c.l.b16 %v4373
    %v4662 = vunpack.c.l.b16 %v4374
    %v4663 = vunpack.c.l.b16 %v4375
    %v4664 = vunpack.c.l.b16 %v4376
    %v4665 = vunpack.c.l.b16 %v4377
    %v4666 = vunpack.c.l.b16 %v4378
    %v4667 = vunpack.c.l.b16 %v4379
    %v4668 = vunpack.c.l.b16 %v4380
    %v4669 = vunpack.c.l.b16 %v4381
    %v4670 = vunpack.c.l.b16 %v4382
    %v4671 = vunpack.c.l.b16 %v4383
    %v4672 = vunpack.c.l.b16 %v4384
    %v4673 = vunpack.c.l.b16 %v4385
    %v4674 = vunpack.c.l.b16 %v4386
    %v4675 = vunpack.c.l.b16 %v4387
    %v4676 = vunpack.c.l.b16 %v4388
    %v4677 = vunpack.c.l.b16 %v4389
    %v4678 = vunpack.c.l.b16 %v4390
    %v4679 = vunpack.c.l.b16 %v4391
    %v4680 = vunpack.c.l.b16 %v4392
    %v4681 = vunpack.c.l.b16 %v4393
    %v4682 = vunpack.c.l.b16 %v4394
    %v4683 = vunpack.c.l.b16 %v4395
    %v4684 = vunpack.c.l.b16 %v4396
    %v4685 = vunpack.c.l.b16 %v4397
    %v4686 = vunpack.c.l.b16 %v4398
    %v4687 = vunpack.c.l.b16 %v4399
    %v4688 = vunpack.c.l.b16 %v4400
    %v4689 = vunpack.c.l.b16 %v4401
    %v4690 = vunpack.c.l.b16 %v4402
    %v4691 = vunpack.c.l.b16 %v4403
    %v4692 = vunpack.c.l.b16 %v4404
    %v4693 = vunpack.c.l.b16 %v4405
    %v4694 = vunpack.c.l.b16 %v4406
    %v4695 = vunpack.c.l.b16 %v4407
    %v4696 = vunpack.c.l.b16 %v4408
    %v4697 = vunpack.c.l.b16 %v4409
    %v4698 = vunpack.c.l.b16 %v4410
    %v4699 = vunpack.c.l.b16 %v4411
    %v4700 = vunpack.c.l.b16 %v4412
    %v4701 = vunpack.c.l.b16 %v4413
    %v4702 = vunpack.c.l.b16 %v4414
    %v4703 = vunpack.c.l.b16 %v4415
    %v4704 = vunpack.c.l.b16 %v4416
    %v4705 = vunpack.c.l.b16 %v4417
    %v4706 = vunpack.c.l.b16 %v4418
    %v4707 = vunpack.c.l.b16 %v4419
    %v4708 = vunpack.c.l.b16 %v4420
    %v4709 = vunpack.c.l.b16 %v4421
    %v4710 = vunpack.c.l.b16 %v4422
    %v4711 = vunpack.c.l.b16 %v4423
    %v4712 = vunpack.c.l.b16 %v4424
    %v4713 = vunpack.c.l.b16 %v4425
    %v4714 = vunpack.c.l.b16 %v4426
    %v4715 = vunpack.c.l.b16 %v4427
    %v4716 = vunpack.c.l.b16 %v4428
    %v4717 = vunpack.c.l.b16 %v4429
    %v4718 = vunpack.c.l.b16 %v4430
    %v4719 = vunpack.c.l.b16 %v4431
    %v4720 = vunpack.c.l.b16 %v4432
    %v4721 = vunpack.c.l.b16 %v4433
    %v4722 = vunpack.c.l.b16 %v4434
    %v4723 = vunpack.c.l.b16 %v4435
    %v4724 = vunpack.c.l.b16 %v4436
    %v4725 = vunpack.c.l.b16 %v4437
    %v4726 = vunpack.c.l.b16 %v4438
    %v4727 = vunpack.c.l.b16 %v4439
    %v4728 = vunpack.c.l.b16 %v4440
    %v4729 = vunpack.c.l.b16 %v4441
    %v4730 = vunpack.c.l.b16 %v4442
    %v4731 = vunpack.c.l.b16 %v4443
    %v4732 = vunpack.c.l.b16 %v4444
    %v4733 = vunpack.c.l.b16 %v4445
    %v4734 = vunpack.c.l.b16 %v4446
    %v4735 = vunpack.c.l.b16 %v4447
    %v4736 = vunpack.c.l.b16 %v4448
    %v4737 = vunpack.c.l.b16 %v4449
    %v4738 = vunpack.c.l.b16 %v4450
    %v4739 = vunpack.c.l.b16 %v4451
    %v4740 = vunpack.c.l.b16 %v4452
    %v4741 = vunpack.c.l.b16 %v4453
    %v4742 = vunpack.c.l.b16 %v4454
    %v4743 = vunpack.c.l.b16 %v4455
    %v4744 = vunpack.c.l.b16 %v4456
    %v4745 = vunpack.c.l.b16 %v4457
    %v4746 = vunpack.c.l.b16 %v4458
    %v4747 = vunpack.c.l.b16 %v4459
    %v4748 = vunpack.c.l.b16 %v4460
    %v4749 = vunpack.c.l.b16 %v4461
    %v4750 = vunpack.c.l.b16 %v4462
    %v4751 = vunpack.c.l.b16 %v4463
    %v4752 = vunpack.c.l.b16 %v4464
    %v4753 = vunpack.c.l.b16 %v4465
    %v4754 = vunpack.c.l.b16 %v4466
    %v4755 = vunpack.c.l.b16 %v4467
    %v4756 = vunpack.c.l.b16 %v4468
    %v4757 = vunpack.c.l.b16 %v4469
    %v4758 = vpack.c.b16 %v4615, %v4614
    %v4759 = vpack.c.b16 %v4617, %v4616
    %v4760 = vpack.c.b16 %v4619, %v4618
    %v4761 = vpack.c.b16 %v4621, %v4620
    %v4762 = vpack.c.b16 %v4623, %v4622
    %v4763 = vpack.c.b16 %v4625, %v4624
    %v4764 = vpack.c.b16 %v4627, %v4626
    %v4765 = vpack.c.b16 %v4629, %v4628
    %v4766 = vpack.c.b16 %v4631, %v4630
    %v4767 = vpack.c.b16 %v4633, %v4632
    %v4768 = vpack.c.b16 %v4635, %v4634
    %v4769 = vpack.c.b16 %v4637, %v4636
    %v4770 = vpack.c.b16 %v4639, %v4638
    %v4771 = vpack.c.b16 %v4641, %v4640
    %v4772 = vpack.c.b16 %v4643, %v4642
    %v4773 = vpack.c.b16 %v4645, %v4644
    %v4774 = vpack.c.b16 %v4647, %v4646
    %v4775 = vpack.c.b16 %v4649, %v4648
    %v4776 = vpack.c.b16 %v4651, %v4650
    %v4777 = vpack.c.b16 %v4653, %v4652
    %v4778 = vpack.c.b16 %v4655, %v4654
    %v4779 = vpack.c.b16 %v4657, %v4656
    %v4780 = vpack.c.b16 %v4659, %v4658
    %v4781 = vpack.c.b16 %v4661, %v4660
    %v4782 = vpack.c.b16 %v4663, %v4662
    %v4783 = vpack.c.b16 %v4665, %v4664
    %v4784 = vpack.c.b16 %v4667, %v4666
    %v4785 = vpack.c.b16 %v4669, %v4668
    %v4786 = vpack.c.b16 %v4671, %v4670
    %v4787 = vpack.c.b16 %v4673, %v4672
    %v4788 = vpack.c.b16 %v4675, %v4674
    %v4789 = vpack.c.b16 %v4677, %v4676
    %v4790 = vpack.c.b16 %v4679, %v4678
    %v4791 = vpack.c.b16 %v4681, %v4680
    %v4792 = vpack.c.b16 %v4683, %v4682
    %v4793 = vpack.c.b16 %v4685, %v4684
    %v4794 = vpack.c.b16 %v4687, %v4686
    %v4795 = vpack.c.b16 %v4689, %v4688
    %v4796 = vpack.c.b16 %v4691, %v4690
    %v4797 = vpack.c.b16 %v4693, %v4692
    %v4798 = vpack.c.b16 %v4695, %v4694
    %v4799 = vpack.c.b16 %v4697, %v4696
    %v4800 = vpack.c.b16 %v4699, %v4698
    %v4801 = vpack.c.b16 %v4701, %v4700
    %v4802 = vpack.c.b16 %v4703, %v4702
    %v4803 = vpack.c.b16 %v4705, %v4704
    %v4804 = vpack.c.b16 %v4707, %v4706
    %v4805 = vpack.c.b16 %v4709, %v4708
    %v4806 = vpack.c.b16 %v4711, %v4710
    %v4807 = vpack.c.b16 %v4713, %v4712
    %v4808 = vpack.c.b16 %v4715, %v4714
    %v4809 = vpack.c.b16 %v4717, %v4716
    %v4810 = vpack.c.b16 %v4719, %v4718
    %v4811 = vpack.c.b16 %v4721, %v4720
    %v4812 = vpack.c.b16 %v4723, %v4722
    %v4813 = vpack.c.b16 %v4725, %v4724
    %v4814 = vpack.c.b16 %v4727, %v4726
    %v4815 = vpack.c.b16 %v4729, %v4728
    %v4816 = vpack.c.b16 %v4731, %v4730
    %v4817 = vpack.c.b16 %v4733, %v4732
    %v4818 = vpack.c.b16 %v4735, %v4734
    %v4819 = vpack.c.b16 %v4737, %v4736
    %v4820 = vpack.c.b16 %v4739, %v4738
    %v4821 = vpack.c.b16 %v4741, %v4740
    %v4822 = vpack.c.b16 %v4743, %v4742
    %v4823 = vpack.c.b16 %v4745, %v4744
    %v4824 = vpack.c.b16 %v4747, %v4746
    %v4825 = vpack.c.b16 %v4749, %v4748
    %v4826 = vpack.c.b16 %v4751, %v4750
    %v4827 = vpack.c.b16 %v4753, %v4752
    %v4828 = vpack.c.b16 %v4755, %v4754
    %v4829 = vpack.c.b16 %v4757, %v4756
    %4902 = vmatprep.subr.bf16.mxu0 0
    %4903 = vmatpush1.bf16.msra.mxu0 %v4765
    %4904 = vmatprep.subr.bf16.mxu0 0
    %4905 = vmatpush1.bf16.msra.mxu0 %v4764
    %4906 = vmatprep.subr.bf16.mxu0 0
    %4907 = vmatpush1.bf16.msra.mxu0 %v4763
    %4908 = vmatprep.subr.bf16.mxu0 0
    %4909 = vmatpush1.bf16.msra.mxu0 %v4762
    %4910 = vmatprep.subr.bf16.mxu0 0
    %4911 = vmatpush1.bf16.msra.mxu0 %v4761
    %4912 = vmatprep.subr.bf16.mxu0 0
    %4913 = vmatpush1.bf16.msra.mxu0 %v4760
    %4914 = vmatprep.subr.bf16.mxu0 0
    %4915 = vmatpush1.bf16.msra.mxu0 %v4759
    %4916 = vmatprep.subr.bf16.mxu0 0
    %4917 = vmatpush1.bf16.msra.mxu0 %v4758
    %4918 = vmatprep.subr.bf16.mxu0 0
    %4919 = vmatpush2.bf16.msra.mxu0 %v4773
    %4920 = vmatprep.subr.bf16.mxu0 0
    %4921 = vmatpush2.bf16.msra.mxu0 %v4772
    %4922 = vmatprep.subr.bf16.mxu0 0
    %4923 = vmatpush2.bf16.msra.mxu0 %v4771
    %4924 = vmatprep.subr.bf16.mxu0 0
    %4925 = vmatpush2.bf16.msra.mxu0 %v4770
    %4926 = vmatprep.subr.bf16.mxu0 0
    %4927 = vmatpush2.bf16.msra.mxu0 %v4769
    %4928 = vmatprep.subr.bf16.mxu0 0
    %4929 = vmatpush2.bf16.msra.mxu0 %v4768
    %4930 = vmatprep.subr.bf16.mxu0 0
    %4931 = vmatpush2.bf16.msra.mxu0 %v4767
    %4932 = vmatprep.subr.bf16.mxu0 0
    %4933 = vmatpush2.bf16.msra.mxu0 %v4766
    %4934 = vmatprep.mubr.bf16.mxu0 %v3958
    %4935 = vmatmul.mubr.bf16.gmra.mxu0 %v3606
    %v4936 = vpop.f32.mrf.mxu0
    %v4937 = vadd.f32 0.0, %v4936
    %v4938 = vpop.f32.mrf.mxu0
    %v4939 = vpop.f32.mrf.mxu0
    %v4940 = vadd.f32 0.0, %v4939
    %v4941 = vpop.f32.mrf.mxu0
    %4942 = vmatprep.mubr.bf16.mxu0 %v3959
    %4943 = vmatmul.mubr.bf16.gmra.mxu0 %v3607
    %v4944 = vpop.f32.mrf.mxu0
    %v4945 = vadd.f32 0.0, %v4944
    %v4946 = vpop.f32.mrf.mxu0
    %v4947 = vpop.f32.mrf.mxu0
    %v4948 = vadd.f32 0.0, %v4947
    %v4949 = vpop.f32.mrf.mxu0
    %4950 = vmatprep.mubr.bf16.mxu0 %v3960
    %4951 = vmatmul.mubr.bf16.gmra.mxu0 %v3608
    %v4952 = vpop.f32.mrf.mxu0
    %v4953 = vadd.f32 0.0, %v4952
    %v4954 = vpop.f32.mrf.mxu0
    %v4955 = vpop.f32.mrf.mxu0
    %v4956 = vadd.f32 0.0, %v4955
    %v4957 = vpop.f32.mrf.mxu0
    %4958 = vmatprep.mubr.bf16.mxu0 %v3961
    %4959 = vmatmul.mubr.bf16.gmra.mxu0 %v3609
    %v4960 = vpop.f32.mrf.mxu0
    %v4961 = vadd.f32 0.0, %v4960
    %v4962 = vpop.f32.mrf.mxu0
    %v4963 = vpop.f32.mrf.mxu0
    %v4964 = vadd.f32 0.0, %v4963
    %v4965 = vpop.f32.mrf.mxu0
    %4966 = vmatprep.mubr.bf16.mxu0 %v3962
    %4967 = vmatmul.mubr.bf16.gmra.mxu0 %v3610
    %v4968 = vpop.f32.mrf.mxu0
    %v4969 = vadd.f32 0.0, %v4968
    %v4970 = vpop.f32.mrf.mxu0
    %v4971 = vpop.f32.mrf.mxu0
    %v4972 = vadd.f32 0.0, %v4971
    %v4973 = vpop.f32.mrf.mxu0
    %4974 = vmatprep.mubr.bf16.mxu0 %v3963
    %4975 = vmatmul.mubr.bf16.gmra.mxu0 %v3611
    %v4976 = vpop.f32.mrf.mxu0
    %v4977 = vadd.f32 0.0, %v4976
    %v4978 = vpop.f32.mrf.mxu0
    %v4979 = vpop.f32.mrf.mxu0
    %v4980 = vadd.f32 0.0, %v4979
    %v4981 = vpop.f32.mrf.mxu0
    %4982 = vmatprep.mubr.bf16.mxu0 %v3964
    %4983 = vmatmul.mubr.bf16.gmra.mxu0 %v3612
    %v4984 = vpop.f32.mrf.mxu0
    %v4985 = vadd.f32 0.0, %v4984
    %v4986 = vpop.f32.mrf.mxu0
    %v4987 = vpop.f32.mrf.mxu0
    %v4988 = vadd.f32 0.0, %v4987
    %v4989 = vpop.f32.mrf.mxu0
    %4990 = vmatprep.mubr.bf16.mxu0 %v3965
    %4991 = vmatmul.mubr.bf16.gmra.mxu0 %v3613
    %v4992 = vpop.f32.mrf.mxu0
    %v4993 = vadd.f32 0.0, %v4992
    %v4994 = vpop.f32.mrf.mxu0
    %v4995 = vpop.f32.mrf.mxu0
    %v4996 = vadd.f32 0.0, %v4995
    %v4997 = vpop.f32.mrf.mxu0
    %4998 = vmatprep.mubr.bf16.mxu0 %v3966
    %4999 = vmatmul.mubr.bf16.gmra.mxu0 %v3614
    %v5000 = vpop.f32.mrf.mxu0
    %v5001 = vadd.f32 0.0, %v5000
    %v5002 = vpop.f32.mrf.mxu0
    %v5003 = vpop.f32.mrf.mxu0
    %v5004 = vadd.f32 0.0, %v5003
    %v5005 = vpop.f32.mrf.mxu0
    %5006 = vmatprep.mubr.bf16.mxu0 %v3967
    %5007 = vmatmul.mubr.bf16.gmra.mxu0 %v3615
    %v5008 = vpop.f32.mrf.mxu0
    %v5009 = vadd.f32 0.0, %v5008
    %v5010 = vpop.f32.mrf.mxu0
    %v5011 = vpop.f32.mrf.mxu0
    %v5012 = vadd.f32 0.0, %v5011
    %v5013 = vpop.f32.mrf.mxu0
    %5014 = vmatprep.mubr.bf16.mxu0 %v3968
    %5015 = vmatmul.mubr.bf16.gmra.mxu0 %v3616
    %v5016 = vpop.f32.mrf.mxu0
    %v5017 = vadd.f32 0.0, %v5016
    %v5018 = vpop.f32.mrf.mxu0
    %v5019 = vpop.f32.mrf.mxu0
    %v5020 = vadd.f32 0.0, %v5019
    %v5021 = vpop.f32.mrf.mxu0
    %5022 = vmatprep.mubr.bf16.mxu0 %v3969
    %5023 = vmatmul.mubr.bf16.gmra.mxu0 %v3617
    %v5024 = vpop.f32.mrf.mxu0
    %v5025 = vadd.f32 0.0, %v5024
    %v5026 = vpop.f32.mrf.mxu0
    %v5027 = vpop.f32.mrf.mxu0
    %v5028 = vadd.f32 0.0, %v5027
    %v5029 = vpop.f32.mrf.mxu0
    %5030 = vmatprep.mubr.bf16.mxu0 %v3970
    %5031 = vmatmul.mubr.bf16.gmra.mxu0 %v3618
    %v5032 = vpop.f32.mrf.mxu0
    %v5033 = vadd.f32 0.0, %v5032
    %v5034 = vpop.f32.mrf.mxu0
    %v5035 = vpop.f32.mrf.mxu0
    %v5036 = vadd.f32 0.0, %v5035
    %v5037 = vpop.f32.mrf.mxu0
    %5038 = vmatprep.mubr.bf16.mxu0 %v3971
    %5039 = vmatmul.mubr.bf16.gmra.mxu0 %v3619
    %v5040 = vpop.f32.mrf.mxu0
    %v5041 = vadd.f32 0.0, %v5040
    %v5042 = vpop.f32.mrf.mxu0
    %v5043 = vpop.f32.mrf.mxu0
    %v5044 = vadd.f32 0.0, %v5043
    %v5045 = vpop.f32.mrf.mxu0
    %5046 = vmatprep.mubr.bf16.mxu0 %v3972
    %5047 = vmatmul.mubr.bf16.gmra.mxu0 %v3620
    %v5048 = vpop.f32.mrf.mxu0
    %v5049 = vadd.f32 0.0, %v5048
    %v5050 = vpop.f32.mrf.mxu0
    %v5051 = vpop.f32.mrf.mxu0
    %v5052 = vadd.f32 0.0, %v5051
    %v5053 = vpop.f32.mrf.mxu0
    %5054 = vmatprep.mubr.bf16.mxu0 %v3973
    %5055 = vmatmul.mubr.bf16.gmra.mxu0 %v3621
    %v5056 = vpop.f32.mrf.mxu0
    %v5057 = vadd.f32 0.0, %v5056
    %v5058 = vpop.f32.mrf.mxu0
    %v5059 = vpop.f32.mrf.mxu0
    %v5060 = vadd.f32 0.0, %v5059
    %v5061 = vpop.f32.mrf.mxu0
    %5062 = vmatprep.mubr.bf16.mxu0 %v3974
    %5063 = vmatmul.mubr.bf16.gmra.mxu0 %v3622
    %v5064 = vpop.f32.mrf.mxu0
    %v5065 = vadd.f32 0.0, %v5064
    %v5066 = vpop.f32.mrf.mxu0
    %v5067 = vpop.f32.mrf.mxu0
    %v5068 = vadd.f32 0.0, %v5067
    %v5069 = vpop.f32.mrf.mxu0
    %5070 = vmatprep.mubr.bf16.mxu0 %v3975
    %5071 = vmatmul.mubr.bf16.gmra.mxu0 %v3623
    %v5072 = vpop.f32.mrf.mxu0
    %v5073 = vadd.f32 0.0, %v5072
    %v5074 = vpop.f32.mrf.mxu0
    %v5075 = vpop.f32.mrf.mxu0
    %v5076 = vadd.f32 0.0, %v5075
    %v5077 = vpop.f32.mrf.mxu0
    %5078 = vmatprep.mubr.bf16.mxu0 %v3976
    %5079 = vmatmul.mubr.bf16.gmra.mxu0 %v3624
    %v5080 = vpop.f32.mrf.mxu0
    %v5081 = vadd.f32 0.0, %v5080
    %v5082 = vpop.f32.mrf.mxu0
    %v5083 = vpop.f32.mrf.mxu0
    %v5084 = vadd.f32 0.0, %v5083
    %v5085 = vpop.f32.mrf.mxu0
    %5086 = vmatprep.mubr.bf16.mxu0 %v3977
    %5087 = vmatmul.mubr.bf16.gmra.mxu0 %v3625
    %v5088 = vpop.f32.mrf.mxu0
    %v5089 = vadd.f32 0.0, %v5088
    %v5090 = vpop.f32.mrf.mxu0
    %v5091 = vpop.f32.mrf.mxu0
    %v5092 = vadd.f32 0.0, %v5091
    %v5093 = vpop.f32.mrf.mxu0
    %5094 = vmatprep.mubr.bf16.mxu0 %v3978
    %5095 = vmatmul.mubr.bf16.gmra.mxu0 %v3626
    %v5096 = vpop.f32.mrf.mxu0
    %v5097 = vadd.f32 0.0, %v5096
    %v5098 = vpop.f32.mrf.mxu0
    %v5099 = vpop.f32.mrf.mxu0
    %v5100 = vadd.f32 0.0, %v5099
    %v5101 = vpop.f32.mrf.mxu0
    %5102 = vmatprep.mubr.bf16.mxu0 %v3979
    %5103 = vmatmul.mubr.bf16.gmra.mxu0 %v3627
    %v5104 = vpop.f32.mrf.mxu0
    %v5105 = vadd.f32 0.0, %v5104
    %v5106 = vpop.f32.mrf.mxu0
    %v5107 = vpop.f32.mrf.mxu0
    %v5108 = vadd.f32 0.0, %v5107
    %v5109 = vpop.f32.mrf.mxu0
    %5110 = vmatprep.mubr.bf16.mxu0 %v3980
    %5111 = vmatmul.mubr.bf16.gmra.mxu0 %v3628
    %v5112 = vpop.f32.mrf.mxu0
    %v5113 = vadd.f32 0.0, %v5112
    %v5114 = vpop.f32.mrf.mxu0
    %v5115 = vpop.f32.mrf.mxu0
    %v5116 = vadd.f32 0.0, %v5115
    %v5117 = vpop.f32.mrf.mxu0
    %5118 = vmatprep.mubr.bf16.mxu0 %v3981
    %5119 = vmatmul.mubr.bf16.gmra.mxu0 %v3629
    %v5120 = vpop.f32.mrf.mxu0
    %v5121 = vadd.f32 0.0, %v5120
    %v5122 = vpop.f32.mrf.mxu0
    %v5123 = vpop.f32.mrf.mxu0
    %v5124 = vadd.f32 0.0, %v5123
    %v5125 = vpop.f32.mrf.mxu0
    %5126 = vmatprep.mubr.bf16.mxu0 %v3982
    %5127 = vmatmul.mubr.bf16.gmra.mxu0 %v3630
    %v5128 = vpop.f32.mrf.mxu0
    %v5129 = vadd.f32 0.0, %v5128
    %v5130 = vpop.f32.mrf.mxu0
    %v5131 = vpop.f32.mrf.mxu0
    %v5132 = vadd.f32 0.0, %v5131
    %v5133 = vpop.f32.mrf.mxu0
    %5134 = vmatprep.mubr.bf16.mxu0 %v3983
    %5135 = vmatmul.mubr.bf16.gmra.mxu0 %v3631
    %v5136 = vpop.f32.mrf.mxu0
    %v5137 = vadd.f32 0.0, %v5136
    %v5138 = vpop.f32.mrf.mxu0
    %v5139 = vpop.f32.mrf.mxu0
    %v5140 = vadd.f32 0.0, %v5139
    %v5141 = vpop.f32.mrf.mxu0
    %5142 = vmatprep.mubr.bf16.mxu0 %v3984
    %5143 = vmatmul.mubr.bf16.gmra.mxu0 %v3632
    %v5144 = vpop.f32.mrf.mxu0
    %v5145 = vadd.f32 0.0, %v5144
    %v5146 = vpop.f32.mrf.mxu0
    %v5147 = vpop.f32.mrf.mxu0
    %v5148 = vadd.f32 0.0, %v5147
    %v5149 = vpop.f32.mrf.mxu0
    %5150 = vmatprep.mubr.bf16.mxu0 %v3985
    %5151 = vmatmul.mubr.bf16.gmra.mxu0 %v3633
    %v5152 = vpop.f32.mrf.mxu0
    %v5153 = vadd.f32 0.0, %v5152
    %v5154 = vpop.f32.mrf.mxu0
    %v5155 = vpop.f32.mrf.mxu0
    %v5156 = vadd.f32 0.0, %v5155
    %v5157 = vpop.f32.mrf.mxu0
    %5158 = vmatprep.mubr.bf16.mxu0 %v3986
    %5159 = vmatmul.mubr.bf16.gmra.mxu0 %v3634
    %v5160 = vpop.f32.mrf.mxu0
    %v5161 = vadd.f32 0.0, %v5160
    %v5162 = vpop.f32.mrf.mxu0
    %v5163 = vpop.f32.mrf.mxu0
    %v5164 = vadd.f32 0.0, %v5163
    %v5165 = vpop.f32.mrf.mxu0
    %5166 = vmatprep.mubr.bf16.mxu0 %v3987
    %5167 = vmatmul.mubr.bf16.gmra.mxu0 %v3635
    %v5168 = vpop.f32.mrf.mxu0
    %v5169 = vadd.f32 0.0, %v5168
    %v5170 = vpop.f32.mrf.mxu0
    %v5171 = vpop.f32.mrf.mxu0
    %v5172 = vadd.f32 0.0, %v5171
    %v5173 = vpop.f32.mrf.mxu0
    %5174 = vmatprep.mubr.bf16.mxu0 %v3988
    %5175 = vmatmul.mubr.bf16.gmra.mxu0 %v3636
    %v5176 = vpop.f32.mrf.mxu0
    %v5177 = vadd.f32 0.0, %v5176
    %v5178 = vpop.f32.mrf.mxu0
    %v5179 = vpop.f32.mrf.mxu0
    %v5180 = vadd.f32 0.0, %v5179
    %v5181 = vpop.f32.mrf.mxu0
    %5182 = vmatprep.mubr.bf16.mxu0 %v3989
    %5183 = vmatmul.mubr.bf16.gmra.mxu0 %v3637
    %v5184 = vpop.f32.mrf.mxu0
    %v5185 = vadd.f32 0.0, %v5184
    %v5186 = vpop.f32.mrf.mxu0
    %v5187 = vpop.f32.mrf.mxu0
    %v5188 = vadd.f32 0.0, %v5187
    %v5189 = vpop.f32.mrf.mxu0
    %5190 = vdwg.mxu0
    %5191 = vmatprep.subr.bf16.mxu0 0
    %5192 = vmatpush1.bf16.msra.mxu0 %v4781
    %5193 = vmatprep.subr.bf16.mxu0 0
    %5194 = vmatpush1.bf16.msra.mxu0 %v4780
    %5195 = vmatprep.subr.bf16.mxu0 0
    %5196 = vmatpush1.bf16.msra.mxu0 %v4779
    %5197 = vmatprep.subr.bf16.mxu0 0
    %5198 = vmatpush1.bf16.msra.mxu0 %v4778
    %5199 = vmatprep.subr.bf16.mxu0 0
    %5200 = vmatpush1.bf16.msra.mxu0 %v4777
    %5201 = vmatprep.subr.bf16.mxu0 0
    %5202 = vmatpush1.bf16.msra.mxu0 %v4776
    %5203 = vmatprep.subr.bf16.mxu0 0
    %5204 = vmatpush1.bf16.msra.mxu0 %v4775
    %5205 = vmatprep.subr.bf16.mxu0 0
    %5206 = vmatpush1.bf16.msra.mxu0 %v4774
    %5207 = vmatprep.subr.bf16.mxu0 0
    %5208 = vmatpush2.bf16.msra.mxu0 %v4789
    %5209 = vmatprep.subr.bf16.mxu0 0
    %5210 = vmatpush2.bf16.msra.mxu0 %v4788
    %5211 = vmatprep.subr.bf16.mxu0 0
    %5212 = vmatpush2.bf16.msra.mxu0 %v4787
    %5213 = vmatprep.subr.bf16.mxu0 0
    %5214 = vmatpush2.bf16.msra.mxu0 %v4786
    %5215 = vmatprep.subr.bf16.mxu0 0
    %5216 = vmatpush2.bf16.msra.mxu0 %v4785
    %5217 = vmatprep.subr.bf16.mxu0 0
    %5218 = vmatpush2.bf16.msra.mxu0 %v4784
    %5219 = vmatprep.subr.bf16.mxu0 0
    %5220 = vmatpush2.bf16.msra.mxu0 %v4783
    %5221 = vmatprep.subr.bf16.mxu0 0
    %5222 = vmatpush2.bf16.msra.mxu0 %v4782
    %5223 = vmatprep.mubr.bf16.mxu0 %v3607
    %5224 = vmatmul.mubr.bf16.gmra.mxu0 %v4214
    %v5225 = vpop.f32.mrf.mxu0
    %v5226 = vadd.f32 %v4937, %v5225
    %v5227 = vpop.f32.mrf.mxu0
    %v5228 = vpop.f32.mrf.mxu0
    %v5229 = vadd.f32 %v4940, %v5228
    %v5230 = vpop.f32.mrf.mxu0
    %5231 = vmatprep.mubr.bf16.mxu0 %v3608
    %5232 = vmatmul.mubr.bf16.gmra.mxu0 %v4215
    %v5233 = vpop.f32.mrf.mxu0
    %v5234 = vadd.f32 %v4945, %v5233
    %v5235 = vpop.f32.mrf.mxu0
    %v5236 = vpop.f32.mrf.mxu0
    %v5237 = vadd.f32 %v4948, %v5236
    %v5238 = vpop.f32.mrf.mxu0
    %5239 = vmatprep.mubr.bf16.mxu0 %v3609
    %5240 = vmatmul.mubr.bf16.gmra.mxu0 %v4216
    %v5241 = vpop.f32.mrf.mxu0
    %v5242 = vadd.f32 %v4953, %v5241
    %v5243 = vpop.f32.mrf.mxu0
    %v5244 = vpop.f32.mrf.mxu0
    %v5245 = vadd.f32 %v4956, %v5244
    %v5246 = vpop.f32.mrf.mxu0
    %5247 = vmatprep.mubr.bf16.mxu0 %v3610
    %5248 = vmatmul.mubr.bf16.gmra.mxu0 %v4217
    %v5249 = vpop.f32.mrf.mxu0
    %v5250 = vadd.f32 %v4961, %v5249
    %v5251 = vpop.f32.mrf.mxu0
    %v5252 = vpop.f32.mrf.mxu0
    %v5253 = vadd.f32 %v4964, %v5252
    %v5254 = vpop.f32.mrf.mxu0
    %5255 = vmatprep.mubr.bf16.mxu0 %v3611
    %5256 = vmatmul.mubr.bf16.gmra.mxu0 %v4218
    %v5257 = vpop.f32.mrf.mxu0
    %v5258 = vadd.f32 %v4969, %v5257
    %v5259 = vpop.f32.mrf.mxu0
    %v5260 = vpop.f32.mrf.mxu0
    %v5261 = vadd.f32 %v4972, %v5260
    %v5262 = vpop.f32.mrf.mxu0
    %5263 = vmatprep.mubr.bf16.mxu0 %v3612
    %5264 = vmatmul.mubr.bf16.gmra.mxu0 %v4219
    %v5265 = vpop.f32.mrf.mxu0
    %v5266 = vadd.f32 %v4977, %v5265
    %v5267 = vpop.f32.mrf.mxu0
    %v5268 = vpop.f32.mrf.mxu0
    %v5269 = vadd.f32 %v4980, %v5268
    %v5270 = vpop.f32.mrf.mxu0
    %5271 = vmatprep.mubr.bf16.mxu0 %v3613
    %5272 = vmatmul.mubr.bf16.gmra.mxu0 %v4220
    %v5273 = vpop.f32.mrf.mxu0
    %v5274 = vadd.f32 %v4985, %v5273
    %v5275 = vpop.f32.mrf.mxu0
    %v5276 = vpop.f32.mrf.mxu0
    %v5277 = vadd.f32 %v4988, %v5276
    %v5278 = vpop.f32.mrf.mxu0
    %5279 = vmatprep.mubr.bf16.mxu0 %v3614
    %5280 = vmatmul.mubr.bf16.gmra.mxu0 %v4221
    %v5281 = vpop.f32.mrf.mxu0
    %v5282 = vadd.f32 %v4993, %v5281
    %v5283 = vpop.f32.mrf.mxu0
    %v5284 = vpop.f32.mrf.mxu0
    %v5285 = vadd.f32 %v4996, %v5284
    %v5286 = vpop.f32.mrf.mxu0
    %5287 = vmatprep.mubr.bf16.mxu0 %v3615
    %5288 = vmatmul.mubr.bf16.gmra.mxu0 %v4222
    %v5289 = vpop.f32.mrf.mxu0
    %v5290 = vadd.f32 %v5001, %v5289
    %v5291 = vpop.f32.mrf.mxu0
    %v5292 = vpop.f32.mrf.mxu0
    %v5293 = vadd.f32 %v5004, %v5292
    %v5294 = vpop.f32.mrf.mxu0
    %5295 = vmatprep.mubr.bf16.mxu0 %v3616
    %5296 = vmatmul.mubr.bf16.gmra.mxu0 %v4223
    %v5297 = vpop.f32.mrf.mxu0
    %v5298 = vadd.f32 %v5009, %v5297
    %v5299 = vpop.f32.mrf.mxu0
    %v5300 = vpop.f32.mrf.mxu0
    %v5301 = vadd.f32 %v5012, %v5300
    %v5302 = vpop.f32.mrf.mxu0
    %5303 = vmatprep.mubr.bf16.mxu0 %v3617
    %5304 = vmatmul.mubr.bf16.gmra.mxu0 %v4224
    %v5305 = vpop.f32.mrf.mxu0
    %v5306 = vadd.f32 %v5017, %v5305
    %v5307 = vpop.f32.mrf.mxu0
    %v5308 = vpop.f32.mrf.mxu0
    %v5309 = vadd.f32 %v5020, %v5308
    %v5310 = vpop.f32.mrf.mxu0
    %5311 = vmatprep.mubr.bf16.mxu0 %v3618
    %5312 = vmatmul.mubr.bf16.gmra.mxu0 %v4225
    %v5313 = vpop.f32.mrf.mxu0
    %v5314 = vadd.f32 %v5025, %v5313
    %v5315 = vpop.f32.mrf.mxu0
    %v5316 = vpop.f32.mrf.mxu0
    %v5317 = vadd.f32 %v5028, %v5316
    %v5318 = vpop.f32.mrf.mxu0
    %5319 = vmatprep.mubr.bf16.mxu0 %v3619
    %5320 = vmatmul.mubr.bf16.gmra.mxu0 %v4226
    %v5321 = vpop.f32.mrf.mxu0
    %v5322 = vadd.f32 %v5033, %v5321
    %v5323 = vpop.f32.mrf.mxu0
    %v5324 = vpop.f32.mrf.mxu0
    %v5325 = vadd.f32 %v5036, %v5324
    %v5326 = vpop.f32.mrf.mxu0
    %5327 = vmatprep.mubr.bf16.mxu0 %v3620
    %5328 = vmatmul.mubr.bf16.gmra.mxu0 %v4227
    %v5329 = vpop.f32.mrf.mxu0
    %v5330 = vadd.f32 %v5041, %v5329
    %v5331 = vpop.f32.mrf.mxu0
    %v5332 = vpop.f32.mrf.mxu0
    %v5333 = vadd.f32 %v5044, %v5332
    %v5334 = vpop.f32.mrf.mxu0
    %5335 = vmatprep.mubr.bf16.mxu0 %v3621
    %5336 = vmatmul.mubr.bf16.gmra.mxu0 %v4228
    %v5337 = vpop.f32.mrf.mxu0
    %v5338 = vadd.f32 %v5049, %v5337
    %v5339 = vpop.f32.mrf.mxu0
    %v5340 = vpop.f32.mrf.mxu0
    %v5341 = vadd.f32 %v5052, %v5340
    %v5342 = vpop.f32.mrf.mxu0
    %5343 = vmatprep.mubr.bf16.mxu0 %v4246
    %5344 = vmatmul.mubr.bf16.gmra.mxu0 %v4229
    %v5345 = vpop.f32.mrf.mxu0
    %v5346 = vadd.f32 %v5057, %v5345
    %v5347 = vpop.f32.mrf.mxu0
    %v5348 = vpop.f32.mrf.mxu0
    %v5349 = vadd.f32 %v5060, %v5348
    %v5350 = vpop.f32.mrf.mxu0
    %5351 = vmatprep.mubr.bf16.mxu0 %v3623
    %5352 = vmatmul.mubr.bf16.gmra.mxu0 %v4230
    %v5353 = vpop.f32.mrf.mxu0
    %v5354 = vadd.f32 %v5065, %v5353
    %v5355 = vpop.f32.mrf.mxu0
    %v5356 = vpop.f32.mrf.mxu0
    %v5357 = vadd.f32 %v5068, %v5356
    %v5358 = vpop.f32.mrf.mxu0
    %5359 = vmatprep.mubr.bf16.mxu0 %v3624
    %5360 = vmatmul.mubr.bf16.gmra.mxu0 %v4231
    %v5361 = vpop.f32.mrf.mxu0
    %v5362 = vadd.f32 %v5073, %v5361
    %v5363 = vpop.f32.mrf.mxu0
    %v5364 = vpop.f32.mrf.mxu0
    %v5365 = vadd.f32 %v5076, %v5364
    %v5366 = vpop.f32.mrf.mxu0
    %5367 = vmatprep.mubr.bf16.mxu0 %v3625
    %5368 = vmatmul.mubr.bf16.gmra.mxu0 %v4232
    %v5369 = vpop.f32.mrf.mxu0
    %v5370 = vadd.f32 %v5081, %v5369
    %v5371 = vpop.f32.mrf.mxu0
    %v5372 = vpop.f32.mrf.mxu0
    %v5373 = vadd.f32 %v5084, %v5372
    %v5374 = vpop.f32.mrf.mxu0
    %5375 = vmatprep.mubr.bf16.mxu0 %v3626
    %5376 = vmatmul.mubr.bf16.gmra.mxu0 %v4233
    %v5377 = vpop.f32.mrf.mxu0
    %v5378 = vadd.f32 %v5089, %v5377
    %v5379 = vpop.f32.mrf.mxu0
    %v5380 = vpop.f32.mrf.mxu0
    %v5381 = vadd.f32 %v5092, %v5380
    %v5382 = vpop.f32.mrf.mxu0
    %5383 = vmatprep.mubr.bf16.mxu0 %v3627
    %5384 = vmatmul.mubr.bf16.gmra.mxu0 %v4234
    %v5385 = vpop.f32.mrf.mxu0
    %v5386 = vadd.f32 %v5097, %v5385
    %v5387 = vpop.f32.mrf.mxu0
    %v5388 = vpop.f32.mrf.mxu0
    %v5389 = vadd.f32 %v5100, %v5388
    %v5390 = vpop.f32.mrf.mxu0
    %5391 = vmatprep.mubr.bf16.mxu0 %v3628
    %5392 = vmatmul.mubr.bf16.gmra.mxu0 %v4235
    %v5393 = vpop.f32.mrf.mxu0
    %v5394 = vadd.f32 %v5105, %v5393
    %v5395 = vpop.f32.mrf.mxu0
    %v5396 = vpop.f32.mrf.mxu0
    %v5397 = vadd.f32 %v5108, %v5396
    %v5398 = vpop.f32.mrf.mxu0
    %5399 = vmatprep.mubr.bf16.mxu0 %v3629
    %5400 = vmatmul.mubr.bf16.gmra.mxu0 %v4236
    %v5401 = vpop.f32.mrf.mxu0
    %v5402 = vadd.f32 %v5113, %v5401
    %v5403 = vpop.f32.mrf.mxu0
    %v5404 = vpop.f32.mrf.mxu0
    %v5405 = vadd.f32 %v5116, %v5404
    %v5406 = vpop.f32.mrf.mxu0
    %5407 = vmatprep.mubr.bf16.mxu0 %v3630
    %5408 = vmatmul.mubr.bf16.gmra.mxu0 %v4237
    %v5409 = vpop.f32.mrf.mxu0
    %v5410 = vadd.f32 %v5121, %v5409
    %v5411 = vpop.f32.mrf.mxu0
    %v5412 = vpop.f32.mrf.mxu0
    %v5413 = vadd.f32 %v5124, %v5412
    %v5414 = vpop.f32.mrf.mxu0
    %5415 = vmatprep.mubr.bf16.mxu0 %v3631
    %5416 = vmatmul.mubr.bf16.gmra.mxu0 %v4238
    %v5417 = vpop.f32.mrf.mxu0
    %v5418 = vadd.f32 %v5129, %v5417
    %v5419 = vpop.f32.mrf.mxu0
    %v5420 = vpop.f32.mrf.mxu0
    %v5421 = vadd.f32 %v5132, %v5420
    %v5422 = vpop.f32.mrf.mxu0
    %5423 = vmatprep.mubr.bf16.mxu0 %v3632
    %5424 = vmatmul.mubr.bf16.gmra.mxu0 %v4239
    %v5425 = vpop.f32.mrf.mxu0
    %v5426 = vadd.f32 %v5137, %v5425
    %v5427 = vpop.f32.mrf.mxu0
    %v5428 = vpop.f32.mrf.mxu0
    %v5429 = vadd.f32 %v5140, %v5428
    %v5430 = vpop.f32.mrf.mxu0
    %5431 = vmatprep.mubr.bf16.mxu0 %v3633
    %5432 = vmatmul.mubr.bf16.gmra.mxu0 %v4240
    %v5433 = vpop.f32.mrf.mxu0
    %v5434 = vadd.f32 %v5145, %v5433
    %v5435 = vpop.f32.mrf.mxu0
    %v5436 = vpop.f32.mrf.mxu0
    %v5437 = vadd.f32 %v5148, %v5436
    %v5438 = vpop.f32.mrf.mxu0
    %5439 = vmatprep.mubr.bf16.mxu0 %v3634
    %5440 = vmatmul.mubr.bf16.gmra.mxu0 %v4241
    %v5441 = vpop.f32.mrf.mxu0
    %v5442 = vadd.f32 %v5153, %v5441
    %v5443 = vpop.f32.mrf.mxu0
    %v5444 = vpop.f32.mrf.mxu0
    %v5445 = vadd.f32 %v5156, %v5444
    %v5446 = vpop.f32.mrf.mxu0
    %5447 = vmatprep.mubr.bf16.mxu0 %v3635
    %5448 = vmatmul.mubr.bf16.gmra.mxu0 %v4242
    %v5449 = vpop.f32.mrf.mxu0
    %v5450 = vadd.f32 %v5161, %v5449
    %v5451 = vpop.f32.mrf.mxu0
    %v5452 = vpop.f32.mrf.mxu0
    %v5453 = vadd.f32 %v5164, %v5452
    %v5454 = vpop.f32.mrf.mxu0
    %5455 = vmatprep.mubr.bf16.mxu0 %v3636
    %5456 = vmatmul.mubr.bf16.gmra.mxu0 %v4243
    %v5457 = vpop.f32.mrf.mxu0
    %v5458 = vadd.f32 %v5169, %v5457
    %v5459 = vpop.f32.mrf.mxu0
    %v5460 = vpop.f32.mrf.mxu0
    %v5461 = vadd.f32 %v5172, %v5460
    %v5462 = vpop.f32.mrf.mxu0
    %5463 = vmatprep.mubr.bf16.mxu0 %v3637
    %5464 = vmatmul.mubr.bf16.gmra.mxu0 %v4244
    %v5465 = vpop.f32.mrf.mxu0
    %v5466 = vadd.f32 %v5177, %v5465
    %v5467 = vpop.f32.mrf.mxu0
    %v5468 = vpop.f32.mrf.mxu0
    %v5469 = vadd.f32 %v5180, %v5468
    %v5470 = vpop.f32.mrf.mxu0
    %5471 = vmatprep.mubr.bf16.mxu0 %v4247
    %5472 = vmatmul.mubr.bf16.gmra.mxu0 %v4245
    %v5473 = vpop.f32.mrf.mxu0
    %v5474 = vadd.f32 %v5185, %v5473
    %v5475 = vpop.f32.mrf.mxu0
    %v5476 = vpop.f32.mrf.mxu0
    %v5477 = vadd.f32 %v5188, %v5476
    %v5478 = vpop.f32.mrf.mxu0
    %5479 = vdwg.mxu0
    %5480 = vmatprep.subr.bf16.mxu0 0
    %5481 = vmatpush1.bf16.msra.mxu0 %v4797
    %5482 = vmatprep.subr.bf16.mxu0 0
    %5483 = vmatpush1.bf16.msra.mxu0 %v4796
    %5484 = vmatprep.subr.bf16.mxu0 0
    %5485 = vmatpush1.bf16.msra.mxu0 %v4795
    %5486 = vmatprep.subr.bf16.mxu0 0
    %5487 = vmatpush1.bf16.msra.mxu0 %v4794
    %5488 = vmatprep.subr.bf16.mxu0 0
    %5489 = vmatpush1.bf16.msra.mxu0 %v4793
    %5490 = vmatprep.subr.bf16.mxu0 0
    %5491 = vmatpush1.bf16.msra.mxu0 %v4792
    %5492 = vmatprep.subr.bf16.mxu0 0
    %5493 = vmatpush1.bf16.msra.mxu0 %v4791
    %5494 = vmatprep.subr.bf16.mxu0 0
    %5495 = vmatpush1.bf16.msra.mxu0 %v4790
    %5496 = vmatprep.subr.bf16.mxu0 0
    %5497 = vmatpush2.bf16.msra.mxu0 %v4805
    %5498 = vmatprep.subr.bf16.mxu0 0
    %5499 = vmatpush2.bf16.msra.mxu0 %v4804
    %5500 = vmatprep.subr.bf16.mxu0 0
    %5501 = vmatpush2.bf16.msra.mxu0 %v4803
    %5502 = vmatprep.subr.bf16.mxu0 0
    %5503 = vmatpush2.bf16.msra.mxu0 %v4802
    %5504 = vmatprep.subr.bf16.mxu0 0
    %5505 = vmatpush2.bf16.msra.mxu0 %v4801
    %5506 = vmatprep.subr.bf16.mxu0 0
    %5507 = vmatpush2.bf16.msra.mxu0 %v4800
    %5508 = vmatprep.subr.bf16.mxu0 0
    %5509 = vmatpush2.bf16.msra.mxu0 %v4799
    %5510 = vmatprep.subr.bf16.mxu0 0
    %5511 = vmatpush2.bf16.msra.mxu0 %v4798
    %5512 = vmatprep.mubr.bf16.mxu0 %v4215
    %5513 = vmatmul.mubr.bf16.gmra.mxu0 %v3959
    %v5514 = vpop.f32.mrf.mxu0
    %v5515 = vadd.f32 %v5226, %v5514
    %v5516 = vpop.f32.mrf.mxu0
    %v5517 = vpop.f32.mrf.mxu0
    %v5518 = vadd.f32 %v5229, %v5517
    %v5519 = vpop.f32.mrf.mxu0
    %5520 = vmatprep.mubr.bf16.mxu0 %v4216
    %5521 = vmatmul.mubr.bf16.gmra.mxu0 %v3960
    %v5522 = vpop.f32.mrf.mxu0
    %v5523 = vadd.f32 %v5234, %v5522
    %v5524 = vpop.f32.mrf.mxu0
    %v5525 = vpop.f32.mrf.mxu0
    %v5526 = vadd.f32 %v5237, %v5525
    %v5527 = vpop.f32.mrf.mxu0
    %5528 = vmatprep.mubr.bf16.mxu0 %v4217
    %5529 = vmatmul.mubr.bf16.gmra.mxu0 %v3961
    %v5530 = vpop.f32.mrf.mxu0
    %v5531 = vadd.f32 %v5242, %v5530
    %v5532 = vpop.f32.mrf.mxu0
    %v5533 = vpop.f32.mrf.mxu0
    %v5534 = vadd.f32 %v5245, %v5533
    %v5535 = vpop.f32.mrf.mxu0
    %5536 = vmatprep.mubr.bf16.mxu0 %v4218
    %5537 = vmatmul.mubr.bf16.gmra.mxu0 %v3962
    %v5538 = vpop.f32.mrf.mxu0
    %v5539 = vadd.f32 %v5250, %v5538
    %v5540 = vpop.f32.mrf.mxu0
    %v5541 = vpop.f32.mrf.mxu0
    %v5542 = vadd.f32 %v5253, %v5541
    %v5543 = vpop.f32.mrf.mxu0
    %5544 = vmatprep.mubr.bf16.mxu0 %v4219
    %5545 = vmatmul.mubr.bf16.gmra.mxu0 %v3963
    %v5546 = vpop.f32.mrf.mxu0
    %v5547 = vadd.f32 %v5258, %v5546
    %v5548 = vpop.f32.mrf.mxu0
    %v5549 = vpop.f32.mrf.mxu0
    %v5550 = vadd.f32 %v5261, %v5549
    %v5551 = vpop.f32.mrf.mxu0
    %5552 = vmatprep.mubr.bf16.mxu0 %v4220
    %5553 = vmatmul.mubr.bf16.gmra.mxu0 %v3964
    %v5554 = vpop.f32.mrf.mxu0
    %v5555 = vadd.f32 %v5266, %v5554
    %v5556 = vpop.f32.mrf.mxu0
    %v5557 = vpop.f32.mrf.mxu0
    %v5558 = vadd.f32 %v5269, %v5557
    %v5559 = vpop.f32.mrf.mxu0
    %5560 = vmatprep.mubr.bf16.mxu0 %v4221
    %5561 = vmatmul.mubr.bf16.gmra.mxu0 %v3965
    %v5562 = vpop.f32.mrf.mxu0
    %v5563 = vadd.f32 %v5274, %v5562
    %v5564 = vpop.f32.mrf.mxu0
    %v5565 = vpop.f32.mrf.mxu0
    %v5566 = vadd.f32 %v5277, %v5565
    %v5567 = vpop.f32.mrf.mxu0
    %5568 = vmatprep.mubr.bf16.mxu0 %v4222
    %5569 = vmatmul.mubr.bf16.gmra.mxu0 %v3966
    %v5570 = vpop.f32.mrf.mxu0
    %v5571 = vadd.f32 %v5282, %v5570
    %v5572 = vpop.f32.mrf.mxu0
    %v5573 = vpop.f32.mrf.mxu0
    %v5574 = vadd.f32 %v5285, %v5573
    %v5575 = vpop.f32.mrf.mxu0
    %5576 = vmatprep.mubr.bf16.mxu0 %v4223
    %5577 = vmatmul.mubr.bf16.gmra.mxu0 %v3967
    %v5578 = vpop.f32.mrf.mxu0
    %v5579 = vadd.f32 %v5290, %v5578
    %v5580 = vpop.f32.mrf.mxu0
    %v5581 = vpop.f32.mrf.mxu0
    %v5582 = vadd.f32 %v5293, %v5581
    %v5583 = vpop.f32.mrf.mxu0
    %5584 = vmatprep.mubr.bf16.mxu0 %v4224
    %5585 = vmatmul.mubr.bf16.gmra.mxu0 %v3968
    %v5586 = vpop.f32.mrf.mxu0
    %v5587 = vadd.f32 %v5298, %v5586
    %v5588 = vpop.f32.mrf.mxu0
    %v5589 = vpop.f32.mrf.mxu0
    %v5590 = vadd.f32 %v5301, %v5589
    %v5591 = vpop.f32.mrf.mxu0
    %5592 = vmatprep.mubr.bf16.mxu0 %v4225
    %5593 = vmatmul.mubr.bf16.gmra.mxu0 %v3969
    %v5594 = vpop.f32.mrf.mxu0
    %v5595 = vadd.f32 %v5306, %v5594
    %v5596 = vpop.f32.mrf.mxu0
    %v5597 = vpop.f32.mrf.mxu0
    %v5598 = vadd.f32 %v5309, %v5597
    %v5599 = vpop.f32.mrf.mxu0
    %5600 = vmatprep.mubr.bf16.mxu0 %v4226
    %5601 = vmatmul.mubr.bf16.gmra.mxu0 %v3970
    %v5602 = vpop.f32.mrf.mxu0
    %v5603 = vadd.f32 %v5314, %v5602
    %v5604 = vpop.f32.mrf.mxu0
    %v5605 = vpop.f32.mrf.mxu0
    %v5606 = vadd.f32 %v5317, %v5605
    %v5607 = vpop.f32.mrf.mxu0
    %5608 = vmatprep.mubr.bf16.mxu0 %v4227
    %5609 = vmatmul.mubr.bf16.gmra.mxu0 %v3971
    %v5610 = vpop.f32.mrf.mxu0
    %v5611 = vadd.f32 %v5322, %v5610
    %v5612 = vpop.f32.mrf.mxu0
    %v5613 = vpop.f32.mrf.mxu0
    %v5614 = vadd.f32 %v5325, %v5613
    %v5615 = vpop.f32.mrf.mxu0
    %5616 = vmatprep.mubr.bf16.mxu0 %v4228
    %5617 = vmatmul.mubr.bf16.gmra.mxu0 %v3972
    %v5618 = vpop.f32.mrf.mxu0
    %v5619 = vadd.f32 %v5330, %v5618
    %v5620 = vpop.f32.mrf.mxu0
    %v5621 = vpop.f32.mrf.mxu0
    %v5622 = vadd.f32 %v5333, %v5621
    %v5623 = vpop.f32.mrf.mxu0
    %5624 = vmatprep.mubr.bf16.mxu0 %v4229
    %5625 = vmatmul.mubr.bf16.gmra.mxu0 %v3973
    %v5626 = vpop.f32.mrf.mxu0
    %v5627 = vadd.f32 %v5338, %v5626
    %v5628 = vpop.f32.mrf.mxu0
    %v5629 = vpop.f32.mrf.mxu0
    %v5630 = vadd.f32 %v5341, %v5629
    %v5631 = vpop.f32.mrf.mxu0
    %5632 = vmatprep.mubr.bf16.mxu0 %v4284
    %5633 = vmatmul.mubr.bf16.gmra.mxu0 %v4268
    %v5634 = vpop.f32.mrf.mxu0
    %v5635 = vadd.f32 %v5346, %v5634
    %v5636 = vpop.f32.mrf.mxu0
    %v5637 = vpop.f32.mrf.mxu0
    %v5638 = vadd.f32 %v5349, %v5637
    %v5639 = vpop.f32.mrf.mxu0
    %5640 = vmatprep.mubr.bf16.mxu0 %v4231
    %5641 = vmatmul.mubr.bf16.gmra.mxu0 %v3975
    %v5642 = vpop.f32.mrf.mxu0
    %v5643 = vadd.f32 %v5354, %v5642
    %v5644 = vpop.f32.mrf.mxu0
    %v5645 = vpop.f32.mrf.mxu0
    %v5646 = vadd.f32 %v5357, %v5645
    %v5647 = vpop.f32.mrf.mxu0
    %5648 = vmatprep.mubr.bf16.mxu0 %v4232
    %5649 = vmatmul.mubr.bf16.gmra.mxu0 %v3976
    %v5650 = vpop.f32.mrf.mxu0
    %v5651 = vadd.f32 %v5362, %v5650
    %v5652 = vpop.f32.mrf.mxu0
    %v5653 = vpop.f32.mrf.mxu0
    %v5654 = vadd.f32 %v5365, %v5653
    %v5655 = vpop.f32.mrf.mxu0
    %5656 = vmatprep.mubr.bf16.mxu0 %v4233
    %5657 = vmatmul.mubr.bf16.gmra.mxu0 %v3977
    %v5658 = vpop.f32.mrf.mxu0
    %v5659 = vadd.f32 %v5370, %v5658
    %v5660 = vpop.f32.mrf.mxu0
    %v5661 = vpop.f32.mrf.mxu0
    %v5662 = vadd.f32 %v5373, %v5661
    %v5663 = vpop.f32.mrf.mxu0
    %5664 = vmatprep.mubr.bf16.mxu0 %v4234
    %5665 = vmatmul.mubr.bf16.gmra.mxu0 %v3978
    %v5666 = vpop.f32.mrf.mxu0
    %v5667 = vadd.f32 %v5378, %v5666
    %v5668 = vpop.f32.mrf.mxu0
    %v5669 = vpop.f32.mrf.mxu0
    %v5670 = vadd.f32 %v5381, %v5669
    %v5671 = vpop.f32.mrf.mxu0
    %5672 = vmatprep.mubr.bf16.mxu0 %v4235
    %5673 = vmatmul.mubr.bf16.gmra.mxu0 %v3979
    %v5674 = vpop.f32.mrf.mxu0
    %v5675 = vadd.f32 %v5386, %v5674
    %v5676 = vpop.f32.mrf.mxu0
    %v5677 = vpop.f32.mrf.mxu0
    %v5678 = vadd.f32 %v5389, %v5677
    %v5679 = vpop.f32.mrf.mxu0
    %5680 = vmatprep.mubr.bf16.mxu0 %v4236
    %5681 = vmatmul.mubr.bf16.gmra.mxu0 %v3980
    %v5682 = vpop.f32.mrf.mxu0
    %v5683 = vadd.f32 %v5394, %v5682
    %v5684 = vpop.f32.mrf.mxu0
    %v5685 = vpop.f32.mrf.mxu0
    %v5686 = vadd.f32 %v5397, %v5685
    %v5687 = vpop.f32.mrf.mxu0
    %5688 = vmatprep.mubr.bf16.mxu0 %v4237
    %5689 = vmatmul.mubr.bf16.gmra.mxu0 %v3981
    %v5690 = vpop.f32.mrf.mxu0
    %v5691 = vadd.f32 %v5402, %v5690
    %v5692 = vpop.f32.mrf.mxu0
    %v5693 = vpop.f32.mrf.mxu0
    %v5694 = vadd.f32 %v5405, %v5693
    %v5695 = vpop.f32.mrf.mxu0
    %5696 = vmatprep.mubr.bf16.mxu0 %v4238
    %5697 = vmatmul.mubr.bf16.gmra.mxu0 %v3982
    %v5698 = vpop.f32.mrf.mxu0
    %v5699 = vadd.f32 %v5410, %v5698
    %v5700 = vpop.f32.mrf.mxu0
    %v5701 = vpop.f32.mrf.mxu0
    %v5702 = vadd.f32 %v5413, %v5701
    %v5703 = vpop.f32.mrf.mxu0
    %5704 = vmatprep.mubr.bf16.mxu0 %v4239
    %5705 = vmatmul.mubr.bf16.gmra.mxu0 %v3983
    %v5706 = vpop.f32.mrf.mxu0
    %v5707 = vadd.f32 %v5418, %v5706
    %v5708 = vpop.f32.mrf.mxu0
    %v5709 = vpop.f32.mrf.mxu0
    %v5710 = vadd.f32 %v5421, %v5709
    %v5711 = vpop.f32.mrf.mxu0
    %5712 = vmatprep.mubr.bf16.mxu0 %v4240
    %5713 = vmatmul.mubr.bf16.gmra.mxu0 %v3984
    %v5714 = vpop.f32.mrf.mxu0
    %v5715 = vadd.f32 %v5426, %v5714
    %v5716 = vpop.f32.mrf.mxu0
    %v5717 = vpop.f32.mrf.mxu0
    %v5718 = vadd.f32 %v5429, %v5717
    %v5719 = vpop.f32.mrf.mxu0
    %5720 = vmatprep.mubr.bf16.mxu0 %v4241
    %5721 = vmatmul.mubr.bf16.gmra.mxu0 %v3985
    %v5722 = vpop.f32.mrf.mxu0
    %v5723 = vadd.f32 %v5434, %v5722
    %v5724 = vpop.f32.mrf.mxu0
    %v5725 = vpop.f32.mrf.mxu0
    %v5726 = vadd.f32 %v5437, %v5725
    %v5727 = vpop.f32.mrf.mxu0
    %5728 = vmatprep.mubr.bf16.mxu0 %v4242
    %5729 = vmatmul.mubr.bf16.gmra.mxu0 %v3986
    %v5730 = vpop.f32.mrf.mxu0
    %v5731 = vadd.f32 %v5442, %v5730
    %v5732 = vpop.f32.mrf.mxu0
    %v5733 = vpop.f32.mrf.mxu0
    %v5734 = vadd.f32 %v5445, %v5733
    %v5735 = vpop.f32.mrf.mxu0
    %5736 = vmatprep.mubr.bf16.mxu0 %v4243
    %5737 = vmatmul.mubr.bf16.gmra.mxu0 %v3987
    %v5738 = vpop.f32.mrf.mxu0
    %v5739 = vadd.f32 %v5450, %v5738
    %v5740 = vpop.f32.mrf.mxu0
    %v5741 = vpop.f32.mrf.mxu0
    %v5742 = vadd.f32 %v5453, %v5741
    %v5743 = vpop.f32.mrf.mxu0
    %5744 = vmatprep.mubr.bf16.mxu0 %v4244
    %5745 = vmatmul.mubr.bf16.gmra.mxu0 %v3988
    %v5746 = vpop.f32.mrf.mxu0
    %v5747 = vadd.f32 %v5458, %v5746
    %v5748 = vpop.f32.mrf.mxu0
    %v5749 = vpop.f32.mrf.mxu0
    %v5750 = vadd.f32 %v5461, %v5749
    %v5751 = vpop.f32.mrf.mxu0
    %5752 = vmatprep.mubr.bf16.mxu0 %v4245
    %5753 = vmatmul.mubr.bf16.gmra.mxu0 %v3989
    %v5754 = vpop.f32.mrf.mxu0
    %v5755 = vadd.f32 %v5466, %v5754
    %v5756 = vpop.f32.mrf.mxu0
    %v5757 = vpop.f32.mrf.mxu0
    %v5758 = vadd.f32 %v5469, %v5757
    %v5759 = vpop.f32.mrf.mxu0
    %5760 = vmatprep.mubr.bf16.mxu0 %v4285
    %5761 = vmatmul.mubr.bf16.gmra.mxu0 %v4269
    %v5762 = vpop.f32.mrf.mxu0
    %v5763 = vadd.f32 %v5474, %v5762
    %v5764 = vpop.f32.mrf.mxu0
    %v5765 = vpop.f32.mrf.mxu0
    %v5766 = vadd.f32 %v5477, %v5765
    %v5767 = vpop.f32.mrf.mxu0
    %5768 = vdwg.mxu0
    %5769 = vmatprep.subr.bf16.mxu0 0
    %5770 = vmatpush1.bf16.msra.mxu0 %v4813
    %5771 = vmatprep.subr.bf16.mxu0 0
    %5772 = vmatpush1.bf16.msra.mxu0 %v4812
    %5773 = vmatprep.subr.bf16.mxu0 0
    %5774 = vmatpush1.bf16.msra.mxu0 %v4811
    %5775 = vmatprep.subr.bf16.mxu0 0
    %5776 = vmatpush1.bf16.msra.mxu0 %v4810
    %5777 = vmatprep.subr.bf16.mxu0 0
    %5778 = vmatpush1.bf16.msra.mxu0 %v4809
    %5779 = vmatprep.subr.bf16.mxu0 0
    %5780 = vmatpush1.bf16.msra.mxu0 %v4808
    %5781 = vmatprep.subr.bf16.mxu0 0
    %5782 = vmatpush1.bf16.msra.mxu0 %v4807
    %5783 = vmatprep.subr.bf16.mxu0 0
    %5784 = vmatpush1.bf16.msra.mxu0 %v4806
    %5785 = vmatprep.subr.bf16.mxu0 0
    %5786 = vmatpush2.bf16.msra.mxu0 %v4821
    %5787 = vmatprep.subr.bf16.mxu0 0
    %5788 = vmatpush2.bf16.msra.mxu0 %v4820
    %5789 = vmatprep.subr.bf16.mxu0 0
    %5790 = vmatpush2.bf16.msra.mxu0 %v4819
    %5791 = vmatprep.subr.bf16.mxu0 0
    %5792 = vmatpush2.bf16.msra.mxu0 %v4818
    %5793 = vmatprep.subr.bf16.mxu0 0
    %5794 = vmatpush2.bf16.msra.mxu0 %v4817
    %5795 = vmatprep.subr.bf16.mxu0 0
    %5796 = vmatpush2.bf16.msra.mxu0 %v4816
    %5797 = vmatprep.subr.bf16.mxu0 0
    %5798 = vmatpush2.bf16.msra.mxu0 %v4815
    %5799 = vmatprep.subr.bf16.mxu0 0
    %5800 = vmatpush2.bf16.msra.mxu0 %v4814
    %5801 = vmatprep.mubr.bf16.mxu0 %v3960
    %5802 = vmatmul.mubr.bf16.gmra.mxu0 %v3608
    %v5803 = vpop.f32.mrf.mxu0
    %v5804 = vadd.f32 %v5515, %v5803
    %v5805 = vpop.f32.mrf.mxu0
    %v5806 = vpop.f32.mrf.mxu0
    %v5807 = vadd.f32 %v5518, %v5806
    %v5808 = vpop.f32.mrf.mxu0
    %5809 = vmatprep.mubr.bf16.mxu0 %v3961
    %5810 = vmatmul.mubr.bf16.gmra.mxu0 %v3609
    %v5811 = vpop.f32.mrf.mxu0
    %v5812 = vadd.f32 %v5523, %v5811
    %v5813 = vpop.f32.mrf.mxu0
    %v5814 = vpop.f32.mrf.mxu0
    %v5815 = vadd.f32 %v5526, %v5814
    %v5816 = vpop.f32.mrf.mxu0
    %5817 = vmatprep.mubr.bf16.mxu0 %v3962
    %5818 = vmatmul.mubr.bf16.gmra.mxu0 %v3610
    %v5819 = vpop.f32.mrf.mxu0
    %v5820 = vadd.f32 %v5531, %v5819
    %v5821 = vpop.f32.mrf.mxu0
    %v5822 = vpop.f32.mrf.mxu0
    %v5823 = vadd.f32 %v5534, %v5822
    %v5824 = vpop.f32.mrf.mxu0
    %5825 = vmatprep.mubr.bf16.mxu0 %v3963
    %5826 = vmatmul.mubr.bf16.gmra.mxu0 %v3611
    %v5827 = vpop.f32.mrf.mxu0
    %v5828 = vadd.f32 %v5539, %v5827
    %v5829 = vpop.f32.mrf.mxu0
    %v5830 = vpop.f32.mrf.mxu0
    %v5831 = vadd.f32 %v5542, %v5830
    %v5832 = vpop.f32.mrf.mxu0
    %5833 = vmatprep.mubr.bf16.mxu0 %v3964
    %5834 = vmatmul.mubr.bf16.gmra.mxu0 %v3612
    %v5835 = vpop.f32.mrf.mxu0
    %v5836 = vadd.f32 %v5547, %v5835
    %v5837 = vpop.f32.mrf.mxu0
    %v5838 = vpop.f32.mrf.mxu0
    %v5839 = vadd.f32 %v5550, %v5838
    %v5840 = vpop.f32.mrf.mxu0
    %5841 = vmatprep.mubr.bf16.mxu0 %v3965
    %5842 = vmatmul.mubr.bf16.gmra.mxu0 %v3613
    %v5843 = vpop.f32.mrf.mxu0
    %v5844 = vadd.f32 %v5555, %v5843
    %v5845 = vpop.f32.mrf.mxu0
    %v5846 = vpop.f32.mrf.mxu0
    %v5847 = vadd.f32 %v5558, %v5846
    %v5848 = vpop.f32.mrf.mxu0
    %5849 = vmatprep.mubr.bf16.mxu0 %v3966
    %5850 = vmatmul.mubr.bf16.gmra.mxu0 %v3614
    %v5851 = vpop.f32.mrf.mxu0
    %v5852 = vadd.f32 %v5563, %v5851
    %v5853 = vpop.f32.mrf.mxu0
    %v5854 = vpop.f32.mrf.mxu0
    %v5855 = vadd.f32 %v5566, %v5854
    %v5856 = vpop.f32.mrf.mxu0
    %5857 = vmatprep.mubr.bf16.mxu0 %v3967
    %5858 = vmatmul.mubr.bf16.gmra.mxu0 %v3615
    %v5859 = vpop.f32.mrf.mxu0
    %v5860 = vadd.f32 %v5571, %v5859
    %v5861 = vpop.f32.mrf.mxu0
    %v5862 = vpop.f32.mrf.mxu0
    %v5863 = vadd.f32 %v5574, %v5862
    %v5864 = vpop.f32.mrf.mxu0
    %5865 = vmatprep.mubr.bf16.mxu0 %v3968
    %5866 = vmatmul.mubr.bf16.gmra.mxu0 %v3616
    %v5867 = vpop.f32.mrf.mxu0
    %v5868 = vadd.f32 %v5579, %v5867
    %v5869 = vpop.f32.mrf.mxu0
    %v5870 = vpop.f32.mrf.mxu0
    %v5871 = vadd.f32 %v5582, %v5870
    %v5872 = vpop.f32.mrf.mxu0
    %5873 = vmatprep.mubr.bf16.mxu0 %v3969
    %5874 = vmatmul.mubr.bf16.gmra.mxu0 %v3617
    %v5875 = vpop.f32.mrf.mxu0
    %v5876 = vadd.f32 %v5587, %v5875
    %v5877 = vpop.f32.mrf.mxu0
    %v5878 = vpop.f32.mrf.mxu0
    %v5879 = vadd.f32 %v5590, %v5878
    %v5880 = vpop.f32.mrf.mxu0
    %5881 = vmatprep.mubr.bf16.mxu0 %v3970
    %5882 = vmatmul.mubr.bf16.gmra.mxu0 %v3618
    %v5883 = vpop.f32.mrf.mxu0
    %v5884 = vadd.f32 %v5595, %v5883
    %v5885 = vpop.f32.mrf.mxu0
    %v5886 = vpop.f32.mrf.mxu0
    %v5887 = vadd.f32 %v5598, %v5886
    %v5888 = vpop.f32.mrf.mxu0
    %5889 = vmatprep.mubr.bf16.mxu0 %v3971
    %5890 = vmatmul.mubr.bf16.gmra.mxu0 %v3619
    %v5891 = vpop.f32.mrf.mxu0
    %v5892 = vadd.f32 %v5603, %v5891
    %v5893 = vpop.f32.mrf.mxu0
    %v5894 = vpop.f32.mrf.mxu0
    %v5895 = vadd.f32 %v5606, %v5894
    %v5896 = vpop.f32.mrf.mxu0
    %5897 = vmatprep.mubr.bf16.mxu0 %v3972
    %5898 = vmatmul.mubr.bf16.gmra.mxu0 %v3620
    %v5899 = vpop.f32.mrf.mxu0
    %v5900 = vadd.f32 %v5611, %v5899
    %v5901 = vpop.f32.mrf.mxu0
    %v5902 = vpop.f32.mrf.mxu0
    %v5903 = vadd.f32 %v5614, %v5902
    %v5904 = vpop.f32.mrf.mxu0
    %5905 = vmatprep.mubr.bf16.mxu0 %v3973
    %5906 = vmatmul.mubr.bf16.gmra.mxu0 %v3621
    %v5907 = vpop.f32.mrf.mxu0
    %v5908 = vadd.f32 %v5619, %v5907
    %v5909 = vpop.f32.mrf.mxu0
    %v5910 = vpop.f32.mrf.mxu0
    %v5911 = vadd.f32 %v5622, %v5910
    %v5912 = vpop.f32.mrf.mxu0
    %5913 = vmatprep.mubr.bf16.mxu0 %v4268
    %5914 = vmatmul.mubr.bf16.gmra.mxu0 %v4246
    %v5915 = vpop.f32.mrf.mxu0
    %v5916 = vadd.f32 %v5627, %v5915
    %v5917 = vpop.f32.mrf.mxu0
    %v5918 = vpop.f32.mrf.mxu0
    %v5919 = vadd.f32 %v5630, %v5918
    %v5920 = vpop.f32.mrf.mxu0
    %5921 = vmatprep.mubr.bf16.mxu0 %v4308
    %5922 = vmatmul.mubr.bf16.gmra.mxu0 %v4286
    %v5923 = vpop.f32.mrf.mxu0
    %v5924 = vadd.f32 %v5635, %v5923
    %v5925 = vpop.f32.mrf.mxu0
    %v5926 = vpop.f32.mrf.mxu0
    %v5927 = vadd.f32 %v5638, %v5926
    %v5928 = vpop.f32.mrf.mxu0
    %5929 = vmatprep.mubr.bf16.mxu0 %v3976
    %5930 = vmatmul.mubr.bf16.gmra.mxu0 %v3624
    %v5931 = vpop.f32.mrf.mxu0
    %v5932 = vadd.f32 %v5643, %v5931
    %v5933 = vpop.f32.mrf.mxu0
    %v5934 = vpop.f32.mrf.mxu0
    %v5935 = vadd.f32 %v5646, %v5934
    %v5936 = vpop.f32.mrf.mxu0
    %5937 = vmatprep.mubr.bf16.mxu0 %v3977
    %5938 = vmatmul.mubr.bf16.gmra.mxu0 %v3625
    %v5939 = vpop.f32.mrf.mxu0
    %v5940 = vadd.f32 %v5651, %v5939
    %v5941 = vpop.f32.mrf.mxu0
    %v5942 = vpop.f32.mrf.mxu0
    %v5943 = vadd.f32 %v5654, %v5942
    %v5944 = vpop.f32.mrf.mxu0
    %5945 = vmatprep.mubr.bf16.mxu0 %v3978
    %5946 = vmatmul.mubr.bf16.gmra.mxu0 %v3626
    %v5947 = vpop.f32.mrf.mxu0
    %v5948 = vadd.f32 %v5659, %v5947
    %v5949 = vpop.f32.mrf.mxu0
    %v5950 = vpop.f32.mrf.mxu0
    %v5951 = vadd.f32 %v5662, %v5950
    %v5952 = vpop.f32.mrf.mxu0
    %5953 = vmatprep.mubr.bf16.mxu0 %v3979
    %5954 = vmatmul.mubr.bf16.gmra.mxu0 %v3627
    %v5955 = vpop.f32.mrf.mxu0
    %v5956 = vadd.f32 %v5667, %v5955
    %v5957 = vpop.f32.mrf.mxu0
    %v5958 = vpop.f32.mrf.mxu0
    %v5959 = vadd.f32 %v5670, %v5958
    %v5960 = vpop.f32.mrf.mxu0
    %5961 = vmatprep.mubr.bf16.mxu0 %v3980
    %5962 = vmatmul.mubr.bf16.gmra.mxu0 %v3628
    %v5963 = vpop.f32.mrf.mxu0
    %v5964 = vadd.f32 %v5675, %v5963
    %v5965 = vpop.f32.mrf.mxu0
    %v5966 = vpop.f32.mrf.mxu0
    %v5967 = vadd.f32 %v5678, %v5966
    %v5968 = vpop.f32.mrf.mxu0
    %5969 = vmatprep.mubr.bf16.mxu0 %v3981
    %5970 = vmatmul.mubr.bf16.gmra.mxu0 %v3629
    %v5971 = vpop.f32.mrf.mxu0
    %v5972 = vadd.f32 %v5683, %v5971
    %v5973 = vpop.f32.mrf.mxu0
    %v5974 = vpop.f32.mrf.mxu0
    %v5975 = vadd.f32 %v5686, %v5974
    %v5976 = vpop.f32.mrf.mxu0
    %5977 = vmatprep.mubr.bf16.mxu0 %v3982
    %5978 = vmatmul.mubr.bf16.gmra.mxu0 %v3630
    %v5979 = vpop.f32.mrf.mxu0
    %v5980 = vadd.f32 %v5691, %v5979
    %v5981 = vpop.f32.mrf.mxu0
    %v5982 = vpop.f32.mrf.mxu0
    %v5983 = vadd.f32 %v5694, %v5982
    %v5984 = vpop.f32.mrf.mxu0
    %5985 = vmatprep.mubr.bf16.mxu0 %v3983
    %5986 = vmatmul.mubr.bf16.gmra.mxu0 %v3631
    %v5987 = vpop.f32.mrf.mxu0
    %v5988 = vadd.f32 %v5699, %v5987
    %v5989 = vpop.f32.mrf.mxu0
    %v5990 = vpop.f32.mrf.mxu0
    %v5991 = vadd.f32 %v5702, %v5990
    %v5992 = vpop.f32.mrf.mxu0
    %5993 = vmatprep.mubr.bf16.mxu0 %v3984
    %5994 = vmatmul.mubr.bf16.gmra.mxu0 %v3632
    %v5995 = vpop.f32.mrf.mxu0
    %v5996 = vadd.f32 %v5707, %v5995
    %v5997 = vpop.f32.mrf.mxu0
    %v5998 = vpop.f32.mrf.mxu0
    %v5999 = vadd.f32 %v5710, %v5998
    %v6000 = vpop.f32.mrf.mxu0
    %6001 = vmatprep.mubr.bf16.mxu0 %v3985
    %6002 = vmatmul.mubr.bf16.gmra.mxu0 %v3633
    %v6003 = vpop.f32.mrf.mxu0
    %v6004 = vadd.f32 %v5715, %v6003
    %v6005 = vpop.f32.mrf.mxu0
    %v6006 = vpop.f32.mrf.mxu0
    %v6007 = vadd.f32 %v5718, %v6006
    %v6008 = vpop.f32.mrf.mxu0
    %6009 = vmatprep.mubr.bf16.mxu0 %v3986
    %6010 = vmatmul.mubr.bf16.gmra.mxu0 %v3634
    %v6011 = vpop.f32.mrf.mxu0
    %v6012 = vadd.f32 %v5723, %v6011
    %v6013 = vpop.f32.mrf.mxu0
    %v6014 = vpop.f32.mrf.mxu0
    %v6015 = vadd.f32 %v5726, %v6014
    %v6016 = vpop.f32.mrf.mxu0
    %6017 = vmatprep.mubr.bf16.mxu0 %v3987
    %6018 = vmatmul.mubr.bf16.gmra.mxu0 %v3635
    %v6019 = vpop.f32.mrf.mxu0
    %v6020 = vadd.f32 %v5731, %v6019
    %v6021 = vpop.f32.mrf.mxu0
    %v6022 = vpop.f32.mrf.mxu0
    %v6023 = vadd.f32 %v5734, %v6022
    %v6024 = vpop.f32.mrf.mxu0
    %6025 = vmatprep.mubr.bf16.mxu0 %v3988
    %6026 = vmatmul.mubr.bf16.gmra.mxu0 %v3636
    %v6027 = vpop.f32.mrf.mxu0
    %v6028 = vadd.f32 %v5739, %v6027
    %v6029 = vpop.f32.mrf.mxu0
    %v6030 = vpop.f32.mrf.mxu0
    %v6031 = vadd.f32 %v5742, %v6030
    %v6032 = vpop.f32.mrf.mxu0
    %6033 = vmatprep.mubr.bf16.mxu0 %v3989
    %6034 = vmatmul.mubr.bf16.gmra.mxu0 %v3637
    %v6035 = vpop.f32.mrf.mxu0
    %v6036 = vadd.f32 %v5747, %v6035
    %v6037 = vpop.f32.mrf.mxu0
    %v6038 = vpop.f32.mrf.mxu0
    %v6039 = vadd.f32 %v5750, %v6038
    %v6040 = vpop.f32.mrf.mxu0
    %6041 = vmatprep.mubr.bf16.mxu0 %v4269
    %6042 = vmatmul.mubr.bf16.gmra.mxu0 %v4247
    %v6043 = vpop.f32.mrf.mxu0
    %v6044 = vadd.f32 %v5755, %v6043
    %v6045 = vpop.f32.mrf.mxu0
    %v6046 = vpop.f32.mrf.mxu0
    %v6047 = vadd.f32 %v5758, %v6046
    %v6048 = vpop.f32.mrf.mxu0
    %6049 = vmatprep.mubr.bf16.mxu0 %v4309
    %6050 = vmatmul.mubr.bf16.gmra.mxu0 %v4287
    %v6051 = vpop.f32.mrf.mxu0
    %v6052 = vadd.f32 %v5763, %v6051
    %v6053 = vpop.f32.mrf.mxu0
    %v6054 = vpop.f32.mrf.mxu0
    %v6055 = vadd.f32 %v5766, %v6054
    %v6056 = vpop.f32.mrf.mxu0
    %6057 = vdwg.mxu0
    %6058 = vmatprep.subr.bf16.mxu0 0
    %6059 = vmatpush1.bf16.msra.mxu0 %v4829
    %6060 = vmatprep.subr.bf16.mxu0 0
    %6061 = vmatpush1.bf16.msra.mxu0 %v4828
    %6062 = vmatprep.subr.bf16.mxu0 0
    %6063 = vmatpush1.bf16.msra.mxu0 %v4827
    %6064 = vmatprep.subr.bf16.mxu0 0
    %6065 = vmatpush1.bf16.msra.mxu0 %v4826
    %6066 = vmatprep.subr.bf16.mxu0 0
    %6067 = vmatpush1.bf16.msra.mxu0 %v4825
    %6068 = vmatprep.subr.bf16.mxu0 0
    %6069 = vmatpush1.bf16.msra.mxu0 %v4824
    %6070 = vmatprep.subr.bf16.mxu0 0
    %6071 = vmatpush1.bf16.msra.mxu0 %v4823
    %6072 = vmatprep.subr.bf16.mxu0 0
    %6073 = vmatpush1.bf16.msra.mxu0 %v4822
    %6074 = vmatprep.subr.bf16.mxu0 0
    %6075 = vmatpush2.bf16.msra.mxu0 0
    %6076 = vmatprep.subr.bf16.mxu0 0
    %6077 = vmatpush2.bf16.msra.mxu0 0
    %6078 = vmatprep.subr.bf16.mxu0 0
    %6079 = vmatpush2.bf16.msra.mxu0 0
    %6080 = vmatprep.subr.bf16.mxu0 0
    %6081 = vmatpush2.bf16.msra.mxu0 0
    %6082 = vmatprep.subr.bf16.mxu0 0
    %6083 = vmatpush2.bf16.msra.mxu0 0
    %6084 = vmatprep.subr.bf16.mxu0 0
    %6085 = vmatpush2.bf16.msra.mxu0 0
    %6086 = vmatprep.subr.bf16.mxu0 0
    %6087 = vmatpush2.bf16.msra.mxu0 0
    %6088 = vmatprep.subr.bf16.mxu0 0
    %6089 = vmatpush2.bf16.msra.mxu0 0
    %6090 = vmatprep.mubr.bf16.mxu0 0
    %6091 = vmatmul.mubr.bf16.gmra.mxu0 %v4216
    %v6092 = vpop.f32.mrf.mxu0
    %v6093 = vadd.f32 %v5804, %v6092
    %v6094 = vpop.f32.mrf.mxu0
    %v6095 = vpop.f32.mrf.mxu0
    %v6096 = vadd.f32 %v5807, %v6095
    %v6097 = vpop.f32.mrf.mxu0
    %6098 = vmatprep.mubr.bf16.mxu0 0
    %6099 = vmatmul.mubr.bf16.gmra.mxu0 %v4217
    %v6100 = vpop.f32.mrf.mxu0
    %v6101 = vadd.f32 %v5812, %v6100
    %v6102 = vpop.f32.mrf.mxu0
    %v6103 = vpop.f32.mrf.mxu0
    %v6104 = vadd.f32 %v5815, %v6103
    %v6105 = vpop.f32.mrf.mxu0
    %6106 = vmatprep.mubr.bf16.mxu0 0
    %6107 = vmatmul.mubr.bf16.gmra.mxu0 %v4218
    %v6108 = vpop.f32.mrf.mxu0
    %v6109 = vadd.f32 %v5820, %v6108
    %v6110 = vpop.f32.mrf.mxu0
    %v6111 = vpop.f32.mrf.mxu0
    %v6112 = vadd.f32 %v5823, %v6111
    %v6113 = vpop.f32.mrf.mxu0
    %6114 = vmatprep.mubr.bf16.mxu0 0
    %6115 = vmatmul.mubr.bf16.gmra.mxu0 %v4219
    %v6116 = vpop.f32.mrf.mxu0
    %v6117 = vadd.f32 %v5828, %v6116
    %v6118 = vpop.f32.mrf.mxu0
    %v6119 = vpop.f32.mrf.mxu0
    %v6120 = vadd.f32 %v5831, %v6119
    %v6121 = vpop.f32.mrf.mxu0
    %6122 = vmatprep.mubr.bf16.mxu0 0
    %6123 = vmatmul.mubr.bf16.gmra.mxu0 %v4220
    %v6124 = vpop.f32.mrf.mxu0
    %v6125 = vadd.f32 %v5836, %v6124
    %v6126 = vpop.f32.mrf.mxu0
    %v6127 = vpop.f32.mrf.mxu0
    %v6128 = vadd.f32 %v5839, %v6127
    %v6129 = vpop.f32.mrf.mxu0
    %6130 = vmatprep.mubr.bf16.mxu0 0
    %6131 = vmatmul.mubr.bf16.gmra.mxu0 %v4221
    %v6132 = vpop.f32.mrf.mxu0
    %v6133 = vadd.f32 %v5844, %v6132
    %v6134 = vpop.f32.mrf.mxu0
    %v6135 = vpop.f32.mrf.mxu0
    %v6136 = vadd.f32 %v5847, %v6135
    %v6137 = vpop.f32.mrf.mxu0
    %6138 = vmatprep.mubr.bf16.mxu0 0
    %6139 = vmatmul.mubr.bf16.gmra.mxu0 %v4222
    %v6140 = vpop.f32.mrf.mxu0
    %v6141 = vadd.f32 %v5852, %v6140
    %v6142 = vpop.f32.mrf.mxu0
    %v6143 = vpop.f32.mrf.mxu0
    %v6144 = vadd.f32 %v5855, %v6143
    %v6145 = vpop.f32.mrf.mxu0
    %6146 = vmatprep.mubr.bf16.mxu0 0
    %6147 = vmatmul.mubr.bf16.gmra.mxu0 %v4223
    %v6148 = vpop.f32.mrf.mxu0
    %v6149 = vadd.f32 %v5860, %v6148
    %v6150 = vpop.f32.mrf.mxu0
    %v6151 = vpop.f32.mrf.mxu0
    %v6152 = vadd.f32 %v5863, %v6151
    %v6153 = vpop.f32.mrf.mxu0
    %6154 = vmatprep.mubr.bf16.mxu0 0
    %6155 = vmatmul.mubr.bf16.gmra.mxu0 %v4224
    %v6156 = vpop.f32.mrf.mxu0
    %v6157 = vadd.f32 %v5868, %v6156
    %v6158 = vpop.f32.mrf.mxu0
    %v6159 = vpop.f32.mrf.mxu0
    %v6160 = vadd.f32 %v5871, %v6159
    %v6161 = vpop.f32.mrf.mxu0
    %6162 = vmatprep.mubr.bf16.mxu0 0
    %6163 = vmatmul.mubr.bf16.gmra.mxu0 %v4225
    %v6164 = vpop.f32.mrf.mxu0
    %v6165 = vadd.f32 %v5876, %v6164
    %v6166 = vpop.f32.mrf.mxu0
    %v6167 = vpop.f32.mrf.mxu0
    %v6168 = vadd.f32 %v5879, %v6167
    %v6169 = vpop.f32.mrf.mxu0
    %6170 = vmatprep.mubr.bf16.mxu0 0
    %6171 = vmatmul.mubr.bf16.gmra.mxu0 %v4226
    %v6172 = vpop.f32.mrf.mxu0
    %v6173 = vadd.f32 %v5884, %v6172
    %v6174 = vpop.f32.mrf.mxu0
    %v6175 = vpop.f32.mrf.mxu0
    %v6176 = vadd.f32 %v5887, %v6175
    %v6177 = vpop.f32.mrf.mxu0
    %6178 = vmatprep.mubr.bf16.mxu0 0
    %6179 = vmatmul.mubr.bf16.gmra.mxu0 %v4227
    %v6180 = vpop.f32.mrf.mxu0
    %v6181 = vadd.f32 %v5892, %v6180
    %v6182 = vpop.f32.mrf.mxu0
    %v6183 = vpop.f32.mrf.mxu0
    %v6184 = vadd.f32 %v5895, %v6183
    %v6185 = vpop.f32.mrf.mxu0
    %6186 = vmatprep.mubr.bf16.mxu0 0
    %6187 = vmatmul.mubr.bf16.gmra.mxu0 %v4228
    %v6188 = vpop.f32.mrf.mxu0
    %v6189 = vadd.f32 %v5900, %v6188
    %v6190 = vpop.f32.mrf.mxu0
    %v6191 = vpop.f32.mrf.mxu0
    %v6192 = vadd.f32 %v5903, %v6191
    %v6193 = vpop.f32.mrf.mxu0
    %6194 = vmatprep.mubr.bf16.mxu0 0
    %6195 = vmatmul.mubr.bf16.gmra.mxu0 %v4229
    %v6196 = vpop.f32.mrf.mxu0
    %v6197 = vadd.f32 %v5908, %v6196
    %v6198 = vpop.f32.mrf.mxu0
    %v6199 = vpop.f32.mrf.mxu0
    %v6200 = vadd.f32 %v5911, %v6199
    %v6201 = vpop.f32.mrf.mxu0
    %6202 = vmatprep.mubr.bf16.mxu0 0
    %6203 = vmatmul.mubr.bf16.gmra.mxu0 %v4284
    %v6204 = vpop.f32.mrf.mxu0
    %v6205 = vadd.f32 %v5916, %v6204
    %v6206 = vpop.f32.mrf.mxu0
    %v6207 = vpop.f32.mrf.mxu0
    %v6208 = vadd.f32 %v5919, %v6207
    %v6209 = vpop.f32.mrf.mxu0
    %6210 = vmatprep.mubr.bf16.mxu0 0
    %6211 = vmatmul.mubr.bf16.gmra.mxu0 %v4324
    %v6212 = vpop.f32.mrf.mxu0
    %v6213 = vadd.f32 %v5924, %v6212
    %v6214 = vpop.f32.mrf.mxu0
    %v6215 = vpop.f32.mrf.mxu0
    %v6216 = vadd.f32 %v5927, %v6215
    %v6217 = vpop.f32.mrf.mxu0
    %6218 = vmatprep.mubr.bf16.mxu0 0
    %6219 = vmatmul.mubr.bf16.gmra.mxu0 %v4232
    %v6220 = vpop.f32.mrf.mxu0
    %v6221 = vadd.f32 %v5932, %v6220
    %v6222 = vpop.f32.mrf.mxu0
    %v6223 = vpop.f32.mrf.mxu0
    %v6224 = vadd.f32 %v5935, %v6223
    %v6225 = vpop.f32.mrf.mxu0
    %6226 = vmatprep.mubr.bf16.mxu0 0
    %6227 = vmatmul.mubr.bf16.gmra.mxu0 %v4233
    %v6228 = vpop.f32.mrf.mxu0
    %v6229 = vadd.f32 %v5940, %v6228
    %v6230 = vpop.f32.mrf.mxu0
    %v6231 = vpop.f32.mrf.mxu0
    %v6232 = vadd.f32 %v5943, %v6231
    %v6233 = vpop.f32.mrf.mxu0
    %6234 = vmatprep.mubr.bf16.mxu0 0
    %6235 = vmatmul.mubr.bf16.gmra.mxu0 %v4234
    %v6236 = vpop.f32.mrf.mxu0
    %v6237 = vadd.f32 %v5948, %v6236
    %v6238 = vpop.f32.mrf.mxu0
    %v6239 = vpop.f32.mrf.mxu0
    %v6240 = vadd.f32 %v5951, %v6239
    %v6241 = vpop.f32.mrf.mxu0
    %6242 = vmatprep.mubr.bf16.mxu0 0
    %6243 = vmatmul.mubr.bf16.gmra.mxu0 %v4235
    %v6244 = vpop.f32.mrf.mxu0
    %v6245 = vadd.f32 %v5956, %v6244
    %v6246 = vpop.f32.mrf.mxu0
    %v6247 = vpop.f32.mrf.mxu0
    %v6248 = vadd.f32 %v5959, %v6247
    %v6249 = vpop.f32.mrf.mxu0
    %6250 = vmatprep.mubr.bf16.mxu0 0
    %6251 = vmatmul.mubr.bf16.gmra.mxu0 %v4236
    %v6252 = vpop.f32.mrf.mxu0
    %v6253 = vadd.f32 %v5964, %v6252
    %v6254 = vpop.f32.mrf.mxu0
    %v6255 = vpop.f32.mrf.mxu0
    %v6256 = vadd.f32 %v5967, %v6255
    %v6257 = vpop.f32.mrf.mxu0
    %6258 = vmatprep.mubr.bf16.mxu0 0
    %6259 = vmatmul.mubr.bf16.gmra.mxu0 %v4237
    %v6260 = vpop.f32.mrf.mxu0
    %v6261 = vadd.f32 %v5972, %v6260
    %v6262 = vpop.f32.mrf.mxu0
    %v6263 = vpop.f32.mrf.mxu0
    %v6264 = vadd.f32 %v5975, %v6263
    %v6265 = vpop.f32.mrf.mxu0
    %6266 = vmatprep.mubr.bf16.mxu0 0
    %6267 = vmatmul.mubr.bf16.gmra.mxu0 %v4238
    %v6268 = vpop.f32.mrf.mxu0
    %v6269 = vadd.f32 %v5980, %v6268
    %v6270 = vpop.f32.mrf.mxu0
    %v6271 = vpop.f32.mrf.mxu0
    %v6272 = vadd.f32 %v5983, %v6271
    %v6273 = vpop.f32.mrf.mxu0
    %6274 = vmatprep.mubr.bf16.mxu0 0
    %6275 = vmatmul.mubr.bf16.gmra.mxu0 %v4239
    %v6276 = vpop.f32.mrf.mxu0
    %v6277 = vadd.f32 %v5988, %v6276
    %v6278 = vpop.f32.mrf.mxu0
    %v6279 = vpop.f32.mrf.mxu0
    %v6280 = vadd.f32 %v5991, %v6279
    %v6281 = vpop.f32.mrf.mxu0
    %6282 = vmatprep.mubr.bf16.mxu0 0
    %6283 = vmatmul.mubr.bf16.gmra.mxu0 %v4240
    %v6284 = vpop.f32.mrf.mxu0
    %v6285 = vadd.f32 %v5996, %v6284
    %v6286 = vpop.f32.mrf.mxu0
    %v6287 = vpop.f32.mrf.mxu0
    %v6288 = vadd.f32 %v5999, %v6287
    %v6289 = vpop.f32.mrf.mxu0
    %6290 = vmatprep.mubr.bf16.mxu0 0
    %6291 = vmatmul.mubr.bf16.gmra.mxu0 %v4241
    %v6292 = vpop.f32.mrf.mxu0
    %v6293 = vadd.f32 %v6004, %v6292
    %v6294 = vpop.f32.mrf.mxu0
    %v6295 = vpop.f32.mrf.mxu0
    %v6296 = vadd.f32 %v6007, %v6295
    %v6297 = vpop.f32.mrf.mxu0
    %6298 = vmatprep.mubr.bf16.mxu0 0
    %6299 = vmatmul.mubr.bf16.gmra.mxu0 %v4242
    %v6300 = vpop.f32.mrf.mxu0
    %v6301 = vadd.f32 %v6012, %v6300
    %v6302 = vpop.f32.mrf.mxu0
    %v6303 = vpop.f32.mrf.mxu0
    %v6304 = vadd.f32 %v6015, %v6303
    %v6305 = vpop.f32.mrf.mxu0
    %6306 = vmatprep.mubr.bf16.mxu0 0
    %6307 = vmatmul.mubr.bf16.gmra.mxu0 %v4243
    %v6308 = vpop.f32.mrf.mxu0
    %v6309 = vadd.f32 %v6020, %v6308
    %v6310 = vpop.f32.mrf.mxu0
    %v6311 = vpop.f32.mrf.mxu0
    %v6312 = vadd.f32 %v6023, %v6311
    %v6313 = vpop.f32.mrf.mxu0
    %6314 = vmatprep.mubr.bf16.mxu0 0
    %6315 = vmatmul.mubr.bf16.gmra.mxu0 %v4244
    %v6316 = vpop.f32.mrf.mxu0
    %v6317 = vadd.f32 %v6028, %v6316
    %v6318 = vpop.f32.mrf.mxu0
    %v6319 = vpop.f32.mrf.mxu0
    %v6320 = vadd.f32 %v6031, %v6319
    %v6321 = vpop.f32.mrf.mxu0
    %6322 = vmatprep.mubr.bf16.mxu0 0
    %6323 = vmatmul.mubr.bf16.gmra.mxu0 %v4245
    %v6324 = vpop.f32.mrf.mxu0
    %v6325 = vadd.f32 %v6036, %v6324
    %v6326 = vpop.f32.mrf.mxu0
    %v6327 = vpop.f32.mrf.mxu0
    %v6328 = vadd.f32 %v6039, %v6327
    %v6329 = vpop.f32.mrf.mxu0
    %6330 = vmatprep.mubr.bf16.mxu0 0
    %6331 = vmatmul.mubr.bf16.gmra.mxu0 %v4285
    %v6332 = vpop.f32.mrf.mxu0
    %v6333 = vadd.f32 %v6044, %v6332
    %v6334 = vpop.f32.mrf.mxu0
    %v6335 = vpop.f32.mrf.mxu0
    %v6336 = vadd.f32 %v6047, %v6335
    %v6337 = vpop.f32.mrf.mxu0
    %6338 = vmatprep.mubr.bf16.mxu0 0
    %6339 = vmatmul.mubr.bf16.gmra.mxu0 %v4325
    %v6340 = vpop.f32.mrf.mxu0
    %v6341 = vadd.f32 %v6052, %v6340
    %v6342 = vpop.f32.mrf.mxu0
    %v6343 = vpop.f32.mrf.mxu0
    %v6344 = vadd.f32 %v6055, %v6343
    %v6345 = vpop.f32.mrf.mxu0
    %6346 = vdwg.mxu0
    %v6347 = vadd.f32 %v6093, %v6096
    %v6348 = vadd.f32 %v6347, %v6101
    %v6349 = vadd.f32 %v6348, %v6104
    %v6350 = vadd.f32 %v6349, %v6109
    %v6351 = vadd.f32 %v6350, %v6112
    %v6352 = vadd.f32 %v6351, %v6117
    %v6353 = vadd.f32 %v6352, %v6120
    %v6354 = vadd.f32 %v6353, %v6125
    %v6355 = vadd.f32 %v6354, %v6128
    %v6356 = vadd.f32 %v6355, %v6133
    %v6357 = vadd.f32 %v6356, %v6136
    %v6358 = vadd.f32 %v6357, %v6141
    %v6359 = vadd.f32 %v6358, %v6144
    %v6360 = vadd.f32 %v6359, %v6149
    %v6361 = vadd.f32 %v6360, %v6152
    %v6362 = vadd.f32 %v6361, %v6157
    %v6363 = vadd.f32 %v6362, %v6160
    %v6364 = vadd.f32 %v6363, %v6165
    %v6365 = vadd.f32 %v6364, %v6168
    %v6366 = vadd.f32 %v6365, %v6173
    %v6367 = vadd.f32 %v6366, %v6176
    %v6368 = vadd.f32 %v6367, %v6181
    %v6369 = vadd.f32 %v6368, %v6184
    %v6370 = vadd.f32 %v6369, %v6189
    %v6371 = vadd.f32 %v6370, %v6192
    %v6372 = vadd.f32 %v6371, %v6197
    %v6373 = vadd.f32 %v6372, %v6200
    %v6374 = vadd.f32 %v6373, %v6205
    %v6375 = vadd.f32 %v6374, %v6208
    %v6376 = vadd.f32 %v6375, %v6213
    %v6377 = vadd.f32 %v6376, %v6216
    %v6378 = vadd.f32 %v6377, %v6221
    %v6379 = vadd.f32 %v6378, %v6224
    %v6380 = vadd.f32 %v6379, %v6229
    %v6381 = vadd.f32 %v6380, %v6232
    %v6382 = vadd.f32 %v6381, %v6237
    %v6383 = vadd.f32 %v6382, %v6240
    %v6384 = vadd.f32 %v6383, %v6245
    %v6385 = vadd.f32 %v6384, %v6248
    %v6386 = vadd.f32 %v6385, %v6253
    %v6387 = vadd.f32 %v6386, %v6256
    %v6388 = vadd.f32 %v6387, %v6261
    %v6389 = vadd.f32 %v6388, %v6264
    %v6390 = vadd.f32 %v6389, %v6269
    %v6391 = vadd.f32 %v6390, %v6272
    %v6392 = vadd.f32 %v6391, %v6277
    %v6393 = vadd.f32 %v6392, %v6280
    %v6394 = vadd.f32 %v6393, %v6285
    %v6395 = vadd.f32 %v6394, %v6288
    %v6396 = vadd.f32 %v6395, %v6293
    %v6397 = vadd.f32 %v6396, %v6296
    %v6398 = vadd.f32 %v6397, %v6301
    %v6399 = vadd.f32 %v6398, %v6304
    %v6400 = vadd.f32 %v6399, %v6309
    %v6401 = vadd.f32 %v6400, %v6312
    %v6402 = vadd.f32 %v6401, %v6317
    %v6403 = vadd.f32 %v6402, %v6320
    %v6404 = vadd.f32 %v6403, %v6325
    %v6405 = vadd.f32 %v6404, %v6328
    %v6406 = vadd.f32 %v6405, %v6333
    %v6407 = vadd.f32 %v6406, %v6336
    %v6408 = vadd.f32 %v6407, %v6341
    %v6409 = vadd.f32 %v6408, %v6344
    %v6410 = vrot.slane %v6409, 4
    %v6411 = vadd.f32 %v6409, %v6410
    %v6412 = vrot.slane %v6411, 2
    %v6413 = vadd.f32 %v6411, %v6412
    %v6414 = vrot.slane %v6413, 1
    %v6415 = vadd.f32 %v6413, %v6414
    %v6416 = vmul.f32 %v6415, 0.001953125
    %v6417 = vmul.f32 %v6093, %v6093
    %v6418 = vmul.f32 %v6096, %v6096
    %v6419 = vmul.f32 %v6101, %v6101
    %v6420 = vmul.f32 %v6104, %v6104
    %v6421 = vmul.f32 %v6109, %v6109
    %v6422 = vmul.f32 %v6112, %v6112
    %v6423 = vmul.f32 %v6117, %v6117
    %v6424 = vmul.f32 %v6120, %v6120
    %v6425 = vmul.f32 %v6125, %v6125
    %v6426 = vmul.f32 %v6128, %v6128
    %v6427 = vmul.f32 %v6133, %v6133
    %v6428 = vmul.f32 %v6136, %v6136
    %v6429 = vmul.f32 %v6141, %v6141
    %v6430 = vmul.f32 %v6144, %v6144
    %v6431 = vmul.f32 %v6149, %v6149
    %v6432 = vmul.f32 %v6152, %v6152
    %v6433 = vmul.f32 %v6157, %v6157
    %v6434 = vmul.f32 %v6160, %v6160
    %v6435 = vmul.f32 %v6165, %v6165
    %v6436 = vmul.f32 %v6168, %v6168
    %v6437 = vmul.f32 %v6173, %v6173
    %v6438 = vmul.f32 %v6176, %v6176
    %v6439 = vmul.f32 %v6181, %v6181
    %v6440 = vmul.f32 %v6184, %v6184
    %v6441 = vmul.f32 %v6189, %v6189
    %v6442 = vmul.f32 %v6192, %v6192
    %v6443 = vmul.f32 %v6197, %v6197
    %v6444 = vmul.f32 %v6200, %v6200
    %v6445 = vmul.f32 %v6205, %v6205
    %v6446 = vmul.f32 %v6208, %v6208
    %v6447 = vmul.f32 %v6213, %v6213
    %v6448 = vmul.f32 %v6216, %v6216
    %v6449 = vmul.f32 %v6221, %v6221
    %v6450 = vmul.f32 %v6224, %v6224
    %v6451 = vmul.f32 %v6229, %v6229
    %v6452 = vmul.f32 %v6232, %v6232
    %v6453 = vmul.f32 %v6237, %v6237
    %v6454 = vmul.f32 %v6240, %v6240
    %v6455 = vmul.f32 %v6245, %v6245
    %v6456 = vmul.f32 %v6248, %v6248
    %v6457 = vmul.f32 %v6253, %v6253
    %v6458 = vmul.f32 %v6256, %v6256
    %v6459 = vmul.f32 %v6261, %v6261
    %v6460 = vmul.f32 %v6264, %v6264
    %v6461 = vmul.f32 %v6269, %v6269
    %v6462 = vmul.f32 %v6272, %v6272
    %v6463 = vmul.f32 %v6277, %v6277
    %v6464 = vmul.f32 %v6280, %v6280
    %v6465 = vmul.f32 %v6285, %v6285
    %v6466 = vmul.f32 %v6288, %v6288
    %v6467 = vmul.f32 %v6293, %v6293
    %v6468 = vmul.f32 %v6296, %v6296
    %v6469 = vmul.f32 %v6301, %v6301
    %v6470 = vmul.f32 %v6304, %v6304
    %v6471 = vmul.f32 %v6309, %v6309
    %v6472 = vmul.f32 %v6312, %v6312
    %v6473 = vmul.f32 %v6317, %v6317
    %v6474 = vmul.f32 %v6320, %v6320
    %v6475 = vmul.f32 %v6325, %v6325
    %v6476 = vmul.f32 %v6328, %v6328
    %v6477 = vmul.f32 %v6333, %v6333
    %v6478 = vmul.f32 %v6336, %v6336
    %v6479 = vmul.f32 %v6341, %v6341
    %v6480 = vmul.f32 %v6344, %v6344
    %v6481 = vadd.f32 %v6417, %v6418
    %v6482 = vadd.f32 %v6481, %v6419
    %v6483 = vadd.f32 %v6482, %v6420
    %v6484 = vadd.f32 %v6483, %v6421
    %v6485 = vadd.f32 %v6484, %v6422
    %v6486 = vadd.f32 %v6485, %v6423
    %v6487 = vadd.f32 %v6486, %v6424
    %v6488 = vadd.f32 %v6487, %v6425
    %v6489 = vadd.f32 %v6488, %v6426
    %v6490 = vadd.f32 %v6489, %v6427
    %v6491 = vadd.f32 %v6490, %v6428
    %v6492 = vadd.f32 %v6491, %v6429
    %v6493 = vadd.f32 %v6492, %v6430
    %v6494 = vadd.f32 %v6493, %v6431
    %v6495 = vadd.f32 %v6494, %v6432
    %v6496 = vadd.f32 %v6495, %v6433
    %v6497 = vadd.f32 %v6496, %v6434
    %v6498 = vadd.f32 %v6497, %v6435
    %v6499 = vadd.f32 %v6498, %v6436
    %v6500 = vadd.f32 %v6499, %v6437
    %v6501 = vadd.f32 %v6500, %v6438
    %v6502 = vadd.f32 %v6501, %v6439
    %v6503 = vadd.f32 %v6502, %v6440
    %v6504 = vadd.f32 %v6503, %v6441
    %v6505 = vadd.f32 %v6504, %v6442
    %v6506 = vadd.f32 %v6505, %v6443
    %v6507 = vadd.f32 %v6506, %v6444
    %v6508 = vadd.f32 %v6507, %v6445
    %v6509 = vadd.f32 %v6508, %v6446
    %v6510 = vadd.f32 %v6509, %v6447
    %v6511 = vadd.f32 %v6510, %v6448
    %v6512 = vadd.f32 %v6511, %v6449
    %v6513 = vadd.f32 %v6512, %v6450
    %v6514 = vadd.f32 %v6513, %v6451
    %v6515 = vadd.f32 %v6514, %v6452
    %v6516 = vadd.f32 %v6515, %v6453
    %v6517 = vadd.f32 %v6516, %v6454
    %v6518 = vadd.f32 %v6517, %v6455
    %v6519 = vadd.f32 %v6518, %v6456
    %v6520 = vadd.f32 %v6519, %v6457
    %v6521 = vadd.f32 %v6520, %v6458
    %v6522 = vadd.f32 %v6521, %v6459
    %v6523 = vadd.f32 %v6522, %v6460
    %v6524 = vadd.f32 %v6523, %v6461
    %v6525 = vadd.f32 %v6524, %v6462
    %v6526 = vadd.f32 %v6525, %v6463
    %v6527 = vadd.f32 %v6526, %v6464
    %v6528 = vadd.f32 %v6527, %v6465
    %v6529 = vadd.f32 %v6528, %v6466
    %v6530 = vadd.f32 %v6529, %v6467
    %v6531 = vadd.f32 %v6530, %v6468
    %v6532 = vadd.f32 %v6531, %v6469
    %v6533 = vadd.f32 %v6532, %v6470
    %v6534 = vadd.f32 %v6533, %v6471
    %v6535 = vadd.f32 %v6534, %v6472
    %v6536 = vadd.f32 %v6535, %v6473
    %v6537 = vadd.f32 %v6536, %v6474
    %v6538 = vadd.f32 %v6537, %v6475
    %v6539 = vadd.f32 %v6538, %v6476
    %v6540 = vadd.f32 %v6539, %v6477
    %v6541 = vadd.f32 %v6540, %v6478
    %v6542 = vadd.f32 %v6541, %v6479
    %v6543 = vadd.f32 %v6542, %v6480
    %v6544 = vrot.slane %v6543, 4
    %v6545 = vadd.f32 %v6543, %v6544
    %v6546 = vrot.slane %v6545, 2
    %v6547 = vadd.f32 %v6545, %v6546
    %v6548 = vrot.slane %v6547, 1
    %v6549 = vadd.f32 %v6547, %v6548
    %v6550 = vmul.f32 %v6549, 0.001953125
    %v6551 = vmul.f32 %v6416, %v6416
    %v6552 = vsub.f32 %v6550, %v6551
    %v6553 = vadd.f32 %v6552, 1e-05
    %v6554 = vrsqrt.pop %v6553
    %v6555 = vld [vmem:[%s5] sm:$0x1]
    %v6556 = vmul.f32 %v6554, %v6555
    %v6557 = vsub.f32 %v6093, %v6416
    %v6558 = vsub.f32 %v6096, %v6416
    %v6559 = vsub.f32 %v6101, %v6416
    %v6560 = vsub.f32 %v6104, %v6416
    %v6561 = vsub.f32 %v6109, %v6416
    %v6562 = vsub.f32 %v6112, %v6416
    %v6563 = vsub.f32 %v6117, %v6416
    %v6564 = vsub.f32 %v6120, %v6416
    %v6565 = vsub.f32 %v6125, %v6416
    %v6566 = vsub.f32 %v6128, %v6416
    %v6567 = vsub.f32 %v6133, %v6416
    %v6568 = vsub.f32 %v6136, %v6416
    %v6569 = vsub.f32 %v6141, %v6416
    %v6570 = vsub.f32 %v6144, %v6416
    %v6571 = vsub.f32 %v6149, %v6416
    %v6572 = vsub.f32 %v6152, %v6416
    %v6573 = vsub.f32 %v6157, %v6416
    %v6574 = vsub.f32 %v6160, %v6416
    %v6575 = vsub.f32 %v6165, %v6416
    %v6576 = vsub.f32 %v6168, %v6416
    %v6577 = vsub.f32 %v6173, %v6416
    %v6578 = vsub.f32 %v6176, %v6416
    %v6579 = vsub.f32 %v6181, %v6416
    %v6580 = vsub.f32 %v6184, %v6416
    %v6581 = vsub.f32 %v6189, %v6416
    %v6582 = vsub.f32 %v6192, %v6416
    %v6583 = vsub.f32 %v6197, %v6416
    %v6584 = vsub.f32 %v6200, %v6416
    %v6585 = vsub.f32 %v6205, %v6416
    %v6586 = vsub.f32 %v6208, %v6416
    %v6587 = vsub.f32 %v6213, %v6416
    %v6588 = vsub.f32 %v6216, %v6416
    %v6589 = vsub.f32 %v6221, %v6416
    %v6590 = vsub.f32 %v6224, %v6416
    %v6591 = vsub.f32 %v6229, %v6416
    %v6592 = vsub.f32 %v6232, %v6416
    %v6593 = vsub.f32 %v6237, %v6416
    %v6594 = vsub.f32 %v6240, %v6416
    %v6595 = vsub.f32 %v6245, %v6416
    %v6596 = vsub.f32 %v6248, %v6416
    %v6597 = vsub.f32 %v6253, %v6416
    %v6598 = vsub.f32 %v6256, %v6416
    %v6599 = vsub.f32 %v6261, %v6416
    %v6600 = vsub.f32 %v6264, %v6416
    %v6601 = vsub.f32 %v6269, %v6416
    %v6602 = vsub.f32 %v6272, %v6416
    %v6603 = vsub.f32 %v6277, %v6416
    %v6604 = vsub.f32 %v6280, %v6416
    %v6605 = vsub.f32 %v6285, %v6416
    %v6606 = vsub.f32 %v6288, %v6416
    %v6607 = vsub.f32 %v6293, %v6416
    %v6608 = vsub.f32 %v6296, %v6416
    %v6609 = vsub.f32 %v6301, %v6416
    %v6610 = vsub.f32 %v6304, %v6416
    %v6611 = vsub.f32 %v6309, %v6416
    %v6612 = vsub.f32 %v6312, %v6416
    %v6613 = vsub.f32 %v6317, %v6416
    %v6614 = vsub.f32 %v6320, %v6416
    %v6615 = vsub.f32 %v6325, %v6416
    %v6616 = vsub.f32 %v6328, %v6416
    %v6617 = vsub.f32 %v6333, %v6416
    %v6618 = vsub.f32 %v6336, %v6416
    %v6619 = vsub.f32 %v6341, %v6416
    %v6620 = vsub.f32 %v6344, %v6416
    %v6621 = vlaneseq
    %v6622 = vshrl.u32 %v6621, 7
    %v6623 = vsub.s32 0, %v6622
    %v6624 = vrot.slane %v6556, %v6623
    %v6625 = vmul.f32 %v6557, %v6624
    %v6626 = vmul.f32 %v6558, %v6624
    %v6627 = vmul.f32 %v6559, %v6624
    %v6628 = vmul.f32 %v6560, %v6624
    %v6629 = vmul.f32 %v6561, %v6624
    %v6630 = vmul.f32 %v6562, %v6624
    %v6631 = vmul.f32 %v6563, %v6624
    %v6632 = vmul.f32 %v6564, %v6624
    %v6633 = vmul.f32 %v6565, %v6624
    %v6634 = vmul.f32 %v6566, %v6624
    %v6635 = vmul.f32 %v6567, %v6624
    %v6636 = vmul.f32 %v6568, %v6624
    %v6637 = vmul.f32 %v6569, %v6624
    %v6638 = vmul.f32 %v6570, %v6624
    %v6639 = vmul.f32 %v6571, %v6624
    %v6640 = vmul.f32 %v6572, %v6624
    %v6641 = vmul.f32 %v6573, %v6624
    %v6642 = vmul.f32 %v6574, %v6624
    %v6643 = vmul.f32 %v6575, %v6624
    %v6644 = vmul.f32 %v6576, %v6624
    %v6645 = vmul.f32 %v6577, %v6624
    %v6646 = vmul.f32 %v6578, %v6624
    %v6647 = vmul.f32 %v6579, %v6624
    %v6648 = vmul.f32 %v6580, %v6624
    %v6649 = vmul.f32 %v6581, %v6624
    %v6650 = vmul.f32 %v6582, %v6624
    %v6651 = vmul.f32 %v6583, %v6624
    %v6652 = vmul.f32 %v6584, %v6624
    %v6653 = vmul.f32 %v6585, %v6624
    %v6654 = vmul.f32 %v6586, %v6624
    %v6655 = vmul.f32 %v6587, %v6624
    %v6656 = vmul.f32 %v6588, %v6624
    %v6657 = vmul.f32 %v6589, %v6624
    %v6658 = vmul.f32 %v6590, %v6624
    %v6659 = vmul.f32 %v6591, %v6624
    %v6660 = vmul.f32 %v6592, %v6624
    %v6661 = vmul.f32 %v6593, %v6624
    %v6662 = vmul.f32 %v6594, %v6624
    %v6663 = vmul.f32 %v6595, %v6624
    %v6664 = vmul.f32 %v6596, %v6624
    %v6665 = vmul.f32 %v6597, %v6624
    %v6666 = vmul.f32 %v6598, %v6624
    %v6667 = vmul.f32 %v6599, %v6624
    %v6668 = vmul.f32 %v6600, %v6624
    %v6669 = vmul.f32 %v6601, %v6624
    %v6670 = vmul.f32 %v6602, %v6624
    %v6671 = vmul.f32 %v6603, %v6624
    %v6672 = vmul.f32 %v6604, %v6624
    %v6673 = vmul.f32 %v6605, %v6624
    %v6674 = vmul.f32 %v6606, %v6624
    %v6675 = vmul.f32 %v6607, %v6624
    %v6676 = vmul.f32 %v6608, %v6624
    %v6677 = vmul.f32 %v6609, %v6624
    %v6678 = vmul.f32 %v6610, %v6624
    %v6679 = vmul.f32 %v6611, %v6624
    %v6680 = vmul.f32 %v6612, %v6624
    %v6681 = vmul.f32 %v6613, %v6624
    %v6682 = vmul.f32 %v6614, %v6624
    %v6683 = vmul.f32 %v6615, %v6624
    %v6684 = vmul.f32 %v6616, %v6624
    %v6685 = vmul.f32 %v6617, %v6624
    %v6686 = vmul.f32 %v6618, %v6624
    %v6687 = vmul.f32 %v6619, %v6624
    %v6688 = vmul.f32 %v6620, %v6624
    %v6689 = vld [vmem:[%s6] sm:$0x1]
    %v6691 = vlaneseq
    %v6692 = vshrl.u32 %v6691, 7
    %v6693 = vsub.s32 0, %v6692
    %v6694 = vrot.slane %v6689, %v6693
    %v6696 = vadd.f32 %v6625, %v6694
    %v6697 = vadd.f32 %v6626, %v6694
    %v6698 = vadd.f32 %v6627, %v6694
    %v6699 = vadd.f32 %v6628, %v6694
    %v6700 = vadd.f32 %v6629, %v6694
    %v6701 = vadd.f32 %v6630, %v6694
    %v6702 = vadd.f32 %v6631, %v6694
    %v6703 = vadd.f32 %v6632, %v6694
    %v6704 = vadd.f32 %v6633, %v6694
    %v6705 = vadd.f32 %v6634, %v6694
    %v6706 = vadd.f32 %v6635, %v6694
    %v6707 = vadd.f32 %v6636, %v6694
    %v6708 = vadd.f32 %v6637, %v6694
    %v6709 = vadd.f32 %v6638, %v6694
    %v6710 = vadd.f32 %v6639, %v6694
    %v6711 = vadd.f32 %v6640, %v6694
    %v6712 = vadd.f32 %v6641, %v6694
    %v6713 = vadd.f32 %v6642, %v6694
    %v6714 = vadd.f32 %v6643, %v6694
    %v6715 = vadd.f32 %v6644, %v6694
    %v6716 = vadd.f32 %v6645, %v6694
    %v6717 = vadd.f32 %v6646, %v6694
    %v6718 = vadd.f32 %v6647, %v6694
    %v6719 = vadd.f32 %v6648, %v6694
    %v6720 = vadd.f32 %v6649, %v6694
    %v6721 = vadd.f32 %v6650, %v6694
    %v6722 = vadd.f32 %v6651, %v6694
    %v6723 = vadd.f32 %v6652, %v6694
    %v6724 = vadd.f32 %v6653, %v6694
    %v6725 = vadd.f32 %v6654, %v6694
    %v6726 = vadd.f32 %v6655, %v6694
    %v6727 = vadd.f32 %v6656, %v6694
    %v6728 = vadd.f32 %v6657, %v6694
    %v6729 = vadd.f32 %v6658, %v6694
    %v6730 = vadd.f32 %v6659, %v6694
    %v6731 = vadd.f32 %v6660, %v6694
    %v6732 = vadd.f32 %v6661, %v6694
    %v6733 = vadd.f32 %v6662, %v6694
    %v6734 = vadd.f32 %v6663, %v6694
    %v6735 = vadd.f32 %v6664, %v6694
    %v6736 = vadd.f32 %v6665, %v6694
    %v6737 = vadd.f32 %v6666, %v6694
    %v6738 = vadd.f32 %v6667, %v6694
    %v6739 = vadd.f32 %v6668, %v6694
    %v6740 = vadd.f32 %v6669, %v6694
    %v6741 = vadd.f32 %v6670, %v6694
    %v6742 = vadd.f32 %v6671, %v6694
    %v6743 = vadd.f32 %v6672, %v6694
    %v6744 = vadd.f32 %v6673, %v6694
    %v6745 = vadd.f32 %v6674, %v6694
    %v6746 = vadd.f32 %v6675, %v6694
    %v6747 = vadd.f32 %v6676, %v6694
    %v6748 = vadd.f32 %v6677, %v6694
    %v6749 = vadd.f32 %v6678, %v6694
    %v6750 = vadd.f32 %v6679, %v6694
    %v6751 = vadd.f32 %v6680, %v6694
    %v6752 = vadd.f32 %v6681, %v6694
    %v6753 = vadd.f32 %v6682, %v6694
    %v6754 = vadd.f32 %v6683, %v6694
    %v6755 = vadd.f32 %v6684, %v6694
    %v6756 = vadd.f32 %v6685, %v6694
    %v6757 = vadd.f32 %v6686, %v6694
    %v6758 = vadd.f32 %v6687, %v6694
    %v6759 = vadd.f32 %v6688, %v6694
    %v6760 = vmax.f32 %v6696, 0.0
    %v6761 = vmax.f32 %v6697, 0.0
    %v6762 = vmax.f32 %v6698, 0.0
    %v6763 = vmax.f32 %v6699, 0.0
    %v6764 = vmax.f32 %v6700, 0.0
    %v6765 = vmax.f32 %v6701, 0.0
    %v6766 = vmax.f32 %v6702, 0.0
    %v6767 = vmax.f32 %v6703, 0.0
    %v6768 = vmax.f32 %v6704, 0.0
    %v6769 = vmax.f32 %v6705, 0.0
    %v6770 = vmax.f32 %v6706, 0.0
    %v6771 = vmax.f32 %v6707, 0.0
    %v6772 = vmax.f32 %v6708, 0.0
    %v6773 = vmax.f32 %v6709, 0.0
    %v6774 = vmax.f32 %v6710, 0.0
    %v6775 = vmax.f32 %v6711, 0.0
    %v6776 = vmax.f32 %v6712, 0.0
    %v6777 = vmax.f32 %v6713, 0.0
    %v6778 = vmax.f32 %v6714, 0.0
    %v6779 = vmax.f32 %v6715, 0.0
    %v6780 = vmax.f32 %v6716, 0.0
    %v6781 = vmax.f32 %v6717, 0.0
    %v6782 = vmax.f32 %v6718, 0.0
    %v6783 = vmax.f32 %v6719, 0.0
    %v6784 = vmax.f32 %v6720, 0.0
    %v6785 = vmax.f32 %v6721, 0.0
    %v6786 = vmax.f32 %v6722, 0.0
    %v6787 = vmax.f32 %v6723, 0.0
    %v6788 = vmax.f32 %v6724, 0.0
    %v6789 = vmax.f32 %v6725, 0.0
    %v6790 = vmax.f32 %v6726, 0.0
    %v6791 = vmax.f32 %v6727, 0.0
    %v6792 = vmax.f32 %v6728, 0.0
    %v6793 = vmax.f32 %v6729, 0.0
    %v6794 = vmax.f32 %v6730, 0.0
    %v6795 = vmax.f32 %v6731, 0.0
    %v6796 = vmax.f32 %v6732, 0.0
    %v6797 = vmax.f32 %v6733, 0.0
    %v6798 = vmax.f32 %v6734, 0.0
    %v6799 = vmax.f32 %v6735, 0.0
    %v6800 = vmax.f32 %v6736, 0.0
    %v6801 = vmax.f32 %v6737, 0.0
    %v6802 = vmax.f32 %v6738, 0.0
    %v6803 = vmax.f32 %v6739, 0.0
    %v6804 = vmax.f32 %v6740, 0.0
    %v6805 = vmax.f32 %v6741, 0.0
    %v6806 = vmax.f32 %v6742, 0.0
    %v6807 = vmax.f32 %v6743, 0.0
    %v6808 = vmax.f32 %v6744, 0.0
    %v6809 = vmax.f32 %v6745, 0.0
    %v6810 = vmax.f32 %v6746, 0.0
    %v6811 = vmax.f32 %v6747, 0.0
    %v6812 = vmax.f32 %v6748, 0.0
    %v6813 = vmax.f32 %v6749, 0.0
    %v6814 = vmax.f32 %v6750, 0.0
    %v6815 = vmax.f32 %v6751, 0.0
    %v6816 = vmax.f32 %v6752, 0.0
    %v6817 = vmax.f32 %v6753, 0.0
    %v6818 = vmax.f32 %v6754, 0.0
    %v6819 = vmax.f32 %v6755, 0.0
    %v6820 = vmax.f32 %v6756, 0.0
    %v6821 = vmax.f32 %v6757, 0.0
    %v6822 = vmax.f32 %v6758, 0.0
    %v6823 = vmax.f32 %v6759, 0.0
    %6824 = vst [vmem:[#allocation3] sm:$0xff] %v6760
    %6825 = vst [vmem:[#allocation3 + $0x8] sm:$0xff] %v6761
    %6826 = vst [vmem:[#allocation3 + $0x10] sm:$0xff] %v6762
    %6827 = vst [vmem:[#allocation3 + $0x18] sm:$0xff] %v6763
    %6828 = vst [vmem:[#allocation3 + $0x20] sm:$0xff] %v6764
    %6829 = vst [vmem:[#allocation3 + $0x28] sm:$0xff] %v6765
    %6830 = vst [vmem:[#allocation3 + $0x30] sm:$0xff] %v6766
    %6831 = vst [vmem:[#allocation3 + $0x38] sm:$0xff] %v6767
    %6832 = vst [vmem:[#allocation3 + $0x40] sm:$0xff] %v6768
    %6833 = vst [vmem:[#allocation3 + $0x48] sm:$0xff] %v6769
    %6834 = vst [vmem:[#allocation3 + $0x50] sm:$0xff] %v6770
    %6835 = vst [vmem:[#allocation3 + $0x58] sm:$0xff] %v6771
    %6836 = vst [vmem:[#allocation3 + $0x60] sm:$0xff] %v6772
    %6837 = vst [vmem:[#allocation3 + $0x68] sm:$0xff] %v6773
    %6838 = vst [vmem:[#allocation3 + $0x70] sm:$0xff] %v6774
    %6839 = vst [vmem:[#allocation3 + $0x78] sm:$0xff] %v6775
    %6840 = vst [vmem:[#allocation3 + $0x80] sm:$0xff] %v6776
    %6841 = vst [vmem:[#allocation3 + $0x88] sm:$0xff] %v6777
    %6842 = vst [vmem:[#allocation3 + $0x90] sm:$0xff] %v6778
    %6843 = vst [vmem:[#allocation3 + $0x98] sm:$0xff] %v6779
    %6844 = vst [vmem:[#allocation3 + $0xa0] sm:$0xff] %v6780
    %6845 = vst [vmem:[#allocation3 + $0xa8] sm:$0xff] %v6781
    %6846 = vst [vmem:[#allocation3 + $0xb0] sm:$0xff] %v6782
    %6847 = vst [vmem:[#allocation3 + $0xb8] sm:$0xff] %v6783
    %6848 = vst [vmem:[#allocation3 + $0xc0] sm:$0xff] %v6784
    %6849 = vst [vmem:[#allocation3 + $0xc8] sm:$0xff] %v6785
    %6850 = vst [vmem:[#allocation3 + $0xd0] sm:$0xff] %v6786
    %6851 = vst [vmem:[#allocation3 + $0xd8] sm:$0xff] %v6787
    %6852 = vst [vmem:[#allocation3 + $0xe0] sm:$0xff] %v6788
    %6853 = vst [vmem:[#allocation3 + $0xe8] sm:$0xff] %v6789
    %6854 = vst [vmem:[#allocation3 + $0xf0] sm:$0xff] %v6790
    %6855 = vst [vmem:[#allocation3 + $0xf8] sm:$0xff] %v6791
    %6856 = vst [vmem:[#allocation3 + $0x100] sm:$0xff] %v6792
    %6857 = vst [vmem:[#allocation3 + $0x108] sm:$0xff] %v6793
    %6858 = vst [vmem:[#allocation3 + $0x110] sm:$0xff] %v6794
    %6859 = vst [vmem:[#allocation3 + $0x118] sm:$0xff] %v6795
    %6860 = vst [vmem:[#allocation3 + $0x120] sm:$0xff] %v6796
    %6861 = vst [vmem:[#allocation3 + $0x128] sm:$0xff] %v6797
    %6862 = vst [vmem:[#allocation3 + $0x130] sm:$0xff] %v6798
    %6863 = vst [vmem:[#allocation3 + $0x138] sm:$0xff] %v6799
    %6864 = vst [vmem:[#allocation3 + $0x140] sm:$0xff] %v6800
    %6865 = vst [vmem:[#allocation3 + $0x148] sm:$0xff] %v6801
    %6866 = vst [vmem:[#allocation3 + $0x150] sm:$0xff] %v6802
    %6867 = vst [vmem:[#allocation3 + $0x158] sm:$0xff] %v6803
    %6868 = vst [vmem:[#allocation3 + $0x160] sm:$0xff] %v6804
    %6869 = vst [vmem:[#allocation3 + $0x168] sm:$0xff] %v6805
    %6870 = vst [vmem:[#allocation3 + $0x170] sm:$0xff] %v6806
    %6871 = vst [vmem:[#allocation3 + $0x178] sm:$0xff] %v6807
    %6872 = vst [vmem:[#allocation3 + $0x180] sm:$0xff] %v6808
    %6873 = vst [vmem:[#allocation3 + $0x188] sm:$0xff] %v6809
    %6874 = vst [vmem:[#allocation3 + $0x190] sm:$0xff] %v6810
    %6875 = vst [vmem:[#allocation3 + $0x198] sm:$0xff] %v6811
    %6876 = vst [vmem:[#allocation3 + $0x1a0] sm:$0xff] %v6812
    %6877 = vst [vmem:[#allocation3 + $0x1a8] sm:$0xff] %v6813
    %6878 = vst [vmem:[#allocation3 + $0x1b0] sm:$0xff] %v6814
    %6879 = vst [vmem:[#allocation3 + $0x1b8] sm:$0xff] %v6815
    %6880 = vst [vmem:[#allocation3 + $0x1c0] sm:$0xff] %v6816
    %6881 = vst [vmem:[#allocation3 + $0x1c8] sm:$0xff] %v6817
    %6882 = vst [vmem:[#allocation3 + $0x1d0] sm:$0xff] %v6818
    %6883 = vst [vmem:[#allocation3 + $0x1d8] sm:$0xff] %v6819
    %6884 = vst [vmem:[#allocation3 + $0x1e0] sm:$0xff] %v6820
    %6885 = vst [vmem:[#allocation3 + $0x1e8] sm:$0xff] %v6821
    %6886 = vst [vmem:[#allocation3 + $0x1f0] sm:$0xff] %v6822
    %6887 = vst [vmem:[#allocation3 + $0x1f8] sm:$0xff] %v6823
    // Predicated region
    $region30: #{tpu_custom_call.1} parent=1 // pred_check
      _
    $region31: #{tpu_custom_call.1} parent=1 // pred_check_branch
      %6889 = sbr.rel (0) target = $region33
    $region32: #{tpu_custom_call.1} parent=1 // pred_region
      %s6891 = ssub.s32 8192, 8192
      %6892 = vsyncadd [#allocation4], %s6891
      %s6893 = sshll.u32 [#allocation3], 4
      %s6894 = int_to_ptr.vmem [resolvable:$true] %s6893
      %6899 = dma.vmem_to_hbm [thread:$0]  %s6894, 8192, %s7, [#allocation4], 128, 128, 8
    $region33: #{tpu_custom_call.1} parent=1 // pred_fallthru
      _
    // Predicated region
    $region34: #{tpu_custom_call.1} parent=1 // pred_check
      _
    $region35: #{tpu_custom_call.1} parent=1 // pred_check_branch
      %6901 = sbr.rel (0) target = $region37
    $region36: #{tpu_custom_call.1} parent=1 // pred_region
      %6902 = dma.done [#allocation4], 8192
    $region37: #{tpu_custom_call.1} parent=1 // pred_fallthru
      _
    %6903 = vsyncpa [#allocation4], 1

</llo_original>
